<compile_context>
chip_gen: v7x
topology: tpu7x:2x2x1
jax: 0.10.0
libtpu: 0.0.40
codegen_flags: <defaults>
</compile_context>

<pallas_src>
import jax
import jax.numpy as jnp
from jax.experimental import pallas as pl
from jax.experimental.pallas import tpu as pltpu

NEG_SLOPE = 0.01   # torch.nn.LeakyReLU default negative_slope
BN_EPS = 1e-5      # torch.nn.BatchNorm2d default eps


def _pick_block_batch(batch, max_bb=8):
    """Images per grid step: largest divisor of `batch` that is <= max_bb and
    still leaves >= 2 grid steps (v7x megacore balance); falls back to 1."""
    best = 1
    for d in range(1, min(batch, max_bb) + 1):
        if batch % d == 0 and (batch // d >= 2 or batch == 1):
            best = d
    return best


def _reflect_pad_into(pad_ref, b, interior):
    """Write `interior` (H, W, C) into pad_ref[b, 1:H+1, 1:W+1, :] and fill the
    1-pixel reflect border (matches PyTorch padding_mode='reflect').

    Every element of pad_ref[b] is written (interior + 2 columns + 2 full
    rows), so no zero fill is needed.  Assumes H, W >= 2."""
    H, W, _ = interior.shape
    pad_ref[b, 1:H + 1, 1:W + 1, :] = interior
    # Left/right columns first, then full top/bottom rows; corners then
    # automatically equal x[1,1] / x[1,W-2] / x[H-2,1] / x[H-2,W-2].
    pad_ref[b, 1:H + 1, 0:1, :] = pad_ref[b, 1:H + 1, 2:3, :]
    pad_ref[b, 1:H + 1, W + 1:W + 2, :] = pad_ref[b, 1:H + 1, W - 1:W, :]
    pad_ref[b, 0:1, :, :] = pad_ref[b, 2:3, :, :]
    pad_ref[b, H + 1:H + 2, :, :] = pad_ref[b, H - 1:H, :, :]


def _conv_stage(pad_ref, w_ref, s_ref):
    """3x3 conv over all BB images as one MXU matmul + BN shift + LeakyReLU.

    pad_ref: (BB, H+2, W+2, C) bf16 reflect-padded inputs
    w_ref:   (9*C, Cout)       bf16, BN scale pre-folded
    s_ref:   (1, Cout)         f32 BN shift
    returns: (BB*H*W, Cout)    f32
    """
    BB, Hp, Wp, C = pad_ref.shape
    H, W = Hp - 2, Wp - 2
    per_img = []
    for b in range(BB):
        # im2col: 9 shifted windows concatenated on the (tiny) K axis.
        # W is a multiple of 8, so the (H, W, C) -> (H*W, C) collapse is
        # layout-preserving (no relayout copies).
        cols = [pad_ref[b, dy:dy + H, dx:dx + W, :].reshape(H * W, C)
                for dy in range(3) for dx in range(3)]
        per_img.append(jnp.concatenate(cols, axis=-1))        # (H*W, 9C) bf16
    patches = per_img[0] if BB == 1 else jnp.concatenate(per_img, axis=0)
    acc = jnp.dot(patches, w_ref[...],
                  preferred_element_type=jnp.float32)          # (BB*HW, Cout)
    acc = acc + s_ref[...]                                     # folded BN shift
    return jnp.where(acc >= 0, acc, NEG_SLOPE * acc)           # LeakyReLU(0.01)


def _conv_block_kernel(x_ref, w1_ref, s1_ref, w2_ref, s2_ref, o_ref,
                       pad1_ref, pad2_ref):
    """Fused ConvBlock forward for one block of BB images (one grid step)."""
    BB, Cin, HW = x_ref.shape
    _, Hp, Wp, _ = pad1_ref.shape
    H, W = Hp - 2, Wp - 2
    Cout = o_ref.shape[1]

    # ---- stage 1 -----------------------------------------------------------
    # NCHW-flat (Cin, H*W) f32 -> (H, W, Cin) bf16, cast exactly once here.
    for b in range(BB):
        img = jnp.transpose(x_ref[b]).reshape(H, W, Cin).astype(jnp.bfloat16)
        _reflect_pad_into(pad1_ref, b, img)
    h1 = _conv_stage(pad1_ref, w1_ref, s1_ref)                # (BB*HW, Cout) f32
    # TODO(synk): Dropout2d(0.3) is identity in eval mode; training-mode
    # channel dropout (pltpu.prng_*) and BN batch statistics are not implemented.

    # ---- stage 2 -----------------------------------------------------------
    # Intermediate stays in VMEM (never written to HBM); cast once to bf16.
    h1_b = h1.astype(jnp.bfloat16)
    for b in range(BB):
        _reflect_pad_into(pad2_ref, b,
                          h1_b[b * HW:(b + 1) * HW, :].reshape(H, W, Cout))
    h2 = _conv_stage(pad2_ref, w2_ref, s2_ref)                # (BB*HW, Cout) f32

    # Lane-dense NCHW-flat store: (Cout, H*W) per image, H*W lanes (>=128).
    for b in range(BB):
        o_ref[b] = jnp.transpose(h2[b * HW:(b + 1) * HW, :])


def _prep_stage_params(w_oihw, gamma, beta, mean, var):
    """Fold eval-mode BN into the conv weight.

    Returns (w, shift): w is (9*Cin, Cout) bf16 with rows ordered
    tap-major / channel-minor (matching the kernel's im2col); shift is
    (1, Cout) f32.  No channel padding.
    """
    cout, cin = w_oihw.shape[0], w_oihw.shape[1]
    inv_std = jax.lax.rsqrt(var.astype(jnp.float32) + BN_EPS)
    scale = gamma * inv_std                                   # (Cout,)
    shift = beta - mean * scale                               # (Cout,)
    w = w_oihw.astype(jnp.float32) * scale[:, None, None, None]
    w = jnp.transpose(w, (2, 3, 1, 0)).reshape(9 * cin, cout)  # (9*Cin, Cout)
    return w.astype(jnp.bfloat16), shift.reshape(1, cout).astype(jnp.float32)


def conv_block_forward(x_nchw, params):
    """ConvBlock.forward: NCHW in, NCHW out (matches the PyTorch module)."""
    B, Cin, H, W = x_nchw.shape
    assert H >= 2 and W >= 2, "1-pixel reflect padding needs H, W >= 2"
    Cout = params["w1"].shape[0]
    HW = H * W

    # Free reshape (merges the last two dims) -- no HBM transpose pass.
    x = x_nchw.reshape(B, Cin, HW)
    w1, s1 = _prep_stage_params(params["w1"], params["g1"], params["b1"],
                                params["m1"], params["v1"])
    w2, s2 = _prep_stage_params(params["w2"], params["g2"], params["b2"],
                                params["m2"], params["v2"])

    BB = _pick_block_batch(B)
    grid = (B // BB,)

    out_flat = pl.pallas_call(
        _conv_block_kernel,
        out_shape=jax.ShapeDtypeStruct((B, Cout, HW), jnp.float32),
        grid=grid,
        in_specs=[
            pl.BlockSpec((BB, Cin, HW), lambda b: (b, 0, 0)),
            pl.BlockSpec((9 * Cin, Cout), lambda b: (0, 0)),
            pl.BlockSpec((1, Cout), lambda b: (0, 0)),
            pl.BlockSpec((9 * Cout, Cout), lambda b: (0, 0)),
            pl.BlockSpec((1, Cout), lambda b: (0, 0)),
        ],
        out_specs=pl.BlockSpec((BB, Cout, HW), lambda b: (b, 0, 0)),
        scratch_shapes=[
            pltpu.VMEM((BB, H + 2, W + 2, Cin), jnp.bfloat16),   # stage-1 pad
            pltpu.VMEM((BB, H + 2, W + 2, Cout), jnp.bfloat16),  # stage-2 pad
        ],
        compiler_params=pltpu.CompilerParams(
            dimension_semantics=("parallel",),   # v7x: 2 TCs split the batch
            # Working set is a few MiB; 32 MiB is ample and safe on v7x's
            # 64 MiB physical VMEM per TensorCore.
            vmem_limit_bytes=32 * 1024 * 1024,
        ),
    )(x, w1, s1, w2, s2)

    return out_flat.reshape(B, Cout, H, W)      # free reshape, still NCHW


def init_params(key, in_channel, out_channel):
    ks = jax.random.split(key, 8)
    return {
        # Conv2d weights: (Cout, Cin, 3, 3), no bias.
        "w1": 0.1 * jax.random.normal(ks[0], (out_channel, in_channel, 3, 3), jnp.float32),
        "w2": 0.1 * jax.random.normal(ks[1], (out_channel, out_channel, 3, 3), jnp.float32),
        # BatchNorm2d affine + running statistics.
        "g1": 1.0 + 0.1 * jax.random.normal(ks[2], (out_channel,), jnp.float32),
        "b1": 0.1 * jax.random.normal(ks[3], (out_channel,), jnp.float32),
        "m1": 0.05 * jax.random.normal(ks[4], (out_channel,), jnp.float32),
        "v1": 1.0 + 0.1 * jax.random.uniform(ks[5], (out_channel,), jnp.float32),
        "g2": 1.0 + 0.1 * jax.random.normal(ks[6], (out_channel,), jnp.float32),
        "b2": 0.1 * jax.random.normal(ks[7], (out_channel,), jnp.float32),
        "m2": jnp.zeros((out_channel,), jnp.float32),
        "v2": jnp.ones((out_channel,), jnp.float32),
    }


def _reference_forward(x_nchw, params):
    """Pure-JAX f32 reference (eval-mode ConvBlock) for a tolerance check."""
    def stage(x, w, g, b, m, v):
        xp = jnp.pad(x, ((0, 0), (0, 0), (1, 1), (1, 1)), mode="reflect")
        y = jax.lax.conv_general_dilated(
            xp, w, window_strides=(1, 1), padding="VALID",
            dimension_numbers=("NCHW", "OIHW", "NCHW"))
        scale = g / jnp.sqrt(v + BN_EPS)
        shift = b - m * scale
        y = y * scale[None, :, None, None] + shift[None, :, None, None]
        return jnp.where(y >= 0, y, NEG_SLOPE * y)

    x = stage(x_nchw, params["w1"], params["g1"], params["b1"],
              params["m1"], params["v1"])
    return stage(x, params["w2"], params["g2"], params["b2"],
                 params["m2"], params["v2"])


if __name__ == "__main__":
    key = jax.random.PRNGKey(0)
    k_x, k_p = jax.random.split(key)

    B, Cin, Cout, H, W = 2, 4, 8, 16, 16
    x = jax.random.normal(k_x, (B, Cin, H, W), jnp.float32)   # NCHW like PyTorch
    params = init_params(k_p, Cin, Cout)

    out = jax.jit(conv_block_forward)(x, params)
    out = jax.block_until_ready(out)

    assert out.shape == (B, Cout, H, W), out.shape
    assert bool(jnp.all(jnp.isfinite(out)))

    # Tolerance vs. f32 reference (kernel input stays f32; only the MXU
    # operands are bf16, f32 accumulation).
    ref = _reference_forward(x, params)
    max_err = float(jnp.max(jnp.abs(out - ref)))
    assert max_err < 5e-2, f"max abs err vs reference: {max_err}"

    print("KERNEL_OK")
</pallas_src>

<mosaic_0001>
module attributes {stable_mosaic.version = 11 : i64} {
  func.func @_conv_block_kernel(%arg0: i32, %arg1: memref<1x4x256xf32, #tpu.memory_space<vmem>>, %arg2: memref<36x8xbf16, #tpu.memory_space<vmem>>, %arg3: memref<1x8xf32, #tpu.memory_space<vmem>>, %arg4: memref<72x8xbf16, #tpu.memory_space<vmem>>, %arg5: memref<1x8xf32, #tpu.memory_space<vmem>>, %arg6: memref<1x8x256xf32, #tpu.memory_space<vmem>>, %arg7: memref<1x18x18x4xbf16, #tpu.memory_space<vmem>>, %arg8: memref<1x18x18x8xbf16, #tpu.memory_space<vmem>>) attributes {dimension_semantics = [#tpu.dimension_semantics<parallel>], iteration_bounds = array<i64: 2>, scalar_prefetch = 0 : i64, scratch_operands = 2 : i64, tpu.core_type = #tpu.core_type<tc>, window_params = [{transform_indices = @transform_0, window_bounds = array<i64: 1, 4, 256>}, {pipeline_mode = #tpu.pipeline_mode<synchronous>, transform_indices = @transform_1, window_bounds = array<i64: 36, 8>}, {pipeline_mode = #tpu.pipeline_mode<synchronous>, transform_indices = @transform_2, window_bounds = array<i64: 1, 8>}, {pipeline_mode = #tpu.pipeline_mode<synchronous>, transform_indices = @transform_3, window_bounds = array<i64: 72, 8>}, {pipeline_mode = #tpu.pipeline_mode<synchronous>, transform_indices = @transform_4, window_bounds = array<i64: 1, 8>}, {transform_indices = @transform_5, window_bounds = array<i64: 1, 8, 256>}]} {
    %c0 = arith.constant 0 : index
    %c0_0 = arith.constant 0 : index
    %c0_1 = arith.constant 0 : index
    %0 = vector.load %arg1[%c0, %c0_0, %c0_1] : memref<1x4x256xf32, #tpu.memory_space<vmem>>, vector<1x4x256xf32>
    %1 = vector.shape_cast %0 : vector<1x4x256xf32> to vector<4x256xf32>
    %2 = tpu.transpose %1, [1, 0] : vector<4x256xf32> -> vector<256x4xf32>
    %3 = vector.shape_cast %2 : vector<256x4xf32> to vector<16x16x4xf32>
    %4 = arith.truncf %3 : vector<16x16x4xf32> to vector<16x16x4xbf16>
    %c0_2 = arith.constant 0 : index
    %c1 = arith.constant 1 : index
    %c1_3 = arith.constant 1 : index
    %c0_4 = arith.constant 0 : index
    %5 = vector.load %arg7[%c0_2, %c1, %c1_3, %c0_4] : memref<1x18x18x4xbf16, #tpu.memory_space<vmem>>, vector<1x16x16x4xbf16>
    %6 = vector.shape_cast %5 : vector<1x16x16x4xbf16> to vector<16x16x4xbf16>
    %7 = vector.shape_cast %4 : vector<16x16x4xbf16> to vector<1x16x16x4xbf16>
    tpu.vector_store %arg7[%c0_2, %c1, %c1_3, %c0_4], %7 {strides = array<i32>} : memref<1x18x18x4xbf16, #tpu.memory_space<vmem>>, vector<1x16x16x4xbf16>,
    %c0_5 = arith.constant 0 : index
    %c1_6 = arith.constant 1 : index
    %c2 = arith.constant 2 : index
    %c0_7 = arith.constant 0 : index
    %8 = vector.load %arg7[%c0_5, %c1_6, %c2, %c0_7] : memref<1x18x18x4xbf16, #tpu.memory_space<vmem>>, vector<1x16x1x4xbf16>
    %9 = vector.shape_cast %8 : vector<1x16x1x4xbf16> to vector<16x1x4xbf16>
    %c0_8 = arith.constant 0 : index
    %c1_9 = arith.constant 1 : index
    %c0_10 = arith.constant 0 : index
    %c0_11 = arith.constant 0 : index
    %10 = vector.load %arg7[%c0_8, %c1_9, %c0_10, %c0_11] : memref<1x18x18x4xbf16, #tpu.memory_space<vmem>>, vector<1x16x1x4xbf16>
    %11 = vector.shape_cast %10 : vector<1x16x1x4xbf16> to vector<16x1x4xbf16>
    %12 = vector.shape_cast %9 : vector<16x1x4xbf16> to vector<1x16x1x4xbf16>
    tpu.vector_store %arg7[%c0_8, %c1_9, %c0_10, %c0_11], %12 {strides = array<i32>} : memref<1x18x18x4xbf16, #tpu.memory_space<vmem>>, vector<1x16x1x4xbf16>,
    %c0_12 = arith.constant 0 : index
    %c1_13 = arith.constant 1 : index
    %c15 = arith.constant 15 : index
    %c0_14 = arith.constant 0 : index
    %13 = vector.load %arg7[%c0_12, %c1_13, %c15, %c0_14] : memref<1x18x18x4xbf16, #tpu.memory_space<vmem>>, vector<1x16x1x4xbf16>
    %14 = vector.shape_cast %13 : vector<1x16x1x4xbf16> to vector<16x1x4xbf16>
    %c0_15 = arith.constant 0 : index
    %c1_16 = arith.constant 1 : index
    %c17 = arith.constant 17 : index
    %c0_17 = arith.constant 0 : index
    %15 = vector.load %arg7[%c0_15, %c1_16, %c17, %c0_17] : memref<1x18x18x4xbf16, #tpu.memory_space<vmem>>, vector<1x16x1x4xbf16>
    %16 = vector.shape_cast %15 : vector<1x16x1x4xbf16> to vector<16x1x4xbf16>
    %17 = vector.shape_cast %14 : vector<16x1x4xbf16> to vector<1x16x1x4xbf16>
    tpu.vector_store %arg7[%c0_15, %c1_16, %c17, %c0_17], %17 {strides = array<i32>} : memref<1x18x18x4xbf16, #tpu.memory_space<vmem>>, vector<1x16x1x4xbf16>,
    %c0_18 = arith.constant 0 : index
    %c2_19 = arith.constant 2 : index
    %c0_20 = arith.constant 0 : index
    %c0_21 = arith.constant 0 : index
    %18 = vector.load %arg7[%c0_18, %c2_19, %c0_20, %c0_21] : memref<1x18x18x4xbf16, #tpu.memory_space<vmem>>, vector<1x1x18x4xbf16>
    %19 = vector.shape_cast %18 : vector<1x1x18x4xbf16> to vector<1x18x4xbf16>
    %c0_22 = arith.constant 0 : index
    %c0_23 = arith.constant 0 : index
    %c0_24 = arith.constant 0 : index
    %c0_25 = arith.constant 0 : index
    %20 = vector.load %arg7[%c0_22, %c0_23, %c0_24, %c0_25] : memref<1x18x18x4xbf16, #tpu.memory_space<vmem>>, vector<1x1x18x4xbf16>
    %21 = vector.shape_cast %20 : vector<1x1x18x4xbf16> to vector<1x18x4xbf16>
    %22 = vector.shape_cast %19 : vector<1x18x4xbf16> to vector<1x1x18x4xbf16>
    tpu.vector_store %arg7[%c0_22, %c0_23, %c0_24, %c0_25], %22 {strides = array<i32>} : memref<1x18x18x4xbf16, #tpu.memory_space<vmem>>, vector<1x1x18x4xbf16>,
    %c0_26 = arith.constant 0 : index
    %c15_27 = arith.constant 15 : index
    %c0_28 = arith.constant 0 : index
    %c0_29 = arith.constant 0 : index
    %23 = vector.load %arg7[%c0_26, %c15_27, %c0_28, %c0_29] : memref<1x18x18x4xbf16, #tpu.memory_space<vmem>>, vector<1x1x18x4xbf16>
    %24 = vector.shape_cast %23 : vector<1x1x18x4xbf16> to vector<1x18x4xbf16>
    %c0_30 = arith.constant 0 : index
    %c17_31 = arith.constant 17 : index
    %c0_32 = arith.constant 0 : index
    %c0_33 = arith.constant 0 : index
    %25 = vector.load %arg7[%c0_30, %c17_31, %c0_32, %c0_33] : memref<1x18x18x4xbf16, #tpu.memory_space<vmem>>, vector<1x1x18x4xbf16>
    %26 = vector.shape_cast %25 : vector<1x1x18x4xbf16> to vector<1x18x4xbf16>
    %27 = vector.shape_cast %24 : vector<1x18x4xbf16> to vector<1x1x18x4xbf16>
    tpu.vector_store %arg7[%c0_30, %c17_31, %c0_32, %c0_33], %27 {strides = array<i32>} : memref<1x18x18x4xbf16, #tpu.memory_space<vmem>>, vector<1x1x18x4xbf16>,
    %c0_34 = arith.constant 0 : index
    %c0_35 = arith.constant 0 : index
    %c0_36 = arith.constant 0 : index
    %c0_37 = arith.constant 0 : index
    %28 = vector.load %arg7[%c0_34, %c0_35, %c0_36, %c0_37] : memref<1x18x18x4xbf16, #tpu.memory_space<vmem>>, vector<1x16x16x4xbf16>
    %29 = vector.shape_cast %28 : vector<1x16x16x4xbf16> to vector<16x16x4xbf16>
    %30 = vector.shape_cast %29 : vector<16x16x4xbf16> to vector<256x4xbf16>
    %c0_38 = arith.constant 0 : index
    %c0_39 = arith.constant 0 : index
    %c1_40 = arith.constant 1 : index
    %c0_41 = arith.constant 0 : index
    %31 = vector.load %arg7[%c0_38, %c0_39, %c1_40, %c0_41] : memref<1x18x18x4xbf16, #tpu.memory_space<vmem>>, vector<1x16x16x4xbf16>
    %32 = vector.shape_cast %31 : vector<1x16x16x4xbf16> to vector<16x16x4xbf16>
    %33 = vector.shape_cast %32 : vector<16x16x4xbf16> to vector<256x4xbf16>
    %c0_42 = arith.constant 0 : index
    %c0_43 = arith.constant 0 : index
    %c2_44 = arith.constant 2 : index
    %c0_45 = arith.constant 0 : index
    %34 = vector.load %arg7[%c0_42, %c0_43, %c2_44, %c0_45] : memref<1x18x18x4xbf16, #tpu.memory_space<vmem>>, vector<1x16x16x4xbf16>
    %35 = vector.shape_cast %34 : vector<1x16x16x4xbf16> to vector<16x16x4xbf16>
    %36 = vector.shape_cast %35 : vector<16x16x4xbf16> to vector<256x4xbf16>
    %c0_46 = arith.constant 0 : index
    %c1_47 = arith.constant 1 : index
    %c0_48 = arith.constant 0 : index
    %c0_49 = arith.constant 0 : index
    %37 = vector.load %arg7[%c0_46, %c1_47, %c0_48, %c0_49] : memref<1x18x18x4xbf16, #tpu.memory_space<vmem>>, vector<1x16x16x4xbf16>
    %38 = vector.shape_cast %37 : vector<1x16x16x4xbf16> to vector<16x16x4xbf16>
    %39 = vector.shape_cast %38 : vector<16x16x4xbf16> to vector<256x4xbf16>
    %c0_50 = arith.constant 0 : index
    %c1_51 = arith.constant 1 : index
    %c1_52 = arith.constant 1 : index
    %c0_53 = arith.constant 0 : index
    %40 = vector.load %arg7[%c0_50, %c1_51, %c1_52, %c0_53] : memref<1x18x18x4xbf16, #tpu.memory_space<vmem>>, vector<1x16x16x4xbf16>
    %41 = vector.shape_cast %40 : vector<1x16x16x4xbf16> to vector<16x16x4xbf16>
    %42 = vector.shape_cast %41 : vector<16x16x4xbf16> to vector<256x4xbf16>
    %c0_54 = arith.constant 0 : index
    %c1_55 = arith.constant 1 : index
    %c2_56 = arith.constant 2 : index
    %c0_57 = arith.constant 0 : index
    %43 = vector.load %arg7[%c0_54, %c1_55, %c2_56, %c0_57] : memref<1x18x18x4xbf16, #tpu.memory_space<vmem>>, vector<1x16x16x4xbf16>
    %44 = vector.shape_cast %43 : vector<1x16x16x4xbf16> to vector<16x16x4xbf16>
    %45 = vector.shape_cast %44 : vector<16x16x4xbf16> to vector<256x4xbf16>
    %c0_58 = arith.constant 0 : index
    %c2_59 = arith.constant 2 : index
    %c0_60 = arith.constant 0 : index
    %c0_61 = arith.constant 0 : index
    %46 = vector.load %arg7[%c0_58, %c2_59, %c0_60, %c0_61] : memref<1x18x18x4xbf16, #tpu.memory_space<vmem>>, vector<1x16x16x4xbf16>
    %47 = vector.shape_cast %46 : vector<1x16x16x4xbf16> to vector<16x16x4xbf16>
    %48 = vector.shape_cast %47 : vector<16x16x4xbf16> to vector<256x4xbf16>
    %c0_62 = arith.constant 0 : index
    %c2_63 = arith.constant 2 : index
    %c1_64 = arith.constant 1 : index
    %c0_65 = arith.constant 0 : index
    %49 = vector.load %arg7[%c0_62, %c2_63, %c1_64, %c0_65] : memref<1x18x18x4xbf16, #tpu.memory_space<vmem>>, vector<1x16x16x4xbf16>
    %50 = vector.shape_cast %49 : vector<1x16x16x4xbf16> to vector<16x16x4xbf16>
    %51 = vector.shape_cast %50 : vector<16x16x4xbf16> to vector<256x4xbf16>
    %c0_66 = arith.constant 0 : index
    %c2_67 = arith.constant 2 : index
    %c2_68 = arith.constant 2 : index
    %c0_69 = arith.constant 0 : index
    %52 = vector.load %arg7[%c0_66, %c2_67, %c2_68, %c0_69] : memref<1x18x18x4xbf16, #tpu.memory_space<vmem>>, vector<1x16x16x4xbf16>
    %53 = vector.shape_cast %52 : vector<1x16x16x4xbf16> to vector<16x16x4xbf16>
    %54 = vector.shape_cast %53 : vector<16x16x4xbf16> to vector<256x4xbf16>
    %55 = tpu.concatenate %30, %33, %36, %39, %42, %45, %48, %51, %54 in 1 : vector<256x4xbf16>, vector<256x4xbf16>, vector<256x4xbf16>, vector<256x4xbf16>, vector<256x4xbf16>, vector<256x4xbf16>, vector<256x4xbf16>, vector<256x4xbf16>, vector<256x4xbf16> -> vector<256x36xbf16>
    %c0_70 = arith.constant 0 : index
    %c0_71 = arith.constant 0 : index
    %56 = vector.load %arg2[%c0_70, %c0_71] : memref<36x8xbf16, #tpu.memory_space<vmem>>, vector<36x8xbf16>
    %cst = arith.constant dense<0.000000e+00> : vector<256x8xf32>
    %57 = tpu.matmul %55, %56, %cst {dimension_numbers = #tpu.dot_dimension_numbers<[1], [0], [0], [1], [0, 0, 1, 1], [], []>} : vector<256x36xbf16>, vector<36x8xbf16>, vector<256x8xf32> -> vector<256x8xf32>
    %c0_72 = arith.constant 0 : index
    %c0_73 = arith.constant 0 : index
    %58 = vector.load %arg3[%c0_72, %c0_73] : memref<1x8xf32, #tpu.memory_space<vmem>>, vector<1x8xf32>
    %59 = vector.broadcast %58 : vector<1x8xf32> to vector<256x8xf32>
    %60 = arith.addf %57, %59 : vector<256x8xf32>
    %cst_74 = arith.constant 0.000000e+00 : f32
    %61 = vector.broadcast %cst_74 : f32 to vector<256x8xf32>
    %62 = arith.cmpf oge, %60, %61 : vector<256x8xf32>
    %cst_75 = arith.constant 0.00999999977 : f32
    %63 = vector.broadcast %cst_75 : f32 to vector<256x8xf32>
    %64 = arith.mulf %63, %60 : vector<256x8xf32>
    %65 = arith.select %62, %60, %64 : vector<256x8xi1>, vector<256x8xf32>
    %66 = arith.truncf %65 : vector<256x8xf32> to vector<256x8xbf16>
    %67 = vector.shape_cast %66 : vector<256x8xbf16> to vector<16x16x8xbf16>
    %c0_76 = arith.constant 0 : index
    %c1_77 = arith.constant 1 : index
    %c1_78 = arith.constant 1 : index
    %c0_79 = arith.constant 0 : index
    %68 = vector.load %arg8[%c0_76, %c1_77, %c1_78, %c0_79] : memref<1x18x18x8xbf16, #tpu.memory_space<vmem>>, vector<1x16x16x8xbf16>
    %69 = vector.shape_cast %68 : vector<1x16x16x8xbf16> to vector<16x16x8xbf16>
    %70 = vector.shape_cast %67 : vector<16x16x8xbf16> to vector<1x16x16x8xbf16>
    tpu.vector_store %arg8[%c0_76, %c1_77, %c1_78, %c0_79], %70 {strides = array<i32>} : memref<1x18x18x8xbf16, #tpu.memory_space<vmem>>, vector<1x16x16x8xbf16>,
    %c0_80 = arith.constant 0 : index
    %c1_81 = arith.constant 1 : index
    %c2_82 = arith.constant 2 : index
    %c0_83 = arith.constant 0 : index
    %71 = vector.load %arg8[%c0_80, %c1_81, %c2_82, %c0_83] : memref<1x18x18x8xbf16, #tpu.memory_space<vmem>>, vector<1x16x1x8xbf16>
    %72 = vector.shape_cast %71 : vector<1x16x1x8xbf16> to vector<16x1x8xbf16>
    %c0_84 = arith.constant 0 : index
    %c1_85 = arith.constant 1 : index
    %c0_86 = arith.constant 0 : index
    %c0_87 = arith.constant 0 : index
    %73 = vector.load %arg8[%c0_84, %c1_85, %c0_86, %c0_87] : memref<1x18x18x8xbf16, #tpu.memory_space<vmem>>, vector<1x16x1x8xbf16>
    %74 = vector.shape_cast %73 : vector<1x16x1x8xbf16> to vector<16x1x8xbf16>
    %75 = vector.shape_cast %72 : vector<16x1x8xbf16> to vector<1x16x1x8xbf16>
    tpu.vector_store %arg8[%c0_84, %c1_85, %c0_86, %c0_87], %75 {strides = array<i32>} : memref<1x18x18x8xbf16, #tpu.memory_space<vmem>>, vector<1x16x1x8xbf16>,
    %c0_88 = arith.constant 0 : index
    %c1_89 = arith.constant 1 : index
    %c15_90 = arith.constant 15 : index
    %c0_91 = arith.constant 0 : index
    %76 = vector.load %arg8[%c0_88, %c1_89, %c15_90, %c0_91] : memref<1x18x18x8xbf16, #tpu.memory_space<vmem>>, vector<1x16x1x8xbf16>
    %77 = vector.shape_cast %76 : vector<1x16x1x8xbf16> to vector<16x1x8xbf16>
    %c0_92 = arith.constant 0 : index
    %c1_93 = arith.constant 1 : index
    %c17_94 = arith.constant 17 : index
    %c0_95 = arith.constant 0 : index
    %78 = vector.load %arg8[%c0_92, %c1_93, %c17_94, %c0_95] : memref<1x18x18x8xbf16, #tpu.memory_space<vmem>>, vector<1x16x1x8xbf16>
    %79 = vector.shape_cast %78 : vector<1x16x1x8xbf16> to vector<16x1x8xbf16>
    %80 = vector.shape_cast %77 : vector<16x1x8xbf16> to vector<1x16x1x8xbf16>
    tpu.vector_store %arg8[%c0_92, %c1_93, %c17_94, %c0_95], %80 {strides = array<i32>} : memref<1x18x18x8xbf16, #tpu.memory_space<vmem>>, vector<1x16x1x8xbf16>,
    %c0_96 = arith.constant 0 : index
    %c2_97 = arith.constant 2 : index
    %c0_98 = arith.constant 0 : index
    %c0_99 = arith.constant 0 : index
    %81 = vector.load %arg8[%c0_96, %c2_97, %c0_98, %c0_99] : memref<1x18x18x8xbf16, #tpu.memory_space<vmem>>, vector<1x1x18x8xbf16>
    %82 = vector.shape_cast %81 : vector<1x1x18x8xbf16> to vector<1x18x8xbf16>
    %c0_100 = arith.constant 0 : index
    %c0_101 = arith.constant 0 : index
    %c0_102 = arith.constant 0 : index
    %c0_103 = arith.constant 0 : index
    %83 = vector.load %arg8[%c0_100, %c0_101, %c0_102, %c0_103] : memref<1x18x18x8xbf16, #tpu.memory_space<vmem>>, vector<1x1x18x8xbf16>
    %84 = vector.shape_cast %83 : vector<1x1x18x8xbf16> to vector<1x18x8xbf16>
    %85 = vector.shape_cast %82 : vector<1x18x8xbf16> to vector<1x1x18x8xbf16>
    tpu.vector_store %arg8[%c0_100, %c0_101, %c0_102, %c0_103], %85 {strides = array<i32>} : memref<1x18x18x8xbf16, #tpu.memory_space<vmem>>, vector<1x1x18x8xbf16>,
    %c0_104 = arith.constant 0 : index
    %c15_105 = arith.constant 15 : index
    %c0_106 = arith.constant 0 : index
    %c0_107 = arith.constant 0 : index
    %86 = vector.load %arg8[%c0_104, %c15_105, %c0_106, %c0_107] : memref<1x18x18x8xbf16, #tpu.memory_space<vmem>>, vector<1x1x18x8xbf16>
    %87 = vector.shape_cast %86 : vector<1x1x18x8xbf16> to vector<1x18x8xbf16>
    %c0_108 = arith.constant 0 : index
    %c17_109 = arith.constant 17 : index
    %c0_110 = arith.constant 0 : index
    %c0_111 = arith.constant 0 : index
    %88 = vector.load %arg8[%c0_108, %c17_109, %c0_110, %c0_111] : memref<1x18x18x8xbf16, #tpu.memory_space<vmem>>, vector<1x1x18x8xbf16>
    %89 = vector.shape_cast %88 : vector<1x1x18x8xbf16> to vector<1x18x8xbf16>
    %90 = vector.shape_cast %87 : vector<1x18x8xbf16> to vector<1x1x18x8xbf16>
    tpu.vector_store %arg8[%c0_108, %c17_109, %c0_110, %c0_111], %90 {strides = array<i32>} : memref<1x18x18x8xbf16, #tpu.memory_space<vmem>>, vector<1x1x18x8xbf16>,
    %c0_112 = arith.constant 0 : index
    %c0_113 = arith.constant 0 : index
    %c0_114 = arith.constant 0 : index
    %c0_115 = arith.constant 0 : index
    %91 = vector.load %arg8[%c0_112, %c0_113, %c0_114, %c0_115] : memref<1x18x18x8xbf16, #tpu.memory_space<vmem>>, vector<1x16x16x8xbf16>
    %92 = vector.shape_cast %91 : vector<1x16x16x8xbf16> to vector<16x16x8xbf16>
    %93 = vector.shape_cast %92 : vector<16x16x8xbf16> to vector<256x8xbf16>
    %c0_116 = arith.constant 0 : index
    %c0_117 = arith.constant 0 : index
    %c1_118 = arith.constant 1 : index
    %c0_119 = arith.constant 0 : index
    %94 = vector.load %arg8[%c0_116, %c0_117, %c1_118, %c0_119] : memref<1x18x18x8xbf16, #tpu.memory_space<vmem>>, vector<1x16x16x8xbf16>
    %95 = vector.shape_cast %94 : vector<1x16x16x8xbf16> to vector<16x16x8xbf16>
    %96 = vector.shape_cast %95 : vector<16x16x8xbf16> to vector<256x8xbf16>
    %c0_120 = arith.constant 0 : index
    %c0_121 = arith.constant 0 : index
    %c2_122 = arith.constant 2 : index
    %c0_123 = arith.constant 0 : index
    %97 = vector.load %arg8[%c0_120, %c0_121, %c2_122, %c0_123] : memref<1x18x18x8xbf16, #tpu.memory_space<vmem>>, vector<1x16x16x8xbf16>
    %98 = vector.shape_cast %97 : vector<1x16x16x8xbf16> to vector<16x16x8xbf16>
    %99 = vector.shape_cast %98 : vector<16x16x8xbf16> to vector<256x8xbf16>
    %c0_124 = arith.constant 0 : index
    %c1_125 = arith.constant 1 : index
    %c0_126 = arith.constant 0 : index
    %c0_127 = arith.constant 0 : index
    %100 = vector.load %arg8[%c0_124, %c1_125, %c0_126, %c0_127] : memref<1x18x18x8xbf16, #tpu.memory_space<vmem>>, vector<1x16x16x8xbf16>
    %101 = vector.shape_cast %100 : vector<1x16x16x8xbf16> to vector<16x16x8xbf16>
    %102 = vector.shape_cast %101 : vector<16x16x8xbf16> to vector<256x8xbf16>
    %c0_128 = arith.constant 0 : index
    %c1_129 = arith.constant 1 : index
    %c1_130 = arith.constant 1 : index
    %c0_131 = arith.constant 0 : index
    %103 = vector.load %arg8[%c0_128, %c1_129, %c1_130, %c0_131] : memref<1x18x18x8xbf16, #tpu.memory_space<vmem>>, vector<1x16x16x8xbf16>
    %104 = vector.shape_cast %103 : vector<1x16x16x8xbf16> to vector<16x16x8xbf16>
    %105 = vector.shape_cast %104 : vector<16x16x8xbf16> to vector<256x8xbf16>
    %c0_132 = arith.constant 0 : index
    %c1_133 = arith.constant 1 : index
    %c2_134 = arith.constant 2 : index
    %c0_135 = arith.constant 0 : index
    %106 = vector.load %arg8[%c0_132, %c1_133, %c2_134, %c0_135] : memref<1x18x18x8xbf16, #tpu.memory_space<vmem>>, vector<1x16x16x8xbf16>
    %107 = vector.shape_cast %106 : vector<1x16x16x8xbf16> to vector<16x16x8xbf16>
    %108 = vector.shape_cast %107 : vector<16x16x8xbf16> to vector<256x8xbf16>
    %c0_136 = arith.constant 0 : index
    %c2_137 = arith.constant 2 : index
    %c0_138 = arith.constant 0 : index
    %c0_139 = arith.constant 0 : index
    %109 = vector.load %arg8[%c0_136, %c2_137, %c0_138, %c0_139] : memref<1x18x18x8xbf16, #tpu.memory_space<vmem>>, vector<1x16x16x8xbf16>
    %110 = vector.shape_cast %109 : vector<1x16x16x8xbf16> to vector<16x16x8xbf16>
    %111 = vector.shape_cast %110 : vector<16x16x8xbf16> to vector<256x8xbf16>
    %c0_140 = arith.constant 0 : index
    %c2_141 = arith.constant 2 : index
    %c1_142 = arith.constant 1 : index
    %c0_143 = arith.constant 0 : index
    %112 = vector.load %arg8[%c0_140, %c2_141, %c1_142, %c0_143] : memref<1x18x18x8xbf16, #tpu.memory_space<vmem>>, vector<1x16x16x8xbf16>
    %113 = vector.shape_cast %112 : vector<1x16x16x8xbf16> to vector<16x16x8xbf16>
    %114 = vector.shape_cast %113 : vector<16x16x8xbf16> to vector<256x8xbf16>
    %c0_144 = arith.constant 0 : index
    %c2_145 = arith.constant 2 : index
    %c2_146 = arith.constant 2 : index
    %c0_147 = arith.constant 0 : index
    %115 = vector.load %arg8[%c0_144, %c2_145, %c2_146, %c0_147] : memref<1x18x18x8xbf16, #tpu.memory_space<vmem>>, vector<1x16x16x8xbf16>
    %116 = vector.shape_cast %115 : vector<1x16x16x8xbf16> to vector<16x16x8xbf16>
    %117 = vector.shape_cast %116 : vector<16x16x8xbf16> to vector<256x8xbf16>
    %118 = tpu.concatenate %93, %96, %99, %102, %105, %108, %111, %114, %117 in 1 : vector<256x8xbf16>, vector<256x8xbf16>, vector<256x8xbf16>, vector<256x8xbf16>, vector<256x8xbf16>, vector<256x8xbf16>, vector<256x8xbf16>, vector<256x8xbf16>, vector<256x8xbf16> -> vector<256x72xbf16>
    %c0_148 = arith.constant 0 : index
    %c0_149 = arith.constant 0 : index
    %119 = vector.load %arg4[%c0_148, %c0_149] : memref<72x8xbf16, #tpu.memory_space<vmem>>, vector<72x8xbf16>
    %cst_150 = arith.constant dense<0.000000e+00> : vector<256x8xf32>
    %120 = tpu.matmul %118, %119, %cst_150 {dimension_numbers = #tpu.dot_dimension_numbers<[1], [0], [0], [1], [0, 0, 1, 1], [], []>} : vector<256x72xbf16>, vector<72x8xbf16>, vector<256x8xf32> -> vector<256x8xf32>
    %c0_151 = arith.constant 0 : index
    %c0_152 = arith.constant 0 : index
    %121 = vector.load %arg5[%c0_151, %c0_152] : memref<1x8xf32, #tpu.memory_space<vmem>>, vector<1x8xf32>
    %122 = vector.broadcast %121 : vector<1x8xf32> to vector<256x8xf32>
    %123 = arith.addf %120, %122 : vector<256x8xf32>
    %cst_153 = arith.constant 0.000000e+00 : f32
    %124 = vector.broadcast %cst_153 : f32 to vector<256x8xf32>
    %125 = arith.cmpf oge, %123, %124 : vector<256x8xf32>
    %cst_154 = arith.constant 0.00999999977 : f32
    %126 = vector.broadcast %cst_154 : f32 to vector<256x8xf32>
    %127 = arith.mulf %126, %123 : vector<256x8xf32>
    %128 = arith.select %125, %123, %127 : vector<256x8xi1>, vector<256x8xf32>
    %129 = tpu.transpose %128, [1, 0] : vector<256x8xf32> -> vector<8x256xf32>
    %c0_155 = arith.constant 0 : index
    %c0_156 = arith.constant 0 : index
    %c0_157 = arith.constant 0 : index
    %130 = vector.load %arg6[%c0_155, %c0_156, %c0_157] : memref<1x8x256xf32, #tpu.memory_space<vmem>>, vector<1x8x256xf32>
    %131 = vector.shape_cast %130 : vector<1x8x256xf32> to vector<8x256xf32>
    %132 = vector.shape_cast %129 : vector<8x256xf32> to vector<1x8x256xf32>
    tpu.vector_store %arg6[%c0_155, %c0_156, %c0_157], %132 {strides = array<i32>} : memref<1x8x256xf32, #tpu.memory_space<vmem>>, vector<1x8x256xf32>,
    return
  }
  func.func @transform_0(%arg0: i32) -> (i32, i32, i32) {
    %c0_i32 = arith.constant 0 : i32
    %c0_i32_0 = arith.constant 0 : i32
    %c0_i32_1 = arith.constant 0 : i32
    return %arg0, %c0_i32, %c0_i32_0 : i32, i32, i32
  }
  func.func @transform_1(%arg0: i32) -> (i32, i32) {
    %c0_i32 = arith.constant 0 : i32
    %c0_i32_0 = arith.constant 0 : i32
    %c0_i32_1 = arith.constant 0 : i32
    return %c0_i32, %c0_i32_0 : i32, i32
  }
  func.func @transform_2(%arg0: i32) -> (i32, i32) {
    %c0_i32 = arith.constant 0 : i32
    %c0_i32_0 = arith.constant 0 : i32
    %c0_i32_1 = arith.constant 0 : i32
    return %c0_i32, %c0_i32_0 : i32, i32
  }
  func.func @transform_3(%arg0: i32) -> (i32, i32) {
    %c0_i32 = arith.constant 0 : i32
    %c0_i32_0 = arith.constant 0 : i32
    %c0_i32_1 = arith.constant 0 : i32
    return %c0_i32, %c0_i32_0 : i32, i32
  }
  func.func @transform_4(%arg0: i32) -> (i32, i32) {
    %c0_i32 = arith.constant 0 : i32
    %c0_i32_0 = arith.constant 0 : i32
    %c0_i32_1 = arith.constant 0 : i32
    return %c0_i32, %c0_i32_0 : i32, i32
  }
  func.func @transform_5(%arg0: i32) -> (i32, i32, i32) {
    %c0_i32 = arith.constant 0 : i32
    %c0_i32_0 = arith.constant 0 : i32
    %c0_i32_1 = arith.constant 0 : i32
    return %arg0, %c0_i32, %c0_i32_0 : i32, i32, i32
  }
}

</mosaic_0001>

<llo_original>
// kernel: conv_block_forward.1
$region0: #{conv_block_forward.1}
  #allocation0 [shape = 'u32[]', space=smem, size = 0x4, offset = 0x4, fixed_abs, tag = 'smem constant byte address 0x4 - core index']
  #allocation1 [shape = 'u32[144,128]{1,0:T(1,128)}', space=vmem, size = 0x12000, scoped, tag = 'internal scratch']
  #allocation2 [shape = 'bf16[1,18,18,4]{3,2,1,0:T(8,128)(2,1)}', space=vmem, size = 0x1b000, scoped, tag = 'scratch operand']
  #allocation3 [shape = 'bf16[1,18,18,8]{3,2,1,0:T(8,128)(2,1)}', space=vmem, size = 0x1b000, scoped, tag = 'scratch operand']
  %s0 = inlined_call_operand.vmem [shape: f32[2,4,256], index: 0, kind: input, shape index: {}]
  %s1 = inlined_call_operand.vmem [shape: bf16[36,8], index: 1, kind: input, shape index: {}]
  %s2 = inlined_call_operand.vmem [shape: f32[1,8], index: 2, kind: input, shape index: {}]
  %s3 = inlined_call_operand.vmem [shape: bf16[72,8], index: 3, kind: input, shape index: {}]
  %s4 = inlined_call_operand.vmem [shape: f32[1,8], index: 4, kind: input, shape index: {}]
  %s5 = inlined_call_operand.vmem [shape: f32[2,8,256], index: 5, kind: output, shape index: {}]
  %s6 = sld [smem:[#allocation0]]
  $region53: #{conv_block_forward.1} parent=0
    _
  %s8 = ssub.s32 1, %s6
  %s9 = scalar_select 0, %s8, %s6
  loop: start=0, step=1, limit=4
  $region2: #{conv_block_forward.1} parent=0 // loop_pre_header
    _
  $region3: #{conv_block_forward.1} parent=0 // loop_header
    %s11 = sphi 0, %s15
    %p12 = scmp.ge.s32.totalorder %s11, 4
    %s21 = sphi 0, %s23
    %s24 = sphi 0, %s21
    %s25 = sphi 0, %s24
    %s41 = sphi 0, %s25
    %s45 = sphi 0, %s45
    %s47 = sphi 0, %s45
    %s48 = sphi 0, %s47
    %s62 = sphi 0, %s48
    %s66 = sphi 0, %s66
    %s68 = sphi 0, %s66
    %s69 = sphi 0, %s68
    %s83 = sphi 0, %s69
    %s87 = sphi 0, %s87
    %s89 = sphi 0, %s87
    %s90 = sphi 0, %s89
    %s104 = sphi 0, %s90
    %s108 = sphi 0, %s108
    %s110 = sphi 0, %s108
    %s111 = sphi 0, %s110
    %s125 = sphi 0, %s111
    %s131 = sphi 0, %s133
    %s134 = sphi 0, %s131
    %s135 = sphi 0, %s134
    %s151 = sphi 0, %s135
  $region4: #{conv_block_forward.1} parent=0 // loop_header_branch
    %14 = sbr.rel (%p12) target = $region8
  $region5: #{conv_block_forward.1} parent=0 // loop_body
    %s16 = ssub.s32 %s11, 1
    %s17 = ssub.s32 %s11, 2
    %s18 = sadd.s32 %s11, 1
    %s19 = ssub.s32 %s11, %s18
    %p20 = scmp.eq.s32.totalorder %s19, 0
    %s22 = sadd.s32 %s21, 1
    %s23 = scalar_select %p20, %s21, %s22
    %p26 = pneg %p20
    %p27 = scmp.eq.s32.totalorder %s11, 1
    %p28 = por %p26, %p27
    %p29 = scmp.ne.s32.totalorder %s21, %s24
    %p30 = scmp.eq.s32.totalorder %s11, 0
    %p31 = por %p29, %p30
    %p32 = scmp.ne.s32.totalorder %s21, %s24
    %p33 = scmp.eq.s32.totalorder %s16, 1
    %p34 = por %p32, %p33
    %p35 = scmp.ne.s32.totalorder %s24, %s25
    %p36 = scmp.eq.s32.totalorder %s16, 0
    %p37 = por %p35, %p36
    %p38 = scmp.ne.s32.totalorder %s24, %s25
    %p39 = scmp.eq.s32.totalorder %s17, 1
    %p40 = por %p38, %p39
    %p42 = scmp.ne.s32.totalorder %s25, %s41
    %p43 = scmp.eq.s32.totalorder %s17, 0
    %p44 = por %p42, %p43
    %s46 = sadd.s32 %s45, 1
    %p49 = scmp.eq.s32.totalorder %s11, 1
    %p50 = scmp.ne.s32.totalorder %s45, %s47
    %p51 = scmp.eq.s32.totalorder %s11, 0
    %p52 = por %p50, %p51
    %p53 = scmp.ne.s32.totalorder %s45, %s47
    %p54 = scmp.eq.s32.totalorder %s16, 1
    %p55 = por %p53, %p54
    %p56 = scmp.ne.s32.totalorder %s47, %s48
    %p57 = scmp.eq.s32.totalorder %s16, 0
    %p58 = por %p56, %p57
    %p59 = scmp.ne.s32.totalorder %s47, %s48
    %p60 = scmp.eq.s32.totalorder %s17, 1
    %p61 = por %p59, %p60
    %p63 = scmp.ne.s32.totalorder %s48, %s62
    %p64 = scmp.eq.s32.totalorder %s17, 0
    %p65 = por %p63, %p64
    %s67 = sadd.s32 %s66, 1
    %p70 = scmp.eq.s32.totalorder %s11, 1
    %p71 = scmp.ne.s32.totalorder %s66, %s68
    %p72 = scmp.eq.s32.totalorder %s11, 0
    %p73 = por %p71, %p72
    %p74 = scmp.ne.s32.totalorder %s66, %s68
    %p75 = scmp.eq.s32.totalorder %s16, 1
    %p76 = por %p74, %p75
    %p77 = scmp.ne.s32.totalorder %s68, %s69
    %p78 = scmp.eq.s32.totalorder %s16, 0
    %p79 = por %p77, %p78
    %p80 = scmp.ne.s32.totalorder %s68, %s69
    %p81 = scmp.eq.s32.totalorder %s17, 1
    %p82 = por %p80, %p81
    %p84 = scmp.ne.s32.totalorder %s69, %s83
    %p85 = scmp.eq.s32.totalorder %s17, 0
    %p86 = por %p84, %p85
    %s88 = sadd.s32 %s87, 1
    %p91 = scmp.eq.s32.totalorder %s11, 1
    %p92 = scmp.ne.s32.totalorder %s87, %s89
    %p93 = scmp.eq.s32.totalorder %s11, 0
    %p94 = por %p92, %p93
    %p95 = scmp.ne.s32.totalorder %s87, %s89
    %p96 = scmp.eq.s32.totalorder %s16, 1
    %p97 = por %p95, %p96
    %p98 = scmp.ne.s32.totalorder %s89, %s90
    %p99 = scmp.eq.s32.totalorder %s16, 0
    %p100 = por %p98, %p99
    %p101 = scmp.ne.s32.totalorder %s89, %s90
    %p102 = scmp.eq.s32.totalorder %s17, 1
    %p103 = por %p101, %p102
    %p105 = scmp.ne.s32.totalorder %s90, %s104
    %p106 = scmp.eq.s32.totalorder %s17, 0
    %p107 = por %p105, %p106
    %s109 = sadd.s32 %s108, 1
    %p112 = scmp.eq.s32.totalorder %s11, 1
    %p113 = scmp.ne.s32.totalorder %s108, %s110
    %p114 = scmp.eq.s32.totalorder %s11, 0
    %p115 = por %p113, %p114
    %p116 = scmp.ne.s32.totalorder %s108, %s110
    %p117 = scmp.eq.s32.totalorder %s16, 1
    %p118 = por %p116, %p117
    %p119 = scmp.ne.s32.totalorder %s110, %s111
    %p120 = scmp.eq.s32.totalorder %s16, 0
    %p121 = por %p119, %p120
    %p122 = scmp.ne.s32.totalorder %s110, %s111
    %p123 = scmp.eq.s32.totalorder %s17, 1
    %p124 = por %p122, %p123
    %p126 = scmp.ne.s32.totalorder %s111, %s125
    %p127 = scmp.eq.s32.totalorder %s17, 0
    %p128 = por %p126, %p127
    %s129 = ssub.s32 %s11, %s18
    %p130 = scmp.eq.s32.totalorder %s129, 0
    %s132 = sadd.s32 %s131, 1
    %s133 = scalar_select %p130, %s131, %s132
    %p136 = pneg %p130
    %p137 = scmp.eq.s32.totalorder %s11, 1
    %p138 = por %p136, %p137
    %p139 = scmp.ne.s32.totalorder %s131, %s134
    %p140 = scmp.eq.s32.totalorder %s11, 0
    %p141 = por %p139, %p140
    %p142 = scmp.ne.s32.totalorder %s131, %s134
    %p143 = scmp.eq.s32.totalorder %s16, 1
    %p144 = por %p142, %p143
    %p145 = scmp.ne.s32.totalorder %s134, %s135
    %p146 = scmp.eq.s32.totalorder %s16, 0
    %p147 = por %p145, %p146
    %p148 = scmp.ne.s32.totalorder %s134, %s135
    %p149 = scmp.eq.s32.totalorder %s17, 1
    %p150 = por %p148, %p149
    %p152 = scmp.ne.s32.totalorder %s135, %s151
    %p153 = scmp.eq.s32.totalorder %s17, 0
    %p154 = por %p152, %p153
    %p155 = scmp.le.s32.totalorder 1, %s11
    %p156 = scmp.lt.s32.totalorder %s11, 3
    %p157 = pnand %p155, %p156
    %p158 = pneg %p157
    // Predicated region
    $region9: #{conv_block_forward.1} parent=5 // pred_check
      _
    $region10: #{conv_block_forward.1} parent=5 // pred_check_branch
      %160 = sbr.rel (%p157) target = $region12
    $region11: #{conv_block_forward.1} parent=5 // pred_region
      %s161 = ssub.s32 %s11, 1
      // Predicated region
      $region13: #{conv_block_forward.1} parent=11 // pred_check
        %p162 = pneg %p58
      $region14: #{conv_block_forward.1} parent=11 // pred_check_branch
        %164 = sbr.rel (%p162) target = $region16
      $region15: #{conv_block_forward.1} parent=11 // pred_region
        _
      $region16: #{conv_block_forward.1} parent=11 // pred_fallthru
        _
      // Predicated region
      $region17: #{conv_block_forward.1} parent=11 // pred_check
        %p165 = pneg %p79
      $region18: #{conv_block_forward.1} parent=11 // pred_check_branch
        %167 = sbr.rel (%p165) target = $region20
      $region19: #{conv_block_forward.1} parent=11 // pred_region
        _
      $region20: #{conv_block_forward.1} parent=11 // pred_fallthru
        _
      // Predicated region
      $region21: #{conv_block_forward.1} parent=11 // pred_check
        %p168 = pneg %p100
      $region22: #{conv_block_forward.1} parent=11 // pred_check_branch
        %170 = sbr.rel (%p168) target = $region24
      $region23: #{conv_block_forward.1} parent=11 // pred_region
        _
      $region24: #{conv_block_forward.1} parent=11 // pred_fallthru
        _
      // Predicated region
      $region25: #{conv_block_forward.1} parent=11 // pred_check
        %p171 = pneg %p121
      $region26: #{conv_block_forward.1} parent=11 // pred_check_branch
        %173 = sbr.rel (%p171) target = $region28
      $region27: #{conv_block_forward.1} parent=11 // pred_region
        _
      $region28: #{conv_block_forward.1} parent=11 // pred_fallthru
        _
    $region12: #{conv_block_forward.1} parent=5 // pred_fallthru
      _
    %p174 = scmp.lt.s32.totalorder %s11, 2
    // Predicated region
    $region29: #{conv_block_forward.1} parent=5 // pred_check
      %p175 = pneg %p174
    $region30: #{conv_block_forward.1} parent=5 // pred_check_branch
      %177 = sbr.rel (%p175) target = $region32
    $region31: #{conv_block_forward.1} parent=5 // pred_region
      // Predicated region
      $region33: #{conv_block_forward.1} parent=31 // pred_check
        %p178 = pneg %p31
      $region34: #{conv_block_forward.1} parent=31 // pred_check_branch
        %180 = sbr.rel (%p178) target = $region36
      $region35: #{conv_block_forward.1} parent=31 // pred_region
        %p181 = scmp.lt.s32.totalorder %s11, 1
        %s182 = scalar_select %p181, %s11, 1
        %s183 = smul.addr %s182, 2
        %s184 = smul.addr %s183, 4
        %s185 = scalar_lea.vmem %s0, %s184
      $region36: #{conv_block_forward.1} parent=31 // pred_fallthru
        _
    $region32: #{conv_block_forward.1} parent=5 // pred_fallthru
      _
    %p186 = scmp.le.s32.totalorder 1, %s11
    %p187 = scmp.lt.s32.totalorder %s11, 3
    %p188 = pnand %p186, %p187
    %p189 = pneg %p188
    // Predicated region
    $region37: #{conv_block_forward.1} parent=5 // pred_check
      _
    $region38: #{conv_block_forward.1} parent=5 // pred_check_branch
      %191 = sbr.rel (%p188) target = $region40
    $region39: #{conv_block_forward.1} parent=5 // pred_region
      %s192 = ssub.s32 %s11, 1
      %p193 = scmp.lt.s32.totalorder %s16, 1
      %s194 = scalar_select %p193, %s16, 1
      %s195 = smul.addr %s194, 2
      %s196 = smul.addr %s195, 4
      %s197 = scalar_lea.vmem %s0, %s196
      %p198 = pneg %p37
      %p199 = pneg %p34
      %p200 = pneg %p58
      %p201 = pneg %p55
      %p202 = pneg %p79
      %p203 = pneg %p76
      %p204 = pneg %p100
      %p205 = pneg %p97
      %p206 = pneg %p121
      %p207 = pneg %p118
      %p208 = pneg %p147
      %p209 = pneg %p144
      %p210 = scmp.lt.s32.totalorder %s16, 1
      %s211 = scalar_select %p210, %s16, 1
      %s212 = smul.addr %s211, 2
      %s213 = smul.addr %s212, 8
      %s214 = scalar_lea.vmem %s5, %s213
      %p215 = scmp.lt.s32.totalorder %s16, 1
      %s216 = scalar_select %p215, %s16, 1
      %s217 = smul.addr %s216, 2
      %s218 = smul.addr %s217, 4
      %s219 = scalar_lea.vmem %s0, %s218
      %p220 = scmp.lt.s32.totalorder %s16, 1
      %s221 = scalar_select %p220, %s16, 1
      %s222 = smul.addr %s221, 2
      %s223 = smul.addr %s222, 8
      %s224 = scalar_lea.vmem %s5, %s223
      %v226 = vld [vmem:[%s219] sm:$0xff]
      %v228 = vcombine.high %v226, %v226
      %230 = vxpose.xlu0.b32.start [1/16] %v226, 128
      %231 = vxpose.xlu0.b32.cont [2/16] 0.0, 128
      %232 = vxpose.xlu0.b32.cont [3/16] 0.0, 128
      %233 = vxpose.xlu0.b32.cont [4/16] 0.0, 128
      %234 = vxpose.xlu0.b32.cont [5/16] 0.0, 128
      %235 = vxpose.xlu0.b32.cont [6/16] 0.0, 128
      %236 = vxpose.xlu0.b32.cont [7/16] 0.0, 128
      %237 = vxpose.xlu0.b32.cont [8/16] 0.0, 128
      %238 = vxpose.xlu0.b32.cont [9/16] 0.0, 128
      %239 = vxpose.xlu0.b32.cont [10/16] 0.0, 128
      %240 = vxpose.xlu0.b32.cont [11/16] 0.0, 128
      %241 = vxpose.xlu0.b32.cont [12/16] 0.0, 128
      %242 = vxpose.xlu0.b32.cont [13/16] 0.0, 128
      %243 = vxpose.xlu0.b32.cont [14/16] 0.0, 128
      %244 = vxpose.xlu0.b32.cont [15/16] 0.0, 128
      %245 = vxpose.xlu0.b32.end [16/16] 0.0, 128
      %v246 = vpop.trf.xlu0
      %v247 = vpop.trf.xlu0
      %v248 = vpop.trf.xlu0
      %v249 = vpop.trf.xlu0
      %v250 = vpop.trf.xlu0
      %v251 = vpop.trf.xlu0
      %v252 = vpop.trf.xlu0
      %v253 = vpop.trf.xlu0
      %v254 = vpop.trf.xlu0
      %v255 = vpop.trf.xlu0
      %v256 = vpop.trf.xlu0
      %v257 = vpop.trf.xlu0
      %v258 = vpop.trf.xlu0
      %v259 = vpop.trf.xlu0
      %v260 = vpop.trf.xlu0
      %v261 = vpop.trf.xlu0
      %262 = vxpose.xlu0.b32.start [1/16] %v228, 128
      %263 = vxpose.xlu0.b32.cont [2/16] 0.0, 128
      %264 = vxpose.xlu0.b32.cont [3/16] 0.0, 128
      %265 = vxpose.xlu0.b32.cont [4/16] 0.0, 128
      %266 = vxpose.xlu0.b32.cont [5/16] 0.0, 128
      %267 = vxpose.xlu0.b32.cont [6/16] 0.0, 128
      %268 = vxpose.xlu0.b32.cont [7/16] 0.0, 128
      %269 = vxpose.xlu0.b32.cont [8/16] 0.0, 128
      %270 = vxpose.xlu0.b32.cont [9/16] 0.0, 128
      %271 = vxpose.xlu0.b32.cont [10/16] 0.0, 128
      %272 = vxpose.xlu0.b32.cont [11/16] 0.0, 128
      %273 = vxpose.xlu0.b32.cont [12/16] 0.0, 128
      %274 = vxpose.xlu0.b32.cont [13/16] 0.0, 128
      %275 = vxpose.xlu0.b32.cont [14/16] 0.0, 128
      %276 = vxpose.xlu0.b32.cont [15/16] 0.0, 128
      %277 = vxpose.xlu0.b32.end [16/16] 0.0, 128
      %v278 = vpop.trf.xlu0
      %v279 = vpop.trf.xlu0
      %v280 = vpop.trf.xlu0
      %v281 = vpop.trf.xlu0
      %v282 = vpop.trf.xlu0
      %v283 = vpop.trf.xlu0
      %v284 = vpop.trf.xlu0
      %v285 = vpop.trf.xlu0
      %v286 = vpop.trf.xlu0
      %v287 = vpop.trf.xlu0
      %v288 = vpop.trf.xlu0
      %v289 = vpop.trf.xlu0
      %v290 = vpop.trf.xlu0
      %v291 = vpop.trf.xlu0
      %v292 = vpop.trf.xlu0
      %v293 = vpop.trf.xlu0
      %v294 = vpack.c.bf16 %v247, %v246
      %v295 = vpack.c.bf16 %v249, %v248
      %v296 = vpack.c.bf16 %v251, %v250
      %v297 = vpack.c.bf16 %v253, %v252
      %v298 = vpack.c.bf16 %v255, %v254
      %v299 = vpack.c.bf16 %v257, %v256
      %v300 = vpack.c.bf16 %v259, %v258
      %v301 = vpack.c.bf16 %v261, %v260
      %v302 = vpack.c.bf16 %v279, %v278
      %v303 = vpack.c.bf16 %v281, %v280
      %v304 = vpack.c.bf16 %v283, %v282
      %v305 = vpack.c.bf16 %v285, %v284
      %v306 = vpack.c.bf16 %v287, %v286
      %v307 = vpack.c.bf16 %v289, %v288
      %v308 = vpack.c.bf16 %v291, %v290
      %v309 = vpack.c.bf16 %v293, %v292
      %v326 = vunpack.c.l.b16 %v294
      %v327 = vunpack.c.h.b16 %v294
      %v328 = vunpack.c.l.b16 %v295
      %v329 = vunpack.c.h.b16 %v295
      %v330 = vunpack.c.l.b16 %v296
      %v331 = vunpack.c.h.b16 %v296
      %v332 = vunpack.c.l.b16 %v297
      %v333 = vunpack.c.h.b16 %v297
      %v334 = vunpack.c.l.b16 %v298
      %v335 = vunpack.c.h.b16 %v298
      %v336 = vunpack.c.l.b16 %v299
      %v337 = vunpack.c.h.b16 %v299
      %v338 = vunpack.c.l.b16 %v300
      %v339 = vunpack.c.h.b16 %v300
      %v340 = vunpack.c.l.b16 %v301
      %v341 = vunpack.c.h.b16 %v301
      %v342 = vunpack.c.l.b16 %v302
      %v343 = vunpack.c.h.b16 %v302
      %v344 = vunpack.c.l.b16 %v303
      %v345 = vunpack.c.h.b16 %v303
      %v346 = vunpack.c.l.b16 %v304
      %v347 = vunpack.c.h.b16 %v304
      %v348 = vunpack.c.l.b16 %v305
      %v349 = vunpack.c.h.b16 %v305
      %v350 = vunpack.c.l.b16 %v306
      %v351 = vunpack.c.h.b16 %v306
      %v352 = vunpack.c.l.b16 %v307
      %v353 = vunpack.c.h.b16 %v307
      %v354 = vunpack.c.l.b16 %v308
      %v355 = vunpack.c.h.b16 %v308
      %v356 = vunpack.c.l.b16 %v309
      %v357 = vunpack.c.h.b16 %v309
      %v358 = vpack.c.b16 %v326, %v326
      %v359 = vpack.c.b16 %v327, %v327
      %v360 = vpack.c.b16 %v328, %v328
      %v361 = vpack.c.b16 %v329, %v329
      %v362 = vpack.c.b16 %v330, %v330
      %v363 = vpack.c.b16 %v331, %v331
      %v364 = vpack.c.b16 %v332, %v332
      %v365 = vpack.c.b16 %v333, %v333
      %v366 = vpack.c.b16 %v334, %v334
      %v367 = vpack.c.b16 %v335, %v335
      %v368 = vpack.c.b16 %v336, %v336
      %v369 = vpack.c.b16 %v337, %v337
      %v370 = vpack.c.b16 %v338, %v338
      %v371 = vpack.c.b16 %v339, %v339
      %v372 = vpack.c.b16 %v340, %v340
      %v373 = vpack.c.b16 %v341, %v341
      %v374 = vpack.c.b16 %v342, %v342
      %v375 = vpack.c.b16 %v343, %v343
      %v376 = vpack.c.b16 %v344, %v344
      %v377 = vpack.c.b16 %v345, %v345
      %v378 = vpack.c.b16 %v346, %v346
      %v379 = vpack.c.b16 %v347, %v347
      %v380 = vpack.c.b16 %v348, %v348
      %v381 = vpack.c.b16 %v349, %v349
      %v382 = vpack.c.b16 %v350, %v350
      %v383 = vpack.c.b16 %v351, %v351
      %v384 = vpack.c.b16 %v352, %v352
      %v385 = vpack.c.b16 %v353, %v353
      %v386 = vpack.c.b16 %v354, %v354
      %v387 = vpack.c.b16 %v355, %v355
      %v388 = vpack.c.b16 %v356, %v356
      %v389 = vpack.c.b16 %v357, %v357
      %vm390 = vsmask.f32 256
      %vm391 = vsmask.f32 4368
      %vm392 = vmor %vm390, %vm391
      %v394 = vshrl.u32 %v358, 16
      %v396 = vrot.slane %v394, 7
      %v397 = vshll.u32 %v358, 16
      %v399 = vor.u32 %v396, %v397
      %v400 = vrot.slane %v396, 4
      %v402 = vshrl.u32 %v359, 16
      %v404 = vrot.slane %v402, 7
      %v405 = vshll.u32 %v359, 16
      %v407 = vor.u32 %v404, %v405
      %v408 = vsel %vm392, %v400, %v407
      %v409 = vrot.slane %v404, 4
      %v411 = vshrl.u32 %v360, 16
      %v413 = vrot.slane %v411, 7
      %v414 = vshll.u32 %v360, 16
      %v416 = vor.u32 %v413, %v414
      %v417 = vrot.slane %v413, 4
      %v419 = vshrl.u32 %v361, 16
      %v421 = vrot.slane %v419, 7
      %v422 = vshll.u32 %v361, 16
      %v424 = vor.u32 %v421, %v422
      %v425 = vsel %vm392, %v417, %v424
      %v426 = vrot.slane %v421, 4
      %v428 = vshrl.u32 %v362, 16
      %v430 = vrot.slane %v428, 7
      %v431 = vshll.u32 %v362, 16
      %v433 = vor.u32 %v430, %v431
      %v434 = vrot.slane %v430, 4
      %v436 = vshrl.u32 %v363, 16
      %v438 = vrot.slane %v436, 7
      %v439 = vshll.u32 %v363, 16
      %v441 = vor.u32 %v438, %v439
      %v442 = vsel %vm392, %v434, %v441
      %v443 = vrot.slane %v438, 4
      %v445 = vshrl.u32 %v364, 16
      %v447 = vrot.slane %v445, 7
      %v448 = vshll.u32 %v364, 16
      %v450 = vor.u32 %v447, %v448
      %v451 = vrot.slane %v447, 4
      %v453 = vshrl.u32 %v365, 16
      %v455 = vrot.slane %v453, 7
      %v456 = vshll.u32 %v365, 16
      %v458 = vor.u32 %v455, %v456
      %v459 = vsel %vm392, %v451, %v458
      %v460 = vrot.slane %v455, 4
      %v462 = vshrl.u32 %v366, 16
      %v464 = vrot.slane %v462, 7
      %v465 = vshll.u32 %v366, 16
      %v467 = vor.u32 %v464, %v465
      %v468 = vrot.slane %v464, 4
      %v470 = vshrl.u32 %v367, 16
      %v472 = vrot.slane %v470, 7
      %v473 = vshll.u32 %v367, 16
      %v475 = vor.u32 %v472, %v473
      %v476 = vsel %vm392, %v468, %v475
      %v477 = vrot.slane %v472, 4
      %v479 = vshrl.u32 %v368, 16
      %v481 = vrot.slane %v479, 7
      %v482 = vshll.u32 %v368, 16
      %v484 = vor.u32 %v481, %v482
      %v485 = vrot.slane %v481, 4
      %v487 = vshrl.u32 %v369, 16
      %v489 = vrot.slane %v487, 7
      %v490 = vshll.u32 %v369, 16
      %v492 = vor.u32 %v489, %v490
      %v493 = vsel %vm392, %v485, %v492
      %v494 = vrot.slane %v489, 4
      %v496 = vshrl.u32 %v370, 16
      %v498 = vrot.slane %v496, 7
      %v499 = vshll.u32 %v370, 16
      %v501 = vor.u32 %v498, %v499
      %v502 = vrot.slane %v498, 4
      %v504 = vshrl.u32 %v371, 16
      %v506 = vrot.slane %v504, 7
      %v507 = vshll.u32 %v371, 16
      %v509 = vor.u32 %v506, %v507
      %v510 = vsel %vm392, %v502, %v509
      %v511 = vrot.slane %v506, 4
      %v513 = vshrl.u32 %v372, 16
      %v515 = vrot.slane %v513, 7
      %v516 = vshll.u32 %v372, 16
      %v518 = vor.u32 %v515, %v516
      %v519 = vrot.slane %v515, 4
      %v521 = vshrl.u32 %v373, 16
      %v523 = vrot.slane %v521, 7
      %v524 = vshll.u32 %v373, 16
      %v526 = vor.u32 %v523, %v524
      %v527 = vsel %vm392, %v519, %v526
      %v528 = vrot.slane %v523, 4
      %v530 = vshrl.u32 %v374, 16
      %v532 = vrot.slane %v530, 7
      %v533 = vshll.u32 %v374, 16
      %v535 = vor.u32 %v532, %v533
      %v536 = vrot.slane %v532, 4
      %v538 = vshrl.u32 %v375, 16
      %v540 = vrot.slane %v538, 7
      %v541 = vshll.u32 %v375, 16
      %v543 = vor.u32 %v540, %v541
      %v544 = vsel %vm392, %v536, %v543
      %v545 = vrot.slane %v540, 4
      %v547 = vshrl.u32 %v376, 16
      %v549 = vrot.slane %v547, 7
      %v550 = vshll.u32 %v376, 16
      %v552 = vor.u32 %v549, %v550
      %v553 = vrot.slane %v549, 4
      %v555 = vshrl.u32 %v377, 16
      %v557 = vrot.slane %v555, 7
      %v558 = vshll.u32 %v377, 16
      %v560 = vor.u32 %v557, %v558
      %v561 = vsel %vm392, %v553, %v560
      %v562 = vrot.slane %v557, 4
      %v564 = vshrl.u32 %v378, 16
      %v566 = vrot.slane %v564, 7
      %v567 = vshll.u32 %v378, 16
      %v569 = vor.u32 %v566, %v567
      %v570 = vrot.slane %v566, 4
      %v572 = vshrl.u32 %v379, 16
      %v574 = vrot.slane %v572, 7
      %v575 = vshll.u32 %v379, 16
      %v577 = vor.u32 %v574, %v575
      %v578 = vsel %vm392, %v570, %v577
      %v579 = vrot.slane %v574, 4
      %v581 = vshrl.u32 %v380, 16
      %v583 = vrot.slane %v581, 7
      %v584 = vshll.u32 %v380, 16
      %v586 = vor.u32 %v583, %v584
      %v587 = vrot.slane %v583, 4
      %v589 = vshrl.u32 %v381, 16
      %v591 = vrot.slane %v589, 7
      %v592 = vshll.u32 %v381, 16
      %v594 = vor.u32 %v591, %v592
      %v595 = vsel %vm392, %v587, %v594
      %v596 = vrot.slane %v591, 4
      %v598 = vshrl.u32 %v382, 16
      %v600 = vrot.slane %v598, 7
      %v601 = vshll.u32 %v382, 16
      %v603 = vor.u32 %v600, %v601
      %v604 = vrot.slane %v600, 4
      %v606 = vshrl.u32 %v383, 16
      %v608 = vrot.slane %v606, 7
      %v609 = vshll.u32 %v383, 16
      %v611 = vor.u32 %v608, %v609
      %v612 = vsel %vm392, %v604, %v611
      %v613 = vrot.slane %v608, 4
      %v615 = vshrl.u32 %v384, 16
      %v617 = vrot.slane %v615, 7
      %v618 = vshll.u32 %v384, 16
      %v620 = vor.u32 %v617, %v618
      %v621 = vrot.slane %v617, 4
      %v623 = vshrl.u32 %v385, 16
      %v625 = vrot.slane %v623, 7
      %v626 = vshll.u32 %v385, 16
      %v628 = vor.u32 %v625, %v626
      %v629 = vsel %vm392, %v621, %v628
      %v630 = vrot.slane %v625, 4
      %v632 = vshrl.u32 %v386, 16
      %v634 = vrot.slane %v632, 7
      %v635 = vshll.u32 %v386, 16
      %v637 = vor.u32 %v634, %v635
      %v638 = vrot.slane %v634, 4
      %v640 = vshrl.u32 %v387, 16
      %v642 = vrot.slane %v640, 7
      %v643 = vshll.u32 %v387, 16
      %v645 = vor.u32 %v642, %v643
      %v646 = vsel %vm392, %v638, %v645
      %v647 = vrot.slane %v642, 4
      %v649 = vshrl.u32 %v388, 16
      %v651 = vrot.slane %v649, 7
      %v652 = vshll.u32 %v388, 16
      %v654 = vor.u32 %v651, %v652
      %v655 = vrot.slane %v651, 4
      %v657 = vshrl.u32 %v389, 16
      %v659 = vrot.slane %v657, 7
      %v660 = vshll.u32 %v389, 16
      %v662 = vor.u32 %v659, %v660
      %v663 = vsel %vm392, %v655, %v662
      %v664 = vrot.slane %v659, 4
      %s713 = scalar_lea.vmem [#allocation2], 12
      %vm714 = vcmask 27648
      %vm715 = vsmask.f32 7938
      %vm716 = vmand %vm714, %vm715
      %v717 = vld [vmem:[%s713] sm:$0xf]
      %v718 = vsel %vm716, %v399, %v717
      %719 = vst [vmem:[%s713] sm:$0xf] %v718
      %vm720 = vcmask 27648
      %721 = vst.msk [vmem:[%s713 + $0x4] sm:$0xf] %vm720, %v408
      %vm722 = vcmask 24576
      %vm723 = vmand %vm722, %vm390
      %v724 = vld [vmem:[%s713 + $0x8] sm:$0x1]
      %v725 = vsel %vm723, %v409, %v724
      %726 = vst [vmem:[%s713 + $0x8] sm:$0x1] %v725
      %v727 = vld [vmem:[%s713 + $0xc] sm:$0xf]
      %v728 = vsel %vm716, %v416, %v727
      %729 = vst [vmem:[%s713 + $0xc] sm:$0xf] %v728
      %730 = vst.msk [vmem:[%s713 + $0x10] sm:$0xf] %vm720, %v425
      %v731 = vld [vmem:[%s713 + $0x14] sm:$0x1]
      %v732 = vsel %vm723, %v426, %v731
      %733 = vst [vmem:[%s713 + $0x14] sm:$0x1] %v732
      %v734 = vld [vmem:[%s713 + $0x18] sm:$0xf]
      %v735 = vsel %vm716, %v433, %v734
      %736 = vst [vmem:[%s713 + $0x18] sm:$0xf] %v735
      %737 = vst.msk [vmem:[%s713 + $0x1c] sm:$0xf] %vm720, %v442
      %v738 = vld [vmem:[%s713 + $0x20] sm:$0x1]
      %v739 = vsel %vm723, %v443, %v738
      %740 = vst [vmem:[%s713 + $0x20] sm:$0x1] %v739
      %v741 = vld [vmem:[%s713 + $0x24] sm:$0xf]
      %v742 = vsel %vm716, %v450, %v741
      %743 = vst [vmem:[%s713 + $0x24] sm:$0xf] %v742
      %744 = vst.msk [vmem:[%s713 + $0x28] sm:$0xf] %vm720, %v459
      %v745 = vld [vmem:[%s713 + $0x2c] sm:$0x1]
      %v746 = vsel %vm723, %v460, %v745
      %747 = vst [vmem:[%s713 + $0x2c] sm:$0x1] %v746
      %v748 = vld [vmem:[%s713 + $0x30] sm:$0xf]
      %v749 = vsel %vm716, %v467, %v748
      %750 = vst [vmem:[%s713 + $0x30] sm:$0xf] %v749
      %751 = vst.msk [vmem:[%s713 + $0x34] sm:$0xf] %vm720, %v476
      %v752 = vld [vmem:[%s713 + $0x38] sm:$0x1]
      %v753 = vsel %vm723, %v477, %v752
      %754 = vst [vmem:[%s713 + $0x38] sm:$0x1] %v753
      %v755 = vld [vmem:[%s713 + $0x3c] sm:$0xf]
      %v756 = vsel %vm716, %v484, %v755
      %757 = vst [vmem:[%s713 + $0x3c] sm:$0xf] %v756
      %758 = vst.msk [vmem:[%s713 + $0x40] sm:$0xf] %vm720, %v493
      %v759 = vld [vmem:[%s713 + $0x44] sm:$0x1]
      %v760 = vsel %vm723, %v494, %v759
      %761 = vst [vmem:[%s713 + $0x44] sm:$0x1] %v760
      %v762 = vld [vmem:[%s713 + $0x48] sm:$0xf]
      %v763 = vsel %vm716, %v501, %v762
      %764 = vst [vmem:[%s713 + $0x48] sm:$0xf] %v763
      %765 = vst.msk [vmem:[%s713 + $0x4c] sm:$0xf] %vm720, %v510
      %v766 = vld [vmem:[%s713 + $0x50] sm:$0x1]
      %v767 = vsel %vm723, %v511, %v766
      %768 = vst [vmem:[%s713 + $0x50] sm:$0x1] %v767
      %v769 = vld [vmem:[%s713 + $0x54] sm:$0xf]
      %v770 = vsel %vm716, %v518, %v769
      %771 = vst [vmem:[%s713 + $0x54] sm:$0xf] %v770
      %772 = vst.msk [vmem:[%s713 + $0x58] sm:$0xf] %vm720, %v527
      %v773 = vld [vmem:[%s713 + $0x5c] sm:$0x1]
      %v774 = vsel %vm723, %v528, %v773
      %775 = vst [vmem:[%s713 + $0x5c] sm:$0x1] %v774
      %v776 = vld [vmem:[%s713 + $0x60] sm:$0xf]
      %v777 = vsel %vm716, %v535, %v776
      %778 = vst [vmem:[%s713 + $0x60] sm:$0xf] %v777
      %779 = vst.msk [vmem:[%s713 + $0x64] sm:$0xf] %vm720, %v544
      %v780 = vld [vmem:[%s713 + $0x68] sm:$0x1]
      %v781 = vsel %vm723, %v545, %v780
      %782 = vst [vmem:[%s713 + $0x68] sm:$0x1] %v781
      %v783 = vld [vmem:[%s713 + $0x6c] sm:$0xf]
      %v784 = vsel %vm716, %v552, %v783
      %785 = vst [vmem:[%s713 + $0x6c] sm:$0xf] %v784
      %786 = vst.msk [vmem:[%s713 + $0x70] sm:$0xf] %vm720, %v561
      %v787 = vld [vmem:[%s713 + $0x74] sm:$0x1]
      %v788 = vsel %vm723, %v562, %v787
      %789 = vst [vmem:[%s713 + $0x74] sm:$0x1] %v788
      %v790 = vld [vmem:[%s713 + $0x78] sm:$0xf]
      %v791 = vsel %vm716, %v569, %v790
      %792 = vst [vmem:[%s713 + $0x78] sm:$0xf] %v791
      %793 = vst.msk [vmem:[%s713 + $0x7c] sm:$0xf] %vm720, %v578
      %v794 = vld [vmem:[%s713 + $0x80] sm:$0x1]
      %v795 = vsel %vm723, %v579, %v794
      %796 = vst [vmem:[%s713 + $0x80] sm:$0x1] %v795
      %v797 = vld [vmem:[%s713 + $0x84] sm:$0xf]
      %v798 = vsel %vm716, %v586, %v797
      %799 = vst [vmem:[%s713 + $0x84] sm:$0xf] %v798
      %800 = vst.msk [vmem:[%s713 + $0x88] sm:$0xf] %vm720, %v595
      %v801 = vld [vmem:[%s713 + $0x8c] sm:$0x1]
      %v802 = vsel %vm723, %v596, %v801
      %803 = vst [vmem:[%s713 + $0x8c] sm:$0x1] %v802
      %v804 = vld [vmem:[%s713 + $0x90] sm:$0xf]
      %v805 = vsel %vm716, %v603, %v804
      %806 = vst [vmem:[%s713 + $0x90] sm:$0xf] %v805
      %807 = vst.msk [vmem:[%s713 + $0x94] sm:$0xf] %vm720, %v612
      %v808 = vld [vmem:[%s713 + $0x98] sm:$0x1]
      %v809 = vsel %vm723, %v613, %v808
      %810 = vst [vmem:[%s713 + $0x98] sm:$0x1] %v809
      %v811 = vld [vmem:[%s713 + $0x9c] sm:$0xf]
      %v812 = vsel %vm716, %v620, %v811
      %813 = vst [vmem:[%s713 + $0x9c] sm:$0xf] %v812
      %814 = vst.msk [vmem:[%s713 + $0xa0] sm:$0xf] %vm720, %v629
      %v815 = vld [vmem:[%s713 + $0xa4] sm:$0x1]
      %v816 = vsel %vm723, %v630, %v815
      %817 = vst [vmem:[%s713 + $0xa4] sm:$0x1] %v816
      %v818 = vld [vmem:[%s713 + $0xa8] sm:$0xf]
      %v819 = vsel %vm716, %v637, %v818
      %820 = vst [vmem:[%s713 + $0xa8] sm:$0xf] %v819
      %821 = vst.msk [vmem:[%s713 + $0xac] sm:$0xf] %vm720, %v646
      %v822 = vld [vmem:[%s713 + $0xb0] sm:$0x1]
      %v823 = vsel %vm723, %v647, %v822
      %824 = vst [vmem:[%s713 + $0xb0] sm:$0x1] %v823
      %v825 = vld [vmem:[%s713 + $0xb4] sm:$0xf]
      %v826 = vsel %vm716, %v654, %v825
      %827 = vst [vmem:[%s713 + $0xb4] sm:$0xf] %v826
      %828 = vst.msk [vmem:[%s713 + $0xb8] sm:$0xf] %vm720, %v663
      %v829 = vld [vmem:[%s713 + $0xbc] sm:$0x1]
      %v830 = vsel %vm723, %v664, %v829
      %831 = vst [vmem:[%s713 + $0xbc] sm:$0x1] %v830
      %v832 = vld [vmem:[%s713] sm:$0x2]
      %v833 = vld [vmem:[%s713 + $0xc] sm:$0x2]
      %v834 = vld [vmem:[%s713 + $0x18] sm:$0x2]
      %v835 = vld [vmem:[%s713 + $0x24] sm:$0x2]
      %v836 = vld [vmem:[%s713 + $0x30] sm:$0x2]
      %v837 = vld [vmem:[%s713 + $0x3c] sm:$0x2]
      %v838 = vld [vmem:[%s713 + $0x48] sm:$0x2]
      %v839 = vld [vmem:[%s713 + $0x54] sm:$0x2]
      %v840 = vld [vmem:[%s713 + $0x60] sm:$0x2]
      %v841 = vld [vmem:[%s713 + $0x6c] sm:$0x2]
      %v842 = vld [vmem:[%s713 + $0x78] sm:$0x2]
      %v843 = vld [vmem:[%s713 + $0x84] sm:$0x2]
      %v844 = vld [vmem:[%s713 + $0x90] sm:$0x2]
      %v845 = vld [vmem:[%s713 + $0x9c] sm:$0x2]
      %v846 = vld [vmem:[%s713 + $0xa8] sm:$0x2]
      %v847 = vld [vmem:[%s713 + $0xb4] sm:$0x2]
      %v864 = vrot.slane %v832, 5
      %v865 = vrot.slane %v864, 4
      %v866 = vrot.slane %v833, 5
      %v867 = vrot.slane %v866, 4
      %v868 = vrot.slane %v834, 5
      %v869 = vrot.slane %v868, 4
      %v870 = vrot.slane %v835, 5
      %v871 = vrot.slane %v870, 4
      %v872 = vrot.slane %v836, 5
      %v873 = vrot.slane %v872, 4
      %v874 = vrot.slane %v837, 5
      %v875 = vrot.slane %v874, 4
      %v876 = vrot.slane %v838, 5
      %v877 = vrot.slane %v876, 4
      %v878 = vrot.slane %v839, 5
      %v879 = vrot.slane %v878, 4
      %v880 = vrot.slane %v840, 5
      %v881 = vrot.slane %v880, 4
      %v882 = vrot.slane %v841, 5
      %v883 = vrot.slane %v882, 4
      %v884 = vrot.slane %v842, 5
      %v885 = vrot.slane %v884, 4
      %v886 = vrot.slane %v843, 5
      %v887 = vrot.slane %v886, 4
      %v888 = vrot.slane %v844, 5
      %v889 = vrot.slane %v888, 4
      %v890 = vrot.slane %v845, 5
      %v891 = vrot.slane %v890, 4
      %v892 = vrot.slane %v846, 5
      %v893 = vrot.slane %v892, 4
      %v894 = vrot.slane %v847, 5
      %v895 = vrot.slane %v894, 4
      %v912 = vld [vmem:[%s713] sm:$0x1]
      %v913 = vsel %vm723, %v865, %v912
      %914 = vst [vmem:[%s713] sm:$0x1] %v913
      %v915 = vld [vmem:[%s713 + $0xc] sm:$0x1]
      %v916 = vsel %vm723, %v867, %v915
      %917 = vst [vmem:[%s713 + $0xc] sm:$0x1] %v916
      %v918 = vld [vmem:[%s713 + $0x18] sm:$0x1]
      %v919 = vsel %vm723, %v869, %v918
      %920 = vst [vmem:[%s713 + $0x18] sm:$0x1] %v919
      %v921 = vld [vmem:[%s713 + $0x24] sm:$0x1]
      %v922 = vsel %vm723, %v871, %v921
      %923 = vst [vmem:[%s713 + $0x24] sm:$0x1] %v922
      %v924 = vld [vmem:[%s713 + $0x30] sm:$0x1]
      %v925 = vsel %vm723, %v873, %v924
      %926 = vst [vmem:[%s713 + $0x30] sm:$0x1] %v925
      %v927 = vld [vmem:[%s713 + $0x3c] sm:$0x1]
      %v928 = vsel %vm723, %v875, %v927
      %929 = vst [vmem:[%s713 + $0x3c] sm:$0x1] %v928
      %v930 = vld [vmem:[%s713 + $0x48] sm:$0x1]
      %v931 = vsel %vm723, %v877, %v930
      %932 = vst [vmem:[%s713 + $0x48] sm:$0x1] %v931
      %v933 = vld [vmem:[%s713 + $0x54] sm:$0x1]
      %v934 = vsel %vm723, %v879, %v933
      %935 = vst [vmem:[%s713 + $0x54] sm:$0x1] %v934
      %v936 = vld [vmem:[%s713 + $0x60] sm:$0x1]
      %v937 = vsel %vm723, %v881, %v936
      %938 = vst [vmem:[%s713 + $0x60] sm:$0x1] %v937
      %v939 = vld [vmem:[%s713 + $0x6c] sm:$0x1]
      %v940 = vsel %vm723, %v883, %v939
      %941 = vst [vmem:[%s713 + $0x6c] sm:$0x1] %v940
      %v942 = vld [vmem:[%s713 + $0x78] sm:$0x1]
      %v943 = vsel %vm723, %v885, %v942
      %944 = vst [vmem:[%s713 + $0x78] sm:$0x1] %v943
      %v945 = vld [vmem:[%s713 + $0x84] sm:$0x1]
      %v946 = vsel %vm723, %v887, %v945
      %947 = vst [vmem:[%s713 + $0x84] sm:$0x1] %v946
      %v948 = vld [vmem:[%s713 + $0x90] sm:$0x1]
      %v949 = vsel %vm723, %v889, %v948
      %950 = vst [vmem:[%s713 + $0x90] sm:$0x1] %v949
      %v951 = vld [vmem:[%s713 + $0x9c] sm:$0x1]
      %v952 = vsel %vm723, %v891, %v951
      %953 = vst [vmem:[%s713 + $0x9c] sm:$0x1] %v952
      %v954 = vld [vmem:[%s713 + $0xa8] sm:$0x1]
      %v955 = vsel %vm723, %v893, %v954
      %956 = vst [vmem:[%s713 + $0xa8] sm:$0x1] %v955
      %v957 = vld [vmem:[%s713 + $0xb4] sm:$0x1]
      %v958 = vsel %vm723, %v895, %v957
      %959 = vst [vmem:[%s713 + $0xb4] sm:$0x1] %v958
      %v960 = vld [vmem:[%s713 + $0x4] sm:$0x8]
      %v961 = vld [vmem:[%s713 + $0x10] sm:$0x8]
      %v962 = vld [vmem:[%s713 + $0x1c] sm:$0x8]
      %v963 = vld [vmem:[%s713 + $0x28] sm:$0x8]
      %v964 = vld [vmem:[%s713 + $0x34] sm:$0x8]
      %v965 = vld [vmem:[%s713 + $0x40] sm:$0x8]
      %v966 = vld [vmem:[%s713 + $0x4c] sm:$0x8]
      %v967 = vld [vmem:[%s713 + $0x58] sm:$0x8]
      %v968 = vld [vmem:[%s713 + $0x64] sm:$0x8]
      %v969 = vld [vmem:[%s713 + $0x70] sm:$0x8]
      %v970 = vld [vmem:[%s713 + $0x7c] sm:$0x8]
      %v971 = vld [vmem:[%s713 + $0x88] sm:$0x8]
      %v972 = vld [vmem:[%s713 + $0x94] sm:$0x8]
      %v973 = vld [vmem:[%s713 + $0xa0] sm:$0x8]
      %v974 = vld [vmem:[%s713 + $0xac] sm:$0x8]
      %v975 = vld [vmem:[%s713 + $0xb8] sm:$0x8]
      %v992 = vrot.slane %v960, 7
      %v993 = vrot.slane %v992, 4
      %v994 = vrot.slane %v961, 7
      %v995 = vrot.slane %v994, 4
      %v996 = vrot.slane %v962, 7
      %v997 = vrot.slane %v996, 4
      %v998 = vrot.slane %v963, 7
      %v999 = vrot.slane %v998, 4
      %v1000 = vrot.slane %v964, 7
      %v1001 = vrot.slane %v1000, 4
      %v1002 = vrot.slane %v965, 7
      %v1003 = vrot.slane %v1002, 4
      %v1004 = vrot.slane %v966, 7
      %v1005 = vrot.slane %v1004, 4
      %v1006 = vrot.slane %v967, 7
      %v1007 = vrot.slane %v1006, 4
      %v1008 = vrot.slane %v968, 7
      %v1009 = vrot.slane %v1008, 4
      %v1010 = vrot.slane %v969, 7
      %v1011 = vrot.slane %v1010, 4
      %v1012 = vrot.slane %v970, 7
      %v1013 = vrot.slane %v1012, 4
      %v1014 = vrot.slane %v971, 7
      %v1015 = vrot.slane %v1014, 4
      %v1016 = vrot.slane %v972, 7
      %v1017 = vrot.slane %v1016, 4
      %v1018 = vrot.slane %v973, 7
      %v1019 = vrot.slane %v1018, 4
      %v1020 = vrot.slane %v974, 7
      %v1021 = vrot.slane %v1020, 4
      %v1022 = vrot.slane %v975, 7
      %v1023 = vrot.slane %v1022, 4
      %vm1040 = vmand %vm722, %vm715
      %v1041 = vld [vmem:[%s713 + $0x8] sm:$0x1]
      %v1042 = vsel %vm1040, %v993, %v1041
      %1043 = vst [vmem:[%s713 + $0x8] sm:$0x1] %v1042
      %v1044 = vld [vmem:[%s713 + $0x14] sm:$0x1]
      %v1045 = vsel %vm1040, %v995, %v1044
      %1046 = vst [vmem:[%s713 + $0x14] sm:$0x1] %v1045
      %v1047 = vld [vmem:[%s713 + $0x20] sm:$0x1]
      %v1048 = vsel %vm1040, %v997, %v1047
      %1049 = vst [vmem:[%s713 + $0x20] sm:$0x1] %v1048
      %v1050 = vld [vmem:[%s713 + $0x2c] sm:$0x1]
      %v1051 = vsel %vm1040, %v999, %v1050
      %1052 = vst [vmem:[%s713 + $0x2c] sm:$0x1] %v1051
      %v1053 = vld [vmem:[%s713 + $0x38] sm:$0x1]
      %v1054 = vsel %vm1040, %v1001, %v1053
      %1055 = vst [vmem:[%s713 + $0x38] sm:$0x1] %v1054
      %v1056 = vld [vmem:[%s713 + $0x44] sm:$0x1]
      %v1057 = vsel %vm1040, %v1003, %v1056
      %1058 = vst [vmem:[%s713 + $0x44] sm:$0x1] %v1057
      %v1059 = vld [vmem:[%s713 + $0x50] sm:$0x1]
      %v1060 = vsel %vm1040, %v1005, %v1059
      %1061 = vst [vmem:[%s713 + $0x50] sm:$0x1] %v1060
      %v1062 = vld [vmem:[%s713 + $0x5c] sm:$0x1]
      %v1063 = vsel %vm1040, %v1007, %v1062
      %1064 = vst [vmem:[%s713 + $0x5c] sm:$0x1] %v1063
      %v1065 = vld [vmem:[%s713 + $0x68] sm:$0x1]
      %v1066 = vsel %vm1040, %v1009, %v1065
      %1067 = vst [vmem:[%s713 + $0x68] sm:$0x1] %v1066
      %v1068 = vld [vmem:[%s713 + $0x74] sm:$0x1]
      %v1069 = vsel %vm1040, %v1011, %v1068
      %1070 = vst [vmem:[%s713 + $0x74] sm:$0x1] %v1069
      %v1071 = vld [vmem:[%s713 + $0x80] sm:$0x1]
      %v1072 = vsel %vm1040, %v1013, %v1071
      %1073 = vst [vmem:[%s713 + $0x80] sm:$0x1] %v1072
      %v1074 = vld [vmem:[%s713 + $0x8c] sm:$0x1]
      %v1075 = vsel %vm1040, %v1015, %v1074
      %1076 = vst [vmem:[%s713 + $0x8c] sm:$0x1] %v1075
      %v1077 = vld [vmem:[%s713 + $0x98] sm:$0x1]
      %v1078 = vsel %vm1040, %v1017, %v1077
      %1079 = vst [vmem:[%s713 + $0x98] sm:$0x1] %v1078
      %v1080 = vld [vmem:[%s713 + $0xa4] sm:$0x1]
      %v1081 = vsel %vm1040, %v1019, %v1080
      %1082 = vst [vmem:[%s713 + $0xa4] sm:$0x1] %v1081
      %v1083 = vld [vmem:[%s713 + $0xb0] sm:$0x1]
      %v1084 = vsel %vm1040, %v1021, %v1083
      %1085 = vst [vmem:[%s713 + $0xb0] sm:$0x1] %v1084
      %v1086 = vld [vmem:[%s713 + $0xbc] sm:$0x1]
      %v1087 = vsel %vm1040, %v1023, %v1086
      %1088 = vst [vmem:[%s713 + $0xbc] sm:$0x1] %v1087
      %s1089 = scalar_lea.vmem [#allocation2], 24
      %v1090 = vld [vmem:[%s1089] sm:$0xf]
      %v1091 = vld [vmem:[%s1089 + $0x4] sm:$0xf]
      %v1092 = vld [vmem:[%s1089 + $0x8] sm:$0x1]
      %1093 = vst.msk [vmem:[#allocation2] sm:$0xf] %vm720, %v1090
      %1094 = vst.msk [vmem:[#allocation2 + $0x4] sm:$0xf] %vm720, %v1091
      %vm1095 = vcmask 24576
      %1096 = vst.msk [vmem:[#allocation2 + $0x8] sm:$0x1] %vm1095, %v1092
      %s1097 = scalar_lea.vmem [#allocation2], 180
      %v1098 = vld [vmem:[%s1097] sm:$0xf]
      %v1099 = vld [vmem:[%s1097 + $0x4] sm:$0xf]
      %v1100 = vld [vmem:[%s1097 + $0x8] sm:$0x1]
      %s1101 = scalar_lea.vmem [#allocation2], 204
      %1102 = vst.msk [vmem:[%s1101] sm:$0xf] %vm720, %v1098
      %1103 = vst.msk [vmem:[%s1101 + $0x4] sm:$0xf] %vm720, %v1099
      %1104 = vst.msk [vmem:[%s1101 + $0x8] sm:$0x1] %vm1095, %v1100
      %v1105 = vld [vmem:[#allocation2] sm:$0xf]
      %v1106 = vld [vmem:[#allocation2 + $0x4] sm:$0xf]
      %v1107 = vld [vmem:[#allocation2 + $0xc] sm:$0xf]
      %v1108 = vld [vmem:[#allocation2 + $0x10] sm:$0xf]
      %v1109 = vld [vmem:[#allocation2 + $0x18] sm:$0xf]
      %v1110 = vld [vmem:[#allocation2 + $0x1c] sm:$0xf]
      %v1111 = vld [vmem:[#allocation2 + $0x24] sm:$0xf]
      %v1112 = vld [vmem:[#allocation2 + $0x28] sm:$0xf]
      %v1113 = vld [vmem:[#allocation2 + $0x30] sm:$0xf]
      %v1114 = vld [vmem:[#allocation2 + $0x34] sm:$0xf]
      %v1115 = vld [vmem:[#allocation2 + $0x3c] sm:$0xf]
      %v1116 = vld [vmem:[#allocation2 + $0x40] sm:$0xf]
      %v1117 = vld [vmem:[#allocation2 + $0x48] sm:$0xf]
      %v1118 = vld [vmem:[#allocation2 + $0x4c] sm:$0xf]
      %v1119 = vld [vmem:[#allocation2 + $0x54] sm:$0xf]
      %v1120 = vld [vmem:[#allocation2 + $0x58] sm:$0xf]
      %v1121 = vld [vmem:[#allocation2 + $0x60] sm:$0xf]
      %v1122 = vld [vmem:[#allocation2 + $0x64] sm:$0xf]
      %v1123 = vld [vmem:[#allocation2 + $0x6c] sm:$0xf]
      %v1124 = vld [vmem:[#allocation2 + $0x70] sm:$0xf]
      %v1125 = vld [vmem:[#allocation2 + $0x78] sm:$0xf]
      %v1126 = vld [vmem:[#allocation2 + $0x7c] sm:$0xf]
      %v1127 = vld [vmem:[#allocation2 + $0x84] sm:$0xf]
      %v1128 = vld [vmem:[#allocation2 + $0x88] sm:$0xf]
      %v1129 = vld [vmem:[#allocation2 + $0x90] sm:$0xf]
      %v1130 = vld [vmem:[#allocation2 + $0x94] sm:$0xf]
      %v1131 = vld [vmem:[#allocation2 + $0x9c] sm:$0xf]
      %v1132 = vld [vmem:[#allocation2 + $0xa0] sm:$0xf]
      %v1133 = vld [vmem:[#allocation2 + $0xa8] sm:$0xf]
      %v1134 = vld [vmem:[#allocation2 + $0xac] sm:$0xf]
      %v1135 = vld [vmem:[#allocation2 + $0xb4] sm:$0xf]
      %v1136 = vld [vmem:[#allocation2 + $0xb8] sm:$0xf]
      %v1137 = vld [vmem:[#allocation2 + $0x8] sm:$0x1]
      %v1138 = vld [vmem:[#allocation2 + $0x14] sm:$0x1]
      %v1139 = vld [vmem:[#allocation2 + $0x20] sm:$0x1]
      %v1140 = vld [vmem:[#allocation2 + $0x2c] sm:$0x1]
      %v1141 = vld [vmem:[#allocation2 + $0x38] sm:$0x1]
      %v1142 = vld [vmem:[#allocation2 + $0x44] sm:$0x1]
      %v1143 = vld [vmem:[#allocation2 + $0x50] sm:$0x1]
      %v1144 = vld [vmem:[#allocation2 + $0x5c] sm:$0x1]
      %v1145 = vld [vmem:[#allocation2 + $0x68] sm:$0x1]
      %v1146 = vld [vmem:[#allocation2 + $0x74] sm:$0x1]
      %v1147 = vld [vmem:[#allocation2 + $0x80] sm:$0x1]
      %v1148 = vld [vmem:[#allocation2 + $0x8c] sm:$0x1]
      %v1149 = vld [vmem:[#allocation2 + $0x98] sm:$0x1]
      %v1150 = vld [vmem:[#allocation2 + $0xa4] sm:$0x1]
      %v1151 = vld [vmem:[#allocation2 + $0xb0] sm:$0x1]
      %v1152 = vld [vmem:[#allocation2 + $0xbc] sm:$0x1]
      %vm1153 = vsmask.f32 3328
      %vm1154 = vsmask.f32 7440
      %vm1155 = vmor %vm1153, %vm1154
      %v1157 = vshrl.u32 %v1105, 16
      %v1159 = vrot.slane %v1157, 4
      %v1160 = vshll.u32 %v1105, 16
      %v1162 = vrot.slane %v1160, 5
      %v1163 = vor.u32 %v1159, %v1162
      %v1164 = vrot.slane %v1163, 4
      %v1166 = vshll.u32 %v1106, 16
      %v1168 = vrot.slane %v1166, 5
      %v1169 = vsel %vm1155, %v1164, %v1168
      %v1170 = vshrl.u32 %v1106, 16
      %v1172 = vrot.slane %v1170, 4
      %v1173 = vor.u32 %v1172, %v1168
      %v1174 = vrot.slane %v1173, 4
      %v1176 = vshll.u32 %v1137, 16
      %v1178 = vrot.slane %v1176, 5
      %v1179 = vsel %vm1155, %v1174, %v1178
      %v1181 = vshrl.u32 %v1107, 16
      %v1183 = vrot.slane %v1181, 4
      %v1184 = vshll.u32 %v1107, 16
      %v1186 = vrot.slane %v1184, 5
      %v1187 = vor.u32 %v1183, %v1186
      %v1188 = vrot.slane %v1187, 4
      %v1190 = vshll.u32 %v1108, 16
      %v1192 = vrot.slane %v1190, 5
      %v1193 = vsel %vm1155, %v1188, %v1192
      %v1194 = vshrl.u32 %v1108, 16
      %v1196 = vrot.slane %v1194, 4
      %v1197 = vor.u32 %v1196, %v1192
      %v1198 = vrot.slane %v1197, 4
      %v1200 = vshll.u32 %v1138, 16
      %v1202 = vrot.slane %v1200, 5
      %v1203 = vsel %vm1155, %v1198, %v1202
      %v1205 = vshrl.u32 %v1109, 16
      %v1207 = vrot.slane %v1205, 4
      %v1208 = vshll.u32 %v1109, 16
      %v1210 = vrot.slane %v1208, 5
      %v1211 = vor.u32 %v1207, %v1210
      %v1212 = vrot.slane %v1211, 4
      %v1214 = vshll.u32 %v1110, 16
      %v1216 = vrot.slane %v1214, 5
      %v1217 = vsel %vm1155, %v1212, %v1216
      %v1218 = vshrl.u32 %v1110, 16
      %v1220 = vrot.slane %v1218, 4
      %v1221 = vor.u32 %v1220, %v1216
      %v1222 = vrot.slane %v1221, 4
      %v1224 = vshll.u32 %v1139, 16
      %v1226 = vrot.slane %v1224, 5
      %v1227 = vsel %vm1155, %v1222, %v1226
      %v1229 = vshrl.u32 %v1111, 16
      %v1231 = vrot.slane %v1229, 4
      %v1232 = vshll.u32 %v1111, 16
      %v1234 = vrot.slane %v1232, 5
      %v1235 = vor.u32 %v1231, %v1234
      %v1236 = vrot.slane %v1235, 4
      %v1238 = vshll.u32 %v1112, 16
      %v1240 = vrot.slane %v1238, 5
      %v1241 = vsel %vm1155, %v1236, %v1240
      %v1242 = vshrl.u32 %v1112, 16
      %v1244 = vrot.slane %v1242, 4
      %v1245 = vor.u32 %v1244, %v1240
      %v1246 = vrot.slane %v1245, 4
      %v1248 = vshll.u32 %v1140, 16
      %v1250 = vrot.slane %v1248, 5
      %v1251 = vsel %vm1155, %v1246, %v1250
      %v1253 = vshrl.u32 %v1113, 16
      %v1255 = vrot.slane %v1253, 4
      %v1256 = vshll.u32 %v1113, 16
      %v1258 = vrot.slane %v1256, 5
      %v1259 = vor.u32 %v1255, %v1258
      %v1260 = vrot.slane %v1259, 4
      %v1262 = vshll.u32 %v1114, 16
      %v1264 = vrot.slane %v1262, 5
      %v1265 = vsel %vm1155, %v1260, %v1264
      %v1266 = vshrl.u32 %v1114, 16
      %v1268 = vrot.slane %v1266, 4
      %v1269 = vor.u32 %v1268, %v1264
      %v1270 = vrot.slane %v1269, 4
      %v1272 = vshll.u32 %v1141, 16
      %v1274 = vrot.slane %v1272, 5
      %v1275 = vsel %vm1155, %v1270, %v1274
      %v1277 = vshrl.u32 %v1115, 16
      %v1279 = vrot.slane %v1277, 4
      %v1280 = vshll.u32 %v1115, 16
      %v1282 = vrot.slane %v1280, 5
      %v1283 = vor.u32 %v1279, %v1282
      %v1284 = vrot.slane %v1283, 4
      %v1286 = vshll.u32 %v1116, 16
      %v1288 = vrot.slane %v1286, 5
      %v1289 = vsel %vm1155, %v1284, %v1288
      %v1290 = vshrl.u32 %v1116, 16
      %v1292 = vrot.slane %v1290, 4
      %v1293 = vor.u32 %v1292, %v1288
      %v1294 = vrot.slane %v1293, 4
      %v1296 = vshll.u32 %v1142, 16
      %v1298 = vrot.slane %v1296, 5
      %v1299 = vsel %vm1155, %v1294, %v1298
      %v1301 = vshrl.u32 %v1117, 16
      %v1303 = vrot.slane %v1301, 4
      %v1304 = vshll.u32 %v1117, 16
      %v1306 = vrot.slane %v1304, 5
      %v1307 = vor.u32 %v1303, %v1306
      %v1308 = vrot.slane %v1307, 4
      %v1310 = vshll.u32 %v1118, 16
      %v1312 = vrot.slane %v1310, 5
      %v1313 = vsel %vm1155, %v1308, %v1312
      %v1314 = vshrl.u32 %v1118, 16
      %v1316 = vrot.slane %v1314, 4
      %v1317 = vor.u32 %v1316, %v1312
      %v1318 = vrot.slane %v1317, 4
      %v1320 = vshll.u32 %v1143, 16
      %v1322 = vrot.slane %v1320, 5
      %v1323 = vsel %vm1155, %v1318, %v1322
      %v1325 = vshrl.u32 %v1119, 16
      %v1327 = vrot.slane %v1325, 4
      %v1328 = vshll.u32 %v1119, 16
      %v1330 = vrot.slane %v1328, 5
      %v1331 = vor.u32 %v1327, %v1330
      %v1332 = vrot.slane %v1331, 4
      %v1334 = vshll.u32 %v1120, 16
      %v1336 = vrot.slane %v1334, 5
      %v1337 = vsel %vm1155, %v1332, %v1336
      %v1338 = vshrl.u32 %v1120, 16
      %v1340 = vrot.slane %v1338, 4
      %v1341 = vor.u32 %v1340, %v1336
      %v1342 = vrot.slane %v1341, 4
      %v1344 = vshll.u32 %v1144, 16
      %v1346 = vrot.slane %v1344, 5
      %v1347 = vsel %vm1155, %v1342, %v1346
      %v1349 = vshrl.u32 %v1121, 16
      %v1351 = vrot.slane %v1349, 4
      %v1352 = vshll.u32 %v1121, 16
      %v1354 = vrot.slane %v1352, 5
      %v1355 = vor.u32 %v1351, %v1354
      %v1356 = vrot.slane %v1355, 4
      %v1358 = vshll.u32 %v1122, 16
      %v1360 = vrot.slane %v1358, 5
      %v1361 = vsel %vm1155, %v1356, %v1360
      %v1362 = vshrl.u32 %v1122, 16
      %v1364 = vrot.slane %v1362, 4
      %v1365 = vor.u32 %v1364, %v1360
      %v1366 = vrot.slane %v1365, 4
      %v1368 = vshll.u32 %v1145, 16
      %v1370 = vrot.slane %v1368, 5
      %v1371 = vsel %vm1155, %v1366, %v1370
      %v1373 = vshrl.u32 %v1123, 16
      %v1375 = vrot.slane %v1373, 4
      %v1376 = vshll.u32 %v1123, 16
      %v1378 = vrot.slane %v1376, 5
      %v1379 = vor.u32 %v1375, %v1378
      %v1380 = vrot.slane %v1379, 4
      %v1382 = vshll.u32 %v1124, 16
      %v1384 = vrot.slane %v1382, 5
      %v1385 = vsel %vm1155, %v1380, %v1384
      %v1386 = vshrl.u32 %v1124, 16
      %v1388 = vrot.slane %v1386, 4
      %v1389 = vor.u32 %v1388, %v1384
      %v1390 = vrot.slane %v1389, 4
      %v1392 = vshll.u32 %v1146, 16
      %v1394 = vrot.slane %v1392, 5
      %v1395 = vsel %vm1155, %v1390, %v1394
      %v1397 = vshrl.u32 %v1125, 16
      %v1399 = vrot.slane %v1397, 4
      %v1400 = vshll.u32 %v1125, 16
      %v1402 = vrot.slane %v1400, 5
      %v1403 = vor.u32 %v1399, %v1402
      %v1404 = vrot.slane %v1403, 4
      %v1406 = vshll.u32 %v1126, 16
      %v1408 = vrot.slane %v1406, 5
      %v1409 = vsel %vm1155, %v1404, %v1408
      %v1410 = vshrl.u32 %v1126, 16
      %v1412 = vrot.slane %v1410, 4
      %v1413 = vor.u32 %v1412, %v1408
      %v1414 = vrot.slane %v1413, 4
      %v1416 = vshll.u32 %v1147, 16
      %v1418 = vrot.slane %v1416, 5
      %v1419 = vsel %vm1155, %v1414, %v1418
      %v1421 = vshrl.u32 %v1127, 16
      %v1423 = vrot.slane %v1421, 4
      %v1424 = vshll.u32 %v1127, 16
      %v1426 = vrot.slane %v1424, 5
      %v1427 = vor.u32 %v1423, %v1426
      %v1428 = vrot.slane %v1427, 4
      %v1430 = vshll.u32 %v1128, 16
      %v1432 = vrot.slane %v1430, 5
      %v1433 = vsel %vm1155, %v1428, %v1432
      %v1434 = vshrl.u32 %v1128, 16
      %v1436 = vrot.slane %v1434, 4
      %v1437 = vor.u32 %v1436, %v1432
      %v1438 = vrot.slane %v1437, 4
      %v1440 = vshll.u32 %v1148, 16
      %v1442 = vrot.slane %v1440, 5
      %v1443 = vsel %vm1155, %v1438, %v1442
      %v1445 = vshrl.u32 %v1129, 16
      %v1447 = vrot.slane %v1445, 4
      %v1448 = vshll.u32 %v1129, 16
      %v1450 = vrot.slane %v1448, 5
      %v1451 = vor.u32 %v1447, %v1450
      %v1452 = vrot.slane %v1451, 4
      %v1454 = vshll.u32 %v1130, 16
      %v1456 = vrot.slane %v1454, 5
      %v1457 = vsel %vm1155, %v1452, %v1456
      %v1458 = vshrl.u32 %v1130, 16
      %v1460 = vrot.slane %v1458, 4
      %v1461 = vor.u32 %v1460, %v1456
      %v1462 = vrot.slane %v1461, 4
      %v1464 = vshll.u32 %v1149, 16
      %v1466 = vrot.slane %v1464, 5
      %v1467 = vsel %vm1155, %v1462, %v1466
      %v1469 = vshrl.u32 %v1131, 16
      %v1471 = vrot.slane %v1469, 4
      %v1472 = vshll.u32 %v1131, 16
      %v1474 = vrot.slane %v1472, 5
      %v1475 = vor.u32 %v1471, %v1474
      %v1476 = vrot.slane %v1475, 4
      %v1478 = vshll.u32 %v1132, 16
      %v1480 = vrot.slane %v1478, 5
      %v1481 = vsel %vm1155, %v1476, %v1480
      %v1482 = vshrl.u32 %v1132, 16
      %v1484 = vrot.slane %v1482, 4
      %v1485 = vor.u32 %v1484, %v1480
      %v1486 = vrot.slane %v1485, 4
      %v1488 = vshll.u32 %v1150, 16
      %v1490 = vrot.slane %v1488, 5
      %v1491 = vsel %vm1155, %v1486, %v1490
      %v1493 = vshrl.u32 %v1133, 16
      %v1495 = vrot.slane %v1493, 4
      %v1496 = vshll.u32 %v1133, 16
      %v1498 = vrot.slane %v1496, 5
      %v1499 = vor.u32 %v1495, %v1498
      %v1500 = vrot.slane %v1499, 4
      %v1502 = vshll.u32 %v1134, 16
      %v1504 = vrot.slane %v1502, 5
      %v1505 = vsel %vm1155, %v1500, %v1504
      %v1506 = vshrl.u32 %v1134, 16
      %v1508 = vrot.slane %v1506, 4
      %v1509 = vor.u32 %v1508, %v1504
      %v1510 = vrot.slane %v1509, 4
      %v1512 = vshll.u32 %v1151, 16
      %v1514 = vrot.slane %v1512, 5
      %v1515 = vsel %vm1155, %v1510, %v1514
      %v1517 = vshrl.u32 %v1135, 16
      %v1519 = vrot.slane %v1517, 4
      %v1520 = vshll.u32 %v1135, 16
      %v1522 = vrot.slane %v1520, 5
      %v1523 = vor.u32 %v1519, %v1522
      %v1524 = vrot.slane %v1523, 4
      %v1526 = vshll.u32 %v1136, 16
      %v1528 = vrot.slane %v1526, 5
      %v1529 = vsel %vm1155, %v1524, %v1528
      %v1530 = vshrl.u32 %v1136, 16
      %v1532 = vrot.slane %v1530, 4
      %v1533 = vor.u32 %v1532, %v1528
      %v1534 = vrot.slane %v1533, 4
      %v1536 = vshll.u32 %v1152, 16
      %v1538 = vrot.slane %v1536, 5
      %v1539 = vsel %vm1155, %v1534, %v1538
      %v1540 = vld [vmem:[#allocation2] sm:$0xe]
      %v1541 = vld [vmem:[#allocation2 + $0xc] sm:$0xe]
      %v1542 = vld [vmem:[#allocation2 + $0x18] sm:$0xe]
      %v1543 = vld [vmem:[#allocation2 + $0x24] sm:$0xe]
      %v1544 = vld [vmem:[#allocation2 + $0x30] sm:$0xe]
      %v1545 = vld [vmem:[#allocation2 + $0x3c] sm:$0xe]
      %v1546 = vld [vmem:[#allocation2 + $0x48] sm:$0xe]
      %v1547 = vld [vmem:[#allocation2 + $0x54] sm:$0xe]
      %v1548 = vld [vmem:[#allocation2 + $0x60] sm:$0xe]
      %v1549 = vld [vmem:[#allocation2 + $0x6c] sm:$0xe]
      %v1550 = vld [vmem:[#allocation2 + $0x78] sm:$0xe]
      %v1551 = vld [vmem:[#allocation2 + $0x84] sm:$0xe]
      %v1552 = vld [vmem:[#allocation2 + $0x90] sm:$0xe]
      %v1553 = vld [vmem:[#allocation2 + $0x9c] sm:$0xe]
      %v1554 = vld [vmem:[#allocation2 + $0xa8] sm:$0xe]
      %v1555 = vld [vmem:[#allocation2 + $0xb4] sm:$0xe]
      %vm1604 = vcmask 1042432
      %vm1605 = vcmask 1046532
      %vm1606 = vmor %vm1604, %vm1605
      %v1607 = vrot.slane %v1540, 5
      %v1608 = vrot.slane %v1607, 4
      %v1609 = vrot.slane %v1106, 5
      %v1610 = vsel %vm1606, %v1608, %v1609
      %v1611 = vrot.slane %v1609, 4
      %v1612 = vrot.slane %v1137, 5
      %v1613 = vsel %vm1606, %v1611, %v1612
      %v1614 = vrot.slane %v1541, 5
      %v1615 = vrot.slane %v1614, 4
      %v1616 = vrot.slane %v1108, 5
      %v1617 = vsel %vm1606, %v1615, %v1616
      %v1618 = vrot.slane %v1616, 4
      %v1619 = vrot.slane %v1138, 5
      %v1620 = vsel %vm1606, %v1618, %v1619
      %v1621 = vrot.slane %v1542, 5
      %v1622 = vrot.slane %v1621, 4
      %v1623 = vrot.slane %v1110, 5
      %v1624 = vsel %vm1606, %v1622, %v1623
      %v1625 = vrot.slane %v1623, 4
      %v1626 = vrot.slane %v1139, 5
      %v1627 = vsel %vm1606, %v1625, %v1626
      %v1628 = vrot.slane %v1543, 5
      %v1629 = vrot.slane %v1628, 4
      %v1630 = vrot.slane %v1112, 5
      %v1631 = vsel %vm1606, %v1629, %v1630
      %v1632 = vrot.slane %v1630, 4
      %v1633 = vrot.slane %v1140, 5
      %v1634 = vsel %vm1606, %v1632, %v1633
      %v1635 = vrot.slane %v1544, 5
      %v1636 = vrot.slane %v1635, 4
      %v1637 = vrot.slane %v1114, 5
      %v1638 = vsel %vm1606, %v1636, %v1637
      %v1639 = vrot.slane %v1637, 4
      %v1640 = vrot.slane %v1141, 5
      %v1641 = vsel %vm1606, %v1639, %v1640
      %v1642 = vrot.slane %v1545, 5
      %v1643 = vrot.slane %v1642, 4
      %v1644 = vrot.slane %v1116, 5
      %v1645 = vsel %vm1606, %v1643, %v1644
      %v1646 = vrot.slane %v1644, 4
      %v1647 = vrot.slane %v1142, 5
      %v1648 = vsel %vm1606, %v1646, %v1647
      %v1649 = vrot.slane %v1546, 5
      %v1650 = vrot.slane %v1649, 4
      %v1651 = vrot.slane %v1118, 5
      %v1652 = vsel %vm1606, %v1650, %v1651
      %v1653 = vrot.slane %v1651, 4
      %v1654 = vrot.slane %v1143, 5
      %v1655 = vsel %vm1606, %v1653, %v1654
      %v1656 = vrot.slane %v1547, 5
      %v1657 = vrot.slane %v1656, 4
      %v1658 = vrot.slane %v1120, 5
      %v1659 = vsel %vm1606, %v1657, %v1658
      %v1660 = vrot.slane %v1658, 4
      %v1661 = vrot.slane %v1144, 5
      %v1662 = vsel %vm1606, %v1660, %v1661
      %v1663 = vrot.slane %v1548, 5
      %v1664 = vrot.slane %v1663, 4
      %v1665 = vrot.slane %v1122, 5
      %v1666 = vsel %vm1606, %v1664, %v1665
      %v1667 = vrot.slane %v1665, 4
      %v1668 = vrot.slane %v1145, 5
      %v1669 = vsel %vm1606, %v1667, %v1668
      %v1670 = vrot.slane %v1549, 5
      %v1671 = vrot.slane %v1670, 4
      %v1672 = vrot.slane %v1124, 5
      %v1673 = vsel %vm1606, %v1671, %v1672
      %v1674 = vrot.slane %v1672, 4
      %v1675 = vrot.slane %v1146, 5
      %v1676 = vsel %vm1606, %v1674, %v1675
      %v1677 = vrot.slane %v1550, 5
      %v1678 = vrot.slane %v1677, 4
      %v1679 = vrot.slane %v1126, 5
      %v1680 = vsel %vm1606, %v1678, %v1679
      %v1681 = vrot.slane %v1679, 4
      %v1682 = vrot.slane %v1147, 5
      %v1683 = vsel %vm1606, %v1681, %v1682
      %v1684 = vrot.slane %v1551, 5
      %v1685 = vrot.slane %v1684, 4
      %v1686 = vrot.slane %v1128, 5
      %v1687 = vsel %vm1606, %v1685, %v1686
      %v1688 = vrot.slane %v1686, 4
      %v1689 = vrot.slane %v1148, 5
      %v1690 = vsel %vm1606, %v1688, %v1689
      %v1691 = vrot.slane %v1552, 5
      %v1692 = vrot.slane %v1691, 4
      %v1693 = vrot.slane %v1130, 5
      %v1694 = vsel %vm1606, %v1692, %v1693
      %v1695 = vrot.slane %v1693, 4
      %v1696 = vrot.slane %v1149, 5
      %v1697 = vsel %vm1606, %v1695, %v1696
      %v1698 = vrot.slane %v1553, 5
      %v1699 = vrot.slane %v1698, 4
      %v1700 = vrot.slane %v1132, 5
      %v1701 = vsel %vm1606, %v1699, %v1700
      %v1702 = vrot.slane %v1700, 4
      %v1703 = vrot.slane %v1150, 5
      %v1704 = vsel %vm1606, %v1702, %v1703
      %v1705 = vrot.slane %v1554, 5
      %v1706 = vrot.slane %v1705, 4
      %v1707 = vrot.slane %v1134, 5
      %v1708 = vsel %vm1606, %v1706, %v1707
      %v1709 = vrot.slane %v1707, 4
      %v1710 = vrot.slane %v1151, 5
      %v1711 = vsel %vm1606, %v1709, %v1710
      %v1712 = vrot.slane %v1555, 5
      %v1713 = vrot.slane %v1712, 4
      %v1714 = vrot.slane %v1136, 5
      %v1715 = vsel %vm1606, %v1713, %v1714
      %v1716 = vrot.slane %v1714, 4
      %v1717 = vrot.slane %v1152, 5
      %v1718 = vsel %vm1606, %v1716, %v1717
      %v1719 = vld [vmem:[%s713] sm:$0xf]
      %v1720 = vld [vmem:[%s713 + $0x4] sm:$0xf]
      %v1721 = vld [vmem:[%s713 + $0xc] sm:$0xf]
      %v1722 = vld [vmem:[%s713 + $0x10] sm:$0xf]
      %v1723 = vld [vmem:[%s713 + $0x18] sm:$0xf]
      %v1724 = vld [vmem:[%s713 + $0x1c] sm:$0xf]
      %v1725 = vld [vmem:[%s713 + $0x24] sm:$0xf]
      %v1726 = vld [vmem:[%s713 + $0x28] sm:$0xf]
      %v1727 = vld [vmem:[%s713 + $0x30] sm:$0xf]
      %v1728 = vld [vmem:[%s713 + $0x34] sm:$0xf]
      %v1729 = vld [vmem:[%s713 + $0x3c] sm:$0xf]
      %v1730 = vld [vmem:[%s713 + $0x40] sm:$0xf]
      %v1731 = vld [vmem:[%s713 + $0x48] sm:$0xf]
      %v1732 = vld [vmem:[%s713 + $0x4c] sm:$0xf]
      %v1733 = vld [vmem:[%s713 + $0x54] sm:$0xf]
      %v1734 = vld [vmem:[%s713 + $0x58] sm:$0xf]
      %v1735 = vld [vmem:[%s713 + $0x60] sm:$0xf]
      %v1736 = vld [vmem:[%s713 + $0x64] sm:$0xf]
      %v1737 = vld [vmem:[%s713 + $0x6c] sm:$0xf]
      %v1738 = vld [vmem:[%s713 + $0x70] sm:$0xf]
      %v1739 = vld [vmem:[%s713 + $0x78] sm:$0xf]
      %v1740 = vld [vmem:[%s713 + $0x7c] sm:$0xf]
      %v1741 = vld [vmem:[%s713 + $0x84] sm:$0xf]
      %v1742 = vld [vmem:[%s713 + $0x88] sm:$0xf]
      %v1743 = vld [vmem:[%s713 + $0x90] sm:$0xf]
      %v1744 = vld [vmem:[%s713 + $0x94] sm:$0xf]
      %v1745 = vld [vmem:[%s713 + $0x9c] sm:$0xf]
      %v1746 = vld [vmem:[%s713 + $0xa0] sm:$0xf]
      %v1747 = vld [vmem:[%s713 + $0xa8] sm:$0xf]
      %v1748 = vld [vmem:[%s713 + $0xac] sm:$0xf]
      %v1749 = vld [vmem:[%s713 + $0xb4] sm:$0xf]
      %v1750 = vld [vmem:[%s713 + $0xb8] sm:$0xf]
      %v1751 = vld [vmem:[%s713 + $0x8] sm:$0x1]
      %v1752 = vld [vmem:[%s713 + $0x14] sm:$0x1]
      %v1753 = vld [vmem:[%s713 + $0x20] sm:$0x1]
      %v1754 = vld [vmem:[%s713 + $0x2c] sm:$0x1]
      %v1755 = vld [vmem:[%s713 + $0x38] sm:$0x1]
      %v1756 = vld [vmem:[%s713 + $0x44] sm:$0x1]
      %v1757 = vld [vmem:[%s713 + $0x50] sm:$0x1]
      %v1758 = vld [vmem:[%s713 + $0x5c] sm:$0x1]
      %v1759 = vld [vmem:[%s713 + $0x68] sm:$0x1]
      %v1760 = vld [vmem:[%s713 + $0x74] sm:$0x1]
      %v1761 = vld [vmem:[%s713 + $0x80] sm:$0x1]
      %v1762 = vld [vmem:[%s713 + $0x8c] sm:$0x1]
      %v1763 = vld [vmem:[%s713 + $0x98] sm:$0x1]
      %v1764 = vld [vmem:[%s713 + $0xa4] sm:$0x1]
      %v1765 = vld [vmem:[%s713 + $0xb0] sm:$0x1]
      %v1766 = vld [vmem:[%s713 + $0xbc] sm:$0x1]
      %v1768 = vshrl.u32 %v1719, 16
      %v1770 = vrot.slane %v1768, 4
      %v1771 = vshll.u32 %v1719, 16
      %v1773 = vrot.slane %v1771, 5
      %v1774 = vor.u32 %v1770, %v1773
      %v1775 = vrot.slane %v1774, 4
      %v1777 = vshll.u32 %v1720, 16
      %v1779 = vrot.slane %v1777, 5
      %v1780 = vsel %vm1155, %v1775, %v1779
      %v1781 = vshrl.u32 %v1720, 16
      %v1783 = vrot.slane %v1781, 4
      %v1784 = vor.u32 %v1783, %v1779
      %v1785 = vrot.slane %v1784, 4
      %v1787 = vshll.u32 %v1751, 16
      %v1789 = vrot.slane %v1787, 5
      %v1790 = vsel %vm1155, %v1785, %v1789
      %v1792 = vshrl.u32 %v1721, 16
      %v1794 = vrot.slane %v1792, 4
      %v1795 = vshll.u32 %v1721, 16
      %v1797 = vrot.slane %v1795, 5
      %v1798 = vor.u32 %v1794, %v1797
      %v1799 = vrot.slane %v1798, 4
      %v1801 = vshll.u32 %v1722, 16
      %v1803 = vrot.slane %v1801, 5
      %v1804 = vsel %vm1155, %v1799, %v1803
      %v1805 = vshrl.u32 %v1722, 16
      %v1807 = vrot.slane %v1805, 4
      %v1808 = vor.u32 %v1807, %v1803
      %v1809 = vrot.slane %v1808, 4
      %v1811 = vshll.u32 %v1752, 16
      %v1813 = vrot.slane %v1811, 5
      %v1814 = vsel %vm1155, %v1809, %v1813
      %v1816 = vshrl.u32 %v1723, 16
      %v1818 = vrot.slane %v1816, 4
      %v1819 = vshll.u32 %v1723, 16
      %v1821 = vrot.slane %v1819, 5
      %v1822 = vor.u32 %v1818, %v1821
      %v1823 = vrot.slane %v1822, 4
      %v1825 = vshll.u32 %v1724, 16
      %v1827 = vrot.slane %v1825, 5
      %v1828 = vsel %vm1155, %v1823, %v1827
      %v1829 = vshrl.u32 %v1724, 16
      %v1831 = vrot.slane %v1829, 4
      %v1832 = vor.u32 %v1831, %v1827
      %v1833 = vrot.slane %v1832, 4
      %v1835 = vshll.u32 %v1753, 16
      %v1837 = vrot.slane %v1835, 5
      %v1838 = vsel %vm1155, %v1833, %v1837
      %v1840 = vshrl.u32 %v1725, 16
      %v1842 = vrot.slane %v1840, 4
      %v1843 = vshll.u32 %v1725, 16
      %v1845 = vrot.slane %v1843, 5
      %v1846 = vor.u32 %v1842, %v1845
      %v1847 = vrot.slane %v1846, 4
      %v1849 = vshll.u32 %v1726, 16
      %v1851 = vrot.slane %v1849, 5
      %v1852 = vsel %vm1155, %v1847, %v1851
      %v1853 = vshrl.u32 %v1726, 16
      %v1855 = vrot.slane %v1853, 4
      %v1856 = vor.u32 %v1855, %v1851
      %v1857 = vrot.slane %v1856, 4
      %v1859 = vshll.u32 %v1754, 16
      %v1861 = vrot.slane %v1859, 5
      %v1862 = vsel %vm1155, %v1857, %v1861
      %v1864 = vshrl.u32 %v1727, 16
      %v1866 = vrot.slane %v1864, 4
      %v1867 = vshll.u32 %v1727, 16
      %v1869 = vrot.slane %v1867, 5
      %v1870 = vor.u32 %v1866, %v1869
      %v1871 = vrot.slane %v1870, 4
      %v1873 = vshll.u32 %v1728, 16
      %v1875 = vrot.slane %v1873, 5
      %v1876 = vsel %vm1155, %v1871, %v1875
      %v1877 = vshrl.u32 %v1728, 16
      %v1879 = vrot.slane %v1877, 4
      %v1880 = vor.u32 %v1879, %v1875
      %v1881 = vrot.slane %v1880, 4
      %v1883 = vshll.u32 %v1755, 16
      %v1885 = vrot.slane %v1883, 5
      %v1886 = vsel %vm1155, %v1881, %v1885
      %v1888 = vshrl.u32 %v1729, 16
      %v1890 = vrot.slane %v1888, 4
      %v1891 = vshll.u32 %v1729, 16
      %v1893 = vrot.slane %v1891, 5
      %v1894 = vor.u32 %v1890, %v1893
      %v1895 = vrot.slane %v1894, 4
      %v1897 = vshll.u32 %v1730, 16
      %v1899 = vrot.slane %v1897, 5
      %v1900 = vsel %vm1155, %v1895, %v1899
      %v1901 = vshrl.u32 %v1730, 16
      %v1903 = vrot.slane %v1901, 4
      %v1904 = vor.u32 %v1903, %v1899
      %v1905 = vrot.slane %v1904, 4
      %v1907 = vshll.u32 %v1756, 16
      %v1909 = vrot.slane %v1907, 5
      %v1910 = vsel %vm1155, %v1905, %v1909
      %v1912 = vshrl.u32 %v1731, 16
      %v1914 = vrot.slane %v1912, 4
      %v1915 = vshll.u32 %v1731, 16
      %v1917 = vrot.slane %v1915, 5
      %v1918 = vor.u32 %v1914, %v1917
      %v1919 = vrot.slane %v1918, 4
      %v1921 = vshll.u32 %v1732, 16
      %v1923 = vrot.slane %v1921, 5
      %v1924 = vsel %vm1155, %v1919, %v1923
      %v1925 = vshrl.u32 %v1732, 16
      %v1927 = vrot.slane %v1925, 4
      %v1928 = vor.u32 %v1927, %v1923
      %v1929 = vrot.slane %v1928, 4
      %v1931 = vshll.u32 %v1757, 16
      %v1933 = vrot.slane %v1931, 5
      %v1934 = vsel %vm1155, %v1929, %v1933
      %v1936 = vshrl.u32 %v1733, 16
      %v1938 = vrot.slane %v1936, 4
      %v1939 = vshll.u32 %v1733, 16
      %v1941 = vrot.slane %v1939, 5
      %v1942 = vor.u32 %v1938, %v1941
      %v1943 = vrot.slane %v1942, 4
      %v1945 = vshll.u32 %v1734, 16
      %v1947 = vrot.slane %v1945, 5
      %v1948 = vsel %vm1155, %v1943, %v1947
      %v1949 = vshrl.u32 %v1734, 16
      %v1951 = vrot.slane %v1949, 4
      %v1952 = vor.u32 %v1951, %v1947
      %v1953 = vrot.slane %v1952, 4
      %v1955 = vshll.u32 %v1758, 16
      %v1957 = vrot.slane %v1955, 5
      %v1958 = vsel %vm1155, %v1953, %v1957
      %v1960 = vshrl.u32 %v1735, 16
      %v1962 = vrot.slane %v1960, 4
      %v1963 = vshll.u32 %v1735, 16
      %v1965 = vrot.slane %v1963, 5
      %v1966 = vor.u32 %v1962, %v1965
      %v1967 = vrot.slane %v1966, 4
      %v1969 = vshll.u32 %v1736, 16
      %v1971 = vrot.slane %v1969, 5
      %v1972 = vsel %vm1155, %v1967, %v1971
      %v1973 = vshrl.u32 %v1736, 16
      %v1975 = vrot.slane %v1973, 4
      %v1976 = vor.u32 %v1975, %v1971
      %v1977 = vrot.slane %v1976, 4
      %v1979 = vshll.u32 %v1759, 16
      %v1981 = vrot.slane %v1979, 5
      %v1982 = vsel %vm1155, %v1977, %v1981
      %v1984 = vshrl.u32 %v1737, 16
      %v1986 = vrot.slane %v1984, 4
      %v1987 = vshll.u32 %v1737, 16
      %v1989 = vrot.slane %v1987, 5
      %v1990 = vor.u32 %v1986, %v1989
      %v1991 = vrot.slane %v1990, 4
      %v1993 = vshll.u32 %v1738, 16
      %v1995 = vrot.slane %v1993, 5
      %v1996 = vsel %vm1155, %v1991, %v1995
      %v1997 = vshrl.u32 %v1738, 16
      %v1999 = vrot.slane %v1997, 4
      %v2000 = vor.u32 %v1999, %v1995
      %v2001 = vrot.slane %v2000, 4
      %v2003 = vshll.u32 %v1760, 16
      %v2005 = vrot.slane %v2003, 5
      %v2006 = vsel %vm1155, %v2001, %v2005
      %v2008 = vshrl.u32 %v1739, 16
      %v2010 = vrot.slane %v2008, 4
      %v2011 = vshll.u32 %v1739, 16
      %v2013 = vrot.slane %v2011, 5
      %v2014 = vor.u32 %v2010, %v2013
      %v2015 = vrot.slane %v2014, 4
      %v2017 = vshll.u32 %v1740, 16
      %v2019 = vrot.slane %v2017, 5
      %v2020 = vsel %vm1155, %v2015, %v2019
      %v2021 = vshrl.u32 %v1740, 16
      %v2023 = vrot.slane %v2021, 4
      %v2024 = vor.u32 %v2023, %v2019
      %v2025 = vrot.slane %v2024, 4
      %v2027 = vshll.u32 %v1761, 16
      %v2029 = vrot.slane %v2027, 5
      %v2030 = vsel %vm1155, %v2025, %v2029
      %v2032 = vshrl.u32 %v1741, 16
      %v2034 = vrot.slane %v2032, 4
      %v2035 = vshll.u32 %v1741, 16
      %v2037 = vrot.slane %v2035, 5
      %v2038 = vor.u32 %v2034, %v2037
      %v2039 = vrot.slane %v2038, 4
      %v2041 = vshll.u32 %v1742, 16
      %v2043 = vrot.slane %v2041, 5
      %v2044 = vsel %vm1155, %v2039, %v2043
      %v2045 = vshrl.u32 %v1742, 16
      %v2047 = vrot.slane %v2045, 4
      %v2048 = vor.u32 %v2047, %v2043
      %v2049 = vrot.slane %v2048, 4
      %v2051 = vshll.u32 %v1762, 16
      %v2053 = vrot.slane %v2051, 5
      %v2054 = vsel %vm1155, %v2049, %v2053
      %v2056 = vshrl.u32 %v1743, 16
      %v2058 = vrot.slane %v2056, 4
      %v2059 = vshll.u32 %v1743, 16
      %v2061 = vrot.slane %v2059, 5
      %v2062 = vor.u32 %v2058, %v2061
      %v2063 = vrot.slane %v2062, 4
      %v2065 = vshll.u32 %v1744, 16
      %v2067 = vrot.slane %v2065, 5
      %v2068 = vsel %vm1155, %v2063, %v2067
      %v2069 = vshrl.u32 %v1744, 16
      %v2071 = vrot.slane %v2069, 4
      %v2072 = vor.u32 %v2071, %v2067
      %v2073 = vrot.slane %v2072, 4
      %v2075 = vshll.u32 %v1763, 16
      %v2077 = vrot.slane %v2075, 5
      %v2078 = vsel %vm1155, %v2073, %v2077
      %v2080 = vshrl.u32 %v1745, 16
      %v2082 = vrot.slane %v2080, 4
      %v2083 = vshll.u32 %v1745, 16
      %v2085 = vrot.slane %v2083, 5
      %v2086 = vor.u32 %v2082, %v2085
      %v2087 = vrot.slane %v2086, 4
      %v2089 = vshll.u32 %v1746, 16
      %v2091 = vrot.slane %v2089, 5
      %v2092 = vsel %vm1155, %v2087, %v2091
      %v2093 = vshrl.u32 %v1746, 16
      %v2095 = vrot.slane %v2093, 4
      %v2096 = vor.u32 %v2095, %v2091
      %v2097 = vrot.slane %v2096, 4
      %v2099 = vshll.u32 %v1764, 16
      %v2101 = vrot.slane %v2099, 5
      %v2102 = vsel %vm1155, %v2097, %v2101
      %v2104 = vshrl.u32 %v1747, 16
      %v2106 = vrot.slane %v2104, 4
      %v2107 = vshll.u32 %v1747, 16
      %v2109 = vrot.slane %v2107, 5
      %v2110 = vor.u32 %v2106, %v2109
      %v2111 = vrot.slane %v2110, 4
      %v2113 = vshll.u32 %v1748, 16
      %v2115 = vrot.slane %v2113, 5
      %v2116 = vsel %vm1155, %v2111, %v2115
      %v2117 = vshrl.u32 %v1748, 16
      %v2119 = vrot.slane %v2117, 4
      %v2120 = vor.u32 %v2119, %v2115
      %v2121 = vrot.slane %v2120, 4
      %v2123 = vshll.u32 %v1765, 16
      %v2125 = vrot.slane %v2123, 5
      %v2126 = vsel %vm1155, %v2121, %v2125
      %v2128 = vshrl.u32 %v1749, 16
      %v2130 = vrot.slane %v2128, 4
      %v2131 = vshll.u32 %v1749, 16
      %v2133 = vrot.slane %v2131, 5
      %v2134 = vor.u32 %v2130, %v2133
      %v2135 = vrot.slane %v2134, 4
      %v2137 = vshll.u32 %v1750, 16
      %v2139 = vrot.slane %v2137, 5
      %v2140 = vsel %vm1155, %v2135, %v2139
      %v2141 = vshrl.u32 %v1750, 16
      %v2143 = vrot.slane %v2141, 4
      %v2144 = vor.u32 %v2143, %v2139
      %v2145 = vrot.slane %v2144, 4
      %v2147 = vshll.u32 %v1766, 16
      %v2149 = vrot.slane %v2147, 5
      %v2150 = vsel %vm1155, %v2145, %v2149
      %v2151 = vld [vmem:[%s713] sm:$0xe]
      %v2152 = vld [vmem:[%s713 + $0xc] sm:$0xe]
      %v2153 = vld [vmem:[%s713 + $0x18] sm:$0xe]
      %v2154 = vld [vmem:[%s713 + $0x24] sm:$0xe]
      %v2155 = vld [vmem:[%s713 + $0x30] sm:$0xe]
      %v2156 = vld [vmem:[%s713 + $0x3c] sm:$0xe]
      %v2157 = vld [vmem:[%s713 + $0x48] sm:$0xe]
      %v2158 = vld [vmem:[%s713 + $0x54] sm:$0xe]
      %v2159 = vld [vmem:[%s713 + $0x60] sm:$0xe]
      %v2160 = vld [vmem:[%s713 + $0x6c] sm:$0xe]
      %v2161 = vld [vmem:[%s713 + $0x78] sm:$0xe]
      %v2162 = vld [vmem:[%s713 + $0x84] sm:$0xe]
      %v2163 = vld [vmem:[%s713 + $0x90] sm:$0xe]
      %v2164 = vld [vmem:[%s713 + $0x9c] sm:$0xe]
      %v2165 = vld [vmem:[%s713 + $0xa8] sm:$0xe]
      %v2166 = vld [vmem:[%s713 + $0xb4] sm:$0xe]
      %v2215 = vrot.slane %v2151, 5
      %v2216 = vrot.slane %v2215, 4
      %v2217 = vrot.slane %v1720, 5
      %v2218 = vsel %vm1606, %v2216, %v2217
      %v2219 = vrot.slane %v2217, 4
      %v2220 = vrot.slane %v1751, 5
      %v2221 = vsel %vm1606, %v2219, %v2220
      %v2222 = vrot.slane %v2152, 5
      %v2223 = vrot.slane %v2222, 4
      %v2224 = vrot.slane %v1722, 5
      %v2225 = vsel %vm1606, %v2223, %v2224
      %v2226 = vrot.slane %v2224, 4
      %v2227 = vrot.slane %v1752, 5
      %v2228 = vsel %vm1606, %v2226, %v2227
      %v2229 = vrot.slane %v2153, 5
      %v2230 = vrot.slane %v2229, 4
      %v2231 = vrot.slane %v1724, 5
      %v2232 = vsel %vm1606, %v2230, %v2231
      %v2233 = vrot.slane %v2231, 4
      %v2234 = vrot.slane %v1753, 5
      %v2235 = vsel %vm1606, %v2233, %v2234
      %v2236 = vrot.slane %v2154, 5
      %v2237 = vrot.slane %v2236, 4
      %v2238 = vrot.slane %v1726, 5
      %v2239 = vsel %vm1606, %v2237, %v2238
      %v2240 = vrot.slane %v2238, 4
      %v2241 = vrot.slane %v1754, 5
      %v2242 = vsel %vm1606, %v2240, %v2241
      %v2243 = vrot.slane %v2155, 5
      %v2244 = vrot.slane %v2243, 4
      %v2245 = vrot.slane %v1728, 5
      %v2246 = vsel %vm1606, %v2244, %v2245
      %v2247 = vrot.slane %v2245, 4
      %v2248 = vrot.slane %v1755, 5
      %v2249 = vsel %vm1606, %v2247, %v2248
      %v2250 = vrot.slane %v2156, 5
      %v2251 = vrot.slane %v2250, 4
      %v2252 = vrot.slane %v1730, 5
      %v2253 = vsel %vm1606, %v2251, %v2252
      %v2254 = vrot.slane %v2252, 4
      %v2255 = vrot.slane %v1756, 5
      %v2256 = vsel %vm1606, %v2254, %v2255
      %v2257 = vrot.slane %v2157, 5
      %v2258 = vrot.slane %v2257, 4
      %v2259 = vrot.slane %v1732, 5
      %v2260 = vsel %vm1606, %v2258, %v2259
      %v2261 = vrot.slane %v2259, 4
      %v2262 = vrot.slane %v1757, 5
      %v2263 = vsel %vm1606, %v2261, %v2262
      %v2264 = vrot.slane %v2158, 5
      %v2265 = vrot.slane %v2264, 4
      %v2266 = vrot.slane %v1734, 5
      %v2267 = vsel %vm1606, %v2265, %v2266
      %v2268 = vrot.slane %v2266, 4
      %v2269 = vrot.slane %v1758, 5
      %v2270 = vsel %vm1606, %v2268, %v2269
      %v2271 = vrot.slane %v2159, 5
      %v2272 = vrot.slane %v2271, 4
      %v2273 = vrot.slane %v1736, 5
      %v2274 = vsel %vm1606, %v2272, %v2273
      %v2275 = vrot.slane %v2273, 4
      %v2276 = vrot.slane %v1759, 5
      %v2277 = vsel %vm1606, %v2275, %v2276
      %v2278 = vrot.slane %v2160, 5
      %v2279 = vrot.slane %v2278, 4
      %v2280 = vrot.slane %v1738, 5
      %v2281 = vsel %vm1606, %v2279, %v2280
      %v2282 = vrot.slane %v2280, 4
      %v2283 = vrot.slane %v1760, 5
      %v2284 = vsel %vm1606, %v2282, %v2283
      %v2285 = vrot.slane %v2161, 5
      %v2286 = vrot.slane %v2285, 4
      %v2287 = vrot.slane %v1740, 5
      %v2288 = vsel %vm1606, %v2286, %v2287
      %v2289 = vrot.slane %v2287, 4
      %v2290 = vrot.slane %v1761, 5
      %v2291 = vsel %vm1606, %v2289, %v2290
      %v2292 = vrot.slane %v2162, 5
      %v2293 = vrot.slane %v2292, 4
      %v2294 = vrot.slane %v1742, 5
      %v2295 = vsel %vm1606, %v2293, %v2294
      %v2296 = vrot.slane %v2294, 4
      %v2297 = vrot.slane %v1762, 5
      %v2298 = vsel %vm1606, %v2296, %v2297
      %v2299 = vrot.slane %v2163, 5
      %v2300 = vrot.slane %v2299, 4
      %v2301 = vrot.slane %v1744, 5
      %v2302 = vsel %vm1606, %v2300, %v2301
      %v2303 = vrot.slane %v2301, 4
      %v2304 = vrot.slane %v1763, 5
      %v2305 = vsel %vm1606, %v2303, %v2304
      %v2306 = vrot.slane %v2164, 5
      %v2307 = vrot.slane %v2306, 4
      %v2308 = vrot.slane %v1746, 5
      %v2309 = vsel %vm1606, %v2307, %v2308
      %v2310 = vrot.slane %v2308, 4
      %v2311 = vrot.slane %v1764, 5
      %v2312 = vsel %vm1606, %v2310, %v2311
      %v2313 = vrot.slane %v2165, 5
      %v2314 = vrot.slane %v2313, 4
      %v2315 = vrot.slane %v1748, 5
      %v2316 = vsel %vm1606, %v2314, %v2315
      %v2317 = vrot.slane %v2315, 4
      %v2318 = vrot.slane %v1765, 5
      %v2319 = vsel %vm1606, %v2317, %v2318
      %v2320 = vrot.slane %v2166, 5
      %v2321 = vrot.slane %v2320, 4
      %v2322 = vrot.slane %v1750, 5
      %v2323 = vsel %vm1606, %v2321, %v2322
      %v2324 = vrot.slane %v2322, 4
      %v2325 = vrot.slane %v1766, 5
      %v2326 = vsel %vm1606, %v2324, %v2325
      %v2327 = vld [vmem:[%s1089] sm:$0xf]
      %v2328 = vld [vmem:[%s1089 + $0x4] sm:$0xf]
      %v2329 = vld [vmem:[%s1089 + $0xc] sm:$0xf]
      %v2330 = vld [vmem:[%s1089 + $0x10] sm:$0xf]
      %v2331 = vld [vmem:[%s1089 + $0x18] sm:$0xf]
      %v2332 = vld [vmem:[%s1089 + $0x1c] sm:$0xf]
      %v2333 = vld [vmem:[%s1089 + $0x24] sm:$0xf]
      %v2334 = vld [vmem:[%s1089 + $0x28] sm:$0xf]
      %v2335 = vld [vmem:[%s1089 + $0x30] sm:$0xf]
      %v2336 = vld [vmem:[%s1089 + $0x34] sm:$0xf]
      %v2337 = vld [vmem:[%s1089 + $0x3c] sm:$0xf]
      %v2338 = vld [vmem:[%s1089 + $0x40] sm:$0xf]
      %v2339 = vld [vmem:[%s1089 + $0x48] sm:$0xf]
      %v2340 = vld [vmem:[%s1089 + $0x4c] sm:$0xf]
      %v2341 = vld [vmem:[%s1089 + $0x54] sm:$0xf]
      %v2342 = vld [vmem:[%s1089 + $0x58] sm:$0xf]
      %v2343 = vld [vmem:[%s1089 + $0x60] sm:$0xf]
      %v2344 = vld [vmem:[%s1089 + $0x64] sm:$0xf]
      %v2345 = vld [vmem:[%s1089 + $0x6c] sm:$0xf]
      %v2346 = vld [vmem:[%s1089 + $0x70] sm:$0xf]
      %v2347 = vld [vmem:[%s1089 + $0x78] sm:$0xf]
      %v2348 = vld [vmem:[%s1089 + $0x7c] sm:$0xf]
      %v2349 = vld [vmem:[%s1089 + $0x84] sm:$0xf]
      %v2350 = vld [vmem:[%s1089 + $0x88] sm:$0xf]
      %v2351 = vld [vmem:[%s1089 + $0x90] sm:$0xf]
      %v2352 = vld [vmem:[%s1089 + $0x94] sm:$0xf]
      %v2353 = vld [vmem:[%s1089 + $0x9c] sm:$0xf]
      %v2354 = vld [vmem:[%s1089 + $0xa0] sm:$0xf]
      %v2355 = vld [vmem:[%s1089 + $0xa8] sm:$0xf]
      %v2356 = vld [vmem:[%s1089 + $0xac] sm:$0xf]
      %v2357 = vld [vmem:[%s1089 + $0xb4] sm:$0xf]
      %v2358 = vld [vmem:[%s1089 + $0xb8] sm:$0xf]
      %v2359 = vld [vmem:[%s1089 + $0x8] sm:$0x1]
      %v2360 = vld [vmem:[%s1089 + $0x14] sm:$0x1]
      %v2361 = vld [vmem:[%s1089 + $0x20] sm:$0x1]
      %v2362 = vld [vmem:[%s1089 + $0x2c] sm:$0x1]
      %v2363 = vld [vmem:[%s1089 + $0x38] sm:$0x1]
      %v2364 = vld [vmem:[%s1089 + $0x44] sm:$0x1]
      %v2365 = vld [vmem:[%s1089 + $0x50] sm:$0x1]
      %v2366 = vld [vmem:[%s1089 + $0x5c] sm:$0x1]
      %v2367 = vld [vmem:[%s1089 + $0x68] sm:$0x1]
      %v2368 = vld [vmem:[%s1089 + $0x74] sm:$0x1]
      %v2369 = vld [vmem:[%s1089 + $0x80] sm:$0x1]
      %v2370 = vld [vmem:[%s1089 + $0x8c] sm:$0x1]
      %v2371 = vld [vmem:[%s1089 + $0x98] sm:$0x1]
      %v2372 = vld [vmem:[%s1089 + $0xa4] sm:$0x1]
      %v2373 = vld [vmem:[%s1089 + $0xb0] sm:$0x1]
      %v2374 = vld [vmem:[%s1089 + $0xbc] sm:$0x1]
      %v2376 = vshrl.u32 %v2327, 16
      %v2378 = vrot.slane %v2376, 4
      %v2379 = vshll.u32 %v2327, 16
      %v2381 = vrot.slane %v2379, 5
      %v2382 = vor.u32 %v2378, %v2381
      %v2383 = vrot.slane %v2382, 4
      %v2385 = vshll.u32 %v2328, 16
      %v2387 = vrot.slane %v2385, 5
      %v2388 = vsel %vm1155, %v2383, %v2387
      %v2389 = vshrl.u32 %v2328, 16
      %v2391 = vrot.slane %v2389, 4
      %v2392 = vor.u32 %v2391, %v2387
      %v2393 = vrot.slane %v2392, 4
      %v2395 = vshll.u32 %v2359, 16
      %v2397 = vrot.slane %v2395, 5
      %v2398 = vsel %vm1155, %v2393, %v2397
      %v2400 = vshrl.u32 %v2329, 16
      %v2402 = vrot.slane %v2400, 4
      %v2403 = vshll.u32 %v2329, 16
      %v2405 = vrot.slane %v2403, 5
      %v2406 = vor.u32 %v2402, %v2405
      %v2407 = vrot.slane %v2406, 4
      %v2409 = vshll.u32 %v2330, 16
      %v2411 = vrot.slane %v2409, 5
      %v2412 = vsel %vm1155, %v2407, %v2411
      %v2413 = vshrl.u32 %v2330, 16
      %v2415 = vrot.slane %v2413, 4
      %v2416 = vor.u32 %v2415, %v2411
      %v2417 = vrot.slane %v2416, 4
      %v2419 = vshll.u32 %v2360, 16
      %v2421 = vrot.slane %v2419, 5
      %v2422 = vsel %vm1155, %v2417, %v2421
      %v2424 = vshrl.u32 %v2331, 16
      %v2426 = vrot.slane %v2424, 4
      %v2427 = vshll.u32 %v2331, 16
      %v2429 = vrot.slane %v2427, 5
      %v2430 = vor.u32 %v2426, %v2429
      %v2431 = vrot.slane %v2430, 4
      %v2433 = vshll.u32 %v2332, 16
      %v2435 = vrot.slane %v2433, 5
      %v2436 = vsel %vm1155, %v2431, %v2435
      %v2437 = vshrl.u32 %v2332, 16
      %v2439 = vrot.slane %v2437, 4
      %v2440 = vor.u32 %v2439, %v2435
      %v2441 = vrot.slane %v2440, 4
      %v2443 = vshll.u32 %v2361, 16
      %v2445 = vrot.slane %v2443, 5
      %v2446 = vsel %vm1155, %v2441, %v2445
      %v2448 = vshrl.u32 %v2333, 16
      %v2450 = vrot.slane %v2448, 4
      %v2451 = vshll.u32 %v2333, 16
      %v2453 = vrot.slane %v2451, 5
      %v2454 = vor.u32 %v2450, %v2453
      %v2455 = vrot.slane %v2454, 4
      %v2457 = vshll.u32 %v2334, 16
      %v2459 = vrot.slane %v2457, 5
      %v2460 = vsel %vm1155, %v2455, %v2459
      %v2461 = vshrl.u32 %v2334, 16
      %v2463 = vrot.slane %v2461, 4
      %v2464 = vor.u32 %v2463, %v2459
      %v2465 = vrot.slane %v2464, 4
      %v2467 = vshll.u32 %v2362, 16
      %v2469 = vrot.slane %v2467, 5
      %v2470 = vsel %vm1155, %v2465, %v2469
      %v2472 = vshrl.u32 %v2335, 16
      %v2474 = vrot.slane %v2472, 4
      %v2475 = vshll.u32 %v2335, 16
      %v2477 = vrot.slane %v2475, 5
      %v2478 = vor.u32 %v2474, %v2477
      %v2479 = vrot.slane %v2478, 4
      %v2481 = vshll.u32 %v2336, 16
      %v2483 = vrot.slane %v2481, 5
      %v2484 = vsel %vm1155, %v2479, %v2483
      %v2485 = vshrl.u32 %v2336, 16
      %v2487 = vrot.slane %v2485, 4
      %v2488 = vor.u32 %v2487, %v2483
      %v2489 = vrot.slane %v2488, 4
      %v2491 = vshll.u32 %v2363, 16
      %v2493 = vrot.slane %v2491, 5
      %v2494 = vsel %vm1155, %v2489, %v2493
      %v2496 = vshrl.u32 %v2337, 16
      %v2498 = vrot.slane %v2496, 4
      %v2499 = vshll.u32 %v2337, 16
      %v2501 = vrot.slane %v2499, 5
      %v2502 = vor.u32 %v2498, %v2501
      %v2503 = vrot.slane %v2502, 4
      %v2505 = vshll.u32 %v2338, 16
      %v2507 = vrot.slane %v2505, 5
      %v2508 = vsel %vm1155, %v2503, %v2507
      %v2509 = vshrl.u32 %v2338, 16
      %v2511 = vrot.slane %v2509, 4
      %v2512 = vor.u32 %v2511, %v2507
      %v2513 = vrot.slane %v2512, 4
      %v2515 = vshll.u32 %v2364, 16
      %v2517 = vrot.slane %v2515, 5
      %v2518 = vsel %vm1155, %v2513, %v2517
      %v2520 = vshrl.u32 %v2339, 16
      %v2522 = vrot.slane %v2520, 4
      %v2523 = vshll.u32 %v2339, 16
      %v2525 = vrot.slane %v2523, 5
      %v2526 = vor.u32 %v2522, %v2525
      %v2527 = vrot.slane %v2526, 4
      %v2529 = vshll.u32 %v2340, 16
      %v2531 = vrot.slane %v2529, 5
      %v2532 = vsel %vm1155, %v2527, %v2531
      %v2533 = vshrl.u32 %v2340, 16
      %v2535 = vrot.slane %v2533, 4
      %v2536 = vor.u32 %v2535, %v2531
      %v2537 = vrot.slane %v2536, 4
      %v2539 = vshll.u32 %v2365, 16
      %v2541 = vrot.slane %v2539, 5
      %v2542 = vsel %vm1155, %v2537, %v2541
      %v2544 = vshrl.u32 %v2341, 16
      %v2546 = vrot.slane %v2544, 4
      %v2547 = vshll.u32 %v2341, 16
      %v2549 = vrot.slane %v2547, 5
      %v2550 = vor.u32 %v2546, %v2549
      %v2551 = vrot.slane %v2550, 4
      %v2553 = vshll.u32 %v2342, 16
      %v2555 = vrot.slane %v2553, 5
      %v2556 = vsel %vm1155, %v2551, %v2555
      %v2557 = vshrl.u32 %v2342, 16
      %v2559 = vrot.slane %v2557, 4
      %v2560 = vor.u32 %v2559, %v2555
      %v2561 = vrot.slane %v2560, 4
      %v2563 = vshll.u32 %v2366, 16
      %v2565 = vrot.slane %v2563, 5
      %v2566 = vsel %vm1155, %v2561, %v2565
      %v2568 = vshrl.u32 %v2343, 16
      %v2570 = vrot.slane %v2568, 4
      %v2571 = vshll.u32 %v2343, 16
      %v2573 = vrot.slane %v2571, 5
      %v2574 = vor.u32 %v2570, %v2573
      %v2575 = vrot.slane %v2574, 4
      %v2577 = vshll.u32 %v2344, 16
      %v2579 = vrot.slane %v2577, 5
      %v2580 = vsel %vm1155, %v2575, %v2579
      %v2581 = vshrl.u32 %v2344, 16
      %v2583 = vrot.slane %v2581, 4
      %v2584 = vor.u32 %v2583, %v2579
      %v2585 = vrot.slane %v2584, 4
      %v2587 = vshll.u32 %v2367, 16
      %v2589 = vrot.slane %v2587, 5
      %v2590 = vsel %vm1155, %v2585, %v2589
      %v2592 = vshrl.u32 %v2345, 16
      %v2594 = vrot.slane %v2592, 4
      %v2595 = vshll.u32 %v2345, 16
      %v2597 = vrot.slane %v2595, 5
      %v2598 = vor.u32 %v2594, %v2597
      %v2599 = vrot.slane %v2598, 4
      %v2601 = vshll.u32 %v2346, 16
      %v2603 = vrot.slane %v2601, 5
      %v2604 = vsel %vm1155, %v2599, %v2603
      %v2605 = vshrl.u32 %v2346, 16
      %v2607 = vrot.slane %v2605, 4
      %v2608 = vor.u32 %v2607, %v2603
      %v2609 = vrot.slane %v2608, 4
      %v2611 = vshll.u32 %v2368, 16
      %v2613 = vrot.slane %v2611, 5
      %v2614 = vsel %vm1155, %v2609, %v2613
      %v2616 = vshrl.u32 %v2347, 16
      %v2618 = vrot.slane %v2616, 4
      %v2619 = vshll.u32 %v2347, 16
      %v2621 = vrot.slane %v2619, 5
      %v2622 = vor.u32 %v2618, %v2621
      %v2623 = vrot.slane %v2622, 4
      %v2625 = vshll.u32 %v2348, 16
      %v2627 = vrot.slane %v2625, 5
      %v2628 = vsel %vm1155, %v2623, %v2627
      %v2629 = vshrl.u32 %v2348, 16
      %v2631 = vrot.slane %v2629, 4
      %v2632 = vor.u32 %v2631, %v2627
      %v2633 = vrot.slane %v2632, 4
      %v2635 = vshll.u32 %v2369, 16
      %v2637 = vrot.slane %v2635, 5
      %v2638 = vsel %vm1155, %v2633, %v2637
      %v2640 = vshrl.u32 %v2349, 16
      %v2642 = vrot.slane %v2640, 4
      %v2643 = vshll.u32 %v2349, 16
      %v2645 = vrot.slane %v2643, 5
      %v2646 = vor.u32 %v2642, %v2645
      %v2647 = vrot.slane %v2646, 4
      %v2649 = vshll.u32 %v2350, 16
      %v2651 = vrot.slane %v2649, 5
      %v2652 = vsel %vm1155, %v2647, %v2651
      %v2653 = vshrl.u32 %v2350, 16
      %v2655 = vrot.slane %v2653, 4
      %v2656 = vor.u32 %v2655, %v2651
      %v2657 = vrot.slane %v2656, 4
      %v2659 = vshll.u32 %v2370, 16
      %v2661 = vrot.slane %v2659, 5
      %v2662 = vsel %vm1155, %v2657, %v2661
      %v2664 = vshrl.u32 %v2351, 16
      %v2666 = vrot.slane %v2664, 4
      %v2667 = vshll.u32 %v2351, 16
      %v2669 = vrot.slane %v2667, 5
      %v2670 = vor.u32 %v2666, %v2669
      %v2671 = vrot.slane %v2670, 4
      %v2673 = vshll.u32 %v2352, 16
      %v2675 = vrot.slane %v2673, 5
      %v2676 = vsel %vm1155, %v2671, %v2675
      %v2677 = vshrl.u32 %v2352, 16
      %v2679 = vrot.slane %v2677, 4
      %v2680 = vor.u32 %v2679, %v2675
      %v2681 = vrot.slane %v2680, 4
      %v2683 = vshll.u32 %v2371, 16
      %v2685 = vrot.slane %v2683, 5
      %v2686 = vsel %vm1155, %v2681, %v2685
      %v2688 = vshrl.u32 %v2353, 16
      %v2690 = vrot.slane %v2688, 4
      %v2691 = vshll.u32 %v2353, 16
      %v2693 = vrot.slane %v2691, 5
      %v2694 = vor.u32 %v2690, %v2693
      %v2695 = vrot.slane %v2694, 4
      %v2697 = vshll.u32 %v2354, 16
      %v2699 = vrot.slane %v2697, 5
      %v2700 = vsel %vm1155, %v2695, %v2699
      %v2701 = vshrl.u32 %v2354, 16
      %v2703 = vrot.slane %v2701, 4
      %v2704 = vor.u32 %v2703, %v2699
      %v2705 = vrot.slane %v2704, 4
      %v2707 = vshll.u32 %v2372, 16
      %v2709 = vrot.slane %v2707, 5
      %v2710 = vsel %vm1155, %v2705, %v2709
      %v2712 = vshrl.u32 %v2355, 16
      %v2714 = vrot.slane %v2712, 4
      %v2715 = vshll.u32 %v2355, 16
      %v2717 = vrot.slane %v2715, 5
      %v2718 = vor.u32 %v2714, %v2717
      %v2719 = vrot.slane %v2718, 4
      %v2721 = vshll.u32 %v2356, 16
      %v2723 = vrot.slane %v2721, 5
      %v2724 = vsel %vm1155, %v2719, %v2723
      %v2725 = vshrl.u32 %v2356, 16
      %v2727 = vrot.slane %v2725, 4
      %v2728 = vor.u32 %v2727, %v2723
      %v2729 = vrot.slane %v2728, 4
      %v2731 = vshll.u32 %v2373, 16
      %v2733 = vrot.slane %v2731, 5
      %v2734 = vsel %vm1155, %v2729, %v2733
      %v2736 = vshrl.u32 %v2357, 16
      %v2738 = vrot.slane %v2736, 4
      %v2739 = vshll.u32 %v2357, 16
      %v2741 = vrot.slane %v2739, 5
      %v2742 = vor.u32 %v2738, %v2741
      %v2743 = vrot.slane %v2742, 4
      %v2745 = vshll.u32 %v2358, 16
      %v2747 = vrot.slane %v2745, 5
      %v2748 = vsel %vm1155, %v2743, %v2747
      %v2749 = vshrl.u32 %v2358, 16
      %v2751 = vrot.slane %v2749, 4
      %v2752 = vor.u32 %v2751, %v2747
      %v2753 = vrot.slane %v2752, 4
      %v2755 = vshll.u32 %v2374, 16
      %v2757 = vrot.slane %v2755, 5
      %v2758 = vsel %vm1155, %v2753, %v2757
      %v2759 = vld [vmem:[%s1089] sm:$0xe]
      %v2760 = vld [vmem:[%s1089 + $0xc] sm:$0xe]
      %v2761 = vld [vmem:[%s1089 + $0x18] sm:$0xe]
      %v2762 = vld [vmem:[%s1089 + $0x24] sm:$0xe]
      %v2763 = vld [vmem:[%s1089 + $0x30] sm:$0xe]
      %v2764 = vld [vmem:[%s1089 + $0x3c] sm:$0xe]
      %v2765 = vld [vmem:[%s1089 + $0x48] sm:$0xe]
      %v2766 = vld [vmem:[%s1089 + $0x54] sm:$0xe]
      %v2767 = vld [vmem:[%s1089 + $0x60] sm:$0xe]
      %v2768 = vld [vmem:[%s1089 + $0x6c] sm:$0xe]
      %v2769 = vld [vmem:[%s1089 + $0x78] sm:$0xe]
      %v2770 = vld [vmem:[%s1089 + $0x84] sm:$0xe]
      %v2771 = vld [vmem:[%s1089 + $0x90] sm:$0xe]
      %v2772 = vld [vmem:[%s1089 + $0x9c] sm:$0xe]
      %v2773 = vld [vmem:[%s1089 + $0xa8] sm:$0xe]
      %v2774 = vld [vmem:[%s1089 + $0xb4] sm:$0xe]
      %v2823 = vrot.slane %v2759, 5
      %v2824 = vrot.slane %v2823, 4
      %v2825 = vrot.slane %v2328, 5
      %v2826 = vsel %vm1606, %v2824, %v2825
      %v2827 = vrot.slane %v2825, 4
      %v2828 = vrot.slane %v2359, 5
      %v2829 = vsel %vm1606, %v2827, %v2828
      %v2830 = vrot.slane %v2760, 5
      %v2831 = vrot.slane %v2830, 4
      %v2832 = vrot.slane %v2330, 5
      %v2833 = vsel %vm1606, %v2831, %v2832
      %v2834 = vrot.slane %v2832, 4
      %v2835 = vrot.slane %v2360, 5
      %v2836 = vsel %vm1606, %v2834, %v2835
      %v2837 = vrot.slane %v2761, 5
      %v2838 = vrot.slane %v2837, 4
      %v2839 = vrot.slane %v2332, 5
      %v2840 = vsel %vm1606, %v2838, %v2839
      %v2841 = vrot.slane %v2839, 4
      %v2842 = vrot.slane %v2361, 5
      %v2843 = vsel %vm1606, %v2841, %v2842
      %v2844 = vrot.slane %v2762, 5
      %v2845 = vrot.slane %v2844, 4
      %v2846 = vrot.slane %v2334, 5
      %v2847 = vsel %vm1606, %v2845, %v2846
      %v2848 = vrot.slane %v2846, 4
      %v2849 = vrot.slane %v2362, 5
      %v2850 = vsel %vm1606, %v2848, %v2849
      %v2851 = vrot.slane %v2763, 5
      %v2852 = vrot.slane %v2851, 4
      %v2853 = vrot.slane %v2336, 5
      %v2854 = vsel %vm1606, %v2852, %v2853
      %v2855 = vrot.slane %v2853, 4
      %v2856 = vrot.slane %v2363, 5
      %v2857 = vsel %vm1606, %v2855, %v2856
      %v2858 = vrot.slane %v2764, 5
      %v2859 = vrot.slane %v2858, 4
      %v2860 = vrot.slane %v2338, 5
      %v2861 = vsel %vm1606, %v2859, %v2860
      %v2862 = vrot.slane %v2860, 4
      %v2863 = vrot.slane %v2364, 5
      %v2864 = vsel %vm1606, %v2862, %v2863
      %v2865 = vrot.slane %v2765, 5
      %v2866 = vrot.slane %v2865, 4
      %v2867 = vrot.slane %v2340, 5
      %v2868 = vsel %vm1606, %v2866, %v2867
      %v2869 = vrot.slane %v2867, 4
      %v2870 = vrot.slane %v2365, 5
      %v2871 = vsel %vm1606, %v2869, %v2870
      %v2872 = vrot.slane %v2766, 5
      %v2873 = vrot.slane %v2872, 4
      %v2874 = vrot.slane %v2342, 5
      %v2875 = vsel %vm1606, %v2873, %v2874
      %v2876 = vrot.slane %v2874, 4
      %v2877 = vrot.slane %v2366, 5
      %v2878 = vsel %vm1606, %v2876, %v2877
      %v2879 = vrot.slane %v2767, 5
      %v2880 = vrot.slane %v2879, 4
      %v2881 = vrot.slane %v2344, 5
      %v2882 = vsel %vm1606, %v2880, %v2881
      %v2883 = vrot.slane %v2881, 4
      %v2884 = vrot.slane %v2367, 5
      %v2885 = vsel %vm1606, %v2883, %v2884
      %v2886 = vrot.slane %v2768, 5
      %v2887 = vrot.slane %v2886, 4
      %v2888 = vrot.slane %v2346, 5
      %v2889 = vsel %vm1606, %v2887, %v2888
      %v2890 = vrot.slane %v2888, 4
      %v2891 = vrot.slane %v2368, 5
      %v2892 = vsel %vm1606, %v2890, %v2891
      %v2893 = vrot.slane %v2769, 5
      %v2894 = vrot.slane %v2893, 4
      %v2895 = vrot.slane %v2348, 5
      %v2896 = vsel %vm1606, %v2894, %v2895
      %v2897 = vrot.slane %v2895, 4
      %v2898 = vrot.slane %v2369, 5
      %v2899 = vsel %vm1606, %v2897, %v2898
      %v2900 = vrot.slane %v2770, 5
      %v2901 = vrot.slane %v2900, 4
      %v2902 = vrot.slane %v2350, 5
      %v2903 = vsel %vm1606, %v2901, %v2902
      %v2904 = vrot.slane %v2902, 4
      %v2905 = vrot.slane %v2370, 5
      %v2906 = vsel %vm1606, %v2904, %v2905
      %v2907 = vrot.slane %v2771, 5
      %v2908 = vrot.slane %v2907, 4
      %v2909 = vrot.slane %v2352, 5
      %v2910 = vsel %vm1606, %v2908, %v2909
      %v2911 = vrot.slane %v2909, 4
      %v2912 = vrot.slane %v2371, 5
      %v2913 = vsel %vm1606, %v2911, %v2912
      %v2914 = vrot.slane %v2772, 5
      %v2915 = vrot.slane %v2914, 4
      %v2916 = vrot.slane %v2354, 5
      %v2917 = vsel %vm1606, %v2915, %v2916
      %v2918 = vrot.slane %v2916, 4
      %v2919 = vrot.slane %v2372, 5
      %v2920 = vsel %vm1606, %v2918, %v2919
      %v2921 = vrot.slane %v2773, 5
      %v2922 = vrot.slane %v2921, 4
      %v2923 = vrot.slane %v2356, 5
      %v2924 = vsel %vm1606, %v2922, %v2923
      %v2925 = vrot.slane %v2923, 4
      %v2926 = vrot.slane %v2373, 5
      %v2927 = vsel %vm1606, %v2925, %v2926
      %v2928 = vrot.slane %v2774, 5
      %v2929 = vrot.slane %v2928, 4
      %v2930 = vrot.slane %v2358, 5
      %v2931 = vsel %vm1606, %v2929, %v2930
      %v2932 = vrot.slane %v2930, 4
      %v2933 = vrot.slane %v2374, 5
      %v2934 = vsel %vm1606, %v2932, %v2933
      %v2951 = vunpack.c.l.b16 %v1105
      %v2952 = vunpack.c.l.b16 %v1106
      %v2953 = vunpack.c.l.b16 %v1107
      %v2954 = vunpack.c.l.b16 %v1108
      %v2955 = vunpack.c.l.b16 %v1109
      %v2956 = vunpack.c.l.b16 %v1110
      %v2957 = vunpack.c.l.b16 %v1111
      %v2958 = vunpack.c.l.b16 %v1112
      %v2959 = vunpack.c.l.b16 %v1113
      %v2960 = vunpack.c.l.b16 %v1114
      %v2961 = vunpack.c.l.b16 %v1115
      %v2962 = vunpack.c.l.b16 %v1116
      %v2963 = vunpack.c.l.b16 %v1117
      %v2964 = vunpack.c.l.b16 %v1118
      %v2965 = vunpack.c.l.b16 %v1119
      %v2966 = vunpack.c.l.b16 %v1120
      %v2967 = vunpack.c.l.b16 %v1121
      %v2968 = vunpack.c.l.b16 %v1122
      %v2969 = vunpack.c.l.b16 %v1123
      %v2970 = vunpack.c.l.b16 %v1124
      %v2971 = vunpack.c.l.b16 %v1125
      %v2972 = vunpack.c.l.b16 %v1126
      %v2973 = vunpack.c.l.b16 %v1127
      %v2974 = vunpack.c.l.b16 %v1128
      %v2975 = vunpack.c.l.b16 %v1129
      %v2976 = vunpack.c.l.b16 %v1130
      %v2977 = vunpack.c.l.b16 %v1131
      %v2978 = vunpack.c.l.b16 %v1132
      %v2979 = vunpack.c.l.b16 %v1133
      %v2980 = vunpack.c.l.b16 %v1134
      %v2981 = vunpack.c.l.b16 %v1135
      %v2982 = vunpack.c.l.b16 %v1136
      %v2983 = vpack.c.b16 %v2952, %v2951
      %v2984 = vpack.c.b16 %v2954, %v2953
      %v2985 = vpack.c.b16 %v2956, %v2955
      %v2986 = vpack.c.b16 %v2958, %v2957
      %v2987 = vpack.c.b16 %v2960, %v2959
      %v2988 = vpack.c.b16 %v2962, %v2961
      %v2989 = vpack.c.b16 %v2964, %v2963
      %v2990 = vpack.c.b16 %v2966, %v2965
      %v2991 = vpack.c.b16 %v2968, %v2967
      %v2992 = vpack.c.b16 %v2970, %v2969
      %v2993 = vpack.c.b16 %v2972, %v2971
      %v2994 = vpack.c.b16 %v2974, %v2973
      %v2995 = vpack.c.b16 %v2976, %v2975
      %v2996 = vpack.c.b16 %v2978, %v2977
      %v2997 = vpack.c.b16 %v2980, %v2979
      %v2998 = vpack.c.b16 %v2982, %v2981
      %v2999 = vunpack.c.l.b16 %v1169
      %v3000 = vunpack.c.l.b16 %v1179
      %v3001 = vunpack.c.l.b16 %v1193
      %v3002 = vunpack.c.l.b16 %v1203
      %v3003 = vunpack.c.l.b16 %v1217
      %v3004 = vunpack.c.l.b16 %v1227
      %v3005 = vunpack.c.l.b16 %v1241
      %v3006 = vunpack.c.l.b16 %v1251
      %v3007 = vunpack.c.l.b16 %v1265
      %v3008 = vunpack.c.l.b16 %v1275
      %v3009 = vunpack.c.l.b16 %v1289
      %v3010 = vunpack.c.l.b16 %v1299
      %v3011 = vunpack.c.l.b16 %v1313
      %v3012 = vunpack.c.l.b16 %v1323
      %v3013 = vunpack.c.l.b16 %v1337
      %v3014 = vunpack.c.l.b16 %v1347
      %v3015 = vunpack.c.l.b16 %v1361
      %v3016 = vunpack.c.l.b16 %v1371
      %v3017 = vunpack.c.l.b16 %v1385
      %v3018 = vunpack.c.l.b16 %v1395
      %v3019 = vunpack.c.l.b16 %v1409
      %v3020 = vunpack.c.l.b16 %v1419
      %v3021 = vunpack.c.l.b16 %v1433
      %v3022 = vunpack.c.l.b16 %v1443
      %v3023 = vunpack.c.l.b16 %v1457
      %v3024 = vunpack.c.l.b16 %v1467
      %v3025 = vunpack.c.l.b16 %v1481
      %v3026 = vunpack.c.l.b16 %v1491
      %v3027 = vunpack.c.l.b16 %v1505
      %v3028 = vunpack.c.l.b16 %v1515
      %v3029 = vunpack.c.l.b16 %v1529
      %v3030 = vunpack.c.l.b16 %v1539
      %v3031 = vpack.c.b16 %v3000, %v2999
      %v3032 = vpack.c.b16 %v3002, %v3001
      %v3033 = vpack.c.b16 %v3004, %v3003
      %v3034 = vpack.c.b16 %v3006, %v3005
      %v3035 = vpack.c.b16 %v3008, %v3007
      %v3036 = vpack.c.b16 %v3010, %v3009
      %v3037 = vpack.c.b16 %v3012, %v3011
      %v3038 = vpack.c.b16 %v3014, %v3013
      %v3039 = vpack.c.b16 %v3016, %v3015
      %v3040 = vpack.c.b16 %v3018, %v3017
      %v3041 = vpack.c.b16 %v3020, %v3019
      %v3042 = vpack.c.b16 %v3022, %v3021
      %v3043 = vpack.c.b16 %v3024, %v3023
      %v3044 = vpack.c.b16 %v3026, %v3025
      %v3045 = vpack.c.b16 %v3028, %v3027
      %v3046 = vpack.c.b16 %v3030, %v3029
      %3047 = vrot.lane.b32.xlu0 %v3031, 4
      %v3048 = vpop.permute.xlu0 %3047
      %3049 = vrot.lane.b32.xlu0 %v3032, 4
      %v3050 = vpop.permute.xlu0 %3049
      %3051 = vrot.lane.b32.xlu0 %v3033, 4
      %v3052 = vpop.permute.xlu0 %3051
      %3053 = vrot.lane.b32.xlu0 %v3034, 4
      %v3054 = vpop.permute.xlu0 %3053
      %3055 = vrot.lane.b32.xlu0 %v3035, 4
      %v3056 = vpop.permute.xlu0 %3055
      %3057 = vrot.lane.b32.xlu0 %v3036, 4
      %v3058 = vpop.permute.xlu0 %3057
      %3059 = vrot.lane.b32.xlu0 %v3037, 4
      %v3060 = vpop.permute.xlu0 %3059
      %3061 = vrot.lane.b32.xlu0 %v3038, 4
      %v3062 = vpop.permute.xlu0 %3061
      %3063 = vrot.lane.b32.xlu0 %v3039, 4
      %v3064 = vpop.permute.xlu0 %3063
      %3065 = vrot.lane.b32.xlu0 %v3040, 4
      %v3066 = vpop.permute.xlu0 %3065
      %3067 = vrot.lane.b32.xlu0 %v3041, 4
      %v3068 = vpop.permute.xlu0 %3067
      %3069 = vrot.lane.b32.xlu0 %v3042, 4
      %v3070 = vpop.permute.xlu0 %3069
      %3071 = vrot.lane.b32.xlu0 %v3043, 4
      %v3072 = vpop.permute.xlu0 %3071
      %3073 = vrot.lane.b32.xlu0 %v3044, 4
      %v3074 = vpop.permute.xlu0 %3073
      %3075 = vrot.lane.b32.xlu0 %v3045, 4
      %v3076 = vpop.permute.xlu0 %3075
      %3077 = vrot.lane.b32.xlu0 %v3046, 4
      %v3078 = vpop.permute.xlu0 %3077
      %v3079 = vunpack.c.l.b16 %v1610
      %v3080 = vunpack.c.l.b16 %v1613
      %v3081 = vunpack.c.l.b16 %v1617
      %v3082 = vunpack.c.l.b16 %v1620
      %v3083 = vunpack.c.l.b16 %v1624
      %v3084 = vunpack.c.l.b16 %v1627
      %v3085 = vunpack.c.l.b16 %v1631
      %v3086 = vunpack.c.l.b16 %v1634
      %v3087 = vunpack.c.l.b16 %v1638
      %v3088 = vunpack.c.l.b16 %v1641
      %v3089 = vunpack.c.l.b16 %v1645
      %v3090 = vunpack.c.l.b16 %v1648
      %v3091 = vunpack.c.l.b16 %v1652
      %v3092 = vunpack.c.l.b16 %v1655
      %v3093 = vunpack.c.l.b16 %v1659
      %v3094 = vunpack.c.l.b16 %v1662
      %v3095 = vunpack.c.l.b16 %v1666
      %v3096 = vunpack.c.l.b16 %v1669
      %v3097 = vunpack.c.l.b16 %v1673
      %v3098 = vunpack.c.l.b16 %v1676
      %v3099 = vunpack.c.l.b16 %v1680
      %v3100 = vunpack.c.l.b16 %v1683
      %v3101 = vunpack.c.l.b16 %v1687
      %v3102 = vunpack.c.l.b16 %v1690
      %v3103 = vunpack.c.l.b16 %v1694
      %v3104 = vunpack.c.l.b16 %v1697
      %v3105 = vunpack.c.l.b16 %v1701
      %v3106 = vunpack.c.l.b16 %v1704
      %v3107 = vunpack.c.l.b16 %v1708
      %v3108 = vunpack.c.l.b16 %v1711
      %v3109 = vunpack.c.l.b16 %v1715
      %v3110 = vunpack.c.l.b16 %v1718
      %v3111 = vpack.c.b16 %v3080, %v3079
      %v3112 = vpack.c.b16 %v3082, %v3081
      %v3113 = vpack.c.b16 %v3084, %v3083
      %v3114 = vpack.c.b16 %v3086, %v3085
      %v3115 = vpack.c.b16 %v3088, %v3087
      %v3116 = vpack.c.b16 %v3090, %v3089
      %v3117 = vpack.c.b16 %v3092, %v3091
      %v3118 = vpack.c.b16 %v3094, %v3093
      %v3119 = vpack.c.b16 %v3096, %v3095
      %v3120 = vpack.c.b16 %v3098, %v3097
      %v3121 = vpack.c.b16 %v3100, %v3099
      %v3122 = vpack.c.b16 %v3102, %v3101
      %v3123 = vpack.c.b16 %v3104, %v3103
      %v3124 = vpack.c.b16 %v3106, %v3105
      %v3125 = vpack.c.b16 %v3108, %v3107
      %v3126 = vpack.c.b16 %v3110, %v3109
      %3127 = vrot.lane.b32.xlu0 %v3111, 8
      %v3128 = vpop.permute.xlu0 %3127
      %3129 = vrot.lane.b32.xlu0 %v3112, 8
      %v3130 = vpop.permute.xlu0 %3129
      %3131 = vrot.lane.b32.xlu0 %v3113, 8
      %v3132 = vpop.permute.xlu0 %3131
      %3133 = vrot.lane.b32.xlu0 %v3114, 8
      %v3134 = vpop.permute.xlu0 %3133
      %3135 = vrot.lane.b32.xlu0 %v3115, 8
      %v3136 = vpop.permute.xlu0 %3135
      %3137 = vrot.lane.b32.xlu0 %v3116, 8
      %v3138 = vpop.permute.xlu0 %3137
      %3139 = vrot.lane.b32.xlu0 %v3117, 8
      %v3140 = vpop.permute.xlu0 %3139
      %3141 = vrot.lane.b32.xlu0 %v3118, 8
      %v3142 = vpop.permute.xlu0 %3141
      %3143 = vrot.lane.b32.xlu0 %v3119, 8
      %v3144 = vpop.permute.xlu0 %3143
      %3145 = vrot.lane.b32.xlu0 %v3120, 8
      %v3146 = vpop.permute.xlu0 %3145
      %3147 = vrot.lane.b32.xlu0 %v3121, 8
      %v3148 = vpop.permute.xlu0 %3147
      %3149 = vrot.lane.b32.xlu0 %v3122, 8
      %v3150 = vpop.permute.xlu0 %3149
      %3151 = vrot.lane.b32.xlu0 %v3123, 8
      %v3152 = vpop.permute.xlu0 %3151
      %3153 = vrot.lane.b32.xlu0 %v3124, 8
      %v3154 = vpop.permute.xlu0 %3153
      %3155 = vrot.lane.b32.xlu0 %v3125, 8
      %v3156 = vpop.permute.xlu0 %3155
      %3157 = vrot.lane.b32.xlu0 %v3126, 8
      %v3158 = vpop.permute.xlu0 %3157
      %v3175 = vunpack.c.l.b16 %v1719
      %v3176 = vunpack.c.l.b16 %v1720
      %v3177 = vunpack.c.l.b16 %v1721
      %v3178 = vunpack.c.l.b16 %v1722
      %v3179 = vunpack.c.l.b16 %v1723
      %v3180 = vunpack.c.l.b16 %v1724
      %v3181 = vunpack.c.l.b16 %v1725
      %v3182 = vunpack.c.l.b16 %v1726
      %v3183 = vunpack.c.l.b16 %v1727
      %v3184 = vunpack.c.l.b16 %v1728
      %v3185 = vunpack.c.l.b16 %v1729
      %v3186 = vunpack.c.l.b16 %v1730
      %v3187 = vunpack.c.l.b16 %v1731
      %v3188 = vunpack.c.l.b16 %v1732
      %v3189 = vunpack.c.l.b16 %v1733
      %v3190 = vunpack.c.l.b16 %v1734
      %v3191 = vunpack.c.l.b16 %v1735
      %v3192 = vunpack.c.l.b16 %v1736
      %v3193 = vunpack.c.l.b16 %v1737
      %v3194 = vunpack.c.l.b16 %v1738
      %v3195 = vunpack.c.l.b16 %v1739
      %v3196 = vunpack.c.l.b16 %v1740
      %v3197 = vunpack.c.l.b16 %v1741
      %v3198 = vunpack.c.l.b16 %v1742
      %v3199 = vunpack.c.l.b16 %v1743
      %v3200 = vunpack.c.l.b16 %v1744
      %v3201 = vunpack.c.l.b16 %v1745
      %v3202 = vunpack.c.l.b16 %v1746
      %v3203 = vunpack.c.l.b16 %v1747
      %v3204 = vunpack.c.l.b16 %v1748
      %v3205 = vunpack.c.l.b16 %v1749
      %v3206 = vunpack.c.l.b16 %v1750
      %v3207 = vpack.c.b16 %v3176, %v3175
      %v3208 = vpack.c.b16 %v3178, %v3177
      %v3209 = vpack.c.b16 %v3180, %v3179
      %v3210 = vpack.c.b16 %v3182, %v3181
      %v3211 = vpack.c.b16 %v3184, %v3183
      %v3212 = vpack.c.b16 %v3186, %v3185
      %v3213 = vpack.c.b16 %v3188, %v3187
      %v3214 = vpack.c.b16 %v3190, %v3189
      %v3215 = vpack.c.b16 %v3192, %v3191
      %v3216 = vpack.c.b16 %v3194, %v3193
      %v3217 = vpack.c.b16 %v3196, %v3195
      %v3218 = vpack.c.b16 %v3198, %v3197
      %v3219 = vpack.c.b16 %v3200, %v3199
      %v3220 = vpack.c.b16 %v3202, %v3201
      %v3221 = vpack.c.b16 %v3204, %v3203
      %v3222 = vpack.c.b16 %v3206, %v3205
      %3223 = vrot.lane.b32.xlu0 %v3207, 12
      %v3224 = vpop.permute.xlu0 %3223
      %3225 = vrot.lane.b32.xlu0 %v3208, 12
      %v3226 = vpop.permute.xlu0 %3225
      %3227 = vrot.lane.b32.xlu0 %v3209, 12
      %v3228 = vpop.permute.xlu0 %3227
      %3229 = vrot.lane.b32.xlu0 %v3210, 12
      %v3230 = vpop.permute.xlu0 %3229
      %3231 = vrot.lane.b32.xlu0 %v3211, 12
      %v3232 = vpop.permute.xlu0 %3231
      %3233 = vrot.lane.b32.xlu0 %v3212, 12
      %v3234 = vpop.permute.xlu0 %3233
      %3235 = vrot.lane.b32.xlu0 %v3213, 12
      %v3236 = vpop.permute.xlu0 %3235
      %3237 = vrot.lane.b32.xlu0 %v3214, 12
      %v3238 = vpop.permute.xlu0 %3237
      %3239 = vrot.lane.b32.xlu0 %v3215, 12
      %v3240 = vpop.permute.xlu0 %3239
      %3241 = vrot.lane.b32.xlu0 %v3216, 12
      %v3242 = vpop.permute.xlu0 %3241
      %3243 = vrot.lane.b32.xlu0 %v3217, 12
      %v3244 = vpop.permute.xlu0 %3243
      %3245 = vrot.lane.b32.xlu0 %v3218, 12
      %v3246 = vpop.permute.xlu0 %3245
      %3247 = vrot.lane.b32.xlu0 %v3219, 12
      %v3248 = vpop.permute.xlu0 %3247
      %3249 = vrot.lane.b32.xlu0 %v3220, 12
      %v3250 = vpop.permute.xlu0 %3249
      %3251 = vrot.lane.b32.xlu0 %v3221, 12
      %v3252 = vpop.permute.xlu0 %3251
      %3253 = vrot.lane.b32.xlu0 %v3222, 12
      %v3254 = vpop.permute.xlu0 %3253
      %v3255 = vunpack.c.l.b16 %v1780
      %v3256 = vunpack.c.l.b16 %v1790
      %v3257 = vunpack.c.l.b16 %v1804
      %v3258 = vunpack.c.l.b16 %v1814
      %v3259 = vunpack.c.l.b16 %v1828
      %v3260 = vunpack.c.l.b16 %v1838
      %v3261 = vunpack.c.l.b16 %v1852
      %v3262 = vunpack.c.l.b16 %v1862
      %v3263 = vunpack.c.l.b16 %v1876
      %v3264 = vunpack.c.l.b16 %v1886
      %v3265 = vunpack.c.l.b16 %v1900
      %v3266 = vunpack.c.l.b16 %v1910
      %v3267 = vunpack.c.l.b16 %v1924
      %v3268 = vunpack.c.l.b16 %v1934
      %v3269 = vunpack.c.l.b16 %v1948
      %v3270 = vunpack.c.l.b16 %v1958
      %v3271 = vunpack.c.l.b16 %v1972
      %v3272 = vunpack.c.l.b16 %v1982
      %v3273 = vunpack.c.l.b16 %v1996
      %v3274 = vunpack.c.l.b16 %v2006
      %v3275 = vunpack.c.l.b16 %v2020
      %v3276 = vunpack.c.l.b16 %v2030
      %v3277 = vunpack.c.l.b16 %v2044
      %v3278 = vunpack.c.l.b16 %v2054
      %v3279 = vunpack.c.l.b16 %v2068
      %v3280 = vunpack.c.l.b16 %v2078
      %v3281 = vunpack.c.l.b16 %v2092
      %v3282 = vunpack.c.l.b16 %v2102
      %v3283 = vunpack.c.l.b16 %v2116
      %v3284 = vunpack.c.l.b16 %v2126
      %v3285 = vunpack.c.l.b16 %v2140
      %v3286 = vunpack.c.l.b16 %v2150
      %v3287 = vpack.c.b16 %v3256, %v3255
      %v3288 = vpack.c.b16 %v3258, %v3257
      %v3289 = vpack.c.b16 %v3260, %v3259
      %v3290 = vpack.c.b16 %v3262, %v3261
      %v3291 = vpack.c.b16 %v3264, %v3263
      %v3292 = vpack.c.b16 %v3266, %v3265
      %v3293 = vpack.c.b16 %v3268, %v3267
      %v3294 = vpack.c.b16 %v3270, %v3269
      %v3295 = vpack.c.b16 %v3272, %v3271
      %v3296 = vpack.c.b16 %v3274, %v3273
      %v3297 = vpack.c.b16 %v3276, %v3275
      %v3298 = vpack.c.b16 %v3278, %v3277
      %v3299 = vpack.c.b16 %v3280, %v3279
      %v3300 = vpack.c.b16 %v3282, %v3281
      %v3301 = vpack.c.b16 %v3284, %v3283
      %v3302 = vpack.c.b16 %v3286, %v3285
      %3303 = vrot.lane.b32.xlu0 %v3287, 16
      %v3304 = vpop.permute.xlu0 %3303
      %3305 = vrot.lane.b32.xlu0 %v3288, 16
      %v3306 = vpop.permute.xlu0 %3305
      %3307 = vrot.lane.b32.xlu0 %v3289, 16
      %v3308 = vpop.permute.xlu0 %3307
      %3309 = vrot.lane.b32.xlu0 %v3290, 16
      %v3310 = vpop.permute.xlu0 %3309
      %3311 = vrot.lane.b32.xlu0 %v3291, 16
      %v3312 = vpop.permute.xlu0 %3311
      %3313 = vrot.lane.b32.xlu0 %v3292, 16
      %v3314 = vpop.permute.xlu0 %3313
      %3315 = vrot.lane.b32.xlu0 %v3293, 16
      %v3316 = vpop.permute.xlu0 %3315
      %3317 = vrot.lane.b32.xlu0 %v3294, 16
      %v3318 = vpop.permute.xlu0 %3317
      %3319 = vrot.lane.b32.xlu0 %v3295, 16
      %v3320 = vpop.permute.xlu0 %3319
      %3321 = vrot.lane.b32.xlu0 %v3296, 16
      %v3322 = vpop.permute.xlu0 %3321
      %3323 = vrot.lane.b32.xlu0 %v3297, 16
      %v3324 = vpop.permute.xlu0 %3323
      %3325 = vrot.lane.b32.xlu0 %v3298, 16
      %v3326 = vpop.permute.xlu0 %3325
      %3327 = vrot.lane.b32.xlu0 %v3299, 16
      %v3328 = vpop.permute.xlu0 %3327
      %3329 = vrot.lane.b32.xlu0 %v3300, 16
      %v3330 = vpop.permute.xlu0 %3329
      %3331 = vrot.lane.b32.xlu0 %v3301, 16
      %v3332 = vpop.permute.xlu0 %3331
      %3333 = vrot.lane.b32.xlu0 %v3302, 16
      %v3334 = vpop.permute.xlu0 %3333
      %v3335 = vunpack.c.l.b16 %v2218
      %v3336 = vunpack.c.l.b16 %v2221
      %v3337 = vunpack.c.l.b16 %v2225
      %v3338 = vunpack.c.l.b16 %v2228
      %v3339 = vunpack.c.l.b16 %v2232
      %v3340 = vunpack.c.l.b16 %v2235
      %v3341 = vunpack.c.l.b16 %v2239
      %v3342 = vunpack.c.l.b16 %v2242
      %v3343 = vunpack.c.l.b16 %v2246
      %v3344 = vunpack.c.l.b16 %v2249
      %v3345 = vunpack.c.l.b16 %v2253
      %v3346 = vunpack.c.l.b16 %v2256
      %v3347 = vunpack.c.l.b16 %v2260
      %v3348 = vunpack.c.l.b16 %v2263
      %v3349 = vunpack.c.l.b16 %v2267
      %v3350 = vunpack.c.l.b16 %v2270
      %v3351 = vunpack.c.l.b16 %v2274
      %v3352 = vunpack.c.l.b16 %v2277
      %v3353 = vunpack.c.l.b16 %v2281
      %v3354 = vunpack.c.l.b16 %v2284
      %v3355 = vunpack.c.l.b16 %v2288
      %v3356 = vunpack.c.l.b16 %v2291
      %v3357 = vunpack.c.l.b16 %v2295
      %v3358 = vunpack.c.l.b16 %v2298
      %v3359 = vunpack.c.l.b16 %v2302
      %v3360 = vunpack.c.l.b16 %v2305
      %v3361 = vunpack.c.l.b16 %v2309
      %v3362 = vunpack.c.l.b16 %v2312
      %v3363 = vunpack.c.l.b16 %v2316
      %v3364 = vunpack.c.l.b16 %v2319
      %v3365 = vunpack.c.l.b16 %v2323
      %v3366 = vunpack.c.l.b16 %v2326
      %v3367 = vpack.c.b16 %v3336, %v3335
      %v3368 = vpack.c.b16 %v3338, %v3337
      %v3369 = vpack.c.b16 %v3340, %v3339
      %v3370 = vpack.c.b16 %v3342, %v3341
      %v3371 = vpack.c.b16 %v3344, %v3343
      %v3372 = vpack.c.b16 %v3346, %v3345
      %v3373 = vpack.c.b16 %v3348, %v3347
      %v3374 = vpack.c.b16 %v3350, %v3349
      %v3375 = vpack.c.b16 %v3352, %v3351
      %v3376 = vpack.c.b16 %v3354, %v3353
      %v3377 = vpack.c.b16 %v3356, %v3355
      %v3378 = vpack.c.b16 %v3358, %v3357
      %v3379 = vpack.c.b16 %v3360, %v3359
      %v3380 = vpack.c.b16 %v3362, %v3361
      %v3381 = vpack.c.b16 %v3364, %v3363
      %v3382 = vpack.c.b16 %v3366, %v3365
      %3383 = vrot.lane.b32.xlu0 %v3367, 20
      %v3384 = vpop.permute.xlu0 %3383
      %3385 = vrot.lane.b32.xlu0 %v3368, 20
      %v3386 = vpop.permute.xlu0 %3385
      %3387 = vrot.lane.b32.xlu0 %v3369, 20
      %v3388 = vpop.permute.xlu0 %3387
      %3389 = vrot.lane.b32.xlu0 %v3370, 20
      %v3390 = vpop.permute.xlu0 %3389
      %3391 = vrot.lane.b32.xlu0 %v3371, 20
      %v3392 = vpop.permute.xlu0 %3391
      %3393 = vrot.lane.b32.xlu0 %v3372, 20
      %v3394 = vpop.permute.xlu0 %3393
      %3395 = vrot.lane.b32.xlu0 %v3373, 20
      %v3396 = vpop.permute.xlu0 %3395
      %3397 = vrot.lane.b32.xlu0 %v3374, 20
      %v3398 = vpop.permute.xlu0 %3397
      %3399 = vrot.lane.b32.xlu0 %v3375, 20
      %v3400 = vpop.permute.xlu0 %3399
      %3401 = vrot.lane.b32.xlu0 %v3376, 20
      %v3402 = vpop.permute.xlu0 %3401
      %3403 = vrot.lane.b32.xlu0 %v3377, 20
      %v3404 = vpop.permute.xlu0 %3403
      %3405 = vrot.lane.b32.xlu0 %v3378, 20
      %v3406 = vpop.permute.xlu0 %3405
      %3407 = vrot.lane.b32.xlu0 %v3379, 20
      %v3408 = vpop.permute.xlu0 %3407
      %3409 = vrot.lane.b32.xlu0 %v3380, 20
      %v3410 = vpop.permute.xlu0 %3409
      %3411 = vrot.lane.b32.xlu0 %v3381, 20
      %v3412 = vpop.permute.xlu0 %3411
      %3413 = vrot.lane.b32.xlu0 %v3382, 20
      %v3414 = vpop.permute.xlu0 %3413
      %v3431 = vunpack.c.l.b16 %v2327
      %v3432 = vunpack.c.l.b16 %v2328
      %v3433 = vunpack.c.l.b16 %v2329
      %v3434 = vunpack.c.l.b16 %v2330
      %v3435 = vunpack.c.l.b16 %v2331
      %v3436 = vunpack.c.l.b16 %v2332
      %v3437 = vunpack.c.l.b16 %v2333
      %v3438 = vunpack.c.l.b16 %v2334
      %v3439 = vunpack.c.l.b16 %v2335
      %v3440 = vunpack.c.l.b16 %v2336
      %v3441 = vunpack.c.l.b16 %v2337
      %v3442 = vunpack.c.l.b16 %v2338
      %v3443 = vunpack.c.l.b16 %v2339
      %v3444 = vunpack.c.l.b16 %v2340
      %v3445 = vunpack.c.l.b16 %v2341
      %v3446 = vunpack.c.l.b16 %v2342
      %v3447 = vunpack.c.l.b16 %v2343
      %v3448 = vunpack.c.l.b16 %v2344
      %v3449 = vunpack.c.l.b16 %v2345
      %v3450 = vunpack.c.l.b16 %v2346
      %v3451 = vunpack.c.l.b16 %v2347
      %v3452 = vunpack.c.l.b16 %v2348
      %v3453 = vunpack.c.l.b16 %v2349
      %v3454 = vunpack.c.l.b16 %v2350
      %v3455 = vunpack.c.l.b16 %v2351
      %v3456 = vunpack.c.l.b16 %v2352
      %v3457 = vunpack.c.l.b16 %v2353
      %v3458 = vunpack.c.l.b16 %v2354
      %v3459 = vunpack.c.l.b16 %v2355
      %v3460 = vunpack.c.l.b16 %v2356
      %v3461 = vunpack.c.l.b16 %v2357
      %v3462 = vunpack.c.l.b16 %v2358
      %v3463 = vpack.c.b16 %v3432, %v3431
      %v3464 = vpack.c.b16 %v3434, %v3433
      %v3465 = vpack.c.b16 %v3436, %v3435
      %v3466 = vpack.c.b16 %v3438, %v3437
      %v3467 = vpack.c.b16 %v3440, %v3439
      %v3468 = vpack.c.b16 %v3442, %v3441
      %v3469 = vpack.c.b16 %v3444, %v3443
      %v3470 = vpack.c.b16 %v3446, %v3445
      %v3471 = vpack.c.b16 %v3448, %v3447
      %v3472 = vpack.c.b16 %v3450, %v3449
      %v3473 = vpack.c.b16 %v3452, %v3451
      %v3474 = vpack.c.b16 %v3454, %v3453
      %v3475 = vpack.c.b16 %v3456, %v3455
      %v3476 = vpack.c.b16 %v3458, %v3457
      %v3477 = vpack.c.b16 %v3460, %v3459
      %v3478 = vpack.c.b16 %v3462, %v3461
      %3479 = vrot.lane.b32.xlu0 %v3463, 24
      %v3480 = vpop.permute.xlu0 %3479
      %3481 = vrot.lane.b32.xlu0 %v3464, 24
      %v3482 = vpop.permute.xlu0 %3481
      %3483 = vrot.lane.b32.xlu0 %v3465, 24
      %v3484 = vpop.permute.xlu0 %3483
      %3485 = vrot.lane.b32.xlu0 %v3466, 24
      %v3486 = vpop.permute.xlu0 %3485
      %3487 = vrot.lane.b32.xlu0 %v3467, 24
      %v3488 = vpop.permute.xlu0 %3487
      %3489 = vrot.lane.b32.xlu0 %v3468, 24
      %v3490 = vpop.permute.xlu0 %3489
      %3491 = vrot.lane.b32.xlu0 %v3469, 24
      %v3492 = vpop.permute.xlu0 %3491
      %3493 = vrot.lane.b32.xlu0 %v3470, 24
      %v3494 = vpop.permute.xlu0 %3493
      %3495 = vrot.lane.b32.xlu0 %v3471, 24
      %v3496 = vpop.permute.xlu0 %3495
      %3497 = vrot.lane.b32.xlu0 %v3472, 24
      %v3498 = vpop.permute.xlu0 %3497
      %3499 = vrot.lane.b32.xlu0 %v3473, 24
      %v3500 = vpop.permute.xlu0 %3499
      %3501 = vrot.lane.b32.xlu0 %v3474, 24
      %v3502 = vpop.permute.xlu0 %3501
      %3503 = vrot.lane.b32.xlu0 %v3475, 24
      %v3504 = vpop.permute.xlu0 %3503
      %3505 = vrot.lane.b32.xlu0 %v3476, 24
      %v3506 = vpop.permute.xlu0 %3505
      %3507 = vrot.lane.b32.xlu0 %v3477, 24
      %v3508 = vpop.permute.xlu0 %3507
      %3509 = vrot.lane.b32.xlu0 %v3478, 24
      %v3510 = vpop.permute.xlu0 %3509
      %v3511 = vunpack.c.l.b16 %v2388
      %v3512 = vunpack.c.l.b16 %v2398
      %v3513 = vunpack.c.l.b16 %v2412
      %v3514 = vunpack.c.l.b16 %v2422
      %v3515 = vunpack.c.l.b16 %v2436
      %v3516 = vunpack.c.l.b16 %v2446
      %v3517 = vunpack.c.l.b16 %v2460
      %v3518 = vunpack.c.l.b16 %v2470
      %v3519 = vunpack.c.l.b16 %v2484
      %v3520 = vunpack.c.l.b16 %v2494
      %v3521 = vunpack.c.l.b16 %v2508
      %v3522 = vunpack.c.l.b16 %v2518
      %v3523 = vunpack.c.l.b16 %v2532
      %v3524 = vunpack.c.l.b16 %v2542
      %v3525 = vunpack.c.l.b16 %v2556
      %v3526 = vunpack.c.l.b16 %v2566
      %v3527 = vunpack.c.l.b16 %v2580
      %v3528 = vunpack.c.l.b16 %v2590
      %v3529 = vunpack.c.l.b16 %v2604
      %v3530 = vunpack.c.l.b16 %v2614
      %v3531 = vunpack.c.l.b16 %v2628
      %v3532 = vunpack.c.l.b16 %v2638
      %v3533 = vunpack.c.l.b16 %v2652
      %v3534 = vunpack.c.l.b16 %v2662
      %v3535 = vunpack.c.l.b16 %v2676
      %v3536 = vunpack.c.l.b16 %v2686
      %v3537 = vunpack.c.l.b16 %v2700
      %v3538 = vunpack.c.l.b16 %v2710
      %v3539 = vunpack.c.l.b16 %v2724
      %v3540 = vunpack.c.l.b16 %v2734
      %v3541 = vunpack.c.l.b16 %v2748
      %v3542 = vunpack.c.l.b16 %v2758
      %v3543 = vpack.c.b16 %v3512, %v3511
      %v3544 = vpack.c.b16 %v3514, %v3513
      %v3545 = vpack.c.b16 %v3516, %v3515
      %v3546 = vpack.c.b16 %v3518, %v3517
      %v3547 = vpack.c.b16 %v3520, %v3519
      %v3548 = vpack.c.b16 %v3522, %v3521
      %v3549 = vpack.c.b16 %v3524, %v3523
      %v3550 = vpack.c.b16 %v3526, %v3525
      %v3551 = vpack.c.b16 %v3528, %v3527
      %v3552 = vpack.c.b16 %v3530, %v3529
      %v3553 = vpack.c.b16 %v3532, %v3531
      %v3554 = vpack.c.b16 %v3534, %v3533
      %v3555 = vpack.c.b16 %v3536, %v3535
      %v3556 = vpack.c.b16 %v3538, %v3537
      %v3557 = vpack.c.b16 %v3540, %v3539
      %v3558 = vpack.c.b16 %v3542, %v3541
      %3559 = vrot.lane.b32.xlu0 %v3543, 28
      %v3560 = vpop.permute.xlu0 %3559
      %3561 = vrot.lane.b32.xlu0 %v3544, 28
      %v3562 = vpop.permute.xlu0 %3561
      %3563 = vrot.lane.b32.xlu0 %v3545, 28
      %v3564 = vpop.permute.xlu0 %3563
      %3565 = vrot.lane.b32.xlu0 %v3546, 28
      %v3566 = vpop.permute.xlu0 %3565
      %3567 = vrot.lane.b32.xlu0 %v3547, 28
      %v3568 = vpop.permute.xlu0 %3567
      %3569 = vrot.lane.b32.xlu0 %v3548, 28
      %v3570 = vpop.permute.xlu0 %3569
      %3571 = vrot.lane.b32.xlu0 %v3549, 28
      %v3572 = vpop.permute.xlu0 %3571
      %3573 = vrot.lane.b32.xlu0 %v3550, 28
      %v3574 = vpop.permute.xlu0 %3573
      %3575 = vrot.lane.b32.xlu0 %v3551, 28
      %v3576 = vpop.permute.xlu0 %3575
      %3577 = vrot.lane.b32.xlu0 %v3552, 28
      %v3578 = vpop.permute.xlu0 %3577
      %3579 = vrot.lane.b32.xlu0 %v3553, 28
      %v3580 = vpop.permute.xlu0 %3579
      %3581 = vrot.lane.b32.xlu0 %v3554, 28
      %v3582 = vpop.permute.xlu0 %3581
      %3583 = vrot.lane.b32.xlu0 %v3555, 28
      %v3584 = vpop.permute.xlu0 %3583
      %3585 = vrot.lane.b32.xlu0 %v3556, 28
      %v3586 = vpop.permute.xlu0 %3585
      %3587 = vrot.lane.b32.xlu0 %v3557, 28
      %v3588 = vpop.permute.xlu0 %3587
      %3589 = vrot.lane.b32.xlu0 %v3558, 28
      %v3590 = vpop.permute.xlu0 %3589
      %v3591 = vunpack.c.l.b16 %v2826
      %v3592 = vunpack.c.l.b16 %v2829
      %v3593 = vunpack.c.l.b16 %v2833
      %v3594 = vunpack.c.l.b16 %v2836
      %v3595 = vunpack.c.l.b16 %v2840
      %v3596 = vunpack.c.l.b16 %v2843
      %v3597 = vunpack.c.l.b16 %v2847
      %v3598 = vunpack.c.l.b16 %v2850
      %v3599 = vunpack.c.l.b16 %v2854
      %v3600 = vunpack.c.l.b16 %v2857
      %v3601 = vunpack.c.l.b16 %v2861
      %v3602 = vunpack.c.l.b16 %v2864
      %v3603 = vunpack.c.l.b16 %v2868
      %v3604 = vunpack.c.l.b16 %v2871
      %v3605 = vunpack.c.l.b16 %v2875
      %v3606 = vunpack.c.l.b16 %v2878
      %v3607 = vunpack.c.l.b16 %v2882
      %v3608 = vunpack.c.l.b16 %v2885
      %v3609 = vunpack.c.l.b16 %v2889
      %v3610 = vunpack.c.l.b16 %v2892
      %v3611 = vunpack.c.l.b16 %v2896
      %v3612 = vunpack.c.l.b16 %v2899
      %v3613 = vunpack.c.l.b16 %v2903
      %v3614 = vunpack.c.l.b16 %v2906
      %v3615 = vunpack.c.l.b16 %v2910
      %v3616 = vunpack.c.l.b16 %v2913
      %v3617 = vunpack.c.l.b16 %v2917
      %v3618 = vunpack.c.l.b16 %v2920
      %v3619 = vunpack.c.l.b16 %v2924
      %v3620 = vunpack.c.l.b16 %v2927
      %v3621 = vunpack.c.l.b16 %v2931
      %v3622 = vunpack.c.l.b16 %v2934
      %v3623 = vpack.c.b16 %v3592, %v3591
      %v3624 = vpack.c.b16 %v3594, %v3593
      %v3625 = vpack.c.b16 %v3596, %v3595
      %v3626 = vpack.c.b16 %v3598, %v3597
      %v3627 = vpack.c.b16 %v3600, %v3599
      %v3628 = vpack.c.b16 %v3602, %v3601
      %v3629 = vpack.c.b16 %v3604, %v3603
      %v3630 = vpack.c.b16 %v3606, %v3605
      %v3631 = vpack.c.b16 %v3608, %v3607
      %v3632 = vpack.c.b16 %v3610, %v3609
      %v3633 = vpack.c.b16 %v3612, %v3611
      %v3634 = vpack.c.b16 %v3614, %v3613
      %v3635 = vpack.c.b16 %v3616, %v3615
      %v3636 = vpack.c.b16 %v3618, %v3617
      %v3637 = vpack.c.b16 %v3620, %v3619
      %v3638 = vpack.c.b16 %v3622, %v3621
      %3639 = vrot.lane.b32.xlu0 %v3623, 32
      %v3640 = vpop.permute.xlu0 %3639
      %3641 = vrot.lane.b32.xlu0 %v3624, 32
      %v3642 = vpop.permute.xlu0 %3641
      %3643 = vrot.lane.b32.xlu0 %v3625, 32
      %v3644 = vpop.permute.xlu0 %3643
      %3645 = vrot.lane.b32.xlu0 %v3626, 32
      %v3646 = vpop.permute.xlu0 %3645
      %3647 = vrot.lane.b32.xlu0 %v3627, 32
      %v3648 = vpop.permute.xlu0 %3647
      %3649 = vrot.lane.b32.xlu0 %v3628, 32
      %v3650 = vpop.permute.xlu0 %3649
      %3651 = vrot.lane.b32.xlu0 %v3629, 32
      %v3652 = vpop.permute.xlu0 %3651
      %3653 = vrot.lane.b32.xlu0 %v3630, 32
      %v3654 = vpop.permute.xlu0 %3653
      %3655 = vrot.lane.b32.xlu0 %v3631, 32
      %v3656 = vpop.permute.xlu0 %3655
      %3657 = vrot.lane.b32.xlu0 %v3632, 32
      %v3658 = vpop.permute.xlu0 %3657
      %3659 = vrot.lane.b32.xlu0 %v3633, 32
      %v3660 = vpop.permute.xlu0 %3659
      %3661 = vrot.lane.b32.xlu0 %v3634, 32
      %v3662 = vpop.permute.xlu0 %3661
      %3663 = vrot.lane.b32.xlu0 %v3635, 32
      %v3664 = vpop.permute.xlu0 %3663
      %3665 = vrot.lane.b32.xlu0 %v3636, 32
      %v3666 = vpop.permute.xlu0 %3665
      %3667 = vrot.lane.b32.xlu0 %v3637, 32
      %v3668 = vpop.permute.xlu0 %3667
      %3669 = vrot.lane.b32.xlu0 %v3638, 32
      %v3670 = vpop.permute.xlu0 %3669
      %vm3671 = vcmask 31744
      %v3674 = vsel %vm3671, %v2983, %v3048
      %v3677 = vsel %vm3671, %v2984, %v3050
      %v3680 = vsel %vm3671, %v2985, %v3052
      %v3683 = vsel %vm3671, %v2986, %v3054
      %v3686 = vsel %vm3671, %v2987, %v3056
      %v3689 = vsel %vm3671, %v2988, %v3058
      %v3692 = vsel %vm3671, %v2989, %v3060
      %v3695 = vsel %vm3671, %v2990, %v3062
      %v3698 = vsel %vm3671, %v2991, %v3064
      %v3701 = vsel %vm3671, %v2992, %v3066
      %v3704 = vsel %vm3671, %v2993, %v3068
      %v3707 = vsel %vm3671, %v2994, %v3070
      %v3710 = vsel %vm3671, %v2995, %v3072
      %v3713 = vsel %vm3671, %v2996, %v3074
      %v3716 = vsel %vm3671, %v2997, %v3076
      %v3719 = vsel %vm3671, %v2998, %v3078
      %vm3720 = vcmask 64512
      %v3722 = vsel %vm3720, %v3674, %v3128
      %v3724 = vsel %vm3720, %v3677, %v3130
      %v3726 = vsel %vm3720, %v3680, %v3132
      %v3728 = vsel %vm3720, %v3683, %v3134
      %v3730 = vsel %vm3720, %v3686, %v3136
      %v3732 = vsel %vm3720, %v3689, %v3138
      %v3734 = vsel %vm3720, %v3692, %v3140
      %v3736 = vsel %vm3720, %v3695, %v3142
      %v3738 = vsel %vm3720, %v3698, %v3144
      %v3740 = vsel %vm3720, %v3701, %v3146
      %v3742 = vsel %vm3720, %v3704, %v3148
      %v3744 = vsel %vm3720, %v3707, %v3150
      %v3746 = vsel %vm3720, %v3710, %v3152
      %v3748 = vsel %vm3720, %v3713, %v3154
      %v3750 = vsel %vm3720, %v3716, %v3156
      %v3752 = vsel %vm3720, %v3719, %v3158
      %vm3753 = vcmask 97280
      %v3755 = vsel %vm3753, %v3722, %v3224
      %v3757 = vsel %vm3753, %v3724, %v3226
      %v3759 = vsel %vm3753, %v3726, %v3228
      %v3761 = vsel %vm3753, %v3728, %v3230
      %v3763 = vsel %vm3753, %v3730, %v3232
      %v3765 = vsel %vm3753, %v3732, %v3234
      %v3767 = vsel %vm3753, %v3734, %v3236
      %v3769 = vsel %vm3753, %v3736, %v3238
      %v3771 = vsel %vm3753, %v3738, %v3240
      %v3773 = vsel %vm3753, %v3740, %v3242
      %v3775 = vsel %vm3753, %v3742, %v3244
      %v3777 = vsel %vm3753, %v3744, %v3246
      %v3779 = vsel %vm3753, %v3746, %v3248
      %v3781 = vsel %vm3753, %v3748, %v3250
      %v3783 = vsel %vm3753, %v3750, %v3252
      %v3785 = vsel %vm3753, %v3752, %v3254
      %vm3786 = vcmask 130048
      %v3788 = vsel %vm3786, %v3755, %v3304
      %v3790 = vsel %vm3786, %v3757, %v3306
      %v3792 = vsel %vm3786, %v3759, %v3308
      %v3794 = vsel %vm3786, %v3761, %v3310
      %v3796 = vsel %vm3786, %v3763, %v3312
      %v3798 = vsel %vm3786, %v3765, %v3314
      %v3800 = vsel %vm3786, %v3767, %v3316
      %v3802 = vsel %vm3786, %v3769, %v3318
      %v3804 = vsel %vm3786, %v3771, %v3320
      %v3806 = vsel %vm3786, %v3773, %v3322
      %v3808 = vsel %vm3786, %v3775, %v3324
      %v3810 = vsel %vm3786, %v3777, %v3326
      %v3812 = vsel %vm3786, %v3779, %v3328
      %v3814 = vsel %vm3786, %v3781, %v3330
      %v3816 = vsel %vm3786, %v3783, %v3332
      %v3818 = vsel %vm3786, %v3785, %v3334
      %vm3819 = vcmask 162816
      %v3821 = vsel %vm3819, %v3788, %v3384
      %v3823 = vsel %vm3819, %v3790, %v3386
      %v3825 = vsel %vm3819, %v3792, %v3388
      %v3827 = vsel %vm3819, %v3794, %v3390
      %v3829 = vsel %vm3819, %v3796, %v3392
      %v3831 = vsel %vm3819, %v3798, %v3394
      %v3833 = vsel %vm3819, %v3800, %v3396
      %v3835 = vsel %vm3819, %v3802, %v3398
      %v3837 = vsel %vm3819, %v3804, %v3400
      %v3839 = vsel %vm3819, %v3806, %v3402
      %v3841 = vsel %vm3819, %v3808, %v3404
      %v3843 = vsel %vm3819, %v3810, %v3406
      %v3845 = vsel %vm3819, %v3812, %v3408
      %v3847 = vsel %vm3819, %v3814, %v3410
      %v3849 = vsel %vm3819, %v3816, %v3412
      %v3851 = vsel %vm3819, %v3818, %v3414
      %vm3852 = vcmask 195584
      %v3854 = vsel %vm3852, %v3821, %v3480
      %v3856 = vsel %vm3852, %v3823, %v3482
      %v3858 = vsel %vm3852, %v3825, %v3484
      %v3860 = vsel %vm3852, %v3827, %v3486
      %v3862 = vsel %vm3852, %v3829, %v3488
      %v3864 = vsel %vm3852, %v3831, %v3490
      %v3866 = vsel %vm3852, %v3833, %v3492
      %v3868 = vsel %vm3852, %v3835, %v3494
      %v3870 = vsel %vm3852, %v3837, %v3496
      %v3872 = vsel %vm3852, %v3839, %v3498
      %v3874 = vsel %vm3852, %v3841, %v3500
      %v3876 = vsel %vm3852, %v3843, %v3502
      %v3878 = vsel %vm3852, %v3845, %v3504
      %v3880 = vsel %vm3852, %v3847, %v3506
      %v3882 = vsel %vm3852, %v3849, %v3508
      %v3884 = vsel %vm3852, %v3851, %v3510
      %vm3885 = vcmask 228352
      %v3887 = vsel %vm3885, %v3854, %v3560
      %v3889 = vsel %vm3885, %v3856, %v3562
      %v3891 = vsel %vm3885, %v3858, %v3564
      %v3893 = vsel %vm3885, %v3860, %v3566
      %v3895 = vsel %vm3885, %v3862, %v3568
      %v3897 = vsel %vm3885, %v3864, %v3570
      %v3899 = vsel %vm3885, %v3866, %v3572
      %v3901 = vsel %vm3885, %v3868, %v3574
      %v3903 = vsel %vm3885, %v3870, %v3576
      %v3905 = vsel %vm3885, %v3872, %v3578
      %v3907 = vsel %vm3885, %v3874, %v3580
      %v3909 = vsel %vm3885, %v3876, %v3582
      %v3911 = vsel %vm3885, %v3878, %v3584
      %v3913 = vsel %vm3885, %v3880, %v3586
      %v3915 = vsel %vm3885, %v3882, %v3588
      %v3917 = vsel %vm3885, %v3884, %v3590
      %vm3918 = vcmask 261120
      %v3920 = vsel %vm3918, %v3887, %v3640
      %v3922 = vsel %vm3918, %v3889, %v3642
      %v3924 = vsel %vm3918, %v3891, %v3644
      %v3926 = vsel %vm3918, %v3893, %v3646
      %v3928 = vsel %vm3918, %v3895, %v3648
      %v3930 = vsel %vm3918, %v3897, %v3650
      %v3932 = vsel %vm3918, %v3899, %v3652
      %v3934 = vsel %vm3918, %v3901, %v3654
      %v3936 = vsel %vm3918, %v3903, %v3656
      %v3938 = vsel %vm3918, %v3905, %v3658
      %v3940 = vsel %vm3918, %v3907, %v3660
      %v3942 = vsel %vm3918, %v3909, %v3662
      %v3944 = vsel %vm3918, %v3911, %v3664
      %v3946 = vsel %vm3918, %v3913, %v3666
      %v3948 = vsel %vm3918, %v3915, %v3668
      %v3950 = vsel %vm3918, %v3917, %v3670
      %v3951 = vld [vmem:[%s1] sm:$0xf]
      %v3952 = vld [vmem:[%s1 + $0x4] sm:$0xf]
      %v3953 = vld [vmem:[%s1 + $0x8] sm:$0xf]
      %v3954 = vld [vmem:[%s1 + $0xc] sm:$0xf]
      %v3955 = vld [vmem:[%s1 + $0x10] sm:$0x3]
      %v3956 = vld [vmem:[%s2] sm:$0x1]
      %v3958 = vlaneseq
      %v3959 = vshrl.u32 %v3958, 7
      %v3960 = vsub.s32 0, %v3959
      %v3961 = vrot.slane %v3956, %v3960
      %v3968 = vunpack.c.l.b16 %v3951
      %v3969 = vunpack.c.l.b16 %v3952
      %v3970 = vunpack.c.l.b16 %v3953
      %v3971 = vunpack.c.l.b16 %v3954
      %v3972 = vunpack.c.l.b16 %v3955
      %v3973 = vpack.c.b16 %v3969, %v3968
      %v3974 = vpack.c.b16 %v3971, %v3970
      %v3975 = vpack.c.b16 %v3972, %v3972
      %vm3978 = vcmask 293888
      %v3979 = vsel %vm3978, %v3920, 0
      %v3981 = vsel %vm3978, %v3922, 0
      %v3983 = vsel %vm3978, %v3924, 0
      %v3985 = vsel %vm3978, %v3926, 0
      %v3987 = vsel %vm3978, %v3928, 0
      %v3989 = vsel %vm3978, %v3930, 0
      %v3991 = vsel %vm3978, %v3932, 0
      %v3993 = vsel %vm3978, %v3934, 0
      %v3995 = vsel %vm3978, %v3936, 0
      %v3997 = vsel %vm3978, %v3938, 0
      %v3999 = vsel %vm3978, %v3940, 0
      %v4001 = vsel %vm3978, %v3942, 0
      %v4003 = vsel %vm3978, %v3944, 0
      %v4005 = vsel %vm3978, %v3946, 0
      %v4007 = vsel %vm3978, %v3948, 0
      %v4009 = vsel %vm3978, %v3950, 0
      %vm4011 = vcmask 1041408
      %v4013 = vsel %vm4011, %v3975, 0
      %4015 = vmatprep.subr.bf16.mxu0 0
      %4016 = vmatpush1.bf16.msra.mxu0 %v3973
      %4017 = vmatprep.subr.bf16.mxu0 0
      %4018 = vmatpush1.bf16.msra.mxu0 %v3974
      %4019 = vmatprep.subr.bf16.mxu0 0
      %4020 = vmatpush1.bf16.msra.mxu0 %v4013
      %4021 = vmatprep.subr.bf16.mxu0 0
      %4022 = vmatpush1.bf16.msra.mxu0 0
      %4023 = vmatprep.subr.bf16.mxu0 0
      %4024 = vmatpush1.bf16.msra.mxu0 0
      %4025 = vmatprep.subr.bf16.mxu0 0
      %4026 = vmatpush1.bf16.msra.mxu0 0
      %4027 = vmatprep.subr.bf16.mxu0 0
      %4028 = vmatpush1.bf16.msra.mxu0 0
      %4029 = vmatprep.subr.bf16.mxu0 0
      %4030 = vmatpush1.bf16.msra.mxu0 0
      %4031 = vmatprep.subr.bf16.mxu0 0
      %4032 = vmatpush1.bf16.msra.mxu0 0
      %4033 = vmatprep.subr.bf16.mxu0 0
      %4034 = vmatpush1.bf16.msra.mxu0 0
      %4035 = vmatprep.subr.bf16.mxu0 0
      %4036 = vmatpush1.bf16.msra.mxu0 0
      %4037 = vmatprep.subr.bf16.mxu0 0
      %4038 = vmatpush1.bf16.msra.mxu0 0
      %4039 = vmatprep.subr.bf16.mxu0 0
      %4040 = vmatpush1.bf16.msra.mxu0 0
      %4041 = vmatprep.subr.bf16.mxu0 0
      %4042 = vmatpush1.bf16.msra.mxu0 0
      %4043 = vmatprep.subr.bf16.mxu0 0
      %4044 = vmatpush1.bf16.msra.mxu0 0
      %4045 = vmatprep.subr.bf16.mxu0 0
      %4046 = vmatpush1.bf16.msra.mxu0 0
      %4047 = vmatprep.mubr.bf16.mxu0 0
      %4048 = vmatmul.mubr.bf16.gmra.mrb[0].mxu0 %v3979
      %v4049 = vpop.f32.mrb[0].mxu0
      %v4050 = vadd.f32 %v3961, %v4049
      %v4051 = vpop.f32.mrb[0].mxu0
      %v4052 = vpop.f32.mrb[0].mxu0
      %v4053 = vadd.f32 %v3961, %v4052
      %v4054 = vpop.f32.mrb[0].mxu0
      %4055 = vmatprep.mubr.bf16.mxu0 0
      %4056 = vmatmul.mubr.bf16.gmra.mrb[0].mxu0 %v3981
      %v4057 = vpop.f32.mrb[0].mxu0
      %v4058 = vadd.f32 %v3961, %v4057
      %v4059 = vpop.f32.mrb[0].mxu0
      %v4060 = vpop.f32.mrb[0].mxu0
      %v4061 = vadd.f32 %v3961, %v4060
      %v4062 = vpop.f32.mrb[0].mxu0
      %4063 = vmatprep.mubr.bf16.mxu0 0
      %4064 = vmatmul.mubr.bf16.gmra.mrb[0].mxu0 %v3983
      %v4065 = vpop.f32.mrb[0].mxu0
      %v4066 = vadd.f32 %v3961, %v4065
      %v4067 = vpop.f32.mrb[0].mxu0
      %v4068 = vpop.f32.mrb[0].mxu0
      %v4069 = vadd.f32 %v3961, %v4068
      %v4070 = vpop.f32.mrb[0].mxu0
      %4071 = vmatprep.mubr.bf16.mxu0 0
      %4072 = vmatmul.mubr.bf16.gmra.mrb[0].mxu0 %v3985
      %v4073 = vpop.f32.mrb[0].mxu0
      %v4074 = vadd.f32 %v3961, %v4073
      %v4075 = vpop.f32.mrb[0].mxu0
      %v4076 = vpop.f32.mrb[0].mxu0
      %v4077 = vadd.f32 %v3961, %v4076
      %v4078 = vpop.f32.mrb[0].mxu0
      %4079 = vmatprep.mubr.bf16.mxu0 0
      %4080 = vmatmul.mubr.bf16.gmra.mrb[0].mxu0 %v3987
      %v4081 = vpop.f32.mrb[0].mxu0
      %v4082 = vadd.f32 %v3961, %v4081
      %v4083 = vpop.f32.mrb[0].mxu0
      %v4084 = vpop.f32.mrb[0].mxu0
      %v4085 = vadd.f32 %v3961, %v4084
      %v4086 = vpop.f32.mrb[0].mxu0
      %4087 = vmatprep.mubr.bf16.mxu0 0
      %4088 = vmatmul.mubr.bf16.gmra.mrb[0].mxu0 %v3989
      %v4089 = vpop.f32.mrb[0].mxu0
      %v4090 = vadd.f32 %v3961, %v4089
      %v4091 = vpop.f32.mrb[0].mxu0
      %v4092 = vpop.f32.mrb[0].mxu0
      %v4093 = vadd.f32 %v3961, %v4092
      %v4094 = vpop.f32.mrb[0].mxu0
      %4095 = vmatprep.mubr.bf16.mxu0 0
      %4096 = vmatmul.mubr.bf16.gmra.mrb[0].mxu0 %v3991
      %v4097 = vpop.f32.mrb[0].mxu0
      %v4098 = vadd.f32 %v3961, %v4097
      %v4099 = vpop.f32.mrb[0].mxu0
      %v4100 = vpop.f32.mrb[0].mxu0
      %v4101 = vadd.f32 %v3961, %v4100
      %v4102 = vpop.f32.mrb[0].mxu0
      %4103 = vmatprep.mubr.bf16.mxu0 0
      %4104 = vmatmul.mubr.bf16.gmra.mrb[0].mxu0 %v3993
      %v4105 = vpop.f32.mrb[0].mxu0
      %v4106 = vadd.f32 %v3961, %v4105
      %v4107 = vpop.f32.mrb[0].mxu0
      %v4108 = vpop.f32.mrb[0].mxu0
      %v4109 = vadd.f32 %v3961, %v4108
      %v4110 = vpop.f32.mrb[0].mxu0
      %4111 = vmatprep.mubr.bf16.mxu0 0
      %4112 = vmatmul.mubr.bf16.gmra.mrb[0].mxu0 %v3995
      %v4113 = vpop.f32.mrb[0].mxu0
      %v4114 = vadd.f32 %v3961, %v4113
      %v4115 = vpop.f32.mrb[0].mxu0
      %v4116 = vpop.f32.mrb[0].mxu0
      %v4117 = vadd.f32 %v3961, %v4116
      %v4118 = vpop.f32.mrb[0].mxu0
      %4119 = vmatprep.mubr.bf16.mxu0 0
      %4120 = vmatmul.mubr.bf16.gmra.mrb[0].mxu0 %v3997
      %v4121 = vpop.f32.mrb[0].mxu0
      %v4122 = vadd.f32 %v3961, %v4121
      %v4123 = vpop.f32.mrb[0].mxu0
      %v4124 = vpop.f32.mrb[0].mxu0
      %v4125 = vadd.f32 %v3961, %v4124
      %v4126 = vpop.f32.mrb[0].mxu0
      %4127 = vmatprep.mubr.bf16.mxu0 0
      %4128 = vmatmul.mubr.bf16.gmra.mrb[0].mxu0 %v3999
      %v4129 = vpop.f32.mrb[0].mxu0
      %v4130 = vadd.f32 %v3961, %v4129
      %v4131 = vpop.f32.mrb[0].mxu0
      %v4132 = vpop.f32.mrb[0].mxu0
      %v4133 = vadd.f32 %v3961, %v4132
      %v4134 = vpop.f32.mrb[0].mxu0
      %4135 = vmatprep.mubr.bf16.mxu0 0
      %4136 = vmatmul.mubr.bf16.gmra.mrb[0].mxu0 %v4001
      %v4137 = vpop.f32.mrb[0].mxu0
      %v4138 = vadd.f32 %v3961, %v4137
      %v4139 = vpop.f32.mrb[0].mxu0
      %v4140 = vpop.f32.mrb[0].mxu0
      %v4141 = vadd.f32 %v3961, %v4140
      %v4142 = vpop.f32.mrb[0].mxu0
      %4143 = vmatprep.mubr.bf16.mxu0 0
      %4144 = vmatmul.mubr.bf16.gmra.mrb[0].mxu0 %v4003
      %v4145 = vpop.f32.mrb[0].mxu0
      %v4146 = vadd.f32 %v3961, %v4145
      %v4147 = vpop.f32.mrb[0].mxu0
      %v4148 = vpop.f32.mrb[0].mxu0
      %v4149 = vadd.f32 %v3961, %v4148
      %v4150 = vpop.f32.mrb[0].mxu0
      %4151 = vmatprep.mubr.bf16.mxu0 0
      %4152 = vmatmul.mubr.bf16.gmra.mrb[0].mxu0 %v4005
      %v4153 = vpop.f32.mrb[0].mxu0
      %v4154 = vadd.f32 %v3961, %v4153
      %v4155 = vpop.f32.mrb[0].mxu0
      %v4156 = vpop.f32.mrb[0].mxu0
      %v4157 = vadd.f32 %v3961, %v4156
      %v4158 = vpop.f32.mrb[0].mxu0
      %4159 = vmatprep.mubr.bf16.mxu0 0
      %4160 = vmatmul.mubr.bf16.gmra.mrb[0].mxu0 %v4007
      %v4161 = vpop.f32.mrb[0].mxu0
      %v4162 = vadd.f32 %v3961, %v4161
      %v4163 = vpop.f32.mrb[0].mxu0
      %v4164 = vpop.f32.mrb[0].mxu0
      %v4165 = vadd.f32 %v3961, %v4164
      %v4166 = vpop.f32.mrb[0].mxu0
      %4167 = vmatprep.mubr.bf16.mxu0 0
      %4168 = vmatmul.mubr.bf16.gmra.mrb[0].mxu0 %v4009
      %v4169 = vpop.f32.mrb[0].mxu0
      %v4170 = vadd.f32 %v3961, %v4169
      %v4171 = vpop.f32.mrb[0].mxu0
      %v4172 = vpop.f32.mrb[0].mxu0
      %v4173 = vadd.f32 %v3961, %v4172
      %v4174 = vpop.f32.mrb[0].mxu0
      %4175 = vdwg.mxu0
      %vm4176 = vcmp.ge.f32.partialorder %v4050, 0.0
      %vm4177 = vcmp.ge.f32.partialorder %v4053, 0.0
      %vm4178 = vcmp.ge.f32.partialorder %v4058, 0.0
      %vm4179 = vcmp.ge.f32.partialorder %v4061, 0.0
      %vm4180 = vcmp.ge.f32.partialorder %v4066, 0.0
      %vm4181 = vcmp.ge.f32.partialorder %v4069, 0.0
      %vm4182 = vcmp.ge.f32.partialorder %v4074, 0.0
      %vm4183 = vcmp.ge.f32.partialorder %v4077, 0.0
      %vm4184 = vcmp.ge.f32.partialorder %v4082, 0.0
      %vm4185 = vcmp.ge.f32.partialorder %v4085, 0.0
      %vm4186 = vcmp.ge.f32.partialorder %v4090, 0.0
      %vm4187 = vcmp.ge.f32.partialorder %v4093, 0.0
      %vm4188 = vcmp.ge.f32.partialorder %v4098, 0.0
      %vm4189 = vcmp.ge.f32.partialorder %v4101, 0.0
      %vm4190 = vcmp.ge.f32.partialorder %v4106, 0.0
      %vm4191 = vcmp.ge.f32.partialorder %v4109, 0.0
      %vm4192 = vcmp.ge.f32.partialorder %v4114, 0.0
      %vm4193 = vcmp.ge.f32.partialorder %v4117, 0.0
      %vm4194 = vcmp.ge.f32.partialorder %v4122, 0.0
      %vm4195 = vcmp.ge.f32.partialorder %v4125, 0.0
      %vm4196 = vcmp.ge.f32.partialorder %v4130, 0.0
      %vm4197 = vcmp.ge.f32.partialorder %v4133, 0.0
      %vm4198 = vcmp.ge.f32.partialorder %v4138, 0.0
      %vm4199 = vcmp.ge.f32.partialorder %v4141, 0.0
      %vm4200 = vcmp.ge.f32.partialorder %v4146, 0.0
      %vm4201 = vcmp.ge.f32.partialorder %v4149, 0.0
      %vm4202 = vcmp.ge.f32.partialorder %v4154, 0.0
      %vm4203 = vcmp.ge.f32.partialorder %v4157, 0.0
      %vm4204 = vcmp.ge.f32.partialorder %v4162, 0.0
      %vm4205 = vcmp.ge.f32.partialorder %v4165, 0.0
      %vm4206 = vcmp.ge.f32.partialorder %v4170, 0.0
      %vm4207 = vcmp.ge.f32.partialorder %v4173, 0.0
      %v4208 = vmul.f32 %v4050, 0.01
      %v4209 = vmul.f32 %v4053, 0.01
      %v4210 = vmul.f32 %v4058, 0.01
      %v4211 = vmul.f32 %v4061, 0.01
      %v4212 = vmul.f32 %v4066, 0.01
      %v4213 = vmul.f32 %v4069, 0.01
      %v4214 = vmul.f32 %v4074, 0.01
      %v4215 = vmul.f32 %v4077, 0.01
      %v4216 = vmul.f32 %v4082, 0.01
      %v4217 = vmul.f32 %v4085, 0.01
      %v4218 = vmul.f32 %v4090, 0.01
      %v4219 = vmul.f32 %v4093, 0.01
      %v4220 = vmul.f32 %v4098, 0.01
      %v4221 = vmul.f32 %v4101, 0.01
      %v4222 = vmul.f32 %v4106, 0.01
      %v4223 = vmul.f32 %v4109, 0.01
      %v4224 = vmul.f32 %v4114, 0.01
      %v4225 = vmul.f32 %v4117, 0.01
      %v4226 = vmul.f32 %v4122, 0.01
      %v4227 = vmul.f32 %v4125, 0.01
      %v4228 = vmul.f32 %v4130, 0.01
      %v4229 = vmul.f32 %v4133, 0.01
      %v4230 = vmul.f32 %v4138, 0.01
      %v4231 = vmul.f32 %v4141, 0.01
      %v4232 = vmul.f32 %v4146, 0.01
      %v4233 = vmul.f32 %v4149, 0.01
      %v4234 = vmul.f32 %v4154, 0.01
      %v4235 = vmul.f32 %v4157, 0.01
      %v4236 = vmul.f32 %v4162, 0.01
      %v4237 = vmul.f32 %v4165, 0.01
      %v4238 = vmul.f32 %v4170, 0.01
      %v4239 = vmul.f32 %v4173, 0.01
      %v4240 = vsel %vm4176, %v4050, %v4208
      %v4241 = vsel %vm4177, %v4053, %v4209
      %v4242 = vsel %vm4178, %v4058, %v4210
      %v4243 = vsel %vm4179, %v4061, %v4211
      %v4244 = vsel %vm4180, %v4066, %v4212
      %v4245 = vsel %vm4181, %v4069, %v4213
      %v4246 = vsel %vm4182, %v4074, %v4214
      %v4247 = vsel %vm4183, %v4077, %v4215
      %v4248 = vsel %vm4184, %v4082, %v4216
      %v4249 = vsel %vm4185, %v4085, %v4217
      %v4250 = vsel %vm4186, %v4090, %v4218
      %v4251 = vsel %vm4187, %v4093, %v4219
      %v4252 = vsel %vm4188, %v4098, %v4220
      %v4253 = vsel %vm4189, %v4101, %v4221
      %v4254 = vsel %vm4190, %v4106, %v4222
      %v4255 = vsel %vm4191, %v4109, %v4223
      %v4256 = vsel %vm4192, %v4114, %v4224
      %v4257 = vsel %vm4193, %v4117, %v4225
      %v4258 = vsel %vm4194, %v4122, %v4226
      %v4259 = vsel %vm4195, %v4125, %v4227
      %v4260 = vsel %vm4196, %v4130, %v4228
      %v4261 = vsel %vm4197, %v4133, %v4229
      %v4262 = vsel %vm4198, %v4138, %v4230
      %v4263 = vsel %vm4199, %v4141, %v4231
      %v4264 = vsel %vm4200, %v4146, %v4232
      %v4265 = vsel %vm4201, %v4149, %v4233
      %v4266 = vsel %vm4202, %v4154, %v4234
      %v4267 = vsel %vm4203, %v4157, %v4235
      %v4268 = vsel %vm4204, %v4162, %v4236
      %v4269 = vsel %vm4205, %v4165, %v4237
      %v4270 = vsel %vm4206, %v4170, %v4238
      %v4271 = vsel %vm4207, %v4173, %v4239
      %v4272 = vpack.c.bf16 %v4241, %v4240
      %v4273 = vpack.c.bf16 %v4243, %v4242
      %v4274 = vpack.c.bf16 %v4245, %v4244
      %v4275 = vpack.c.bf16 %v4247, %v4246
      %v4276 = vpack.c.bf16 %v4249, %v4248
      %v4277 = vpack.c.bf16 %v4251, %v4250
      %v4278 = vpack.c.bf16 %v4253, %v4252
      %v4279 = vpack.c.bf16 %v4255, %v4254
      %v4280 = vpack.c.bf16 %v4257, %v4256
      %v4281 = vpack.c.bf16 %v4259, %v4258
      %v4282 = vpack.c.bf16 %v4261, %v4260
      %v4283 = vpack.c.bf16 %v4263, %v4262
      %v4284 = vpack.c.bf16 %v4265, %v4264
      %v4285 = vpack.c.bf16 %v4267, %v4266
      %v4286 = vpack.c.bf16 %v4269, %v4268
      %v4287 = vpack.c.bf16 %v4271, %v4270
      %v4304 = vunpack.c.l.b16 %v4272
      %v4305 = vunpack.c.h.b16 %v4272
      %v4306 = vunpack.c.l.b16 %v4273
      %v4307 = vunpack.c.h.b16 %v4273
      %v4308 = vunpack.c.l.b16 %v4274
      %v4309 = vunpack.c.h.b16 %v4274
      %v4310 = vunpack.c.l.b16 %v4275
      %v4311 = vunpack.c.h.b16 %v4275
      %v4312 = vunpack.c.l.b16 %v4276
      %v4313 = vunpack.c.h.b16 %v4276
      %v4314 = vunpack.c.l.b16 %v4277
      %v4315 = vunpack.c.h.b16 %v4277
      %v4316 = vunpack.c.l.b16 %v4278
      %v4317 = vunpack.c.h.b16 %v4278
      %v4318 = vunpack.c.l.b16 %v4279
      %v4319 = vunpack.c.h.b16 %v4279
      %v4320 = vunpack.c.l.b16 %v4280
      %v4321 = vunpack.c.h.b16 %v4280
      %v4322 = vunpack.c.l.b16 %v4281
      %v4323 = vunpack.c.h.b16 %v4281
      %v4324 = vunpack.c.l.b16 %v4282
      %v4325 = vunpack.c.h.b16 %v4282
      %v4326 = vunpack.c.l.b16 %v4283
      %v4327 = vunpack.c.h.b16 %v4283
      %v4328 = vunpack.c.l.b16 %v4284
      %v4329 = vunpack.c.h.b16 %v4284
      %v4330 = vunpack.c.l.b16 %v4285
      %v4331 = vunpack.c.h.b16 %v4285
      %v4332 = vunpack.c.l.b16 %v4286
      %v4333 = vunpack.c.h.b16 %v4286
      %v4334 = vunpack.c.l.b16 %v4287
      %v4335 = vunpack.c.h.b16 %v4287
      %v4336 = vpack.c.b16 %v4304, %v4304
      %v4337 = vpack.c.b16 %v4305, %v4305
      %v4338 = vpack.c.b16 %v4306, %v4306
      %v4339 = vpack.c.b16 %v4307, %v4307
      %v4340 = vpack.c.b16 %v4308, %v4308
      %v4341 = vpack.c.b16 %v4309, %v4309
      %v4342 = vpack.c.b16 %v4310, %v4310
      %v4343 = vpack.c.b16 %v4311, %v4311
      %v4344 = vpack.c.b16 %v4312, %v4312
      %v4345 = vpack.c.b16 %v4313, %v4313
      %v4346 = vpack.c.b16 %v4314, %v4314
      %v4347 = vpack.c.b16 %v4315, %v4315
      %v4348 = vpack.c.b16 %v4316, %v4316
      %v4349 = vpack.c.b16 %v4317, %v4317
      %v4350 = vpack.c.b16 %v4318, %v4318
      %v4351 = vpack.c.b16 %v4319, %v4319
      %v4352 = vpack.c.b16 %v4320, %v4320
      %v4353 = vpack.c.b16 %v4321, %v4321
      %v4354 = vpack.c.b16 %v4322, %v4322
      %v4355 = vpack.c.b16 %v4323, %v4323
      %v4356 = vpack.c.b16 %v4324, %v4324
      %v4357 = vpack.c.b16 %v4325, %v4325
      %v4358 = vpack.c.b16 %v4326, %v4326
      %v4359 = vpack.c.b16 %v4327, %v4327
      %v4360 = vpack.c.b16 %v4328, %v4328
      %v4361 = vpack.c.b16 %v4329, %v4329
      %v4362 = vpack.c.b16 %v4330, %v4330
      %v4363 = vpack.c.b16 %v4331, %v4331
      %v4364 = vpack.c.b16 %v4332, %v4332
      %v4365 = vpack.c.b16 %v4333, %v4333
      %v4366 = vpack.c.b16 %v4334, %v4334
      %v4367 = vpack.c.b16 %v4335, %v4335
      %v4369 = vshrl.u32 %v4336, 16
      %v4371 = vrot.slane %v4369, 7
      %v4372 = vshll.u32 %v4336, 16
      %v4374 = vor.u32 %v4371, %v4372
      %v4375 = vrot.slane %v4371, 4
      %v4377 = vshrl.u32 %v4337, 16
      %v4379 = vrot.slane %v4377, 7
      %v4380 = vshll.u32 %v4337, 16
      %v4382 = vor.u32 %v4379, %v4380
      %v4383 = vsel %vm392, %v4375, %v4382
      %v4384 = vrot.slane %v4379, 4
      %v4386 = vshrl.u32 %v4338, 16
      %v4388 = vrot.slane %v4386, 7
      %v4389 = vshll.u32 %v4338, 16
      %v4391 = vor.u32 %v4388, %v4389
      %v4392 = vrot.slane %v4388, 4
      %v4394 = vshrl.u32 %v4339, 16
      %v4396 = vrot.slane %v4394, 7
      %v4397 = vshll.u32 %v4339, 16
      %v4399 = vor.u32 %v4396, %v4397
      %v4400 = vsel %vm392, %v4392, %v4399
      %v4401 = vrot.slane %v4396, 4
      %v4403 = vshrl.u32 %v4340, 16
      %v4405 = vrot.slane %v4403, 7
      %v4406 = vshll.u32 %v4340, 16
      %v4408 = vor.u32 %v4405, %v4406
      %v4409 = vrot.slane %v4405, 4
      %v4411 = vshrl.u32 %v4341, 16
      %v4413 = vrot.slane %v4411, 7
      %v4414 = vshll.u32 %v4341, 16
      %v4416 = vor.u32 %v4413, %v4414
      %v4417 = vsel %vm392, %v4409, %v4416
      %v4418 = vrot.slane %v4413, 4
      %v4420 = vshrl.u32 %v4342, 16
      %v4422 = vrot.slane %v4420, 7
      %v4423 = vshll.u32 %v4342, 16
      %v4425 = vor.u32 %v4422, %v4423
      %v4426 = vrot.slane %v4422, 4
      %v4428 = vshrl.u32 %v4343, 16
      %v4430 = vrot.slane %v4428, 7
      %v4431 = vshll.u32 %v4343, 16
      %v4433 = vor.u32 %v4430, %v4431
      %v4434 = vsel %vm392, %v4426, %v4433
      %v4435 = vrot.slane %v4430, 4
      %v4437 = vshrl.u32 %v4344, 16
      %v4439 = vrot.slane %v4437, 7
      %v4440 = vshll.u32 %v4344, 16
      %v4442 = vor.u32 %v4439, %v4440
      %v4443 = vrot.slane %v4439, 4
      %v4445 = vshrl.u32 %v4345, 16
      %v4447 = vrot.slane %v4445, 7
      %v4448 = vshll.u32 %v4345, 16
      %v4450 = vor.u32 %v4447, %v4448
      %v4451 = vsel %vm392, %v4443, %v4450
      %v4452 = vrot.slane %v4447, 4
      %v4454 = vshrl.u32 %v4346, 16
      %v4456 = vrot.slane %v4454, 7
      %v4457 = vshll.u32 %v4346, 16
      %v4459 = vor.u32 %v4456, %v4457
      %v4460 = vrot.slane %v4456, 4
      %v4462 = vshrl.u32 %v4347, 16
      %v4464 = vrot.slane %v4462, 7
      %v4465 = vshll.u32 %v4347, 16
      %v4467 = vor.u32 %v4464, %v4465
      %v4468 = vsel %vm392, %v4460, %v4467
      %v4469 = vrot.slane %v4464, 4
      %v4471 = vshrl.u32 %v4348, 16
      %v4473 = vrot.slane %v4471, 7
      %v4474 = vshll.u32 %v4348, 16
      %v4476 = vor.u32 %v4473, %v4474
      %v4477 = vrot.slane %v4473, 4
      %v4479 = vshrl.u32 %v4349, 16
      %v4481 = vrot.slane %v4479, 7
      %v4482 = vshll.u32 %v4349, 16
      %v4484 = vor.u32 %v4481, %v4482
      %v4485 = vsel %vm392, %v4477, %v4484
      %v4486 = vrot.slane %v4481, 4
      %v4488 = vshrl.u32 %v4350, 16
      %v4490 = vrot.slane %v4488, 7
      %v4491 = vshll.u32 %v4350, 16
      %v4493 = vor.u32 %v4490, %v4491
      %v4494 = vrot.slane %v4490, 4
      %v4496 = vshrl.u32 %v4351, 16
      %v4498 = vrot.slane %v4496, 7
      %v4499 = vshll.u32 %v4351, 16
      %v4501 = vor.u32 %v4498, %v4499
      %v4502 = vsel %vm392, %v4494, %v4501
      %v4503 = vrot.slane %v4498, 4
      %v4505 = vshrl.u32 %v4352, 16
      %v4507 = vrot.slane %v4505, 7
      %v4508 = vshll.u32 %v4352, 16
      %v4510 = vor.u32 %v4507, %v4508
      %v4511 = vrot.slane %v4507, 4
      %v4513 = vshrl.u32 %v4353, 16
      %v4515 = vrot.slane %v4513, 7
      %v4516 = vshll.u32 %v4353, 16
      %v4518 = vor.u32 %v4515, %v4516
      %v4519 = vsel %vm392, %v4511, %v4518
      %v4520 = vrot.slane %v4515, 4
      %v4522 = vshrl.u32 %v4354, 16
      %v4524 = vrot.slane %v4522, 7
      %v4525 = vshll.u32 %v4354, 16
      %v4527 = vor.u32 %v4524, %v4525
      %v4528 = vrot.slane %v4524, 4
      %v4530 = vshrl.u32 %v4355, 16
      %v4532 = vrot.slane %v4530, 7
      %v4533 = vshll.u32 %v4355, 16
      %v4535 = vor.u32 %v4532, %v4533
      %v4536 = vsel %vm392, %v4528, %v4535
      %v4537 = vrot.slane %v4532, 4
      %v4539 = vshrl.u32 %v4356, 16
      %v4541 = vrot.slane %v4539, 7
      %v4542 = vshll.u32 %v4356, 16
      %v4544 = vor.u32 %v4541, %v4542
      %v4545 = vrot.slane %v4541, 4
      %v4547 = vshrl.u32 %v4357, 16
      %v4549 = vrot.slane %v4547, 7
      %v4550 = vshll.u32 %v4357, 16
      %v4552 = vor.u32 %v4549, %v4550
      %v4553 = vsel %vm392, %v4545, %v4552
      %v4554 = vrot.slane %v4549, 4
      %v4556 = vshrl.u32 %v4358, 16
      %v4558 = vrot.slane %v4556, 7
      %v4559 = vshll.u32 %v4358, 16
      %v4561 = vor.u32 %v4558, %v4559
      %v4562 = vrot.slane %v4558, 4
      %v4564 = vshrl.u32 %v4359, 16
      %v4566 = vrot.slane %v4564, 7
      %v4567 = vshll.u32 %v4359, 16
      %v4569 = vor.u32 %v4566, %v4567
      %v4570 = vsel %vm392, %v4562, %v4569
      %v4571 = vrot.slane %v4566, 4
      %v4573 = vshrl.u32 %v4360, 16
      %v4575 = vrot.slane %v4573, 7
      %v4576 = vshll.u32 %v4360, 16
      %v4578 = vor.u32 %v4575, %v4576
      %v4579 = vrot.slane %v4575, 4
      %v4581 = vshrl.u32 %v4361, 16
      %v4583 = vrot.slane %v4581, 7
      %v4584 = vshll.u32 %v4361, 16
      %v4586 = vor.u32 %v4583, %v4584
      %v4587 = vsel %vm392, %v4579, %v4586
      %v4588 = vrot.slane %v4583, 4
      %v4590 = vshrl.u32 %v4362, 16
      %v4592 = vrot.slane %v4590, 7
      %v4593 = vshll.u32 %v4362, 16
      %v4595 = vor.u32 %v4592, %v4593
      %v4596 = vrot.slane %v4592, 4
      %v4598 = vshrl.u32 %v4363, 16
      %v4600 = vrot.slane %v4598, 7
      %v4601 = vshll.u32 %v4363, 16
      %v4603 = vor.u32 %v4600, %v4601
      %v4604 = vsel %vm392, %v4596, %v4603
      %v4605 = vrot.slane %v4600, 4
      %v4607 = vshrl.u32 %v4364, 16
      %v4609 = vrot.slane %v4607, 7
      %v4610 = vshll.u32 %v4364, 16
      %v4612 = vor.u32 %v4609, %v4610
      %v4613 = vrot.slane %v4609, 4
      %v4615 = vshrl.u32 %v4365, 16
      %v4617 = vrot.slane %v4615, 7
      %v4618 = vshll.u32 %v4365, 16
      %v4620 = vor.u32 %v4617, %v4618
      %v4621 = vsel %vm392, %v4613, %v4620
      %v4622 = vrot.slane %v4617, 4
      %v4624 = vshrl.u32 %v4366, 16
      %v4626 = vrot.slane %v4624, 7
      %v4627 = vshll.u32 %v4366, 16
      %v4629 = vor.u32 %v4626, %v4627
      %v4630 = vrot.slane %v4626, 4
      %v4632 = vshrl.u32 %v4367, 16
      %v4634 = vrot.slane %v4632, 7
      %v4635 = vshll.u32 %v4367, 16
      %v4637 = vor.u32 %v4634, %v4635
      %v4638 = vsel %vm392, %v4630, %v4637
      %v4639 = vrot.slane %v4634, 4
      %s4688 = scalar_lea.vmem [#allocation3], 12
      %vm4689 = vcmask 60416
      %vm4690 = vmand %vm4689, %vm715
      %v4691 = vld [vmem:[%s4688] sm:$0xf]
      %v4692 = vsel %vm4690, %v4374, %v4691
      %4693 = vst [vmem:[%s4688] sm:$0xf] %v4692
      %vm4694 = vcmask 60416
      %4695 = vst.msk [vmem:[%s4688 + $0x4] sm:$0xf] %vm4694, %v4383
      %vm4696 = vcmask 57344
      %vm4697 = vmand %vm4696, %vm390
      %v4698 = vld [vmem:[%s4688 + $0x8] sm:$0x1]
      %v4699 = vsel %vm4697, %v4384, %v4698
      %4700 = vst [vmem:[%s4688 + $0x8] sm:$0x1] %v4699
      %v4701 = vld [vmem:[%s4688 + $0xc] sm:$0xf]
      %v4702 = vsel %vm4690, %v4391, %v4701
      %4703 = vst [vmem:[%s4688 + $0xc] sm:$0xf] %v4702
      %4704 = vst.msk [vmem:[%s4688 + $0x10] sm:$0xf] %vm4694, %v4400
      %v4705 = vld [vmem:[%s4688 + $0x14] sm:$0x1]
      %v4706 = vsel %vm4697, %v4401, %v4705
      %4707 = vst [vmem:[%s4688 + $0x14] sm:$0x1] %v4706
      %v4708 = vld [vmem:[%s4688 + $0x18] sm:$0xf]
      %v4709 = vsel %vm4690, %v4408, %v4708
      %4710 = vst [vmem:[%s4688 + $0x18] sm:$0xf] %v4709
      %4711 = vst.msk [vmem:[%s4688 + $0x1c] sm:$0xf] %vm4694, %v4417
      %v4712 = vld [vmem:[%s4688 + $0x20] sm:$0x1]
      %v4713 = vsel %vm4697, %v4418, %v4712
      %4714 = vst [vmem:[%s4688 + $0x20] sm:$0x1] %v4713
      %v4715 = vld [vmem:[%s4688 + $0x24] sm:$0xf]
      %v4716 = vsel %vm4690, %v4425, %v4715
      %4717 = vst [vmem:[%s4688 + $0x24] sm:$0xf] %v4716
      %4718 = vst.msk [vmem:[%s4688 + $0x28] sm:$0xf] %vm4694, %v4434
      %v4719 = vld [vmem:[%s4688 + $0x2c] sm:$0x1]
      %v4720 = vsel %vm4697, %v4435, %v4719
      %4721 = vst [vmem:[%s4688 + $0x2c] sm:$0x1] %v4720
      %v4722 = vld [vmem:[%s4688 + $0x30] sm:$0xf]
      %v4723 = vsel %vm4690, %v4442, %v4722
      %4724 = vst [vmem:[%s4688 + $0x30] sm:$0xf] %v4723
      %4725 = vst.msk [vmem:[%s4688 + $0x34] sm:$0xf] %vm4694, %v4451
      %v4726 = vld [vmem:[%s4688 + $0x38] sm:$0x1]
      %v4727 = vsel %vm4697, %v4452, %v4726
      %4728 = vst [vmem:[%s4688 + $0x38] sm:$0x1] %v4727
      %v4729 = vld [vmem:[%s4688 + $0x3c] sm:$0xf]
      %v4730 = vsel %vm4690, %v4459, %v4729
      %4731 = vst [vmem:[%s4688 + $0x3c] sm:$0xf] %v4730
      %4732 = vst.msk [vmem:[%s4688 + $0x40] sm:$0xf] %vm4694, %v4468
      %v4733 = vld [vmem:[%s4688 + $0x44] sm:$0x1]
      %v4734 = vsel %vm4697, %v4469, %v4733
      %4735 = vst [vmem:[%s4688 + $0x44] sm:$0x1] %v4734
      %v4736 = vld [vmem:[%s4688 + $0x48] sm:$0xf]
      %v4737 = vsel %vm4690, %v4476, %v4736
      %4738 = vst [vmem:[%s4688 + $0x48] sm:$0xf] %v4737
      %4739 = vst.msk [vmem:[%s4688 + $0x4c] sm:$0xf] %vm4694, %v4485
      %v4740 = vld [vmem:[%s4688 + $0x50] sm:$0x1]
      %v4741 = vsel %vm4697, %v4486, %v4740
      %4742 = vst [vmem:[%s4688 + $0x50] sm:$0x1] %v4741
      %v4743 = vld [vmem:[%s4688 + $0x54] sm:$0xf]
      %v4744 = vsel %vm4690, %v4493, %v4743
      %4745 = vst [vmem:[%s4688 + $0x54] sm:$0xf] %v4744
      %4746 = vst.msk [vmem:[%s4688 + $0x58] sm:$0xf] %vm4694, %v4502
      %v4747 = vld [vmem:[%s4688 + $0x5c] sm:$0x1]
      %v4748 = vsel %vm4697, %v4503, %v4747
      %4749 = vst [vmem:[%s4688 + $0x5c] sm:$0x1] %v4748
      %v4750 = vld [vmem:[%s4688 + $0x60] sm:$0xf]
      %v4751 = vsel %vm4690, %v4510, %v4750
      %4752 = vst [vmem:[%s4688 + $0x60] sm:$0xf] %v4751
      %4753 = vst.msk [vmem:[%s4688 + $0x64] sm:$0xf] %vm4694, %v4519
      %v4754 = vld [vmem:[%s4688 + $0x68] sm:$0x1]
      %v4755 = vsel %vm4697, %v4520, %v4754
      %4756 = vst [vmem:[%s4688 + $0x68] sm:$0x1] %v4755
      %v4757 = vld [vmem:[%s4688 + $0x6c] sm:$0xf]
      %v4758 = vsel %vm4690, %v4527, %v4757
      %4759 = vst [vmem:[%s4688 + $0x6c] sm:$0xf] %v4758
      %4760 = vst.msk [vmem:[%s4688 + $0x70] sm:$0xf] %vm4694, %v4536
      %v4761 = vld [vmem:[%s4688 + $0x74] sm:$0x1]
      %v4762 = vsel %vm4697, %v4537, %v4761
      %4763 = vst [vmem:[%s4688 + $0x74] sm:$0x1] %v4762
      %v4764 = vld [vmem:[%s4688 + $0x78] sm:$0xf]
      %v4765 = vsel %vm4690, %v4544, %v4764
      %4766 = vst [vmem:[%s4688 + $0x78] sm:$0xf] %v4765
      %4767 = vst.msk [vmem:[%s4688 + $0x7c] sm:$0xf] %vm4694, %v4553
      %v4768 = vld [vmem:[%s4688 + $0x80] sm:$0x1]
      %v4769 = vsel %vm4697, %v4554, %v4768
      %4770 = vst [vmem:[%s4688 + $0x80] sm:$0x1] %v4769
      %v4771 = vld [vmem:[%s4688 + $0x84] sm:$0xf]
      %v4772 = vsel %vm4690, %v4561, %v4771
      %4773 = vst [vmem:[%s4688 + $0x84] sm:$0xf] %v4772
      %4774 = vst.msk [vmem:[%s4688 + $0x88] sm:$0xf] %vm4694, %v4570
      %v4775 = vld [vmem:[%s4688 + $0x8c] sm:$0x1]
      %v4776 = vsel %vm4697, %v4571, %v4775
      %4777 = vst [vmem:[%s4688 + $0x8c] sm:$0x1] %v4776
      %v4778 = vld [vmem:[%s4688 + $0x90] sm:$0xf]
      %v4779 = vsel %vm4690, %v4578, %v4778
      %4780 = vst [vmem:[%s4688 + $0x90] sm:$0xf] %v4779
      %4781 = vst.msk [vmem:[%s4688 + $0x94] sm:$0xf] %vm4694, %v4587
      %v4782 = vld [vmem:[%s4688 + $0x98] sm:$0x1]
      %v4783 = vsel %vm4697, %v4588, %v4782
      %4784 = vst [vmem:[%s4688 + $0x98] sm:$0x1] %v4783
      %v4785 = vld [vmem:[%s4688 + $0x9c] sm:$0xf]
      %v4786 = vsel %vm4690, %v4595, %v4785
      %4787 = vst [vmem:[%s4688 + $0x9c] sm:$0xf] %v4786
      %4788 = vst.msk [vmem:[%s4688 + $0xa0] sm:$0xf] %vm4694, %v4604
      %v4789 = vld [vmem:[%s4688 + $0xa4] sm:$0x1]
      %v4790 = vsel %vm4697, %v4605, %v4789
      %4791 = vst [vmem:[%s4688 + $0xa4] sm:$0x1] %v4790
      %v4792 = vld [vmem:[%s4688 + $0xa8] sm:$0xf]
      %v4793 = vsel %vm4690, %v4612, %v4792
      %4794 = vst [vmem:[%s4688 + $0xa8] sm:$0xf] %v4793
      %4795 = vst.msk [vmem:[%s4688 + $0xac] sm:$0xf] %vm4694, %v4621
      %v4796 = vld [vmem:[%s4688 + $0xb0] sm:$0x1]
      %v4797 = vsel %vm4697, %v4622, %v4796
      %4798 = vst [vmem:[%s4688 + $0xb0] sm:$0x1] %v4797
      %v4799 = vld [vmem:[%s4688 + $0xb4] sm:$0xf]
      %v4800 = vsel %vm4690, %v4629, %v4799
      %4801 = vst [vmem:[%s4688 + $0xb4] sm:$0xf] %v4800
      %4802 = vst.msk [vmem:[%s4688 + $0xb8] sm:$0xf] %vm4694, %v4638
      %v4803 = vld [vmem:[%s4688 + $0xbc] sm:$0x1]
      %v4804 = vsel %vm4697, %v4639, %v4803
      %4805 = vst [vmem:[%s4688 + $0xbc] sm:$0x1] %v4804
      %v4806 = vld [vmem:[%s4688] sm:$0x2]
      %v4807 = vld [vmem:[%s4688 + $0xc] sm:$0x2]
      %v4808 = vld [vmem:[%s4688 + $0x18] sm:$0x2]
      %v4809 = vld [vmem:[%s4688 + $0x24] sm:$0x2]
      %v4810 = vld [vmem:[%s4688 + $0x30] sm:$0x2]
      %v4811 = vld [vmem:[%s4688 + $0x3c] sm:$0x2]
      %v4812 = vld [vmem:[%s4688 + $0x48] sm:$0x2]
      %v4813 = vld [vmem:[%s4688 + $0x54] sm:$0x2]
      %v4814 = vld [vmem:[%s4688 + $0x60] sm:$0x2]
      %v4815 = vld [vmem:[%s4688 + $0x6c] sm:$0x2]
      %v4816 = vld [vmem:[%s4688 + $0x78] sm:$0x2]
      %v4817 = vld [vmem:[%s4688 + $0x84] sm:$0x2]
      %v4818 = vld [vmem:[%s4688 + $0x90] sm:$0x2]
      %v4819 = vld [vmem:[%s4688 + $0x9c] sm:$0x2]
      %v4820 = vld [vmem:[%s4688 + $0xa8] sm:$0x2]
      %v4821 = vld [vmem:[%s4688 + $0xb4] sm:$0x2]
      %v4838 = vrot.slane %v4806, 5
      %v4839 = vrot.slane %v4838, 4
      %v4840 = vrot.slane %v4807, 5
      %v4841 = vrot.slane %v4840, 4
      %v4842 = vrot.slane %v4808, 5
      %v4843 = vrot.slane %v4842, 4
      %v4844 = vrot.slane %v4809, 5
      %v4845 = vrot.slane %v4844, 4
      %v4846 = vrot.slane %v4810, 5
      %v4847 = vrot.slane %v4846, 4
      %v4848 = vrot.slane %v4811, 5
      %v4849 = vrot.slane %v4848, 4
      %v4850 = vrot.slane %v4812, 5
      %v4851 = vrot.slane %v4850, 4
      %v4852 = vrot.slane %v4813, 5
      %v4853 = vrot.slane %v4852, 4
      %v4854 = vrot.slane %v4814, 5
      %v4855 = vrot.slane %v4854, 4
      %v4856 = vrot.slane %v4815, 5
      %v4857 = vrot.slane %v4856, 4
      %v4858 = vrot.slane %v4816, 5
      %v4859 = vrot.slane %v4858, 4
      %v4860 = vrot.slane %v4817, 5
      %v4861 = vrot.slane %v4860, 4
      %v4862 = vrot.slane %v4818, 5
      %v4863 = vrot.slane %v4862, 4
      %v4864 = vrot.slane %v4819, 5
      %v4865 = vrot.slane %v4864, 4
      %v4866 = vrot.slane %v4820, 5
      %v4867 = vrot.slane %v4866, 4
      %v4868 = vrot.slane %v4821, 5
      %v4869 = vrot.slane %v4868, 4
      %v4886 = vld [vmem:[%s4688] sm:$0x1]
      %v4887 = vsel %vm4697, %v4839, %v4886
      %4888 = vst [vmem:[%s4688] sm:$0x1] %v4887
      %v4889 = vld [vmem:[%s4688 + $0xc] sm:$0x1]
      %v4890 = vsel %vm4697, %v4841, %v4889
      %4891 = vst [vmem:[%s4688 + $0xc] sm:$0x1] %v4890
      %v4892 = vld [vmem:[%s4688 + $0x18] sm:$0x1]
      %v4893 = vsel %vm4697, %v4843, %v4892
      %4894 = vst [vmem:[%s4688 + $0x18] sm:$0x1] %v4893
      %v4895 = vld [vmem:[%s4688 + $0x24] sm:$0x1]
      %v4896 = vsel %vm4697, %v4845, %v4895
      %4897 = vst [vmem:[%s4688 + $0x24] sm:$0x1] %v4896
      %v4898 = vld [vmem:[%s4688 + $0x30] sm:$0x1]
      %v4899 = vsel %vm4697, %v4847, %v4898
      %4900 = vst [vmem:[%s4688 + $0x30] sm:$0x1] %v4899
      %v4901 = vld [vmem:[%s4688 + $0x3c] sm:$0x1]
      %v4902 = vsel %vm4697, %v4849, %v4901
      %4903 = vst [vmem:[%s4688 + $0x3c] sm:$0x1] %v4902
      %v4904 = vld [vmem:[%s4688 + $0x48] sm:$0x1]
      %v4905 = vsel %vm4697, %v4851, %v4904
      %4906 = vst [vmem:[%s4688 + $0x48] sm:$0x1] %v4905
      %v4907 = vld [vmem:[%s4688 + $0x54] sm:$0x1]
      %v4908 = vsel %vm4697, %v4853, %v4907
      %4909 = vst [vmem:[%s4688 + $0x54] sm:$0x1] %v4908
      %v4910 = vld [vmem:[%s4688 + $0x60] sm:$0x1]
      %v4911 = vsel %vm4697, %v4855, %v4910
      %4912 = vst [vmem:[%s4688 + $0x60] sm:$0x1] %v4911
      %v4913 = vld [vmem:[%s4688 + $0x6c] sm:$0x1]
      %v4914 = vsel %vm4697, %v4857, %v4913
      %4915 = vst [vmem:[%s4688 + $0x6c] sm:$0x1] %v4914
      %v4916 = vld [vmem:[%s4688 + $0x78] sm:$0x1]
      %v4917 = vsel %vm4697, %v4859, %v4916
      %4918 = vst [vmem:[%s4688 + $0x78] sm:$0x1] %v4917
      %v4919 = vld [vmem:[%s4688 + $0x84] sm:$0x1]
      %v4920 = vsel %vm4697, %v4861, %v4919
      %4921 = vst [vmem:[%s4688 + $0x84] sm:$0x1] %v4920
      %v4922 = vld [vmem:[%s4688 + $0x90] sm:$0x1]
      %v4923 = vsel %vm4697, %v4863, %v4922
      %4924 = vst [vmem:[%s4688 + $0x90] sm:$0x1] %v4923
      %v4925 = vld [vmem:[%s4688 + $0x9c] sm:$0x1]
      %v4926 = vsel %vm4697, %v4865, %v4925
      %4927 = vst [vmem:[%s4688 + $0x9c] sm:$0x1] %v4926
      %v4928 = vld [vmem:[%s4688 + $0xa8] sm:$0x1]
      %v4929 = vsel %vm4697, %v4867, %v4928
      %4930 = vst [vmem:[%s4688 + $0xa8] sm:$0x1] %v4929
      %v4931 = vld [vmem:[%s4688 + $0xb4] sm:$0x1]
      %v4932 = vsel %vm4697, %v4869, %v4931
      %4933 = vst [vmem:[%s4688 + $0xb4] sm:$0x1] %v4932
      %v4934 = vld [vmem:[%s4688 + $0x4] sm:$0x8]
      %v4935 = vld [vmem:[%s4688 + $0x10] sm:$0x8]
      %v4936 = vld [vmem:[%s4688 + $0x1c] sm:$0x8]
      %v4937 = vld [vmem:[%s4688 + $0x28] sm:$0x8]
      %v4938 = vld [vmem:[%s4688 + $0x34] sm:$0x8]
      %v4939 = vld [vmem:[%s4688 + $0x40] sm:$0x8]
      %v4940 = vld [vmem:[%s4688 + $0x4c] sm:$0x8]
      %v4941 = vld [vmem:[%s4688 + $0x58] sm:$0x8]
      %v4942 = vld [vmem:[%s4688 + $0x64] sm:$0x8]
      %v4943 = vld [vmem:[%s4688 + $0x70] sm:$0x8]
      %v4944 = vld [vmem:[%s4688 + $0x7c] sm:$0x8]
      %v4945 = vld [vmem:[%s4688 + $0x88] sm:$0x8]
      %v4946 = vld [vmem:[%s4688 + $0x94] sm:$0x8]
      %v4947 = vld [vmem:[%s4688 + $0xa0] sm:$0x8]
      %v4948 = vld [vmem:[%s4688 + $0xac] sm:$0x8]
      %v4949 = vld [vmem:[%s4688 + $0xb8] sm:$0x8]
      %v4966 = vrot.slane %v4934, 7
      %v4967 = vrot.slane %v4966, 4
      %v4968 = vrot.slane %v4935, 7
      %v4969 = vrot.slane %v4968, 4
      %v4970 = vrot.slane %v4936, 7
      %v4971 = vrot.slane %v4970, 4
      %v4972 = vrot.slane %v4937, 7
      %v4973 = vrot.slane %v4972, 4
      %v4974 = vrot.slane %v4938, 7
      %v4975 = vrot.slane %v4974, 4
      %v4976 = vrot.slane %v4939, 7
      %v4977 = vrot.slane %v4976, 4
      %v4978 = vrot.slane %v4940, 7
      %v4979 = vrot.slane %v4978, 4
      %v4980 = vrot.slane %v4941, 7
      %v4981 = vrot.slane %v4980, 4
      %v4982 = vrot.slane %v4942, 7
      %v4983 = vrot.slane %v4982, 4
      %v4984 = vrot.slane %v4943, 7
      %v4985 = vrot.slane %v4984, 4
      %v4986 = vrot.slane %v4944, 7
      %v4987 = vrot.slane %v4986, 4
      %v4988 = vrot.slane %v4945, 7
      %v4989 = vrot.slane %v4988, 4
      %v4990 = vrot.slane %v4946, 7
      %v4991 = vrot.slane %v4990, 4
      %v4992 = vrot.slane %v4947, 7
      %v4993 = vrot.slane %v4992, 4
      %v4994 = vrot.slane %v4948, 7
      %v4995 = vrot.slane %v4994, 4
      %v4996 = vrot.slane %v4949, 7
      %v4997 = vrot.slane %v4996, 4
      %vm5014 = vmand %vm4696, %vm715
      %v5015 = vld [vmem:[%s4688 + $0x8] sm:$0x1]
      %v5016 = vsel %vm5014, %v4967, %v5015
      %5017 = vst [vmem:[%s4688 + $0x8] sm:$0x1] %v5016
      %v5018 = vld [vmem:[%s4688 + $0x14] sm:$0x1]
      %v5019 = vsel %vm5014, %v4969, %v5018
      %5020 = vst [vmem:[%s4688 + $0x14] sm:$0x1] %v5019
      %v5021 = vld [vmem:[%s4688 + $0x20] sm:$0x1]
      %v5022 = vsel %vm5014, %v4971, %v5021
      %5023 = vst [vmem:[%s4688 + $0x20] sm:$0x1] %v5022
      %v5024 = vld [vmem:[%s4688 + $0x2c] sm:$0x1]
      %v5025 = vsel %vm5014, %v4973, %v5024
      %5026 = vst [vmem:[%s4688 + $0x2c] sm:$0x1] %v5025
      %v5027 = vld [vmem:[%s4688 + $0x38] sm:$0x1]
      %v5028 = vsel %vm5014, %v4975, %v5027
      %5029 = vst [vmem:[%s4688 + $0x38] sm:$0x1] %v5028
      %v5030 = vld [vmem:[%s4688 + $0x44] sm:$0x1]
      %v5031 = vsel %vm5014, %v4977, %v5030
      %5032 = vst [vmem:[%s4688 + $0x44] sm:$0x1] %v5031
      %v5033 = vld [vmem:[%s4688 + $0x50] sm:$0x1]
      %v5034 = vsel %vm5014, %v4979, %v5033
      %5035 = vst [vmem:[%s4688 + $0x50] sm:$0x1] %v5034
      %v5036 = vld [vmem:[%s4688 + $0x5c] sm:$0x1]
      %v5037 = vsel %vm5014, %v4981, %v5036
      %5038 = vst [vmem:[%s4688 + $0x5c] sm:$0x1] %v5037
      %v5039 = vld [vmem:[%s4688 + $0x68] sm:$0x1]
      %v5040 = vsel %vm5014, %v4983, %v5039
      %5041 = vst [vmem:[%s4688 + $0x68] sm:$0x1] %v5040
      %v5042 = vld [vmem:[%s4688 + $0x74] sm:$0x1]
      %v5043 = vsel %vm5014, %v4985, %v5042
      %5044 = vst [vmem:[%s4688 + $0x74] sm:$0x1] %v5043
      %v5045 = vld [vmem:[%s4688 + $0x80] sm:$0x1]
      %v5046 = vsel %vm5014, %v4987, %v5045
      %5047 = vst [vmem:[%s4688 + $0x80] sm:$0x1] %v5046
      %v5048 = vld [vmem:[%s4688 + $0x8c] sm:$0x1]
      %v5049 = vsel %vm5014, %v4989, %v5048
      %5050 = vst [vmem:[%s4688 + $0x8c] sm:$0x1] %v5049
      %v5051 = vld [vmem:[%s4688 + $0x98] sm:$0x1]
      %v5052 = vsel %vm5014, %v4991, %v5051
      %5053 = vst [vmem:[%s4688 + $0x98] sm:$0x1] %v5052
      %v5054 = vld [vmem:[%s4688 + $0xa4] sm:$0x1]
      %v5055 = vsel %vm5014, %v4993, %v5054
      %5056 = vst [vmem:[%s4688 + $0xa4] sm:$0x1] %v5055
      %v5057 = vld [vmem:[%s4688 + $0xb0] sm:$0x1]
      %v5058 = vsel %vm5014, %v4995, %v5057
      %5059 = vst [vmem:[%s4688 + $0xb0] sm:$0x1] %v5058
      %v5060 = vld [vmem:[%s4688 + $0xbc] sm:$0x1]
      %v5061 = vsel %vm5014, %v4997, %v5060
      %5062 = vst [vmem:[%s4688 + $0xbc] sm:$0x1] %v5061
      %s5063 = scalar_lea.vmem [#allocation3], 24
      %v5064 = vld [vmem:[%s5063] sm:$0xf]
      %v5065 = vld [vmem:[%s5063 + $0x4] sm:$0xf]
      %v5066 = vld [vmem:[%s5063 + $0x8] sm:$0x1]
      %5067 = vst.msk [vmem:[#allocation3] sm:$0xf] %vm4694, %v5064
      %5068 = vst.msk [vmem:[#allocation3 + $0x4] sm:$0xf] %vm4694, %v5065
      %vm5069 = vcmask 57344
      %5070 = vst.msk [vmem:[#allocation3 + $0x8] sm:$0x1] %vm5069, %v5066
      %s5071 = scalar_lea.vmem [#allocation3], 180
      %v5072 = vld [vmem:[%s5071] sm:$0xf]
      %v5073 = vld [vmem:[%s5071 + $0x4] sm:$0xf]
      %v5074 = vld [vmem:[%s5071 + $0x8] sm:$0x1]
      %s5075 = scalar_lea.vmem [#allocation3], 204
      %5076 = vst.msk [vmem:[%s5075] sm:$0xf] %vm4694, %v5072
      %5077 = vst.msk [vmem:[%s5075 + $0x4] sm:$0xf] %vm4694, %v5073
      %5078 = vst.msk [vmem:[%s5075 + $0x8] sm:$0x1] %vm5069, %v5074
      %v5079 = vld [vmem:[#allocation3] sm:$0xf]
      %v5080 = vld [vmem:[#allocation3 + $0x4] sm:$0xf]
      %v5081 = vld [vmem:[#allocation3 + $0xc] sm:$0xf]
      %v5082 = vld [vmem:[#allocation3 + $0x10] sm:$0xf]
      %v5083 = vld [vmem:[#allocation3 + $0x18] sm:$0xf]
      %v5084 = vld [vmem:[#allocation3 + $0x1c] sm:$0xf]
      %v5085 = vld [vmem:[#allocation3 + $0x24] sm:$0xf]
      %v5086 = vld [vmem:[#allocation3 + $0x28] sm:$0xf]
      %v5087 = vld [vmem:[#allocation3 + $0x30] sm:$0xf]
      %v5088 = vld [vmem:[#allocation3 + $0x34] sm:$0xf]
      %v5089 = vld [vmem:[#allocation3 + $0x3c] sm:$0xf]
      %v5090 = vld [vmem:[#allocation3 + $0x40] sm:$0xf]
      %v5091 = vld [vmem:[#allocation3 + $0x48] sm:$0xf]
      %v5092 = vld [vmem:[#allocation3 + $0x4c] sm:$0xf]
      %v5093 = vld [vmem:[#allocation3 + $0x54] sm:$0xf]
      %v5094 = vld [vmem:[#allocation3 + $0x58] sm:$0xf]
      %v5095 = vld [vmem:[#allocation3 + $0x60] sm:$0xf]
      %v5096 = vld [vmem:[#allocation3 + $0x64] sm:$0xf]
      %v5097 = vld [vmem:[#allocation3 + $0x6c] sm:$0xf]
      %v5098 = vld [vmem:[#allocation3 + $0x70] sm:$0xf]
      %v5099 = vld [vmem:[#allocation3 + $0x78] sm:$0xf]
      %v5100 = vld [vmem:[#allocation3 + $0x7c] sm:$0xf]
      %v5101 = vld [vmem:[#allocation3 + $0x84] sm:$0xf]
      %v5102 = vld [vmem:[#allocation3 + $0x88] sm:$0xf]
      %v5103 = vld [vmem:[#allocation3 + $0x90] sm:$0xf]
      %v5104 = vld [vmem:[#allocation3 + $0x94] sm:$0xf]
      %v5105 = vld [vmem:[#allocation3 + $0x9c] sm:$0xf]
      %v5106 = vld [vmem:[#allocation3 + $0xa0] sm:$0xf]
      %v5107 = vld [vmem:[#allocation3 + $0xa8] sm:$0xf]
      %v5108 = vld [vmem:[#allocation3 + $0xac] sm:$0xf]
      %v5109 = vld [vmem:[#allocation3 + $0xb4] sm:$0xf]
      %v5110 = vld [vmem:[#allocation3 + $0xb8] sm:$0xf]
      %v5111 = vld [vmem:[#allocation3 + $0x8] sm:$0x1]
      %v5112 = vld [vmem:[#allocation3 + $0x14] sm:$0x1]
      %v5113 = vld [vmem:[#allocation3 + $0x20] sm:$0x1]
      %v5114 = vld [vmem:[#allocation3 + $0x2c] sm:$0x1]
      %v5115 = vld [vmem:[#allocation3 + $0x38] sm:$0x1]
      %v5116 = vld [vmem:[#allocation3 + $0x44] sm:$0x1]
      %v5117 = vld [vmem:[#allocation3 + $0x50] sm:$0x1]
      %v5118 = vld [vmem:[#allocation3 + $0x5c] sm:$0x1]
      %v5119 = vld [vmem:[#allocation3 + $0x68] sm:$0x1]
      %v5120 = vld [vmem:[#allocation3 + $0x74] sm:$0x1]
      %v5121 = vld [vmem:[#allocation3 + $0x80] sm:$0x1]
      %v5122 = vld [vmem:[#allocation3 + $0x8c] sm:$0x1]
      %v5123 = vld [vmem:[#allocation3 + $0x98] sm:$0x1]
      %v5124 = vld [vmem:[#allocation3 + $0xa4] sm:$0x1]
      %v5125 = vld [vmem:[#allocation3 + $0xb0] sm:$0x1]
      %v5126 = vld [vmem:[#allocation3 + $0xbc] sm:$0x1]
      %v5128 = vshrl.u32 %v5079, 16
      %v5130 = vrot.slane %v5128, 4
      %v5131 = vshll.u32 %v5079, 16
      %v5133 = vrot.slane %v5131, 5
      %v5134 = vor.u32 %v5130, %v5133
      %v5135 = vrot.slane %v5134, 4
      %v5137 = vshll.u32 %v5080, 16
      %v5139 = vrot.slane %v5137, 5
      %v5140 = vsel %vm1155, %v5135, %v5139
      %v5141 = vshrl.u32 %v5080, 16
      %v5143 = vrot.slane %v5141, 4
      %v5144 = vor.u32 %v5143, %v5139
      %v5145 = vrot.slane %v5144, 4
      %v5147 = vshll.u32 %v5111, 16
      %v5149 = vrot.slane %v5147, 5
      %v5150 = vsel %vm1155, %v5145, %v5149
      %v5152 = vshrl.u32 %v5081, 16
      %v5154 = vrot.slane %v5152, 4
      %v5155 = vshll.u32 %v5081, 16
      %v5157 = vrot.slane %v5155, 5
      %v5158 = vor.u32 %v5154, %v5157
      %v5159 = vrot.slane %v5158, 4
      %v5161 = vshll.u32 %v5082, 16
      %v5163 = vrot.slane %v5161, 5
      %v5164 = vsel %vm1155, %v5159, %v5163
      %v5165 = vshrl.u32 %v5082, 16
      %v5167 = vrot.slane %v5165, 4
      %v5168 = vor.u32 %v5167, %v5163
      %v5169 = vrot.slane %v5168, 4
      %v5171 = vshll.u32 %v5112, 16
      %v5173 = vrot.slane %v5171, 5
      %v5174 = vsel %vm1155, %v5169, %v5173
      %v5176 = vshrl.u32 %v5083, 16
      %v5178 = vrot.slane %v5176, 4
      %v5179 = vshll.u32 %v5083, 16
      %v5181 = vrot.slane %v5179, 5
      %v5182 = vor.u32 %v5178, %v5181
      %v5183 = vrot.slane %v5182, 4
      %v5185 = vshll.u32 %v5084, 16
      %v5187 = vrot.slane %v5185, 5
      %v5188 = vsel %vm1155, %v5183, %v5187
      %v5189 = vshrl.u32 %v5084, 16
      %v5191 = vrot.slane %v5189, 4
      %v5192 = vor.u32 %v5191, %v5187
      %v5193 = vrot.slane %v5192, 4
      %v5195 = vshll.u32 %v5113, 16
      %v5197 = vrot.slane %v5195, 5
      %v5198 = vsel %vm1155, %v5193, %v5197
      %v5200 = vshrl.u32 %v5085, 16
      %v5202 = vrot.slane %v5200, 4
      %v5203 = vshll.u32 %v5085, 16
      %v5205 = vrot.slane %v5203, 5
      %v5206 = vor.u32 %v5202, %v5205
      %v5207 = vrot.slane %v5206, 4
      %v5209 = vshll.u32 %v5086, 16
      %v5211 = vrot.slane %v5209, 5
      %v5212 = vsel %vm1155, %v5207, %v5211
      %v5213 = vshrl.u32 %v5086, 16
      %v5215 = vrot.slane %v5213, 4
      %v5216 = vor.u32 %v5215, %v5211
      %v5217 = vrot.slane %v5216, 4
      %v5219 = vshll.u32 %v5114, 16
      %v5221 = vrot.slane %v5219, 5
      %v5222 = vsel %vm1155, %v5217, %v5221
      %v5224 = vshrl.u32 %v5087, 16
      %v5226 = vrot.slane %v5224, 4
      %v5227 = vshll.u32 %v5087, 16
      %v5229 = vrot.slane %v5227, 5
      %v5230 = vor.u32 %v5226, %v5229
      %v5231 = vrot.slane %v5230, 4
      %v5233 = vshll.u32 %v5088, 16
      %v5235 = vrot.slane %v5233, 5
      %v5236 = vsel %vm1155, %v5231, %v5235
      %v5237 = vshrl.u32 %v5088, 16
      %v5239 = vrot.slane %v5237, 4
      %v5240 = vor.u32 %v5239, %v5235
      %v5241 = vrot.slane %v5240, 4
      %v5243 = vshll.u32 %v5115, 16
      %v5245 = vrot.slane %v5243, 5
      %v5246 = vsel %vm1155, %v5241, %v5245
      %v5248 = vshrl.u32 %v5089, 16
      %v5250 = vrot.slane %v5248, 4
      %v5251 = vshll.u32 %v5089, 16
      %v5253 = vrot.slane %v5251, 5
      %v5254 = vor.u32 %v5250, %v5253
      %v5255 = vrot.slane %v5254, 4
      %v5257 = vshll.u32 %v5090, 16
      %v5259 = vrot.slane %v5257, 5
      %v5260 = vsel %vm1155, %v5255, %v5259
      %v5261 = vshrl.u32 %v5090, 16
      %v5263 = vrot.slane %v5261, 4
      %v5264 = vor.u32 %v5263, %v5259
      %v5265 = vrot.slane %v5264, 4
      %v5267 = vshll.u32 %v5116, 16
      %v5269 = vrot.slane %v5267, 5
      %v5270 = vsel %vm1155, %v5265, %v5269
      %v5272 = vshrl.u32 %v5091, 16
      %v5274 = vrot.slane %v5272, 4
      %v5275 = vshll.u32 %v5091, 16
      %v5277 = vrot.slane %v5275, 5
      %v5278 = vor.u32 %v5274, %v5277
      %v5279 = vrot.slane %v5278, 4
      %v5281 = vshll.u32 %v5092, 16
      %v5283 = vrot.slane %v5281, 5
      %v5284 = vsel %vm1155, %v5279, %v5283
      %v5285 = vshrl.u32 %v5092, 16
      %v5287 = vrot.slane %v5285, 4
      %v5288 = vor.u32 %v5287, %v5283
      %v5289 = vrot.slane %v5288, 4
      %v5291 = vshll.u32 %v5117, 16
      %v5293 = vrot.slane %v5291, 5
      %v5294 = vsel %vm1155, %v5289, %v5293
      %v5296 = vshrl.u32 %v5093, 16
      %v5298 = vrot.slane %v5296, 4
      %v5299 = vshll.u32 %v5093, 16
      %v5301 = vrot.slane %v5299, 5
      %v5302 = vor.u32 %v5298, %v5301
      %v5303 = vrot.slane %v5302, 4
      %v5305 = vshll.u32 %v5094, 16
      %v5307 = vrot.slane %v5305, 5
      %v5308 = vsel %vm1155, %v5303, %v5307
      %v5309 = vshrl.u32 %v5094, 16
      %v5311 = vrot.slane %v5309, 4
      %v5312 = vor.u32 %v5311, %v5307
      %v5313 = vrot.slane %v5312, 4
      %v5315 = vshll.u32 %v5118, 16
      %v5317 = vrot.slane %v5315, 5
      %v5318 = vsel %vm1155, %v5313, %v5317
      %v5320 = vshrl.u32 %v5095, 16
      %v5322 = vrot.slane %v5320, 4
      %v5323 = vshll.u32 %v5095, 16
      %v5325 = vrot.slane %v5323, 5
      %v5326 = vor.u32 %v5322, %v5325
      %v5327 = vrot.slane %v5326, 4
      %v5329 = vshll.u32 %v5096, 16
      %v5331 = vrot.slane %v5329, 5
      %v5332 = vsel %vm1155, %v5327, %v5331
      %v5333 = vshrl.u32 %v5096, 16
      %v5335 = vrot.slane %v5333, 4
      %v5336 = vor.u32 %v5335, %v5331
      %v5337 = vrot.slane %v5336, 4
      %v5339 = vshll.u32 %v5119, 16
      %v5341 = vrot.slane %v5339, 5
      %v5342 = vsel %vm1155, %v5337, %v5341
      %v5344 = vshrl.u32 %v5097, 16
      %v5346 = vrot.slane %v5344, 4
      %v5347 = vshll.u32 %v5097, 16
      %v5349 = vrot.slane %v5347, 5
      %v5350 = vor.u32 %v5346, %v5349
      %v5351 = vrot.slane %v5350, 4
      %v5353 = vshll.u32 %v5098, 16
      %v5355 = vrot.slane %v5353, 5
      %v5356 = vsel %vm1155, %v5351, %v5355
      %v5357 = vshrl.u32 %v5098, 16
      %v5359 = vrot.slane %v5357, 4
      %v5360 = vor.u32 %v5359, %v5355
      %v5361 = vrot.slane %v5360, 4
      %v5363 = vshll.u32 %v5120, 16
      %v5365 = vrot.slane %v5363, 5
      %v5366 = vsel %vm1155, %v5361, %v5365
      %v5368 = vshrl.u32 %v5099, 16
      %v5370 = vrot.slane %v5368, 4
      %v5371 = vshll.u32 %v5099, 16
      %v5373 = vrot.slane %v5371, 5
      %v5374 = vor.u32 %v5370, %v5373
      %v5375 = vrot.slane %v5374, 4
      %v5377 = vshll.u32 %v5100, 16
      %v5379 = vrot.slane %v5377, 5
      %v5380 = vsel %vm1155, %v5375, %v5379
      %v5381 = vshrl.u32 %v5100, 16
      %v5383 = vrot.slane %v5381, 4
      %v5384 = vor.u32 %v5383, %v5379
      %v5385 = vrot.slane %v5384, 4
      %v5387 = vshll.u32 %v5121, 16
      %v5389 = vrot.slane %v5387, 5
      %v5390 = vsel %vm1155, %v5385, %v5389
      %v5392 = vshrl.u32 %v5101, 16
      %v5394 = vrot.slane %v5392, 4
      %v5395 = vshll.u32 %v5101, 16
      %v5397 = vrot.slane %v5395, 5
      %v5398 = vor.u32 %v5394, %v5397
      %v5399 = vrot.slane %v5398, 4
      %v5401 = vshll.u32 %v5102, 16
      %v5403 = vrot.slane %v5401, 5
      %v5404 = vsel %vm1155, %v5399, %v5403
      %v5405 = vshrl.u32 %v5102, 16
      %v5407 = vrot.slane %v5405, 4
      %v5408 = vor.u32 %v5407, %v5403
      %v5409 = vrot.slane %v5408, 4
      %v5411 = vshll.u32 %v5122, 16
      %v5413 = vrot.slane %v5411, 5
      %v5414 = vsel %vm1155, %v5409, %v5413
      %v5416 = vshrl.u32 %v5103, 16
      %v5418 = vrot.slane %v5416, 4
      %v5419 = vshll.u32 %v5103, 16
      %v5421 = vrot.slane %v5419, 5
      %v5422 = vor.u32 %v5418, %v5421
      %v5423 = vrot.slane %v5422, 4
      %v5425 = vshll.u32 %v5104, 16
      %v5427 = vrot.slane %v5425, 5
      %v5428 = vsel %vm1155, %v5423, %v5427
      %v5429 = vshrl.u32 %v5104, 16
      %v5431 = vrot.slane %v5429, 4
      %v5432 = vor.u32 %v5431, %v5427
      %v5433 = vrot.slane %v5432, 4
      %v5435 = vshll.u32 %v5123, 16
      %v5437 = vrot.slane %v5435, 5
      %v5438 = vsel %vm1155, %v5433, %v5437
      %v5440 = vshrl.u32 %v5105, 16
      %v5442 = vrot.slane %v5440, 4
      %v5443 = vshll.u32 %v5105, 16
      %v5445 = vrot.slane %v5443, 5
      %v5446 = vor.u32 %v5442, %v5445
      %v5447 = vrot.slane %v5446, 4
      %v5449 = vshll.u32 %v5106, 16
      %v5451 = vrot.slane %v5449, 5
      %v5452 = vsel %vm1155, %v5447, %v5451
      %v5453 = vshrl.u32 %v5106, 16
      %v5455 = vrot.slane %v5453, 4
      %v5456 = vor.u32 %v5455, %v5451
      %v5457 = vrot.slane %v5456, 4
      %v5459 = vshll.u32 %v5124, 16
      %v5461 = vrot.slane %v5459, 5
      %v5462 = vsel %vm1155, %v5457, %v5461
      %v5464 = vshrl.u32 %v5107, 16
      %v5466 = vrot.slane %v5464, 4
      %v5467 = vshll.u32 %v5107, 16
      %v5469 = vrot.slane %v5467, 5
      %v5470 = vor.u32 %v5466, %v5469
      %v5471 = vrot.slane %v5470, 4
      %v5473 = vshll.u32 %v5108, 16
      %v5475 = vrot.slane %v5473, 5
      %v5476 = vsel %vm1155, %v5471, %v5475
      %v5477 = vshrl.u32 %v5108, 16
      %v5479 = vrot.slane %v5477, 4
      %v5480 = vor.u32 %v5479, %v5475
      %v5481 = vrot.slane %v5480, 4
      %v5483 = vshll.u32 %v5125, 16
      %v5485 = vrot.slane %v5483, 5
      %v5486 = vsel %vm1155, %v5481, %v5485
      %v5488 = vshrl.u32 %v5109, 16
      %v5490 = vrot.slane %v5488, 4
      %v5491 = vshll.u32 %v5109, 16
      %v5493 = vrot.slane %v5491, 5
      %v5494 = vor.u32 %v5490, %v5493
      %v5495 = vrot.slane %v5494, 4
      %v5497 = vshll.u32 %v5110, 16
      %v5499 = vrot.slane %v5497, 5
      %v5500 = vsel %vm1155, %v5495, %v5499
      %v5501 = vshrl.u32 %v5110, 16
      %v5503 = vrot.slane %v5501, 4
      %v5504 = vor.u32 %v5503, %v5499
      %v5505 = vrot.slane %v5504, 4
      %v5507 = vshll.u32 %v5126, 16
      %v5509 = vrot.slane %v5507, 5
      %v5510 = vsel %vm1155, %v5505, %v5509
      %v5511 = vld [vmem:[#allocation3] sm:$0xe]
      %v5512 = vld [vmem:[#allocation3 + $0xc] sm:$0xe]
      %v5513 = vld [vmem:[#allocation3 + $0x18] sm:$0xe]
      %v5514 = vld [vmem:[#allocation3 + $0x24] sm:$0xe]
      %v5515 = vld [vmem:[#allocation3 + $0x30] sm:$0xe]
      %v5516 = vld [vmem:[#allocation3 + $0x3c] sm:$0xe]
      %v5517 = vld [vmem:[#allocation3 + $0x48] sm:$0xe]
      %v5518 = vld [vmem:[#allocation3 + $0x54] sm:$0xe]
      %v5519 = vld [vmem:[#allocation3 + $0x60] sm:$0xe]
      %v5520 = vld [vmem:[#allocation3 + $0x6c] sm:$0xe]
      %v5521 = vld [vmem:[#allocation3 + $0x78] sm:$0xe]
      %v5522 = vld [vmem:[#allocation3 + $0x84] sm:$0xe]
      %v5523 = vld [vmem:[#allocation3 + $0x90] sm:$0xe]
      %v5524 = vld [vmem:[#allocation3 + $0x9c] sm:$0xe]
      %v5525 = vld [vmem:[#allocation3 + $0xa8] sm:$0xe]
      %v5526 = vld [vmem:[#allocation3 + $0xb4] sm:$0xe]
      %v5575 = vrot.slane %v5511, 5
      %v5576 = vrot.slane %v5575, 4
      %v5577 = vrot.slane %v5080, 5
      %v5578 = vsel %vm1606, %v5576, %v5577
      %v5579 = vrot.slane %v5577, 4
      %v5580 = vrot.slane %v5111, 5
      %v5581 = vsel %vm1606, %v5579, %v5580
      %v5582 = vrot.slane %v5512, 5
      %v5583 = vrot.slane %v5582, 4
      %v5584 = vrot.slane %v5082, 5
      %v5585 = vsel %vm1606, %v5583, %v5584
      %v5586 = vrot.slane %v5584, 4
      %v5587 = vrot.slane %v5112, 5
      %v5588 = vsel %vm1606, %v5586, %v5587
      %v5589 = vrot.slane %v5513, 5
      %v5590 = vrot.slane %v5589, 4
      %v5591 = vrot.slane %v5084, 5
      %v5592 = vsel %vm1606, %v5590, %v5591
      %v5593 = vrot.slane %v5591, 4
      %v5594 = vrot.slane %v5113, 5
      %v5595 = vsel %vm1606, %v5593, %v5594
      %v5596 = vrot.slane %v5514, 5
      %v5597 = vrot.slane %v5596, 4
      %v5598 = vrot.slane %v5086, 5
      %v5599 = vsel %vm1606, %v5597, %v5598
      %v5600 = vrot.slane %v5598, 4
      %v5601 = vrot.slane %v5114, 5
      %v5602 = vsel %vm1606, %v5600, %v5601
      %v5603 = vrot.slane %v5515, 5
      %v5604 = vrot.slane %v5603, 4
      %v5605 = vrot.slane %v5088, 5
      %v5606 = vsel %vm1606, %v5604, %v5605
      %v5607 = vrot.slane %v5605, 4
      %v5608 = vrot.slane %v5115, 5
      %v5609 = vsel %vm1606, %v5607, %v5608
      %v5610 = vrot.slane %v5516, 5
      %v5611 = vrot.slane %v5610, 4
      %v5612 = vrot.slane %v5090, 5
      %v5613 = vsel %vm1606, %v5611, %v5612
      %v5614 = vrot.slane %v5612, 4
      %v5615 = vrot.slane %v5116, 5
      %v5616 = vsel %vm1606, %v5614, %v5615
      %v5617 = vrot.slane %v5517, 5
      %v5618 = vrot.slane %v5617, 4
      %v5619 = vrot.slane %v5092, 5
      %v5620 = vsel %vm1606, %v5618, %v5619
      %v5621 = vrot.slane %v5619, 4
      %v5622 = vrot.slane %v5117, 5
      %v5623 = vsel %vm1606, %v5621, %v5622
      %v5624 = vrot.slane %v5518, 5
      %v5625 = vrot.slane %v5624, 4
      %v5626 = vrot.slane %v5094, 5
      %v5627 = vsel %vm1606, %v5625, %v5626
      %v5628 = vrot.slane %v5626, 4
      %v5629 = vrot.slane %v5118, 5
      %v5630 = vsel %vm1606, %v5628, %v5629
      %v5631 = vrot.slane %v5519, 5
      %v5632 = vrot.slane %v5631, 4
      %v5633 = vrot.slane %v5096, 5
      %v5634 = vsel %vm1606, %v5632, %v5633
      %v5635 = vrot.slane %v5633, 4
      %v5636 = vrot.slane %v5119, 5
      %v5637 = vsel %vm1606, %v5635, %v5636
      %v5638 = vrot.slane %v5520, 5
      %v5639 = vrot.slane %v5638, 4
      %v5640 = vrot.slane %v5098, 5
      %v5641 = vsel %vm1606, %v5639, %v5640
      %v5642 = vrot.slane %v5640, 4
      %v5643 = vrot.slane %v5120, 5
      %v5644 = vsel %vm1606, %v5642, %v5643
      %v5645 = vrot.slane %v5521, 5
      %v5646 = vrot.slane %v5645, 4
      %v5647 = vrot.slane %v5100, 5
      %v5648 = vsel %vm1606, %v5646, %v5647
      %v5649 = vrot.slane %v5647, 4
      %v5650 = vrot.slane %v5121, 5
      %v5651 = vsel %vm1606, %v5649, %v5650
      %v5652 = vrot.slane %v5522, 5
      %v5653 = vrot.slane %v5652, 4
      %v5654 = vrot.slane %v5102, 5
      %v5655 = vsel %vm1606, %v5653, %v5654
      %v5656 = vrot.slane %v5654, 4
      %v5657 = vrot.slane %v5122, 5
      %v5658 = vsel %vm1606, %v5656, %v5657
      %v5659 = vrot.slane %v5523, 5
      %v5660 = vrot.slane %v5659, 4
      %v5661 = vrot.slane %v5104, 5
      %v5662 = vsel %vm1606, %v5660, %v5661
      %v5663 = vrot.slane %v5661, 4
      %v5664 = vrot.slane %v5123, 5
      %v5665 = vsel %vm1606, %v5663, %v5664
      %v5666 = vrot.slane %v5524, 5
      %v5667 = vrot.slane %v5666, 4
      %v5668 = vrot.slane %v5106, 5
      %v5669 = vsel %vm1606, %v5667, %v5668
      %v5670 = vrot.slane %v5668, 4
      %v5671 = vrot.slane %v5124, 5
      %v5672 = vsel %vm1606, %v5670, %v5671
      %v5673 = vrot.slane %v5525, 5
      %v5674 = vrot.slane %v5673, 4
      %v5675 = vrot.slane %v5108, 5
      %v5676 = vsel %vm1606, %v5674, %v5675
      %v5677 = vrot.slane %v5675, 4
      %v5678 = vrot.slane %v5125, 5
      %v5679 = vsel %vm1606, %v5677, %v5678
      %v5680 = vrot.slane %v5526, 5
      %v5681 = vrot.slane %v5680, 4
      %v5682 = vrot.slane %v5110, 5
      %v5683 = vsel %vm1606, %v5681, %v5682
      %v5684 = vrot.slane %v5682, 4
      %v5685 = vrot.slane %v5126, 5
      %v5686 = vsel %vm1606, %v5684, %v5685
      %v5687 = vld [vmem:[%s4688] sm:$0xf]
      %v5688 = vld [vmem:[%s4688 + $0x4] sm:$0xf]
      %v5689 = vld [vmem:[%s4688 + $0xc] sm:$0xf]
      %v5690 = vld [vmem:[%s4688 + $0x10] sm:$0xf]
      %v5691 = vld [vmem:[%s4688 + $0x18] sm:$0xf]
      %v5692 = vld [vmem:[%s4688 + $0x1c] sm:$0xf]
      %v5693 = vld [vmem:[%s4688 + $0x24] sm:$0xf]
      %v5694 = vld [vmem:[%s4688 + $0x28] sm:$0xf]
      %v5695 = vld [vmem:[%s4688 + $0x30] sm:$0xf]
      %v5696 = vld [vmem:[%s4688 + $0x34] sm:$0xf]
      %v5697 = vld [vmem:[%s4688 + $0x3c] sm:$0xf]
      %v5698 = vld [vmem:[%s4688 + $0x40] sm:$0xf]
      %v5699 = vld [vmem:[%s4688 + $0x48] sm:$0xf]
      %v5700 = vld [vmem:[%s4688 + $0x4c] sm:$0xf]
      %v5701 = vld [vmem:[%s4688 + $0x54] sm:$0xf]
      %v5702 = vld [vmem:[%s4688 + $0x58] sm:$0xf]
      %v5703 = vld [vmem:[%s4688 + $0x60] sm:$0xf]
      %v5704 = vld [vmem:[%s4688 + $0x64] sm:$0xf]
      %v5705 = vld [vmem:[%s4688 + $0x6c] sm:$0xf]
      %v5706 = vld [vmem:[%s4688 + $0x70] sm:$0xf]
      %v5707 = vld [vmem:[%s4688 + $0x78] sm:$0xf]
      %v5708 = vld [vmem:[%s4688 + $0x7c] sm:$0xf]
      %v5709 = vld [vmem:[%s4688 + $0x84] sm:$0xf]
      %v5710 = vld [vmem:[%s4688 + $0x88] sm:$0xf]
      %v5711 = vld [vmem:[%s4688 + $0x90] sm:$0xf]
      %v5712 = vld [vmem:[%s4688 + $0x94] sm:$0xf]
      %v5713 = vld [vmem:[%s4688 + $0x9c] sm:$0xf]
      %v5714 = vld [vmem:[%s4688 + $0xa0] sm:$0xf]
      %v5715 = vld [vmem:[%s4688 + $0xa8] sm:$0xf]
      %v5716 = vld [vmem:[%s4688 + $0xac] sm:$0xf]
      %v5717 = vld [vmem:[%s4688 + $0xb4] sm:$0xf]
      %v5718 = vld [vmem:[%s4688 + $0xb8] sm:$0xf]
      %v5719 = vld [vmem:[%s4688 + $0x8] sm:$0x1]
      %v5720 = vld [vmem:[%s4688 + $0x14] sm:$0x1]
      %v5721 = vld [vmem:[%s4688 + $0x20] sm:$0x1]
      %v5722 = vld [vmem:[%s4688 + $0x2c] sm:$0x1]
      %v5723 = vld [vmem:[%s4688 + $0x38] sm:$0x1]
      %v5724 = vld [vmem:[%s4688 + $0x44] sm:$0x1]
      %v5725 = vld [vmem:[%s4688 + $0x50] sm:$0x1]
      %v5726 = vld [vmem:[%s4688 + $0x5c] sm:$0x1]
      %v5727 = vld [vmem:[%s4688 + $0x68] sm:$0x1]
      %v5728 = vld [vmem:[%s4688 + $0x74] sm:$0x1]
      %v5729 = vld [vmem:[%s4688 + $0x80] sm:$0x1]
      %v5730 = vld [vmem:[%s4688 + $0x8c] sm:$0x1]
      %v5731 = vld [vmem:[%s4688 + $0x98] sm:$0x1]
      %v5732 = vld [vmem:[%s4688 + $0xa4] sm:$0x1]
      %v5733 = vld [vmem:[%s4688 + $0xb0] sm:$0x1]
      %v5734 = vld [vmem:[%s4688 + $0xbc] sm:$0x1]
      %v5736 = vshrl.u32 %v5687, 16
      %v5738 = vrot.slane %v5736, 4
      %v5739 = vshll.u32 %v5687, 16
      %v5741 = vrot.slane %v5739, 5
      %v5742 = vor.u32 %v5738, %v5741
      %v5743 = vrot.slane %v5742, 4
      %v5745 = vshll.u32 %v5688, 16
      %v5747 = vrot.slane %v5745, 5
      %v5748 = vsel %vm1155, %v5743, %v5747
      %v5749 = vshrl.u32 %v5688, 16
      %v5751 = vrot.slane %v5749, 4
      %v5752 = vor.u32 %v5751, %v5747
      %v5753 = vrot.slane %v5752, 4
      %v5755 = vshll.u32 %v5719, 16
      %v5757 = vrot.slane %v5755, 5
      %v5758 = vsel %vm1155, %v5753, %v5757
      %v5760 = vshrl.u32 %v5689, 16
      %v5762 = vrot.slane %v5760, 4
      %v5763 = vshll.u32 %v5689, 16
      %v5765 = vrot.slane %v5763, 5
      %v5766 = vor.u32 %v5762, %v5765
      %v5767 = vrot.slane %v5766, 4
      %v5769 = vshll.u32 %v5690, 16
      %v5771 = vrot.slane %v5769, 5
      %v5772 = vsel %vm1155, %v5767, %v5771
      %v5773 = vshrl.u32 %v5690, 16
      %v5775 = vrot.slane %v5773, 4
      %v5776 = vor.u32 %v5775, %v5771
      %v5777 = vrot.slane %v5776, 4
      %v5779 = vshll.u32 %v5720, 16
      %v5781 = vrot.slane %v5779, 5
      %v5782 = vsel %vm1155, %v5777, %v5781
      %v5784 = vshrl.u32 %v5691, 16
      %v5786 = vrot.slane %v5784, 4
      %v5787 = vshll.u32 %v5691, 16
      %v5789 = vrot.slane %v5787, 5
      %v5790 = vor.u32 %v5786, %v5789
      %v5791 = vrot.slane %v5790, 4
      %v5793 = vshll.u32 %v5692, 16
      %v5795 = vrot.slane %v5793, 5
      %v5796 = vsel %vm1155, %v5791, %v5795
      %v5797 = vshrl.u32 %v5692, 16
      %v5799 = vrot.slane %v5797, 4
      %v5800 = vor.u32 %v5799, %v5795
      %v5801 = vrot.slane %v5800, 4
      %v5803 = vshll.u32 %v5721, 16
      %v5805 = vrot.slane %v5803, 5
      %v5806 = vsel %vm1155, %v5801, %v5805
      %v5808 = vshrl.u32 %v5693, 16
      %v5810 = vrot.slane %v5808, 4
      %v5811 = vshll.u32 %v5693, 16
      %v5813 = vrot.slane %v5811, 5
      %v5814 = vor.u32 %v5810, %v5813
      %v5815 = vrot.slane %v5814, 4
      %v5817 = vshll.u32 %v5694, 16
      %v5819 = vrot.slane %v5817, 5
      %v5820 = vsel %vm1155, %v5815, %v5819
      %v5821 = vshrl.u32 %v5694, 16
      %v5823 = vrot.slane %v5821, 4
      %v5824 = vor.u32 %v5823, %v5819
      %v5825 = vrot.slane %v5824, 4
      %v5827 = vshll.u32 %v5722, 16
      %v5829 = vrot.slane %v5827, 5
      %v5830 = vsel %vm1155, %v5825, %v5829
      %v5832 = vshrl.u32 %v5695, 16
      %v5834 = vrot.slane %v5832, 4
      %v5835 = vshll.u32 %v5695, 16
      %v5837 = vrot.slane %v5835, 5
      %v5838 = vor.u32 %v5834, %v5837
      %v5839 = vrot.slane %v5838, 4
      %v5841 = vshll.u32 %v5696, 16
      %v5843 = vrot.slane %v5841, 5
      %v5844 = vsel %vm1155, %v5839, %v5843
      %v5845 = vshrl.u32 %v5696, 16
      %v5847 = vrot.slane %v5845, 4
      %v5848 = vor.u32 %v5847, %v5843
      %v5849 = vrot.slane %v5848, 4
      %v5851 = vshll.u32 %v5723, 16
      %v5853 = vrot.slane %v5851, 5
      %v5854 = vsel %vm1155, %v5849, %v5853
      %v5856 = vshrl.u32 %v5697, 16
      %v5858 = vrot.slane %v5856, 4
      %v5859 = vshll.u32 %v5697, 16
      %v5861 = vrot.slane %v5859, 5
      %v5862 = vor.u32 %v5858, %v5861
      %v5863 = vrot.slane %v5862, 4
      %v5865 = vshll.u32 %v5698, 16
      %v5867 = vrot.slane %v5865, 5
      %v5868 = vsel %vm1155, %v5863, %v5867
      %v5869 = vshrl.u32 %v5698, 16
      %v5871 = vrot.slane %v5869, 4
      %v5872 = vor.u32 %v5871, %v5867
      %v5873 = vrot.slane %v5872, 4
      %v5875 = vshll.u32 %v5724, 16
      %v5877 = vrot.slane %v5875, 5
      %v5878 = vsel %vm1155, %v5873, %v5877
      %v5880 = vshrl.u32 %v5699, 16
      %v5882 = vrot.slane %v5880, 4
      %v5883 = vshll.u32 %v5699, 16
      %v5885 = vrot.slane %v5883, 5
      %v5886 = vor.u32 %v5882, %v5885
      %v5887 = vrot.slane %v5886, 4
      %v5889 = vshll.u32 %v5700, 16
      %v5891 = vrot.slane %v5889, 5
      %v5892 = vsel %vm1155, %v5887, %v5891
      %v5893 = vshrl.u32 %v5700, 16
      %v5895 = vrot.slane %v5893, 4
      %v5896 = vor.u32 %v5895, %v5891
      %v5897 = vrot.slane %v5896, 4
      %v5899 = vshll.u32 %v5725, 16
      %v5901 = vrot.slane %v5899, 5
      %v5902 = vsel %vm1155, %v5897, %v5901
      %v5904 = vshrl.u32 %v5701, 16
      %v5906 = vrot.slane %v5904, 4
      %v5907 = vshll.u32 %v5701, 16
      %v5909 = vrot.slane %v5907, 5
      %v5910 = vor.u32 %v5906, %v5909
      %v5911 = vrot.slane %v5910, 4
      %v5913 = vshll.u32 %v5702, 16
      %v5915 = vrot.slane %v5913, 5
      %v5916 = vsel %vm1155, %v5911, %v5915
      %v5917 = vshrl.u32 %v5702, 16
      %v5919 = vrot.slane %v5917, 4
      %v5920 = vor.u32 %v5919, %v5915
      %v5921 = vrot.slane %v5920, 4
      %v5923 = vshll.u32 %v5726, 16
      %v5925 = vrot.slane %v5923, 5
      %v5926 = vsel %vm1155, %v5921, %v5925
      %v5928 = vshrl.u32 %v5703, 16
      %v5930 = vrot.slane %v5928, 4
      %v5931 = vshll.u32 %v5703, 16
      %v5933 = vrot.slane %v5931, 5
      %v5934 = vor.u32 %v5930, %v5933
      %v5935 = vrot.slane %v5934, 4
      %v5937 = vshll.u32 %v5704, 16
      %v5939 = vrot.slane %v5937, 5
      %v5940 = vsel %vm1155, %v5935, %v5939
      %v5941 = vshrl.u32 %v5704, 16
      %v5943 = vrot.slane %v5941, 4
      %v5944 = vor.u32 %v5943, %v5939
      %v5945 = vrot.slane %v5944, 4
      %v5947 = vshll.u32 %v5727, 16
      %v5949 = vrot.slane %v5947, 5
      %v5950 = vsel %vm1155, %v5945, %v5949
      %v5952 = vshrl.u32 %v5705, 16
      %v5954 = vrot.slane %v5952, 4
      %v5955 = vshll.u32 %v5705, 16
      %v5957 = vrot.slane %v5955, 5
      %v5958 = vor.u32 %v5954, %v5957
      %v5959 = vrot.slane %v5958, 4
      %v5961 = vshll.u32 %v5706, 16
      %v5963 = vrot.slane %v5961, 5
      %v5964 = vsel %vm1155, %v5959, %v5963
      %v5965 = vshrl.u32 %v5706, 16
      %v5967 = vrot.slane %v5965, 4
      %v5968 = vor.u32 %v5967, %v5963
      %v5969 = vrot.slane %v5968, 4
      %v5971 = vshll.u32 %v5728, 16
      %v5973 = vrot.slane %v5971, 5
      %v5974 = vsel %vm1155, %v5969, %v5973
      %v5976 = vshrl.u32 %v5707, 16
      %v5978 = vrot.slane %v5976, 4
      %v5979 = vshll.u32 %v5707, 16
      %v5981 = vrot.slane %v5979, 5
      %v5982 = vor.u32 %v5978, %v5981
      %v5983 = vrot.slane %v5982, 4
      %v5985 = vshll.u32 %v5708, 16
      %v5987 = vrot.slane %v5985, 5
      %v5988 = vsel %vm1155, %v5983, %v5987
      %v5989 = vshrl.u32 %v5708, 16
      %v5991 = vrot.slane %v5989, 4
      %v5992 = vor.u32 %v5991, %v5987
      %v5993 = vrot.slane %v5992, 4
      %v5995 = vshll.u32 %v5729, 16
      %v5997 = vrot.slane %v5995, 5
      %v5998 = vsel %vm1155, %v5993, %v5997
      %v6000 = vshrl.u32 %v5709, 16
      %v6002 = vrot.slane %v6000, 4
      %v6003 = vshll.u32 %v5709, 16
      %v6005 = vrot.slane %v6003, 5
      %v6006 = vor.u32 %v6002, %v6005
      %v6007 = vrot.slane %v6006, 4
      %v6009 = vshll.u32 %v5710, 16
      %v6011 = vrot.slane %v6009, 5
      %v6012 = vsel %vm1155, %v6007, %v6011
      %v6013 = vshrl.u32 %v5710, 16
      %v6015 = vrot.slane %v6013, 4
      %v6016 = vor.u32 %v6015, %v6011
      %v6017 = vrot.slane %v6016, 4
      %v6019 = vshll.u32 %v5730, 16
      %v6021 = vrot.slane %v6019, 5
      %v6022 = vsel %vm1155, %v6017, %v6021
      %v6024 = vshrl.u32 %v5711, 16
      %v6026 = vrot.slane %v6024, 4
      %v6027 = vshll.u32 %v5711, 16
      %v6029 = vrot.slane %v6027, 5
      %v6030 = vor.u32 %v6026, %v6029
      %v6031 = vrot.slane %v6030, 4
      %v6033 = vshll.u32 %v5712, 16
      %v6035 = vrot.slane %v6033, 5
      %v6036 = vsel %vm1155, %v6031, %v6035
      %v6037 = vshrl.u32 %v5712, 16
      %v6039 = vrot.slane %v6037, 4
      %v6040 = vor.u32 %v6039, %v6035
      %v6041 = vrot.slane %v6040, 4
      %v6043 = vshll.u32 %v5731, 16
      %v6045 = vrot.slane %v6043, 5
      %v6046 = vsel %vm1155, %v6041, %v6045
      %v6048 = vshrl.u32 %v5713, 16
      %v6050 = vrot.slane %v6048, 4
      %v6051 = vshll.u32 %v5713, 16
      %v6053 = vrot.slane %v6051, 5
      %v6054 = vor.u32 %v6050, %v6053
      %v6055 = vrot.slane %v6054, 4
      %v6057 = vshll.u32 %v5714, 16
      %v6059 = vrot.slane %v6057, 5
      %v6060 = vsel %vm1155, %v6055, %v6059
      %v6061 = vshrl.u32 %v5714, 16
      %v6063 = vrot.slane %v6061, 4
      %v6064 = vor.u32 %v6063, %v6059
      %v6065 = vrot.slane %v6064, 4
      %v6067 = vshll.u32 %v5732, 16
      %v6069 = vrot.slane %v6067, 5
      %v6070 = vsel %vm1155, %v6065, %v6069
      %v6072 = vshrl.u32 %v5715, 16
      %v6074 = vrot.slane %v6072, 4
      %v6075 = vshll.u32 %v5715, 16
      %v6077 = vrot.slane %v6075, 5
      %v6078 = vor.u32 %v6074, %v6077
      %v6079 = vrot.slane %v6078, 4
      %v6081 = vshll.u32 %v5716, 16
      %v6083 = vrot.slane %v6081, 5
      %v6084 = vsel %vm1155, %v6079, %v6083
      %v6085 = vshrl.u32 %v5716, 16
      %v6087 = vrot.slane %v6085, 4
      %v6088 = vor.u32 %v6087, %v6083
      %v6089 = vrot.slane %v6088, 4
      %v6091 = vshll.u32 %v5733, 16
      %v6093 = vrot.slane %v6091, 5
      %v6094 = vsel %vm1155, %v6089, %v6093
      %v6096 = vshrl.u32 %v5717, 16
      %v6098 = vrot.slane %v6096, 4
      %v6099 = vshll.u32 %v5717, 16
      %v6101 = vrot.slane %v6099, 5
      %v6102 = vor.u32 %v6098, %v6101
      %v6103 = vrot.slane %v6102, 4
      %v6105 = vshll.u32 %v5718, 16
      %v6107 = vrot.slane %v6105, 5
      %v6108 = vsel %vm1155, %v6103, %v6107
      %v6109 = vshrl.u32 %v5718, 16
      %v6111 = vrot.slane %v6109, 4
      %v6112 = vor.u32 %v6111, %v6107
      %v6113 = vrot.slane %v6112, 4
      %v6115 = vshll.u32 %v5734, 16
      %v6117 = vrot.slane %v6115, 5
      %v6118 = vsel %vm1155, %v6113, %v6117
      %v6119 = vld [vmem:[%s4688] sm:$0xe]
      %v6120 = vld [vmem:[%s4688 + $0xc] sm:$0xe]
      %v6121 = vld [vmem:[%s4688 + $0x18] sm:$0xe]
      %v6122 = vld [vmem:[%s4688 + $0x24] sm:$0xe]
      %v6123 = vld [vmem:[%s4688 + $0x30] sm:$0xe]
      %v6124 = vld [vmem:[%s4688 + $0x3c] sm:$0xe]
      %v6125 = vld [vmem:[%s4688 + $0x48] sm:$0xe]
      %v6126 = vld [vmem:[%s4688 + $0x54] sm:$0xe]
      %v6127 = vld [vmem:[%s4688 + $0x60] sm:$0xe]
      %v6128 = vld [vmem:[%s4688 + $0x6c] sm:$0xe]
      %v6129 = vld [vmem:[%s4688 + $0x78] sm:$0xe]
      %v6130 = vld [vmem:[%s4688 + $0x84] sm:$0xe]
      %v6131 = vld [vmem:[%s4688 + $0x90] sm:$0xe]
      %v6132 = vld [vmem:[%s4688 + $0x9c] sm:$0xe]
      %v6133 = vld [vmem:[%s4688 + $0xa8] sm:$0xe]
      %v6134 = vld [vmem:[%s4688 + $0xb4] sm:$0xe]
      %v6183 = vrot.slane %v6119, 5
      %v6184 = vrot.slane %v6183, 4
      %v6185 = vrot.slane %v5688, 5
      %v6186 = vsel %vm1606, %v6184, %v6185
      %v6187 = vrot.slane %v6185, 4
      %v6188 = vrot.slane %v5719, 5
      %v6189 = vsel %vm1606, %v6187, %v6188
      %v6190 = vrot.slane %v6120, 5
      %v6191 = vrot.slane %v6190, 4
      %v6192 = vrot.slane %v5690, 5
      %v6193 = vsel %vm1606, %v6191, %v6192
      %v6194 = vrot.slane %v6192, 4
      %v6195 = vrot.slane %v5720, 5
      %v6196 = vsel %vm1606, %v6194, %v6195
      %v6197 = vrot.slane %v6121, 5
      %v6198 = vrot.slane %v6197, 4
      %v6199 = vrot.slane %v5692, 5
      %v6200 = vsel %vm1606, %v6198, %v6199
      %v6201 = vrot.slane %v6199, 4
      %v6202 = vrot.slane %v5721, 5
      %v6203 = vsel %vm1606, %v6201, %v6202
      %v6204 = vrot.slane %v6122, 5
      %v6205 = vrot.slane %v6204, 4
      %v6206 = vrot.slane %v5694, 5
      %v6207 = vsel %vm1606, %v6205, %v6206
      %v6208 = vrot.slane %v6206, 4
      %v6209 = vrot.slane %v5722, 5
      %v6210 = vsel %vm1606, %v6208, %v6209
      %v6211 = vrot.slane %v6123, 5
      %v6212 = vrot.slane %v6211, 4
      %v6213 = vrot.slane %v5696, 5
      %v6214 = vsel %vm1606, %v6212, %v6213
      %v6215 = vrot.slane %v6213, 4
      %v6216 = vrot.slane %v5723, 5
      %v6217 = vsel %vm1606, %v6215, %v6216
      %v6218 = vrot.slane %v6124, 5
      %v6219 = vrot.slane %v6218, 4
      %v6220 = vrot.slane %v5698, 5
      %v6221 = vsel %vm1606, %v6219, %v6220
      %v6222 = vrot.slane %v6220, 4
      %v6223 = vrot.slane %v5724, 5
      %v6224 = vsel %vm1606, %v6222, %v6223
      %v6225 = vrot.slane %v6125, 5
      %v6226 = vrot.slane %v6225, 4
      %v6227 = vrot.slane %v5700, 5
      %v6228 = vsel %vm1606, %v6226, %v6227
      %v6229 = vrot.slane %v6227, 4
      %v6230 = vrot.slane %v5725, 5
      %v6231 = vsel %vm1606, %v6229, %v6230
      %v6232 = vrot.slane %v6126, 5
      %v6233 = vrot.slane %v6232, 4
      %v6234 = vrot.slane %v5702, 5
      %v6235 = vsel %vm1606, %v6233, %v6234
      %v6236 = vrot.slane %v6234, 4
      %v6237 = vrot.slane %v5726, 5
      %v6238 = vsel %vm1606, %v6236, %v6237
      %v6239 = vrot.slane %v6127, 5
      %v6240 = vrot.slane %v6239, 4
      %v6241 = vrot.slane %v5704, 5
      %v6242 = vsel %vm1606, %v6240, %v6241
      %v6243 = vrot.slane %v6241, 4
      %v6244 = vrot.slane %v5727, 5
      %v6245 = vsel %vm1606, %v6243, %v6244
      %v6246 = vrot.slane %v6128, 5
      %v6247 = vrot.slane %v6246, 4
      %v6248 = vrot.slane %v5706, 5
      %v6249 = vsel %vm1606, %v6247, %v6248
      %v6250 = vrot.slane %v6248, 4
      %v6251 = vrot.slane %v5728, 5
      %v6252 = vsel %vm1606, %v6250, %v6251
      %v6253 = vrot.slane %v6129, 5
      %v6254 = vrot.slane %v6253, 4
      %v6255 = vrot.slane %v5708, 5
      %v6256 = vsel %vm1606, %v6254, %v6255
      %v6257 = vrot.slane %v6255, 4
      %v6258 = vrot.slane %v5729, 5
      %v6259 = vsel %vm1606, %v6257, %v6258
      %v6260 = vrot.slane %v6130, 5
      %v6261 = vrot.slane %v6260, 4
      %v6262 = vrot.slane %v5710, 5
      %v6263 = vsel %vm1606, %v6261, %v6262
      %v6264 = vrot.slane %v6262, 4
      %v6265 = vrot.slane %v5730, 5
      %v6266 = vsel %vm1606, %v6264, %v6265
      %v6267 = vrot.slane %v6131, 5
      %v6268 = vrot.slane %v6267, 4
      %v6269 = vrot.slane %v5712, 5
      %v6270 = vsel %vm1606, %v6268, %v6269
      %v6271 = vrot.slane %v6269, 4
      %v6272 = vrot.slane %v5731, 5
      %v6273 = vsel %vm1606, %v6271, %v6272
      %v6274 = vrot.slane %v6132, 5
      %v6275 = vrot.slane %v6274, 4
      %v6276 = vrot.slane %v5714, 5
      %v6277 = vsel %vm1606, %v6275, %v6276
      %v6278 = vrot.slane %v6276, 4
      %v6279 = vrot.slane %v5732, 5
      %v6280 = vsel %vm1606, %v6278, %v6279
      %v6281 = vrot.slane %v6133, 5
      %v6282 = vrot.slane %v6281, 4
      %v6283 = vrot.slane %v5716, 5
      %v6284 = vsel %vm1606, %v6282, %v6283
      %v6285 = vrot.slane %v6283, 4
      %v6286 = vrot.slane %v5733, 5
      %v6287 = vsel %vm1606, %v6285, %v6286
      %v6288 = vrot.slane %v6134, 5
      %v6289 = vrot.slane %v6288, 4
      %v6290 = vrot.slane %v5718, 5
      %v6291 = vsel %vm1606, %v6289, %v6290
      %v6292 = vrot.slane %v6290, 4
      %v6293 = vrot.slane %v5734, 5
      %v6294 = vsel %vm1606, %v6292, %v6293
      %v6295 = vld [vmem:[%s5063] sm:$0xf]
      %v6296 = vld [vmem:[%s5063 + $0x4] sm:$0xf]
      %v6297 = vld [vmem:[%s5063 + $0xc] sm:$0xf]
      %v6298 = vld [vmem:[%s5063 + $0x10] sm:$0xf]
      %v6299 = vld [vmem:[%s5063 + $0x18] sm:$0xf]
      %v6300 = vld [vmem:[%s5063 + $0x1c] sm:$0xf]
      %v6301 = vld [vmem:[%s5063 + $0x24] sm:$0xf]
      %v6302 = vld [vmem:[%s5063 + $0x28] sm:$0xf]
      %v6303 = vld [vmem:[%s5063 + $0x30] sm:$0xf]
      %v6304 = vld [vmem:[%s5063 + $0x34] sm:$0xf]
      %v6305 = vld [vmem:[%s5063 + $0x3c] sm:$0xf]
      %v6306 = vld [vmem:[%s5063 + $0x40] sm:$0xf]
      %v6307 = vld [vmem:[%s5063 + $0x48] sm:$0xf]
      %v6308 = vld [vmem:[%s5063 + $0x4c] sm:$0xf]
      %v6309 = vld [vmem:[%s5063 + $0x54] sm:$0xf]
      %v6310 = vld [vmem:[%s5063 + $0x58] sm:$0xf]
      %v6311 = vld [vmem:[%s5063 + $0x60] sm:$0xf]
      %v6312 = vld [vmem:[%s5063 + $0x64] sm:$0xf]
      %v6313 = vld [vmem:[%s5063 + $0x6c] sm:$0xf]
      %v6314 = vld [vmem:[%s5063 + $0x70] sm:$0xf]
      %v6315 = vld [vmem:[%s5063 + $0x78] sm:$0xf]
      %v6316 = vld [vmem:[%s5063 + $0x7c] sm:$0xf]
      %v6317 = vld [vmem:[%s5063 + $0x84] sm:$0xf]
      %v6318 = vld [vmem:[%s5063 + $0x88] sm:$0xf]
      %v6319 = vld [vmem:[%s5063 + $0x90] sm:$0xf]
      %v6320 = vld [vmem:[%s5063 + $0x94] sm:$0xf]
      %v6321 = vld [vmem:[%s5063 + $0x9c] sm:$0xf]
      %v6322 = vld [vmem:[%s5063 + $0xa0] sm:$0xf]
      %v6323 = vld [vmem:[%s5063 + $0xa8] sm:$0xf]
      %v6324 = vld [vmem:[%s5063 + $0xac] sm:$0xf]
      %v6325 = vld [vmem:[%s5063 + $0xb4] sm:$0xf]
      %v6326 = vld [vmem:[%s5063 + $0xb8] sm:$0xf]
      %v6327 = vld [vmem:[%s5063 + $0x8] sm:$0x1]
      %v6328 = vld [vmem:[%s5063 + $0x14] sm:$0x1]
      %v6329 = vld [vmem:[%s5063 + $0x20] sm:$0x1]
      %v6330 = vld [vmem:[%s5063 + $0x2c] sm:$0x1]
      %v6331 = vld [vmem:[%s5063 + $0x38] sm:$0x1]
      %v6332 = vld [vmem:[%s5063 + $0x44] sm:$0x1]
      %v6333 = vld [vmem:[%s5063 + $0x50] sm:$0x1]
      %v6334 = vld [vmem:[%s5063 + $0x5c] sm:$0x1]
      %v6335 = vld [vmem:[%s5063 + $0x68] sm:$0x1]
      %v6336 = vld [vmem:[%s5063 + $0x74] sm:$0x1]
      %v6337 = vld [vmem:[%s5063 + $0x80] sm:$0x1]
      %v6338 = vld [vmem:[%s5063 + $0x8c] sm:$0x1]
      %v6339 = vld [vmem:[%s5063 + $0x98] sm:$0x1]
      %v6340 = vld [vmem:[%s5063 + $0xa4] sm:$0x1]
      %v6341 = vld [vmem:[%s5063 + $0xb0] sm:$0x1]
      %v6342 = vld [vmem:[%s5063 + $0xbc] sm:$0x1]
      %v6344 = vshrl.u32 %v6295, 16
      %v6346 = vrot.slane %v6344, 4
      %v6347 = vshll.u32 %v6295, 16
      %v6349 = vrot.slane %v6347, 5
      %v6350 = vor.u32 %v6346, %v6349
      %v6351 = vrot.slane %v6350, 4
      %v6353 = vshll.u32 %v6296, 16
      %v6355 = vrot.slane %v6353, 5
      %v6356 = vsel %vm1155, %v6351, %v6355
      %v6357 = vshrl.u32 %v6296, 16
      %v6359 = vrot.slane %v6357, 4
      %v6360 = vor.u32 %v6359, %v6355
      %v6361 = vrot.slane %v6360, 4
      %v6363 = vshll.u32 %v6327, 16
      %v6365 = vrot.slane %v6363, 5
      %v6366 = vsel %vm1155, %v6361, %v6365
      %v6368 = vshrl.u32 %v6297, 16
      %v6370 = vrot.slane %v6368, 4
      %v6371 = vshll.u32 %v6297, 16
      %v6373 = vrot.slane %v6371, 5
      %v6374 = vor.u32 %v6370, %v6373
      %v6375 = vrot.slane %v6374, 4
      %v6377 = vshll.u32 %v6298, 16
      %v6379 = vrot.slane %v6377, 5
      %v6380 = vsel %vm1155, %v6375, %v6379
      %v6381 = vshrl.u32 %v6298, 16
      %v6383 = vrot.slane %v6381, 4
      %v6384 = vor.u32 %v6383, %v6379
      %v6385 = vrot.slane %v6384, 4
      %v6387 = vshll.u32 %v6328, 16
      %v6389 = vrot.slane %v6387, 5
      %v6390 = vsel %vm1155, %v6385, %v6389
      %v6392 = vshrl.u32 %v6299, 16
      %v6394 = vrot.slane %v6392, 4
      %v6395 = vshll.u32 %v6299, 16
      %v6397 = vrot.slane %v6395, 5
      %v6398 = vor.u32 %v6394, %v6397
      %v6399 = vrot.slane %v6398, 4
      %v6401 = vshll.u32 %v6300, 16
      %v6403 = vrot.slane %v6401, 5
      %v6404 = vsel %vm1155, %v6399, %v6403
      %v6405 = vshrl.u32 %v6300, 16
      %v6407 = vrot.slane %v6405, 4
      %v6408 = vor.u32 %v6407, %v6403
      %v6409 = vrot.slane %v6408, 4
      %v6411 = vshll.u32 %v6329, 16
      %v6413 = vrot.slane %v6411, 5
      %v6414 = vsel %vm1155, %v6409, %v6413
      %v6416 = vshrl.u32 %v6301, 16
      %v6418 = vrot.slane %v6416, 4
      %v6419 = vshll.u32 %v6301, 16
      %v6421 = vrot.slane %v6419, 5
      %v6422 = vor.u32 %v6418, %v6421
      %v6423 = vrot.slane %v6422, 4
      %v6425 = vshll.u32 %v6302, 16
      %v6427 = vrot.slane %v6425, 5
      %v6428 = vsel %vm1155, %v6423, %v6427
      %v6429 = vshrl.u32 %v6302, 16
      %v6431 = vrot.slane %v6429, 4
      %v6432 = vor.u32 %v6431, %v6427
      %v6433 = vrot.slane %v6432, 4
      %v6435 = vshll.u32 %v6330, 16
      %v6437 = vrot.slane %v6435, 5
      %v6438 = vsel %vm1155, %v6433, %v6437
      %v6440 = vshrl.u32 %v6303, 16
      %v6442 = vrot.slane %v6440, 4
      %v6443 = vshll.u32 %v6303, 16
      %v6445 = vrot.slane %v6443, 5
      %v6446 = vor.u32 %v6442, %v6445
      %v6447 = vrot.slane %v6446, 4
      %v6449 = vshll.u32 %v6304, 16
      %v6451 = vrot.slane %v6449, 5
      %v6452 = vsel %vm1155, %v6447, %v6451
      %v6453 = vshrl.u32 %v6304, 16
      %v6455 = vrot.slane %v6453, 4
      %v6456 = vor.u32 %v6455, %v6451
      %v6457 = vrot.slane %v6456, 4
      %v6459 = vshll.u32 %v6331, 16
      %v6461 = vrot.slane %v6459, 5
      %v6462 = vsel %vm1155, %v6457, %v6461
      %v6464 = vshrl.u32 %v6305, 16
      %v6466 = vrot.slane %v6464, 4
      %v6467 = vshll.u32 %v6305, 16
      %v6469 = vrot.slane %v6467, 5
      %v6470 = vor.u32 %v6466, %v6469
      %v6471 = vrot.slane %v6470, 4
      %v6473 = vshll.u32 %v6306, 16
      %v6475 = vrot.slane %v6473, 5
      %v6476 = vsel %vm1155, %v6471, %v6475
      %v6477 = vshrl.u32 %v6306, 16
      %v6479 = vrot.slane %v6477, 4
      %v6480 = vor.u32 %v6479, %v6475
      %v6481 = vrot.slane %v6480, 4
      %v6483 = vshll.u32 %v6332, 16
      %v6485 = vrot.slane %v6483, 5
      %v6486 = vsel %vm1155, %v6481, %v6485
      %v6488 = vshrl.u32 %v6307, 16
      %v6490 = vrot.slane %v6488, 4
      %v6491 = vshll.u32 %v6307, 16
      %v6493 = vrot.slane %v6491, 5
      %v6494 = vor.u32 %v6490, %v6493
      %v6495 = vrot.slane %v6494, 4
      %v6497 = vshll.u32 %v6308, 16
      %v6499 = vrot.slane %v6497, 5
      %v6500 = vsel %vm1155, %v6495, %v6499
      %v6501 = vshrl.u32 %v6308, 16
      %v6503 = vrot.slane %v6501, 4
      %v6504 = vor.u32 %v6503, %v6499
      %v6505 = vrot.slane %v6504, 4
      %v6507 = vshll.u32 %v6333, 16
      %v6509 = vrot.slane %v6507, 5
      %v6510 = vsel %vm1155, %v6505, %v6509
      %v6512 = vshrl.u32 %v6309, 16
      %v6514 = vrot.slane %v6512, 4
      %v6515 = vshll.u32 %v6309, 16
      %v6517 = vrot.slane %v6515, 5
      %v6518 = vor.u32 %v6514, %v6517
      %v6519 = vrot.slane %v6518, 4
      %v6521 = vshll.u32 %v6310, 16
      %v6523 = vrot.slane %v6521, 5
      %v6524 = vsel %vm1155, %v6519, %v6523
      %v6525 = vshrl.u32 %v6310, 16
      %v6527 = vrot.slane %v6525, 4
      %v6528 = vor.u32 %v6527, %v6523
      %v6529 = vrot.slane %v6528, 4
      %v6531 = vshll.u32 %v6334, 16
      %v6533 = vrot.slane %v6531, 5
      %v6534 = vsel %vm1155, %v6529, %v6533
      %v6536 = vshrl.u32 %v6311, 16
      %v6538 = vrot.slane %v6536, 4
      %v6539 = vshll.u32 %v6311, 16
      %v6541 = vrot.slane %v6539, 5
      %v6542 = vor.u32 %v6538, %v6541
      %v6543 = vrot.slane %v6542, 4
      %v6545 = vshll.u32 %v6312, 16
      %v6547 = vrot.slane %v6545, 5
      %v6548 = vsel %vm1155, %v6543, %v6547
      %v6549 = vshrl.u32 %v6312, 16
      %v6551 = vrot.slane %v6549, 4
      %v6552 = vor.u32 %v6551, %v6547
      %v6553 = vrot.slane %v6552, 4
      %v6555 = vshll.u32 %v6335, 16
      %v6557 = vrot.slane %v6555, 5
      %v6558 = vsel %vm1155, %v6553, %v6557
      %v6560 = vshrl.u32 %v6313, 16
      %v6562 = vrot.slane %v6560, 4
      %v6563 = vshll.u32 %v6313, 16
      %v6565 = vrot.slane %v6563, 5
      %v6566 = vor.u32 %v6562, %v6565
      %v6567 = vrot.slane %v6566, 4
      %v6569 = vshll.u32 %v6314, 16
      %v6571 = vrot.slane %v6569, 5
      %v6572 = vsel %vm1155, %v6567, %v6571
      %v6573 = vshrl.u32 %v6314, 16
      %v6575 = vrot.slane %v6573, 4
      %v6576 = vor.u32 %v6575, %v6571
      %v6577 = vrot.slane %v6576, 4
      %v6579 = vshll.u32 %v6336, 16
      %v6581 = vrot.slane %v6579, 5
      %v6582 = vsel %vm1155, %v6577, %v6581
      %v6584 = vshrl.u32 %v6315, 16
      %v6586 = vrot.slane %v6584, 4
      %v6587 = vshll.u32 %v6315, 16
      %v6589 = vrot.slane %v6587, 5
      %v6590 = vor.u32 %v6586, %v6589
      %v6591 = vrot.slane %v6590, 4
      %v6593 = vshll.u32 %v6316, 16
      %v6595 = vrot.slane %v6593, 5
      %v6596 = vsel %vm1155, %v6591, %v6595
      %v6597 = vshrl.u32 %v6316, 16
      %v6599 = vrot.slane %v6597, 4
      %v6600 = vor.u32 %v6599, %v6595
      %v6601 = vrot.slane %v6600, 4
      %v6603 = vshll.u32 %v6337, 16
      %v6605 = vrot.slane %v6603, 5
      %v6606 = vsel %vm1155, %v6601, %v6605
      %v6608 = vshrl.u32 %v6317, 16
      %v6610 = vrot.slane %v6608, 4
      %v6611 = vshll.u32 %v6317, 16
      %v6613 = vrot.slane %v6611, 5
      %v6614 = vor.u32 %v6610, %v6613
      %v6615 = vrot.slane %v6614, 4
      %v6617 = vshll.u32 %v6318, 16
      %v6619 = vrot.slane %v6617, 5
      %v6620 = vsel %vm1155, %v6615, %v6619
      %v6621 = vshrl.u32 %v6318, 16
      %v6623 = vrot.slane %v6621, 4
      %v6624 = vor.u32 %v6623, %v6619
      %v6625 = vrot.slane %v6624, 4
      %v6627 = vshll.u32 %v6338, 16
      %v6629 = vrot.slane %v6627, 5
      %v6630 = vsel %vm1155, %v6625, %v6629
      %v6632 = vshrl.u32 %v6319, 16
      %v6634 = vrot.slane %v6632, 4
      %v6635 = vshll.u32 %v6319, 16
      %v6637 = vrot.slane %v6635, 5
      %v6638 = vor.u32 %v6634, %v6637
      %v6639 = vrot.slane %v6638, 4
      %v6641 = vshll.u32 %v6320, 16
      %v6643 = vrot.slane %v6641, 5
      %v6644 = vsel %vm1155, %v6639, %v6643
      %v6645 = vshrl.u32 %v6320, 16
      %v6647 = vrot.slane %v6645, 4
      %v6648 = vor.u32 %v6647, %v6643
      %v6649 = vrot.slane %v6648, 4
      %v6651 = vshll.u32 %v6339, 16
      %v6653 = vrot.slane %v6651, 5
      %v6654 = vsel %vm1155, %v6649, %v6653
      %v6656 = vshrl.u32 %v6321, 16
      %v6658 = vrot.slane %v6656, 4
      %v6659 = vshll.u32 %v6321, 16
      %v6661 = vrot.slane %v6659, 5
      %v6662 = vor.u32 %v6658, %v6661
      %v6663 = vrot.slane %v6662, 4
      %v6665 = vshll.u32 %v6322, 16
      %v6667 = vrot.slane %v6665, 5
      %v6668 = vsel %vm1155, %v6663, %v6667
      %v6669 = vshrl.u32 %v6322, 16
      %v6671 = vrot.slane %v6669, 4
      %v6672 = vor.u32 %v6671, %v6667
      %v6673 = vrot.slane %v6672, 4
      %v6675 = vshll.u32 %v6340, 16
      %v6677 = vrot.slane %v6675, 5
      %v6678 = vsel %vm1155, %v6673, %v6677
      %v6680 = vshrl.u32 %v6323, 16
      %v6682 = vrot.slane %v6680, 4
      %v6683 = vshll.u32 %v6323, 16
      %v6685 = vrot.slane %v6683, 5
      %v6686 = vor.u32 %v6682, %v6685
      %v6687 = vrot.slane %v6686, 4
      %v6689 = vshll.u32 %v6324, 16
      %v6691 = vrot.slane %v6689, 5
      %v6692 = vsel %vm1155, %v6687, %v6691
      %v6693 = vshrl.u32 %v6324, 16
      %v6695 = vrot.slane %v6693, 4
      %v6696 = vor.u32 %v6695, %v6691
      %v6697 = vrot.slane %v6696, 4
      %v6699 = vshll.u32 %v6341, 16
      %v6701 = vrot.slane %v6699, 5
      %v6702 = vsel %vm1155, %v6697, %v6701
      %v6704 = vshrl.u32 %v6325, 16
      %v6706 = vrot.slane %v6704, 4
      %v6707 = vshll.u32 %v6325, 16
      %v6709 = vrot.slane %v6707, 5
      %v6710 = vor.u32 %v6706, %v6709
      %v6711 = vrot.slane %v6710, 4
      %v6713 = vshll.u32 %v6326, 16
      %v6715 = vrot.slane %v6713, 5
      %v6716 = vsel %vm1155, %v6711, %v6715
      %v6717 = vshrl.u32 %v6326, 16
      %v6719 = vrot.slane %v6717, 4
      %v6720 = vor.u32 %v6719, %v6715
      %v6721 = vrot.slane %v6720, 4
      %v6723 = vshll.u32 %v6342, 16
      %v6725 = vrot.slane %v6723, 5
      %v6726 = vsel %vm1155, %v6721, %v6725
      %v6727 = vld [vmem:[%s5063] sm:$0xe]
      %v6728 = vld [vmem:[%s5063 + $0xc] sm:$0xe]
      %v6729 = vld [vmem:[%s5063 + $0x18] sm:$0xe]
      %v6730 = vld [vmem:[%s5063 + $0x24] sm:$0xe]
      %v6731 = vld [vmem:[%s5063 + $0x30] sm:$0xe]
      %v6732 = vld [vmem:[%s5063 + $0x3c] sm:$0xe]
      %v6733 = vld [vmem:[%s5063 + $0x48] sm:$0xe]
      %v6734 = vld [vmem:[%s5063 + $0x54] sm:$0xe]
      %v6735 = vld [vmem:[%s5063 + $0x60] sm:$0xe]
      %v6736 = vld [vmem:[%s5063 + $0x6c] sm:$0xe]
      %v6737 = vld [vmem:[%s5063 + $0x78] sm:$0xe]
      %v6738 = vld [vmem:[%s5063 + $0x84] sm:$0xe]
      %v6739 = vld [vmem:[%s5063 + $0x90] sm:$0xe]
      %v6740 = vld [vmem:[%s5063 + $0x9c] sm:$0xe]
      %v6741 = vld [vmem:[%s5063 + $0xa8] sm:$0xe]
      %v6742 = vld [vmem:[%s5063 + $0xb4] sm:$0xe]
      %v6791 = vrot.slane %v6727, 5
      %v6792 = vrot.slane %v6791, 4
      %v6793 = vrot.slane %v6296, 5
      %v6794 = vsel %vm1606, %v6792, %v6793
      %v6795 = vrot.slane %v6793, 4
      %v6796 = vrot.slane %v6327, 5
      %v6797 = vsel %vm1606, %v6795, %v6796
      %v6798 = vrot.slane %v6728, 5
      %v6799 = vrot.slane %v6798, 4
      %v6800 = vrot.slane %v6298, 5
      %v6801 = vsel %vm1606, %v6799, %v6800
      %v6802 = vrot.slane %v6800, 4
      %v6803 = vrot.slane %v6328, 5
      %v6804 = vsel %vm1606, %v6802, %v6803
      %v6805 = vrot.slane %v6729, 5
      %v6806 = vrot.slane %v6805, 4
      %v6807 = vrot.slane %v6300, 5
      %v6808 = vsel %vm1606, %v6806, %v6807
      %v6809 = vrot.slane %v6807, 4
      %v6810 = vrot.slane %v6329, 5
      %v6811 = vsel %vm1606, %v6809, %v6810
      %v6812 = vrot.slane %v6730, 5
      %v6813 = vrot.slane %v6812, 4
      %v6814 = vrot.slane %v6302, 5
      %v6815 = vsel %vm1606, %v6813, %v6814
      %v6816 = vrot.slane %v6814, 4
      %v6817 = vrot.slane %v6330, 5
      %v6818 = vsel %vm1606, %v6816, %v6817
      %v6819 = vrot.slane %v6731, 5
      %v6820 = vrot.slane %v6819, 4
      %v6821 = vrot.slane %v6304, 5
      %v6822 = vsel %vm1606, %v6820, %v6821
      %v6823 = vrot.slane %v6821, 4
      %v6824 = vrot.slane %v6331, 5
      %v6825 = vsel %vm1606, %v6823, %v6824
      %v6826 = vrot.slane %v6732, 5
      %v6827 = vrot.slane %v6826, 4
      %v6828 = vrot.slane %v6306, 5
      %v6829 = vsel %vm1606, %v6827, %v6828
      %v6830 = vrot.slane %v6828, 4
      %v6831 = vrot.slane %v6332, 5
      %v6832 = vsel %vm1606, %v6830, %v6831
      %v6833 = vrot.slane %v6733, 5
      %v6834 = vrot.slane %v6833, 4
      %v6835 = vrot.slane %v6308, 5
      %v6836 = vsel %vm1606, %v6834, %v6835
      %v6837 = vrot.slane %v6835, 4
      %v6838 = vrot.slane %v6333, 5
      %v6839 = vsel %vm1606, %v6837, %v6838
      %v6840 = vrot.slane %v6734, 5
      %v6841 = vrot.slane %v6840, 4
      %v6842 = vrot.slane %v6310, 5
      %v6843 = vsel %vm1606, %v6841, %v6842
      %v6844 = vrot.slane %v6842, 4
      %v6845 = vrot.slane %v6334, 5
      %v6846 = vsel %vm1606, %v6844, %v6845
      %v6847 = vrot.slane %v6735, 5
      %v6848 = vrot.slane %v6847, 4
      %v6849 = vrot.slane %v6312, 5
      %v6850 = vsel %vm1606, %v6848, %v6849
      %v6851 = vrot.slane %v6849, 4
      %v6852 = vrot.slane %v6335, 5
      %v6853 = vsel %vm1606, %v6851, %v6852
      %v6854 = vrot.slane %v6736, 5
      %v6855 = vrot.slane %v6854, 4
      %v6856 = vrot.slane %v6314, 5
      %v6857 = vsel %vm1606, %v6855, %v6856
      %v6858 = vrot.slane %v6856, 4
      %v6859 = vrot.slane %v6336, 5
      %v6860 = vsel %vm1606, %v6858, %v6859
      %v6861 = vrot.slane %v6737, 5
      %v6862 = vrot.slane %v6861, 4
      %v6863 = vrot.slane %v6316, 5
      %v6864 = vsel %vm1606, %v6862, %v6863
      %v6865 = vrot.slane %v6863, 4
      %v6866 = vrot.slane %v6337, 5
      %v6867 = vsel %vm1606, %v6865, %v6866
      %v6868 = vrot.slane %v6738, 5
      %v6869 = vrot.slane %v6868, 4
      %v6870 = vrot.slane %v6318, 5
      %v6871 = vsel %vm1606, %v6869, %v6870
      %v6872 = vrot.slane %v6870, 4
      %v6873 = vrot.slane %v6338, 5
      %v6874 = vsel %vm1606, %v6872, %v6873
      %v6875 = vrot.slane %v6739, 5
      %v6876 = vrot.slane %v6875, 4
      %v6877 = vrot.slane %v6320, 5
      %v6878 = vsel %vm1606, %v6876, %v6877
      %v6879 = vrot.slane %v6877, 4
      %v6880 = vrot.slane %v6339, 5
      %v6881 = vsel %vm1606, %v6879, %v6880
      %v6882 = vrot.slane %v6740, 5
      %v6883 = vrot.slane %v6882, 4
      %v6884 = vrot.slane %v6322, 5
      %v6885 = vsel %vm1606, %v6883, %v6884
      %v6886 = vrot.slane %v6884, 4
      %v6887 = vrot.slane %v6340, 5
      %v6888 = vsel %vm1606, %v6886, %v6887
      %v6889 = vrot.slane %v6741, 5
      %v6890 = vrot.slane %v6889, 4
      %v6891 = vrot.slane %v6324, 5
      %v6892 = vsel %vm1606, %v6890, %v6891
      %v6893 = vrot.slane %v6891, 4
      %v6894 = vrot.slane %v6341, 5
      %v6895 = vsel %vm1606, %v6893, %v6894
      %v6896 = vrot.slane %v6742, 5
      %v6897 = vrot.slane %v6896, 4
      %v6898 = vrot.slane %v6326, 5
      %v6899 = vsel %vm1606, %v6897, %v6898
      %v6900 = vrot.slane %v6898, 4
      %v6901 = vrot.slane %v6342, 5
      %v6902 = vsel %vm1606, %v6900, %v6901
      %v6919 = vunpack.c.l.b16 %v5079
      %v6920 = vunpack.c.l.b16 %v5080
      %v6921 = vunpack.c.l.b16 %v5081
      %v6922 = vunpack.c.l.b16 %v5082
      %v6923 = vunpack.c.l.b16 %v5083
      %v6924 = vunpack.c.l.b16 %v5084
      %v6925 = vunpack.c.l.b16 %v5085
      %v6926 = vunpack.c.l.b16 %v5086
      %v6927 = vunpack.c.l.b16 %v5087
      %v6928 = vunpack.c.l.b16 %v5088
      %v6929 = vunpack.c.l.b16 %v5089
      %v6930 = vunpack.c.l.b16 %v5090
      %v6931 = vunpack.c.l.b16 %v5091
      %v6932 = vunpack.c.l.b16 %v5092
      %v6933 = vunpack.c.l.b16 %v5093
      %v6934 = vunpack.c.l.b16 %v5094
      %v6935 = vunpack.c.l.b16 %v5095
      %v6936 = vunpack.c.l.b16 %v5096
      %v6937 = vunpack.c.l.b16 %v5097
      %v6938 = vunpack.c.l.b16 %v5098
      %v6939 = vunpack.c.l.b16 %v5099
      %v6940 = vunpack.c.l.b16 %v5100
      %v6941 = vunpack.c.l.b16 %v5101
      %v6942 = vunpack.c.l.b16 %v5102
      %v6943 = vunpack.c.l.b16 %v5103
      %v6944 = vunpack.c.l.b16 %v5104
      %v6945 = vunpack.c.l.b16 %v5105
      %v6946 = vunpack.c.l.b16 %v5106
      %v6947 = vunpack.c.l.b16 %v5107
      %v6948 = vunpack.c.l.b16 %v5108
      %v6949 = vunpack.c.l.b16 %v5109
      %v6950 = vunpack.c.l.b16 %v5110
      %v6951 = vpack.c.b16 %v6920, %v6919
      %v6952 = vpack.c.b16 %v6922, %v6921
      %v6953 = vpack.c.b16 %v6924, %v6923
      %v6954 = vpack.c.b16 %v6926, %v6925
      %v6955 = vpack.c.b16 %v6928, %v6927
      %v6956 = vpack.c.b16 %v6930, %v6929
      %v6957 = vpack.c.b16 %v6932, %v6931
      %v6958 = vpack.c.b16 %v6934, %v6933
      %v6959 = vpack.c.b16 %v6936, %v6935
      %v6960 = vpack.c.b16 %v6938, %v6937
      %v6961 = vpack.c.b16 %v6940, %v6939
      %v6962 = vpack.c.b16 %v6942, %v6941
      %v6963 = vpack.c.b16 %v6944, %v6943
      %v6964 = vpack.c.b16 %v6946, %v6945
      %v6965 = vpack.c.b16 %v6948, %v6947
      %v6966 = vpack.c.b16 %v6950, %v6949
      %v6967 = vunpack.c.l.b16 %v5140
      %v6968 = vunpack.c.l.b16 %v5150
      %v6969 = vunpack.c.l.b16 %v5164
      %v6970 = vunpack.c.l.b16 %v5174
      %v6971 = vunpack.c.l.b16 %v5188
      %v6972 = vunpack.c.l.b16 %v5198
      %v6973 = vunpack.c.l.b16 %v5212
      %v6974 = vunpack.c.l.b16 %v5222
      %v6975 = vunpack.c.l.b16 %v5236
      %v6976 = vunpack.c.l.b16 %v5246
      %v6977 = vunpack.c.l.b16 %v5260
      %v6978 = vunpack.c.l.b16 %v5270
      %v6979 = vunpack.c.l.b16 %v5284
      %v6980 = vunpack.c.l.b16 %v5294
      %v6981 = vunpack.c.l.b16 %v5308
      %v6982 = vunpack.c.l.b16 %v5318
      %v6983 = vunpack.c.l.b16 %v5332
      %v6984 = vunpack.c.l.b16 %v5342
      %v6985 = vunpack.c.l.b16 %v5356
      %v6986 = vunpack.c.l.b16 %v5366
      %v6987 = vunpack.c.l.b16 %v5380
      %v6988 = vunpack.c.l.b16 %v5390
      %v6989 = vunpack.c.l.b16 %v5404
      %v6990 = vunpack.c.l.b16 %v5414
      %v6991 = vunpack.c.l.b16 %v5428
      %v6992 = vunpack.c.l.b16 %v5438
      %v6993 = vunpack.c.l.b16 %v5452
      %v6994 = vunpack.c.l.b16 %v5462
      %v6995 = vunpack.c.l.b16 %v5476
      %v6996 = vunpack.c.l.b16 %v5486
      %v6997 = vunpack.c.l.b16 %v5500
      %v6998 = vunpack.c.l.b16 %v5510
      %v6999 = vpack.c.b16 %v6968, %v6967
      %v7000 = vpack.c.b16 %v6970, %v6969
      %v7001 = vpack.c.b16 %v6972, %v6971
      %v7002 = vpack.c.b16 %v6974, %v6973
      %v7003 = vpack.c.b16 %v6976, %v6975
      %v7004 = vpack.c.b16 %v6978, %v6977
      %v7005 = vpack.c.b16 %v6980, %v6979
      %v7006 = vpack.c.b16 %v6982, %v6981
      %v7007 = vpack.c.b16 %v6984, %v6983
      %v7008 = vpack.c.b16 %v6986, %v6985
      %v7009 = vpack.c.b16 %v6988, %v6987
      %v7010 = vpack.c.b16 %v6990, %v6989
      %v7011 = vpack.c.b16 %v6992, %v6991
      %v7012 = vpack.c.b16 %v6994, %v6993
      %v7013 = vpack.c.b16 %v6996, %v6995
      %v7014 = vpack.c.b16 %v6998, %v6997
      %7015 = vrot.lane.b32.xlu0 %v6999, 8
      %v7016 = vpop.permute.xlu0 %7015
      %7017 = vrot.lane.b32.xlu0 %v7000, 8
      %v7018 = vpop.permute.xlu0 %7017
      %7019 = vrot.lane.b32.xlu0 %v7001, 8
      %v7020 = vpop.permute.xlu0 %7019
      %7021 = vrot.lane.b32.xlu0 %v7002, 8
      %v7022 = vpop.permute.xlu0 %7021
      %7023 = vrot.lane.b32.xlu0 %v7003, 8
      %v7024 = vpop.permute.xlu0 %7023
      %7025 = vrot.lane.b32.xlu0 %v7004, 8
      %v7026 = vpop.permute.xlu0 %7025
      %7027 = vrot.lane.b32.xlu0 %v7005, 8
      %v7028 = vpop.permute.xlu0 %7027
      %7029 = vrot.lane.b32.xlu0 %v7006, 8
      %v7030 = vpop.permute.xlu0 %7029
      %7031 = vrot.lane.b32.xlu0 %v7007, 8
      %v7032 = vpop.permute.xlu0 %7031
      %7033 = vrot.lane.b32.xlu0 %v7008, 8
      %v7034 = vpop.permute.xlu0 %7033
      %7035 = vrot.lane.b32.xlu0 %v7009, 8
      %v7036 = vpop.permute.xlu0 %7035
      %7037 = vrot.lane.b32.xlu0 %v7010, 8
      %v7038 = vpop.permute.xlu0 %7037
      %7039 = vrot.lane.b32.xlu0 %v7011, 8
      %v7040 = vpop.permute.xlu0 %7039
      %7041 = vrot.lane.b32.xlu0 %v7012, 8
      %v7042 = vpop.permute.xlu0 %7041
      %7043 = vrot.lane.b32.xlu0 %v7013, 8
      %v7044 = vpop.permute.xlu0 %7043
      %7045 = vrot.lane.b32.xlu0 %v7014, 8
      %v7046 = vpop.permute.xlu0 %7045
      %v7047 = vunpack.c.l.b16 %v5578
      %v7048 = vunpack.c.l.b16 %v5581
      %v7049 = vunpack.c.l.b16 %v5585
      %v7050 = vunpack.c.l.b16 %v5588
      %v7051 = vunpack.c.l.b16 %v5592
      %v7052 = vunpack.c.l.b16 %v5595
      %v7053 = vunpack.c.l.b16 %v5599
      %v7054 = vunpack.c.l.b16 %v5602
      %v7055 = vunpack.c.l.b16 %v5606
      %v7056 = vunpack.c.l.b16 %v5609
      %v7057 = vunpack.c.l.b16 %v5613
      %v7058 = vunpack.c.l.b16 %v5616
      %v7059 = vunpack.c.l.b16 %v5620
      %v7060 = vunpack.c.l.b16 %v5623
      %v7061 = vunpack.c.l.b16 %v5627
      %v7062 = vunpack.c.l.b16 %v5630
      %v7063 = vunpack.c.l.b16 %v5634
      %v7064 = vunpack.c.l.b16 %v5637
      %v7065 = vunpack.c.l.b16 %v5641
      %v7066 = vunpack.c.l.b16 %v5644
      %v7067 = vunpack.c.l.b16 %v5648
      %v7068 = vunpack.c.l.b16 %v5651
      %v7069 = vunpack.c.l.b16 %v5655
      %v7070 = vunpack.c.l.b16 %v5658
      %v7071 = vunpack.c.l.b16 %v5662
      %v7072 = vunpack.c.l.b16 %v5665
      %v7073 = vunpack.c.l.b16 %v5669
      %v7074 = vunpack.c.l.b16 %v5672
      %v7075 = vunpack.c.l.b16 %v5676
      %v7076 = vunpack.c.l.b16 %v5679
      %v7077 = vunpack.c.l.b16 %v5683
      %v7078 = vunpack.c.l.b16 %v5686
      %v7079 = vpack.c.b16 %v7048, %v7047
      %v7080 = vpack.c.b16 %v7050, %v7049
      %v7081 = vpack.c.b16 %v7052, %v7051
      %v7082 = vpack.c.b16 %v7054, %v7053
      %v7083 = vpack.c.b16 %v7056, %v7055
      %v7084 = vpack.c.b16 %v7058, %v7057
      %v7085 = vpack.c.b16 %v7060, %v7059
      %v7086 = vpack.c.b16 %v7062, %v7061
      %v7087 = vpack.c.b16 %v7064, %v7063
      %v7088 = vpack.c.b16 %v7066, %v7065
      %v7089 = vpack.c.b16 %v7068, %v7067
      %v7090 = vpack.c.b16 %v7070, %v7069
      %v7091 = vpack.c.b16 %v7072, %v7071
      %v7092 = vpack.c.b16 %v7074, %v7073
      %v7093 = vpack.c.b16 %v7076, %v7075
      %v7094 = vpack.c.b16 %v7078, %v7077
      %7095 = vrot.lane.b32.xlu0 %v7079, 16
      %v7096 = vpop.permute.xlu0 %7095
      %7097 = vrot.lane.b32.xlu0 %v7080, 16
      %v7098 = vpop.permute.xlu0 %7097
      %7099 = vrot.lane.b32.xlu0 %v7081, 16
      %v7100 = vpop.permute.xlu0 %7099
      %7101 = vrot.lane.b32.xlu0 %v7082, 16
      %v7102 = vpop.permute.xlu0 %7101
      %7103 = vrot.lane.b32.xlu0 %v7083, 16
      %v7104 = vpop.permute.xlu0 %7103
      %7105 = vrot.lane.b32.xlu0 %v7084, 16
      %v7106 = vpop.permute.xlu0 %7105
      %7107 = vrot.lane.b32.xlu0 %v7085, 16
      %v7108 = vpop.permute.xlu0 %7107
      %7109 = vrot.lane.b32.xlu0 %v7086, 16
      %v7110 = vpop.permute.xlu0 %7109
      %7111 = vrot.lane.b32.xlu0 %v7087, 16
      %v7112 = vpop.permute.xlu0 %7111
      %7113 = vrot.lane.b32.xlu0 %v7088, 16
      %v7114 = vpop.permute.xlu0 %7113
      %7115 = vrot.lane.b32.xlu0 %v7089, 16
      %v7116 = vpop.permute.xlu0 %7115
      %7117 = vrot.lane.b32.xlu0 %v7090, 16
      %v7118 = vpop.permute.xlu0 %7117
      %7119 = vrot.lane.b32.xlu0 %v7091, 16
      %v7120 = vpop.permute.xlu0 %7119
      %7121 = vrot.lane.b32.xlu0 %v7092, 16
      %v7122 = vpop.permute.xlu0 %7121
      %7123 = vrot.lane.b32.xlu0 %v7093, 16
      %v7124 = vpop.permute.xlu0 %7123
      %7125 = vrot.lane.b32.xlu0 %v7094, 16
      %v7126 = vpop.permute.xlu0 %7125
      %v7143 = vunpack.c.l.b16 %v5687
      %v7144 = vunpack.c.l.b16 %v5688
      %v7145 = vunpack.c.l.b16 %v5689
      %v7146 = vunpack.c.l.b16 %v5690
      %v7147 = vunpack.c.l.b16 %v5691
      %v7148 = vunpack.c.l.b16 %v5692
      %v7149 = vunpack.c.l.b16 %v5693
      %v7150 = vunpack.c.l.b16 %v5694
      %v7151 = vunpack.c.l.b16 %v5695
      %v7152 = vunpack.c.l.b16 %v5696
      %v7153 = vunpack.c.l.b16 %v5697
      %v7154 = vunpack.c.l.b16 %v5698
      %v7155 = vunpack.c.l.b16 %v5699
      %v7156 = vunpack.c.l.b16 %v5700
      %v7157 = vunpack.c.l.b16 %v5701
      %v7158 = vunpack.c.l.b16 %v5702
      %v7159 = vunpack.c.l.b16 %v5703
      %v7160 = vunpack.c.l.b16 %v5704
      %v7161 = vunpack.c.l.b16 %v5705
      %v7162 = vunpack.c.l.b16 %v5706
      %v7163 = vunpack.c.l.b16 %v5707
      %v7164 = vunpack.c.l.b16 %v5708
      %v7165 = vunpack.c.l.b16 %v5709
      %v7166 = vunpack.c.l.b16 %v5710
      %v7167 = vunpack.c.l.b16 %v5711
      %v7168 = vunpack.c.l.b16 %v5712
      %v7169 = vunpack.c.l.b16 %v5713
      %v7170 = vunpack.c.l.b16 %v5714
      %v7171 = vunpack.c.l.b16 %v5715
      %v7172 = vunpack.c.l.b16 %v5716
      %v7173 = vunpack.c.l.b16 %v5717
      %v7174 = vunpack.c.l.b16 %v5718
      %v7175 = vpack.c.b16 %v7144, %v7143
      %v7176 = vpack.c.b16 %v7146, %v7145
      %v7177 = vpack.c.b16 %v7148, %v7147
      %v7178 = vpack.c.b16 %v7150, %v7149
      %v7179 = vpack.c.b16 %v7152, %v7151
      %v7180 = vpack.c.b16 %v7154, %v7153
      %v7181 = vpack.c.b16 %v7156, %v7155
      %v7182 = vpack.c.b16 %v7158, %v7157
      %v7183 = vpack.c.b16 %v7160, %v7159
      %v7184 = vpack.c.b16 %v7162, %v7161
      %v7185 = vpack.c.b16 %v7164, %v7163
      %v7186 = vpack.c.b16 %v7166, %v7165
      %v7187 = vpack.c.b16 %v7168, %v7167
      %v7188 = vpack.c.b16 %v7170, %v7169
      %v7189 = vpack.c.b16 %v7172, %v7171
      %v7190 = vpack.c.b16 %v7174, %v7173
      %7191 = vrot.lane.b32.xlu0 %v7175, 24
      %v7192 = vpop.permute.xlu0 %7191
      %7193 = vrot.lane.b32.xlu0 %v7176, 24
      %v7194 = vpop.permute.xlu0 %7193
      %7195 = vrot.lane.b32.xlu0 %v7177, 24
      %v7196 = vpop.permute.xlu0 %7195
      %7197 = vrot.lane.b32.xlu0 %v7178, 24
      %v7198 = vpop.permute.xlu0 %7197
      %7199 = vrot.lane.b32.xlu0 %v7179, 24
      %v7200 = vpop.permute.xlu0 %7199
      %7201 = vrot.lane.b32.xlu0 %v7180, 24
      %v7202 = vpop.permute.xlu0 %7201
      %7203 = vrot.lane.b32.xlu0 %v7181, 24
      %v7204 = vpop.permute.xlu0 %7203
      %7205 = vrot.lane.b32.xlu0 %v7182, 24
      %v7206 = vpop.permute.xlu0 %7205
      %7207 = vrot.lane.b32.xlu0 %v7183, 24
      %v7208 = vpop.permute.xlu0 %7207
      %7209 = vrot.lane.b32.xlu0 %v7184, 24
      %v7210 = vpop.permute.xlu0 %7209
      %7211 = vrot.lane.b32.xlu0 %v7185, 24
      %v7212 = vpop.permute.xlu0 %7211
      %7213 = vrot.lane.b32.xlu0 %v7186, 24
      %v7214 = vpop.permute.xlu0 %7213
      %7215 = vrot.lane.b32.xlu0 %v7187, 24
      %v7216 = vpop.permute.xlu0 %7215
      %7217 = vrot.lane.b32.xlu0 %v7188, 24
      %v7218 = vpop.permute.xlu0 %7217
      %7219 = vrot.lane.b32.xlu0 %v7189, 24
      %v7220 = vpop.permute.xlu0 %7219
      %7221 = vrot.lane.b32.xlu0 %v7190, 24
      %v7222 = vpop.permute.xlu0 %7221
      %v7223 = vunpack.c.l.b16 %v5748
      %v7224 = vunpack.c.l.b16 %v5758
      %v7225 = vunpack.c.l.b16 %v5772
      %v7226 = vunpack.c.l.b16 %v5782
      %v7227 = vunpack.c.l.b16 %v5796
      %v7228 = vunpack.c.l.b16 %v5806
      %v7229 = vunpack.c.l.b16 %v5820
      %v7230 = vunpack.c.l.b16 %v5830
      %v7231 = vunpack.c.l.b16 %v5844
      %v7232 = vunpack.c.l.b16 %v5854
      %v7233 = vunpack.c.l.b16 %v5868
      %v7234 = vunpack.c.l.b16 %v5878
      %v7235 = vunpack.c.l.b16 %v5892
      %v7236 = vunpack.c.l.b16 %v5902
      %v7237 = vunpack.c.l.b16 %v5916
      %v7238 = vunpack.c.l.b16 %v5926
      %v7239 = vunpack.c.l.b16 %v5940
      %v7240 = vunpack.c.l.b16 %v5950
      %v7241 = vunpack.c.l.b16 %v5964
      %v7242 = vunpack.c.l.b16 %v5974
      %v7243 = vunpack.c.l.b16 %v5988
      %v7244 = vunpack.c.l.b16 %v5998
      %v7245 = vunpack.c.l.b16 %v6012
      %v7246 = vunpack.c.l.b16 %v6022
      %v7247 = vunpack.c.l.b16 %v6036
      %v7248 = vunpack.c.l.b16 %v6046
      %v7249 = vunpack.c.l.b16 %v6060
      %v7250 = vunpack.c.l.b16 %v6070
      %v7251 = vunpack.c.l.b16 %v6084
      %v7252 = vunpack.c.l.b16 %v6094
      %v7253 = vunpack.c.l.b16 %v6108
      %v7254 = vunpack.c.l.b16 %v6118
      %v7255 = vpack.c.b16 %v7224, %v7223
      %v7256 = vpack.c.b16 %v7226, %v7225
      %v7257 = vpack.c.b16 %v7228, %v7227
      %v7258 = vpack.c.b16 %v7230, %v7229
      %v7259 = vpack.c.b16 %v7232, %v7231
      %v7260 = vpack.c.b16 %v7234, %v7233
      %v7261 = vpack.c.b16 %v7236, %v7235
      %v7262 = vpack.c.b16 %v7238, %v7237
      %v7263 = vpack.c.b16 %v7240, %v7239
      %v7264 = vpack.c.b16 %v7242, %v7241
      %v7265 = vpack.c.b16 %v7244, %v7243
      %v7266 = vpack.c.b16 %v7246, %v7245
      %v7267 = vpack.c.b16 %v7248, %v7247
      %v7268 = vpack.c.b16 %v7250, %v7249
      %v7269 = vpack.c.b16 %v7252, %v7251
      %v7270 = vpack.c.b16 %v7254, %v7253
      %7271 = vrot.lane.b32.xlu0 %v7255, 32
      %v7272 = vpop.permute.xlu0 %7271
      %7273 = vrot.lane.b32.xlu0 %v7256, 32
      %v7274 = vpop.permute.xlu0 %7273
      %7275 = vrot.lane.b32.xlu0 %v7257, 32
      %v7276 = vpop.permute.xlu0 %7275
      %7277 = vrot.lane.b32.xlu0 %v7258, 32
      %v7278 = vpop.permute.xlu0 %7277
      %7279 = vrot.lane.b32.xlu0 %v7259, 32
      %v7280 = vpop.permute.xlu0 %7279
      %7281 = vrot.lane.b32.xlu0 %v7260, 32
      %v7282 = vpop.permute.xlu0 %7281
      %7283 = vrot.lane.b32.xlu0 %v7261, 32
      %v7284 = vpop.permute.xlu0 %7283
      %7285 = vrot.lane.b32.xlu0 %v7262, 32
      %v7286 = vpop.permute.xlu0 %7285
      %7287 = vrot.lane.b32.xlu0 %v7263, 32
      %v7288 = vpop.permute.xlu0 %7287
      %7289 = vrot.lane.b32.xlu0 %v7264, 32
      %v7290 = vpop.permute.xlu0 %7289
      %7291 = vrot.lane.b32.xlu0 %v7265, 32
      %v7292 = vpop.permute.xlu0 %7291
      %7293 = vrot.lane.b32.xlu0 %v7266, 32
      %v7294 = vpop.permute.xlu0 %7293
      %7295 = vrot.lane.b32.xlu0 %v7267, 32
      %v7296 = vpop.permute.xlu0 %7295
      %7297 = vrot.lane.b32.xlu0 %v7268, 32
      %v7298 = vpop.permute.xlu0 %7297
      %7299 = vrot.lane.b32.xlu0 %v7269, 32
      %v7300 = vpop.permute.xlu0 %7299
      %7301 = vrot.lane.b32.xlu0 %v7270, 32
      %v7302 = vpop.permute.xlu0 %7301
      %v7303 = vunpack.c.l.b16 %v6186
      %v7304 = vunpack.c.l.b16 %v6189
      %v7305 = vunpack.c.l.b16 %v6193
      %v7306 = vunpack.c.l.b16 %v6196
      %v7307 = vunpack.c.l.b16 %v6200
      %v7308 = vunpack.c.l.b16 %v6203
      %v7309 = vunpack.c.l.b16 %v6207
      %v7310 = vunpack.c.l.b16 %v6210
      %v7311 = vunpack.c.l.b16 %v6214
      %v7312 = vunpack.c.l.b16 %v6217
      %v7313 = vunpack.c.l.b16 %v6221
      %v7314 = vunpack.c.l.b16 %v6224
      %v7315 = vunpack.c.l.b16 %v6228
      %v7316 = vunpack.c.l.b16 %v6231
      %v7317 = vunpack.c.l.b16 %v6235
      %v7318 = vunpack.c.l.b16 %v6238
      %v7319 = vunpack.c.l.b16 %v6242
      %v7320 = vunpack.c.l.b16 %v6245
      %v7321 = vunpack.c.l.b16 %v6249
      %v7322 = vunpack.c.l.b16 %v6252
      %v7323 = vunpack.c.l.b16 %v6256
      %v7324 = vunpack.c.l.b16 %v6259
      %v7325 = vunpack.c.l.b16 %v6263
      %v7326 = vunpack.c.l.b16 %v6266
      %v7327 = vunpack.c.l.b16 %v6270
      %v7328 = vunpack.c.l.b16 %v6273
      %v7329 = vunpack.c.l.b16 %v6277
      %v7330 = vunpack.c.l.b16 %v6280
      %v7331 = vunpack.c.l.b16 %v6284
      %v7332 = vunpack.c.l.b16 %v6287
      %v7333 = vunpack.c.l.b16 %v6291
      %v7334 = vunpack.c.l.b16 %v6294
      %v7335 = vpack.c.b16 %v7304, %v7303
      %v7336 = vpack.c.b16 %v7306, %v7305
      %v7337 = vpack.c.b16 %v7308, %v7307
      %v7338 = vpack.c.b16 %v7310, %v7309
      %v7339 = vpack.c.b16 %v7312, %v7311
      %v7340 = vpack.c.b16 %v7314, %v7313
      %v7341 = vpack.c.b16 %v7316, %v7315
      %v7342 = vpack.c.b16 %v7318, %v7317
      %v7343 = vpack.c.b16 %v7320, %v7319
      %v7344 = vpack.c.b16 %v7322, %v7321
      %v7345 = vpack.c.b16 %v7324, %v7323
      %v7346 = vpack.c.b16 %v7326, %v7325
      %v7347 = vpack.c.b16 %v7328, %v7327
      %v7348 = vpack.c.b16 %v7330, %v7329
      %v7349 = vpack.c.b16 %v7332, %v7331
      %v7350 = vpack.c.b16 %v7334, %v7333
      %7351 = vrot.lane.b32.xlu0 %v7335, 40
      %v7352 = vpop.permute.xlu0 %7351
      %7353 = vrot.lane.b32.xlu0 %v7336, 40
      %v7354 = vpop.permute.xlu0 %7353
      %7355 = vrot.lane.b32.xlu0 %v7337, 40
      %v7356 = vpop.permute.xlu0 %7355
      %7357 = vrot.lane.b32.xlu0 %v7338, 40
      %v7358 = vpop.permute.xlu0 %7357
      %7359 = vrot.lane.b32.xlu0 %v7339, 40
      %v7360 = vpop.permute.xlu0 %7359
      %7361 = vrot.lane.b32.xlu0 %v7340, 40
      %v7362 = vpop.permute.xlu0 %7361
      %7363 = vrot.lane.b32.xlu0 %v7341, 40
      %v7364 = vpop.permute.xlu0 %7363
      %7365 = vrot.lane.b32.xlu0 %v7342, 40
      %v7366 = vpop.permute.xlu0 %7365
      %7367 = vrot.lane.b32.xlu0 %v7343, 40
      %v7368 = vpop.permute.xlu0 %7367
      %7369 = vrot.lane.b32.xlu0 %v7344, 40
      %v7370 = vpop.permute.xlu0 %7369
      %7371 = vrot.lane.b32.xlu0 %v7345, 40
      %v7372 = vpop.permute.xlu0 %7371
      %7373 = vrot.lane.b32.xlu0 %v7346, 40
      %v7374 = vpop.permute.xlu0 %7373
      %7375 = vrot.lane.b32.xlu0 %v7347, 40
      %v7376 = vpop.permute.xlu0 %7375
      %7377 = vrot.lane.b32.xlu0 %v7348, 40
      %v7378 = vpop.permute.xlu0 %7377
      %7379 = vrot.lane.b32.xlu0 %v7349, 40
      %v7380 = vpop.permute.xlu0 %7379
      %7381 = vrot.lane.b32.xlu0 %v7350, 40
      %v7382 = vpop.permute.xlu0 %7381
      %v7399 = vunpack.c.l.b16 %v6295
      %v7400 = vunpack.c.l.b16 %v6296
      %v7401 = vunpack.c.l.b16 %v6297
      %v7402 = vunpack.c.l.b16 %v6298
      %v7403 = vunpack.c.l.b16 %v6299
      %v7404 = vunpack.c.l.b16 %v6300
      %v7405 = vunpack.c.l.b16 %v6301
      %v7406 = vunpack.c.l.b16 %v6302
      %v7407 = vunpack.c.l.b16 %v6303
      %v7408 = vunpack.c.l.b16 %v6304
      %v7409 = vunpack.c.l.b16 %v6305
      %v7410 = vunpack.c.l.b16 %v6306
      %v7411 = vunpack.c.l.b16 %v6307
      %v7412 = vunpack.c.l.b16 %v6308
      %v7413 = vunpack.c.l.b16 %v6309
      %v7414 = vunpack.c.l.b16 %v6310
      %v7415 = vunpack.c.l.b16 %v6311
      %v7416 = vunpack.c.l.b16 %v6312
      %v7417 = vunpack.c.l.b16 %v6313
      %v7418 = vunpack.c.l.b16 %v6314
      %v7419 = vunpack.c.l.b16 %v6315
      %v7420 = vunpack.c.l.b16 %v6316
      %v7421 = vunpack.c.l.b16 %v6317
      %v7422 = vunpack.c.l.b16 %v6318
      %v7423 = vunpack.c.l.b16 %v6319
      %v7424 = vunpack.c.l.b16 %v6320
      %v7425 = vunpack.c.l.b16 %v6321
      %v7426 = vunpack.c.l.b16 %v6322
      %v7427 = vunpack.c.l.b16 %v6323
      %v7428 = vunpack.c.l.b16 %v6324
      %v7429 = vunpack.c.l.b16 %v6325
      %v7430 = vunpack.c.l.b16 %v6326
      %v7431 = vpack.c.b16 %v7400, %v7399
      %v7432 = vpack.c.b16 %v7402, %v7401
      %v7433 = vpack.c.b16 %v7404, %v7403
      %v7434 = vpack.c.b16 %v7406, %v7405
      %v7435 = vpack.c.b16 %v7408, %v7407
      %v7436 = vpack.c.b16 %v7410, %v7409
      %v7437 = vpack.c.b16 %v7412, %v7411
      %v7438 = vpack.c.b16 %v7414, %v7413
      %v7439 = vpack.c.b16 %v7416, %v7415
      %v7440 = vpack.c.b16 %v7418, %v7417
      %v7441 = vpack.c.b16 %v7420, %v7419
      %v7442 = vpack.c.b16 %v7422, %v7421
      %v7443 = vpack.c.b16 %v7424, %v7423
      %v7444 = vpack.c.b16 %v7426, %v7425
      %v7445 = vpack.c.b16 %v7428, %v7427
      %v7446 = vpack.c.b16 %v7430, %v7429
      %7447 = vrot.lane.b32.xlu0 %v7431, 48
      %v7448 = vpop.permute.xlu0 %7447
      %7449 = vrot.lane.b32.xlu0 %v7432, 48
      %v7450 = vpop.permute.xlu0 %7449
      %7451 = vrot.lane.b32.xlu0 %v7433, 48
      %v7452 = vpop.permute.xlu0 %7451
      %7453 = vrot.lane.b32.xlu0 %v7434, 48
      %v7454 = vpop.permute.xlu0 %7453
      %7455 = vrot.lane.b32.xlu0 %v7435, 48
      %v7456 = vpop.permute.xlu0 %7455
      %7457 = vrot.lane.b32.xlu0 %v7436, 48
      %v7458 = vpop.permute.xlu0 %7457
      %7459 = vrot.lane.b32.xlu0 %v7437, 48
      %v7460 = vpop.permute.xlu0 %7459
      %7461 = vrot.lane.b32.xlu0 %v7438, 48
      %v7462 = vpop.permute.xlu0 %7461
      %7463 = vrot.lane.b32.xlu0 %v7439, 48
      %v7464 = vpop.permute.xlu0 %7463
      %7465 = vrot.lane.b32.xlu0 %v7440, 48
      %v7466 = vpop.permute.xlu0 %7465
      %7467 = vrot.lane.b32.xlu0 %v7441, 48
      %v7468 = vpop.permute.xlu0 %7467
      %7469 = vrot.lane.b32.xlu0 %v7442, 48
      %v7470 = vpop.permute.xlu0 %7469
      %7471 = vrot.lane.b32.xlu0 %v7443, 48
      %v7472 = vpop.permute.xlu0 %7471
      %7473 = vrot.lane.b32.xlu0 %v7444, 48
      %v7474 = vpop.permute.xlu0 %7473
      %7475 = vrot.lane.b32.xlu0 %v7445, 48
      %v7476 = vpop.permute.xlu0 %7475
      %7477 = vrot.lane.b32.xlu0 %v7446, 48
      %v7478 = vpop.permute.xlu0 %7477
      %v7479 = vunpack.c.l.b16 %v6356
      %v7480 = vunpack.c.l.b16 %v6366
      %v7481 = vunpack.c.l.b16 %v6380
      %v7482 = vunpack.c.l.b16 %v6390
      %v7483 = vunpack.c.l.b16 %v6404
      %v7484 = vunpack.c.l.b16 %v6414
      %v7485 = vunpack.c.l.b16 %v6428
      %v7486 = vunpack.c.l.b16 %v6438
      %v7487 = vunpack.c.l.b16 %v6452
      %v7488 = vunpack.c.l.b16 %v6462
      %v7489 = vunpack.c.l.b16 %v6476
      %v7490 = vunpack.c.l.b16 %v6486
      %v7491 = vunpack.c.l.b16 %v6500
      %v7492 = vunpack.c.l.b16 %v6510
      %v7493 = vunpack.c.l.b16 %v6524
      %v7494 = vunpack.c.l.b16 %v6534
      %v7495 = vunpack.c.l.b16 %v6548
      %v7496 = vunpack.c.l.b16 %v6558
      %v7497 = vunpack.c.l.b16 %v6572
      %v7498 = vunpack.c.l.b16 %v6582
      %v7499 = vunpack.c.l.b16 %v6596
      %v7500 = vunpack.c.l.b16 %v6606
      %v7501 = vunpack.c.l.b16 %v6620
      %v7502 = vunpack.c.l.b16 %v6630
      %v7503 = vunpack.c.l.b16 %v6644
      %v7504 = vunpack.c.l.b16 %v6654
      %v7505 = vunpack.c.l.b16 %v6668
      %v7506 = vunpack.c.l.b16 %v6678
      %v7507 = vunpack.c.l.b16 %v6692
      %v7508 = vunpack.c.l.b16 %v6702
      %v7509 = vunpack.c.l.b16 %v6716
      %v7510 = vunpack.c.l.b16 %v6726
      %v7511 = vpack.c.b16 %v7480, %v7479
      %v7512 = vpack.c.b16 %v7482, %v7481
      %v7513 = vpack.c.b16 %v7484, %v7483
      %v7514 = vpack.c.b16 %v7486, %v7485
      %v7515 = vpack.c.b16 %v7488, %v7487
      %v7516 = vpack.c.b16 %v7490, %v7489
      %v7517 = vpack.c.b16 %v7492, %v7491
      %v7518 = vpack.c.b16 %v7494, %v7493
      %v7519 = vpack.c.b16 %v7496, %v7495
      %v7520 = vpack.c.b16 %v7498, %v7497
      %v7521 = vpack.c.b16 %v7500, %v7499
      %v7522 = vpack.c.b16 %v7502, %v7501
      %v7523 = vpack.c.b16 %v7504, %v7503
      %v7524 = vpack.c.b16 %v7506, %v7505
      %v7525 = vpack.c.b16 %v7508, %v7507
      %v7526 = vpack.c.b16 %v7510, %v7509
      %7527 = vrot.lane.b32.xlu0 %v7511, 56
      %v7528 = vpop.permute.xlu0 %7527
      %7529 = vrot.lane.b32.xlu0 %v7512, 56
      %v7530 = vpop.permute.xlu0 %7529
      %7531 = vrot.lane.b32.xlu0 %v7513, 56
      %v7532 = vpop.permute.xlu0 %7531
      %7533 = vrot.lane.b32.xlu0 %v7514, 56
      %v7534 = vpop.permute.xlu0 %7533
      %7535 = vrot.lane.b32.xlu0 %v7515, 56
      %v7536 = vpop.permute.xlu0 %7535
      %7537 = vrot.lane.b32.xlu0 %v7516, 56
      %v7538 = vpop.permute.xlu0 %7537
      %7539 = vrot.lane.b32.xlu0 %v7517, 56
      %v7540 = vpop.permute.xlu0 %7539
      %7541 = vrot.lane.b32.xlu0 %v7518, 56
      %v7542 = vpop.permute.xlu0 %7541
      %7543 = vrot.lane.b32.xlu0 %v7519, 56
      %v7544 = vpop.permute.xlu0 %7543
      %7545 = vrot.lane.b32.xlu0 %v7520, 56
      %v7546 = vpop.permute.xlu0 %7545
      %7547 = vrot.lane.b32.xlu0 %v7521, 56
      %v7548 = vpop.permute.xlu0 %7547
      %7549 = vrot.lane.b32.xlu0 %v7522, 56
      %v7550 = vpop.permute.xlu0 %7549
      %7551 = vrot.lane.b32.xlu0 %v7523, 56
      %v7552 = vpop.permute.xlu0 %7551
      %7553 = vrot.lane.b32.xlu0 %v7524, 56
      %v7554 = vpop.permute.xlu0 %7553
      %7555 = vrot.lane.b32.xlu0 %v7525, 56
      %v7556 = vpop.permute.xlu0 %7555
      %7557 = vrot.lane.b32.xlu0 %v7526, 56
      %v7558 = vpop.permute.xlu0 %7557
      %v7559 = vunpack.c.l.b16 %v6794
      %v7560 = vunpack.c.l.b16 %v6797
      %v7561 = vunpack.c.l.b16 %v6801
      %v7562 = vunpack.c.l.b16 %v6804
      %v7563 = vunpack.c.l.b16 %v6808
      %v7564 = vunpack.c.l.b16 %v6811
      %v7565 = vunpack.c.l.b16 %v6815
      %v7566 = vunpack.c.l.b16 %v6818
      %v7567 = vunpack.c.l.b16 %v6822
      %v7568 = vunpack.c.l.b16 %v6825
      %v7569 = vunpack.c.l.b16 %v6829
      %v7570 = vunpack.c.l.b16 %v6832
      %v7571 = vunpack.c.l.b16 %v6836
      %v7572 = vunpack.c.l.b16 %v6839
      %v7573 = vunpack.c.l.b16 %v6843
      %v7574 = vunpack.c.l.b16 %v6846
      %v7575 = vunpack.c.l.b16 %v6850
      %v7576 = vunpack.c.l.b16 %v6853
      %v7577 = vunpack.c.l.b16 %v6857
      %v7578 = vunpack.c.l.b16 %v6860
      %v7579 = vunpack.c.l.b16 %v6864
      %v7580 = vunpack.c.l.b16 %v6867
      %v7581 = vunpack.c.l.b16 %v6871
      %v7582 = vunpack.c.l.b16 %v6874
      %v7583 = vunpack.c.l.b16 %v6878
      %v7584 = vunpack.c.l.b16 %v6881
      %v7585 = vunpack.c.l.b16 %v6885
      %v7586 = vunpack.c.l.b16 %v6888
      %v7587 = vunpack.c.l.b16 %v6892
      %v7588 = vunpack.c.l.b16 %v6895
      %v7589 = vunpack.c.l.b16 %v6899
      %v7590 = vunpack.c.l.b16 %v6902
      %v7591 = vpack.c.b16 %v7560, %v7559
      %v7592 = vpack.c.b16 %v7562, %v7561
      %v7593 = vpack.c.b16 %v7564, %v7563
      %v7594 = vpack.c.b16 %v7566, %v7565
      %v7595 = vpack.c.b16 %v7568, %v7567
      %v7596 = vpack.c.b16 %v7570, %v7569
      %v7597 = vpack.c.b16 %v7572, %v7571
      %v7598 = vpack.c.b16 %v7574, %v7573
      %v7599 = vpack.c.b16 %v7576, %v7575
      %v7600 = vpack.c.b16 %v7578, %v7577
      %v7601 = vpack.c.b16 %v7580, %v7579
      %v7602 = vpack.c.b16 %v7582, %v7581
      %v7603 = vpack.c.b16 %v7584, %v7583
      %v7604 = vpack.c.b16 %v7586, %v7585
      %v7605 = vpack.c.b16 %v7588, %v7587
      %v7606 = vpack.c.b16 %v7590, %v7589
      %7607 = vrot.lane.b32.xlu0 %v7591, 64
      %v7608 = vpop.permute.xlu0 %7607
      %7609 = vrot.lane.b32.xlu0 %v7592, 64
      %v7610 = vpop.permute.xlu0 %7609
      %7611 = vrot.lane.b32.xlu0 %v7593, 64
      %v7612 = vpop.permute.xlu0 %7611
      %7613 = vrot.lane.b32.xlu0 %v7594, 64
      %v7614 = vpop.permute.xlu0 %7613
      %7615 = vrot.lane.b32.xlu0 %v7595, 64
      %v7616 = vpop.permute.xlu0 %7615
      %7617 = vrot.lane.b32.xlu0 %v7596, 64
      %v7618 = vpop.permute.xlu0 %7617
      %7619 = vrot.lane.b32.xlu0 %v7597, 64
      %v7620 = vpop.permute.xlu0 %7619
      %7621 = vrot.lane.b32.xlu0 %v7598, 64
      %v7622 = vpop.permute.xlu0 %7621
      %7623 = vrot.lane.b32.xlu0 %v7599, 64
      %v7624 = vpop.permute.xlu0 %7623
      %7625 = vrot.lane.b32.xlu0 %v7600, 64
      %v7626 = vpop.permute.xlu0 %7625
      %7627 = vrot.lane.b32.xlu0 %v7601, 64
      %v7628 = vpop.permute.xlu0 %7627
      %7629 = vrot.lane.b32.xlu0 %v7602, 64
      %v7630 = vpop.permute.xlu0 %7629
      %7631 = vrot.lane.b32.xlu0 %v7603, 64
      %v7632 = vpop.permute.xlu0 %7631
      %7633 = vrot.lane.b32.xlu0 %v7604, 64
      %v7634 = vpop.permute.xlu0 %7633
      %7635 = vrot.lane.b32.xlu0 %v7605, 64
      %v7636 = vpop.permute.xlu0 %7635
      %7637 = vrot.lane.b32.xlu0 %v7606, 64
      %v7638 = vpop.permute.xlu0 %7637
      %v7641 = vsel %vm3720, %v6951, %v7016
      %v7644 = vsel %vm3720, %v6952, %v7018
      %v7647 = vsel %vm3720, %v6953, %v7020
      %v7650 = vsel %vm3720, %v6954, %v7022
      %v7653 = vsel %vm3720, %v6955, %v7024
      %v7656 = vsel %vm3720, %v6956, %v7026
      %v7659 = vsel %vm3720, %v6957, %v7028
      %v7662 = vsel %vm3720, %v6958, %v7030
      %v7665 = vsel %vm3720, %v6959, %v7032
      %v7668 = vsel %vm3720, %v6960, %v7034
      %v7671 = vsel %vm3720, %v6961, %v7036
      %v7674 = vsel %vm3720, %v6962, %v7038
      %v7677 = vsel %vm3720, %v6963, %v7040
      %v7680 = vsel %vm3720, %v6964, %v7042
      %v7683 = vsel %vm3720, %v6965, %v7044
      %v7686 = vsel %vm3720, %v6966, %v7046
      %v7688 = vsel %vm3786, %v7641, %v7096
      %v7690 = vsel %vm3786, %v7644, %v7098
      %v7692 = vsel %vm3786, %v7647, %v7100
      %v7694 = vsel %vm3786, %v7650, %v7102
      %v7696 = vsel %vm3786, %v7653, %v7104
      %v7698 = vsel %vm3786, %v7656, %v7106
      %v7700 = vsel %vm3786, %v7659, %v7108
      %v7702 = vsel %vm3786, %v7662, %v7110
      %v7704 = vsel %vm3786, %v7665, %v7112
      %v7706 = vsel %vm3786, %v7668, %v7114
      %v7708 = vsel %vm3786, %v7671, %v7116
      %v7710 = vsel %vm3786, %v7674, %v7118
      %v7712 = vsel %vm3786, %v7677, %v7120
      %v7714 = vsel %vm3786, %v7680, %v7122
      %v7716 = vsel %vm3786, %v7683, %v7124
      %v7718 = vsel %vm3786, %v7686, %v7126
      %v7720 = vsel %vm3852, %v7688, %v7192
      %v7722 = vsel %vm3852, %v7690, %v7194
      %v7724 = vsel %vm3852, %v7692, %v7196
      %v7726 = vsel %vm3852, %v7694, %v7198
      %v7728 = vsel %vm3852, %v7696, %v7200
      %v7730 = vsel %vm3852, %v7698, %v7202
      %v7732 = vsel %vm3852, %v7700, %v7204
      %v7734 = vsel %vm3852, %v7702, %v7206
      %v7736 = vsel %vm3852, %v7704, %v7208
      %v7738 = vsel %vm3852, %v7706, %v7210
      %v7740 = vsel %vm3852, %v7708, %v7212
      %v7742 = vsel %vm3852, %v7710, %v7214
      %v7744 = vsel %vm3852, %v7712, %v7216
      %v7746 = vsel %vm3852, %v7714, %v7218
      %v7748 = vsel %vm3852, %v7716, %v7220
      %v7750 = vsel %vm3852, %v7718, %v7222
      %v7752 = vsel %vm3918, %v7720, %v7272
      %v7754 = vsel %vm3918, %v7722, %v7274
      %v7756 = vsel %vm3918, %v7724, %v7276
      %v7758 = vsel %vm3918, %v7726, %v7278
      %v7760 = vsel %vm3918, %v7728, %v7280
      %v7762 = vsel %vm3918, %v7730, %v7282
      %v7764 = vsel %vm3918, %v7732, %v7284
      %v7766 = vsel %vm3918, %v7734, %v7286
      %v7768 = vsel %vm3918, %v7736, %v7288
      %v7770 = vsel %vm3918, %v7738, %v7290
      %v7772 = vsel %vm3918, %v7740, %v7292
      %v7774 = vsel %vm3918, %v7742, %v7294
      %v7776 = vsel %vm3918, %v7744, %v7296
      %v7778 = vsel %vm3918, %v7746, %v7298
      %v7780 = vsel %vm3918, %v7748, %v7300
      %v7782 = vsel %vm3918, %v7750, %v7302
      %vm7783 = vcmask 326656
      %v7785 = vsel %vm7783, %v7752, %v7352
      %v7787 = vsel %vm7783, %v7754, %v7354
      %v7789 = vsel %vm7783, %v7756, %v7356
      %v7791 = vsel %vm7783, %v7758, %v7358
      %v7793 = vsel %vm7783, %v7760, %v7360
      %v7795 = vsel %vm7783, %v7762, %v7362
      %v7797 = vsel %vm7783, %v7764, %v7364
      %v7799 = vsel %vm7783, %v7766, %v7366
      %v7801 = vsel %vm7783, %v7768, %v7368
      %v7803 = vsel %vm7783, %v7770, %v7370
      %v7805 = vsel %vm7783, %v7772, %v7372
      %v7807 = vsel %vm7783, %v7774, %v7374
      %v7809 = vsel %vm7783, %v7776, %v7376
      %v7811 = vsel %vm7783, %v7778, %v7378
      %v7813 = vsel %vm7783, %v7780, %v7380
      %v7815 = vsel %vm7783, %v7782, %v7382
      %vm7816 = vcmask 392192
      %v7818 = vsel %vm7816, %v7785, %v7448
      %v7820 = vsel %vm7816, %v7787, %v7450
      %v7822 = vsel %vm7816, %v7789, %v7452
      %v7824 = vsel %vm7816, %v7791, %v7454
      %v7826 = vsel %vm7816, %v7793, %v7456
      %v7828 = vsel %vm7816, %v7795, %v7458
      %v7830 = vsel %vm7816, %v7797, %v7460
      %v7832 = vsel %vm7816, %v7799, %v7462
      %v7834 = vsel %vm7816, %v7801, %v7464
      %v7836 = vsel %vm7816, %v7803, %v7466
      %v7838 = vsel %vm7816, %v7805, %v7468
      %v7840 = vsel %vm7816, %v7807, %v7470
      %v7842 = vsel %vm7816, %v7809, %v7472
      %v7844 = vsel %vm7816, %v7811, %v7474
      %v7846 = vsel %vm7816, %v7813, %v7476
      %v7848 = vsel %vm7816, %v7815, %v7478
      %vm7849 = vcmask 457728
      %v7851 = vsel %vm7849, %v7818, %v7528
      %v7853 = vsel %vm7849, %v7820, %v7530
      %v7855 = vsel %vm7849, %v7822, %v7532
      %v7857 = vsel %vm7849, %v7824, %v7534
      %v7859 = vsel %vm7849, %v7826, %v7536
      %v7861 = vsel %vm7849, %v7828, %v7538
      %v7863 = vsel %vm7849, %v7830, %v7540
      %v7865 = vsel %vm7849, %v7832, %v7542
      %v7867 = vsel %vm7849, %v7834, %v7544
      %v7869 = vsel %vm7849, %v7836, %v7546
      %v7871 = vsel %vm7849, %v7838, %v7548
      %v7873 = vsel %vm7849, %v7840, %v7550
      %v7875 = vsel %vm7849, %v7842, %v7552
      %v7877 = vsel %vm7849, %v7844, %v7554
      %v7879 = vsel %vm7849, %v7846, %v7556
      %v7881 = vsel %vm7849, %v7848, %v7558
      %vm7882 = vcmask 523264
      %v7884 = vsel %vm7882, %v7851, %v7608
      %v7886 = vsel %vm7882, %v7853, %v7610
      %v7888 = vsel %vm7882, %v7855, %v7612
      %v7890 = vsel %vm7882, %v7857, %v7614
      %v7892 = vsel %vm7882, %v7859, %v7616
      %v7894 = vsel %vm7882, %v7861, %v7618
      %v7896 = vsel %vm7882, %v7863, %v7620
      %v7898 = vsel %vm7882, %v7865, %v7622
      %v7900 = vsel %vm7882, %v7867, %v7624
      %v7902 = vsel %vm7882, %v7869, %v7626
      %v7904 = vsel %vm7882, %v7871, %v7628
      %v7906 = vsel %vm7882, %v7873, %v7630
      %v7908 = vsel %vm7882, %v7875, %v7632
      %v7910 = vsel %vm7882, %v7877, %v7634
      %v7912 = vsel %vm7882, %v7879, %v7636
      %v7914 = vsel %vm7882, %v7881, %v7638
      %v7915 = vld [vmem:[%s3] sm:$0xf]
      %v7916 = vld [vmem:[%s3 + $0x4] sm:$0xf]
      %v7917 = vld [vmem:[%s3 + $0x8] sm:$0xf]
      %v7918 = vld [vmem:[%s3 + $0xc] sm:$0xf]
      %v7919 = vld [vmem:[%s3 + $0x10] sm:$0xf]
      %v7920 = vld [vmem:[%s3 + $0x14] sm:$0xf]
      %v7921 = vld [vmem:[%s3 + $0x18] sm:$0xf]
      %v7922 = vld [vmem:[%s3 + $0x1c] sm:$0xf]
      %v7923 = vld [vmem:[%s3 + $0x20] sm:$0xf]
      %v7924 = vld [vmem:[%s4] sm:$0x1]
      %v7926 = vlaneseq
      %v7927 = vshrl.u32 %v7926, 7
      %v7928 = vsub.s32 0, %v7927
      %v7929 = vrot.slane %v7924, %v7928
      %v7940 = vunpack.c.l.b16 %v7915
      %v7941 = vunpack.c.l.b16 %v7916
      %v7942 = vunpack.c.l.b16 %v7917
      %v7943 = vunpack.c.l.b16 %v7918
      %v7944 = vunpack.c.l.b16 %v7919
      %v7945 = vunpack.c.l.b16 %v7920
      %v7946 = vunpack.c.l.b16 %v7921
      %v7947 = vunpack.c.l.b16 %v7922
      %v7948 = vunpack.c.l.b16 %v7923
      %v7949 = vpack.c.b16 %v7941, %v7940
      %v7950 = vpack.c.b16 %v7943, %v7942
      %v7951 = vpack.c.b16 %v7945, %v7944
      %v7952 = vpack.c.b16 %v7947, %v7946
      %v7953 = vpack.c.b16 %v7948, %v7948
      %vm7958 = vcmask 588800
      %v7959 = vsel %vm7958, %v7884, 0
      %v7961 = vsel %vm7958, %v7886, 0
      %v7963 = vsel %vm7958, %v7888, 0
      %v7965 = vsel %vm7958, %v7890, 0
      %v7967 = vsel %vm7958, %v7892, 0
      %v7969 = vsel %vm7958, %v7894, 0
      %v7971 = vsel %vm7958, %v7896, 0
      %v7973 = vsel %vm7958, %v7898, 0
      %v7975 = vsel %vm7958, %v7900, 0
      %v7977 = vsel %vm7958, %v7902, 0
      %v7979 = vsel %vm7958, %v7904, 0
      %v7981 = vsel %vm7958, %v7906, 0
      %v7983 = vsel %vm7958, %v7908, 0
      %v7985 = vsel %vm7958, %v7910, 0
      %v7987 = vsel %vm7958, %v7912, 0
      %v7989 = vsel %vm7958, %v7914, 0
      %vm7991 = vcmask 1043456
      %v7993 = vsel %vm7991, %v7953, 0
      %7995 = vmatprep.subr.bf16.mxu0 0
      %7996 = vmatpush1.bf16.msra.mxu0 %v7949
      %7997 = vmatprep.subr.bf16.mxu0 0
      %7998 = vmatpush1.bf16.msra.mxu0 %v7950
      %7999 = vmatprep.subr.bf16.mxu0 0
      %8000 = vmatpush1.bf16.msra.mxu0 %v7951
      %8001 = vmatprep.subr.bf16.mxu0 0
      %8002 = vmatpush1.bf16.msra.mxu0 %v7952
      %8003 = vmatprep.subr.bf16.mxu0 0
      %8004 = vmatpush1.bf16.msra.mxu0 %v7993
      %8005 = vmatprep.subr.bf16.mxu0 0
      %8006 = vmatpush1.bf16.msra.mxu0 0
      %8007 = vmatprep.subr.bf16.mxu0 0
      %8008 = vmatpush1.bf16.msra.mxu0 0
      %8009 = vmatprep.subr.bf16.mxu0 0
      %8010 = vmatpush1.bf16.msra.mxu0 0
      %8011 = vmatprep.subr.bf16.mxu0 0
      %8012 = vmatpush1.bf16.msra.mxu0 0
      %8013 = vmatprep.subr.bf16.mxu0 0
      %8014 = vmatpush1.bf16.msra.mxu0 0
      %8015 = vmatprep.subr.bf16.mxu0 0
      %8016 = vmatpush1.bf16.msra.mxu0 0
      %8017 = vmatprep.subr.bf16.mxu0 0
      %8018 = vmatpush1.bf16.msra.mxu0 0
      %8019 = vmatprep.subr.bf16.mxu0 0
      %8020 = vmatpush1.bf16.msra.mxu0 0
      %8021 = vmatprep.subr.bf16.mxu0 0
      %8022 = vmatpush1.bf16.msra.mxu0 0
      %8023 = vmatprep.subr.bf16.mxu0 0
      %8024 = vmatpush1.bf16.msra.mxu0 0
      %8025 = vmatprep.subr.bf16.mxu0 0
      %8026 = vmatpush1.bf16.msra.mxu0 0
      %8027 = vmatprep.mubr.bf16.mxu0 0
      %8028 = vmatmul.mubr.bf16.gmra.mrb[0].mxu0 %v7959
      %v8029 = vpop.f32.mrb[0].mxu0
      %v8030 = vadd.f32 %v7929, %v8029
      %v8031 = vpop.f32.mrb[0].mxu0
      %v8032 = vpop.f32.mrb[0].mxu0
      %v8033 = vadd.f32 %v7929, %v8032
      %v8034 = vpop.f32.mrb[0].mxu0
      %8035 = vmatprep.mubr.bf16.mxu0 0
      %8036 = vmatmul.mubr.bf16.gmra.mrb[0].mxu0 %v7961
      %v8037 = vpop.f32.mrb[0].mxu0
      %v8038 = vadd.f32 %v7929, %v8037
      %v8039 = vpop.f32.mrb[0].mxu0
      %v8040 = vpop.f32.mrb[0].mxu0
      %v8041 = vadd.f32 %v7929, %v8040
      %v8042 = vpop.f32.mrb[0].mxu0
      %8043 = vmatprep.mubr.bf16.mxu0 0
      %8044 = vmatmul.mubr.bf16.gmra.mrb[0].mxu0 %v7963
      %v8045 = vpop.f32.mrb[0].mxu0
      %v8046 = vadd.f32 %v7929, %v8045
      %v8047 = vpop.f32.mrb[0].mxu0
      %v8048 = vpop.f32.mrb[0].mxu0
      %v8049 = vadd.f32 %v7929, %v8048
      %v8050 = vpop.f32.mrb[0].mxu0
      %8051 = vmatprep.mubr.bf16.mxu0 0
      %8052 = vmatmul.mubr.bf16.gmra.mrb[0].mxu0 %v7965
      %v8053 = vpop.f32.mrb[0].mxu0
      %v8054 = vadd.f32 %v7929, %v8053
      %v8055 = vpop.f32.mrb[0].mxu0
      %v8056 = vpop.f32.mrb[0].mxu0
      %v8057 = vadd.f32 %v7929, %v8056
      %v8058 = vpop.f32.mrb[0].mxu0
      %8059 = vmatprep.mubr.bf16.mxu0 0
      %8060 = vmatmul.mubr.bf16.gmra.mrb[0].mxu0 %v7967
      %v8061 = vpop.f32.mrb[0].mxu0
      %v8062 = vadd.f32 %v7929, %v8061
      %v8063 = vpop.f32.mrb[0].mxu0
      %v8064 = vpop.f32.mrb[0].mxu0
      %v8065 = vadd.f32 %v7929, %v8064
      %v8066 = vpop.f32.mrb[0].mxu0
      %8067 = vmatprep.mubr.bf16.mxu0 0
      %8068 = vmatmul.mubr.bf16.gmra.mrb[0].mxu0 %v7969
      %v8069 = vpop.f32.mrb[0].mxu0
      %v8070 = vadd.f32 %v7929, %v8069
      %v8071 = vpop.f32.mrb[0].mxu0
      %v8072 = vpop.f32.mrb[0].mxu0
      %v8073 = vadd.f32 %v7929, %v8072
      %v8074 = vpop.f32.mrb[0].mxu0
      %8075 = vmatprep.mubr.bf16.mxu0 0
      %8076 = vmatmul.mubr.bf16.gmra.mrb[0].mxu0 %v7971
      %v8077 = vpop.f32.mrb[0].mxu0
      %v8078 = vadd.f32 %v7929, %v8077
      %v8079 = vpop.f32.mrb[0].mxu0
      %v8080 = vpop.f32.mrb[0].mxu0
      %v8081 = vadd.f32 %v7929, %v8080
      %v8082 = vpop.f32.mrb[0].mxu0
      %8083 = vmatprep.mubr.bf16.mxu0 0
      %8084 = vmatmul.mubr.bf16.gmra.mrb[0].mxu0 %v7973
      %v8085 = vpop.f32.mrb[0].mxu0
      %v8086 = vadd.f32 %v7929, %v8085
      %v8087 = vpop.f32.mrb[0].mxu0
      %v8088 = vpop.f32.mrb[0].mxu0
      %v8089 = vadd.f32 %v7929, %v8088
      %v8090 = vpop.f32.mrb[0].mxu0
      %8091 = vmatprep.mubr.bf16.mxu0 0
      %8092 = vmatmul.mubr.bf16.gmra.mrb[0].mxu0 %v7975
      %v8093 = vpop.f32.mrb[0].mxu0
      %v8094 = vadd.f32 %v7929, %v8093
      %v8095 = vpop.f32.mrb[0].mxu0
      %v8096 = vpop.f32.mrb[0].mxu0
      %v8097 = vadd.f32 %v7929, %v8096
      %v8098 = vpop.f32.mrb[0].mxu0
      %8099 = vmatprep.mubr.bf16.mxu0 0
      %8100 = vmatmul.mubr.bf16.gmra.mrb[0].mxu0 %v7977
      %v8101 = vpop.f32.mrb[0].mxu0
      %v8102 = vadd.f32 %v7929, %v8101
      %v8103 = vpop.f32.mrb[0].mxu0
      %v8104 = vpop.f32.mrb[0].mxu0
      %v8105 = vadd.f32 %v7929, %v8104
      %v8106 = vpop.f32.mrb[0].mxu0
      %8107 = vmatprep.mubr.bf16.mxu0 0
      %8108 = vmatmul.mubr.bf16.gmra.mrb[0].mxu0 %v7979
      %v8109 = vpop.f32.mrb[0].mxu0
      %v8110 = vadd.f32 %v7929, %v8109
      %v8111 = vpop.f32.mrb[0].mxu0
      %v8112 = vpop.f32.mrb[0].mxu0
      %v8113 = vadd.f32 %v7929, %v8112
      %v8114 = vpop.f32.mrb[0].mxu0
      %8115 = vmatprep.mubr.bf16.mxu0 0
      %8116 = vmatmul.mubr.bf16.gmra.mrb[0].mxu0 %v7981
      %v8117 = vpop.f32.mrb[0].mxu0
      %v8118 = vadd.f32 %v7929, %v8117
      %v8119 = vpop.f32.mrb[0].mxu0
      %v8120 = vpop.f32.mrb[0].mxu0
      %v8121 = vadd.f32 %v7929, %v8120
      %v8122 = vpop.f32.mrb[0].mxu0
      %8123 = vmatprep.mubr.bf16.mxu0 0
      %8124 = vmatmul.mubr.bf16.gmra.mrb[0].mxu0 %v7983
      %v8125 = vpop.f32.mrb[0].mxu0
      %v8126 = vadd.f32 %v7929, %v8125
      %v8127 = vpop.f32.mrb[0].mxu0
      %v8128 = vpop.f32.mrb[0].mxu0
      %v8129 = vadd.f32 %v7929, %v8128
      %v8130 = vpop.f32.mrb[0].mxu0
      %8131 = vmatprep.mubr.bf16.mxu0 0
      %8132 = vmatmul.mubr.bf16.gmra.mrb[0].mxu0 %v7985
      %v8133 = vpop.f32.mrb[0].mxu0
      %v8134 = vadd.f32 %v7929, %v8133
      %v8135 = vpop.f32.mrb[0].mxu0
      %v8136 = vpop.f32.mrb[0].mxu0
      %v8137 = vadd.f32 %v7929, %v8136
      %v8138 = vpop.f32.mrb[0].mxu0
      %8139 = vmatprep.mubr.bf16.mxu0 0
      %8140 = vmatmul.mubr.bf16.gmra.mrb[0].mxu0 %v7987
      %v8141 = vpop.f32.mrb[0].mxu0
      %v8142 = vadd.f32 %v7929, %v8141
      %v8143 = vpop.f32.mrb[0].mxu0
      %v8144 = vpop.f32.mrb[0].mxu0
      %v8145 = vadd.f32 %v7929, %v8144
      %v8146 = vpop.f32.mrb[0].mxu0
      %8147 = vmatprep.mubr.bf16.mxu0 0
      %8148 = vmatmul.mubr.bf16.gmra.mrb[0].mxu0 %v7989
      %v8149 = vpop.f32.mrb[0].mxu0
      %v8150 = vadd.f32 %v7929, %v8149
      %v8151 = vpop.f32.mrb[0].mxu0
      %v8152 = vpop.f32.mrb[0].mxu0
      %v8153 = vadd.f32 %v7929, %v8152
      %v8154 = vpop.f32.mrb[0].mxu0
      %8155 = vdwg.mxu0
      %vm8156 = vcmp.ge.f32.partialorder %v8030, 0.0
      %vm8157 = vcmp.ge.f32.partialorder %v8033, 0.0
      %vm8158 = vcmp.ge.f32.partialorder %v8038, 0.0
      %vm8159 = vcmp.ge.f32.partialorder %v8041, 0.0
      %vm8160 = vcmp.ge.f32.partialorder %v8046, 0.0
      %vm8161 = vcmp.ge.f32.partialorder %v8049, 0.0
      %vm8162 = vcmp.ge.f32.partialorder %v8054, 0.0
      %vm8163 = vcmp.ge.f32.partialorder %v8057, 0.0
      %vm8164 = vcmp.ge.f32.partialorder %v8062, 0.0
      %vm8165 = vcmp.ge.f32.partialorder %v8065, 0.0
      %vm8166 = vcmp.ge.f32.partialorder %v8070, 0.0
      %vm8167 = vcmp.ge.f32.partialorder %v8073, 0.0
      %vm8168 = vcmp.ge.f32.partialorder %v8078, 0.0
      %vm8169 = vcmp.ge.f32.partialorder %v8081, 0.0
      %vm8170 = vcmp.ge.f32.partialorder %v8086, 0.0
      %vm8171 = vcmp.ge.f32.partialorder %v8089, 0.0
      %vm8172 = vcmp.ge.f32.partialorder %v8094, 0.0
      %vm8173 = vcmp.ge.f32.partialorder %v8097, 0.0
      %vm8174 = vcmp.ge.f32.partialorder %v8102, 0.0
      %vm8175 = vcmp.ge.f32.partialorder %v8105, 0.0
      %vm8176 = vcmp.ge.f32.partialorder %v8110, 0.0
      %vm8177 = vcmp.ge.f32.partialorder %v8113, 0.0
      %vm8178 = vcmp.ge.f32.partialorder %v8118, 0.0
      %vm8179 = vcmp.ge.f32.partialorder %v8121, 0.0
      %vm8180 = vcmp.ge.f32.partialorder %v8126, 0.0
      %vm8181 = vcmp.ge.f32.partialorder %v8129, 0.0
      %vm8182 = vcmp.ge.f32.partialorder %v8134, 0.0
      %vm8183 = vcmp.ge.f32.partialorder %v8137, 0.0
      %vm8184 = vcmp.ge.f32.partialorder %v8142, 0.0
      %vm8185 = vcmp.ge.f32.partialorder %v8145, 0.0
      %vm8186 = vcmp.ge.f32.partialorder %v8150, 0.0
      %vm8187 = vcmp.ge.f32.partialorder %v8153, 0.0
      %v8188 = vmul.f32 %v8030, 0.01
      %v8189 = vmul.f32 %v8033, 0.01
      %v8190 = vmul.f32 %v8038, 0.01
      %v8191 = vmul.f32 %v8041, 0.01
      %v8192 = vmul.f32 %v8046, 0.01
      %v8193 = vmul.f32 %v8049, 0.01
      %v8194 = vmul.f32 %v8054, 0.01
      %v8195 = vmul.f32 %v8057, 0.01
      %v8196 = vmul.f32 %v8062, 0.01
      %v8197 = vmul.f32 %v8065, 0.01
      %v8198 = vmul.f32 %v8070, 0.01
      %v8199 = vmul.f32 %v8073, 0.01
      %v8200 = vmul.f32 %v8078, 0.01
      %v8201 = vmul.f32 %v8081, 0.01
      %v8202 = vmul.f32 %v8086, 0.01
      %v8203 = vmul.f32 %v8089, 0.01
      %v8204 = vmul.f32 %v8094, 0.01
      %v8205 = vmul.f32 %v8097, 0.01
      %v8206 = vmul.f32 %v8102, 0.01
      %v8207 = vmul.f32 %v8105, 0.01
      %v8208 = vmul.f32 %v8110, 0.01
      %v8209 = vmul.f32 %v8113, 0.01
      %v8210 = vmul.f32 %v8118, 0.01
      %v8211 = vmul.f32 %v8121, 0.01
      %v8212 = vmul.f32 %v8126, 0.01
      %v8213 = vmul.f32 %v8129, 0.01
      %v8214 = vmul.f32 %v8134, 0.01
      %v8215 = vmul.f32 %v8137, 0.01
      %v8216 = vmul.f32 %v8142, 0.01
      %v8217 = vmul.f32 %v8145, 0.01
      %v8218 = vmul.f32 %v8150, 0.01
      %v8219 = vmul.f32 %v8153, 0.01
      %v8220 = vsel %vm8156, %v8030, %v8188
      %v8221 = vsel %vm8157, %v8033, %v8189
      %v8222 = vsel %vm8158, %v8038, %v8190
      %v8223 = vsel %vm8159, %v8041, %v8191
      %v8224 = vsel %vm8160, %v8046, %v8192
      %v8225 = vsel %vm8161, %v8049, %v8193
      %v8226 = vsel %vm8162, %v8054, %v8194
      %v8227 = vsel %vm8163, %v8057, %v8195
      %v8228 = vsel %vm8164, %v8062, %v8196
      %v8229 = vsel %vm8165, %v8065, %v8197
      %v8230 = vsel %vm8166, %v8070, %v8198
      %v8231 = vsel %vm8167, %v8073, %v8199
      %v8232 = vsel %vm8168, %v8078, %v8200
      %v8233 = vsel %vm8169, %v8081, %v8201
      %v8234 = vsel %vm8170, %v8086, %v8202
      %v8235 = vsel %vm8171, %v8089, %v8203
      %v8236 = vsel %vm8172, %v8094, %v8204
      %v8237 = vsel %vm8173, %v8097, %v8205
      %v8238 = vsel %vm8174, %v8102, %v8206
      %v8239 = vsel %vm8175, %v8105, %v8207
      %v8240 = vsel %vm8176, %v8110, %v8208
      %v8241 = vsel %vm8177, %v8113, %v8209
      %v8242 = vsel %vm8178, %v8118, %v8210
      %v8243 = vsel %vm8179, %v8121, %v8211
      %v8244 = vsel %vm8180, %v8126, %v8212
      %v8245 = vsel %vm8181, %v8129, %v8213
      %v8246 = vsel %vm8182, %v8134, %v8214
      %v8247 = vsel %vm8183, %v8137, %v8215
      %v8248 = vsel %vm8184, %v8142, %v8216
      %v8249 = vsel %vm8185, %v8145, %v8217
      %v8250 = vsel %vm8186, %v8150, %v8218
      %v8251 = vsel %vm8187, %v8153, %v8219
      %8252 = vxpose.xlu0.b32.start [1/16] %v8220, 128
      %8253 = vxpose.xlu0.b32.cont [2/16] %v8221, 128
      %8254 = vxpose.xlu0.b32.cont [3/16] %v8222, 128
      %8255 = vxpose.xlu0.b32.cont [4/16] %v8223, 128
      %8256 = vxpose.xlu0.b32.cont [5/16] %v8224, 128
      %8257 = vxpose.xlu0.b32.cont [6/16] %v8225, 128
      %8258 = vxpose.xlu0.b32.cont [7/16] %v8226, 128
      %8259 = vxpose.xlu0.b32.cont [8/16] %v8227, 128
      %8260 = vxpose.xlu0.b32.cont [9/16] %v8228, 128
      %8261 = vxpose.xlu0.b32.cont [10/16] %v8229, 128
      %8262 = vxpose.xlu0.b32.cont [11/16] %v8230, 128
      %8263 = vxpose.xlu0.b32.cont [12/16] %v8231, 128
      %8264 = vxpose.xlu0.b32.cont [13/16] %v8232, 128
      %8265 = vxpose.xlu0.b32.cont [14/16] %v8233, 128
      %8266 = vxpose.xlu0.b32.cont [15/16] %v8234, 128
      %8267 = vxpose.xlu0.b32.end [16/16] %v8235, 128
      %v8268 = vpop.trf.xlu0
      %v8269 = vpop.trf.xlu0
      %v8270 = vpop.trf.xlu0
      %v8271 = vpop.trf.xlu0
      %v8272 = vpop.trf.xlu0
      %v8273 = vpop.trf.xlu0
      %v8274 = vpop.trf.xlu0
      %v8275 = vpop.trf.xlu0
      %v8276 = vpop.trf.xlu0
      %v8277 = vpop.trf.xlu0
      %v8278 = vpop.trf.xlu0
      %v8279 = vpop.trf.xlu0
      %v8280 = vpop.trf.xlu0
      %v8281 = vpop.trf.xlu0
      %v8282 = vpop.trf.xlu0
      %v8283 = vpop.trf.xlu0
      %8284 = vxpose.xlu0.b32.start [1/16] %v8236, 128
      %8285 = vxpose.xlu0.b32.cont [2/16] %v8237, 128
      %8286 = vxpose.xlu0.b32.cont [3/16] %v8238, 128
      %8287 = vxpose.xlu0.b32.cont [4/16] %v8239, 128
      %8288 = vxpose.xlu0.b32.cont [5/16] %v8240, 128
      %8289 = vxpose.xlu0.b32.cont [6/16] %v8241, 128
      %8290 = vxpose.xlu0.b32.cont [7/16] %v8242, 128
      %8291 = vxpose.xlu0.b32.cont [8/16] %v8243, 128
      %8292 = vxpose.xlu0.b32.cont [9/16] %v8244, 128
      %8293 = vxpose.xlu0.b32.cont [10/16] %v8245, 128
      %8294 = vxpose.xlu0.b32.cont [11/16] %v8246, 128
      %8295 = vxpose.xlu0.b32.cont [12/16] %v8247, 128
      %8296 = vxpose.xlu0.b32.cont [13/16] %v8248, 128
      %8297 = vxpose.xlu0.b32.cont [14/16] %v8249, 128
      %8298 = vxpose.xlu0.b32.cont [15/16] %v8250, 128
      %8299 = vxpose.xlu0.b32.end [16/16] %v8251, 128
      %v8300 = vpop.trf.xlu0
      %v8301 = vpop.trf.xlu0
      %v8302 = vpop.trf.xlu0
      %v8303 = vpop.trf.xlu0
      %v8304 = vpop.trf.xlu0
      %v8305 = vpop.trf.xlu0
      %v8306 = vpop.trf.xlu0
      %v8307 = vpop.trf.xlu0
      %v8308 = vpop.trf.xlu0
      %v8309 = vpop.trf.xlu0
      %v8310 = vpop.trf.xlu0
      %v8311 = vpop.trf.xlu0
      %v8312 = vpop.trf.xlu0
      %v8313 = vpop.trf.xlu0
      %v8314 = vpop.trf.xlu0
      %v8315 = vpop.trf.xlu0
      %8316 = vst [vmem:[%s224] sm:$0xff] %v8268
      %8317 = vst [vmem:[%s224 + $0x8] sm:$0xff] %v8300
      %p8318 = scmp.lt.s32.totalorder %s16, 1
      %s8319 = scalar_select %p8318, %s16, 1
      %s8320 = smul.addr %s8319, 2
      %s8321 = smul.addr %s8320, 8
      %s8322 = scalar_lea.vmem %s5, %s8321
      // Predicated region
      $region41: #{conv_block_forward.1} parent=39 // pred_check
        %p8323 = pneg %p144
      $region42: #{conv_block_forward.1} parent=39 // pred_check_branch
        %8325 = sbr.rel (%p8323) target = $region44
      $region43: #{conv_block_forward.1} parent=39 // pred_region
        _
      $region44: #{conv_block_forward.1} parent=39 // pred_fallthru
        _
    $region40: #{conv_block_forward.1} parent=5 // pred_fallthru
      _
    %p8326 = scmp.le.s32.totalorder 2, %s11
    // Predicated region
    $region45: #{conv_block_forward.1} parent=5 // pred_check
      %p8327 = pneg %p8326
    $region46: #{conv_block_forward.1} parent=5 // pred_check_branch
      %8329 = sbr.rel (%p8327) target = $region48
    $region47: #{conv_block_forward.1} parent=5 // pred_region
      %s8330 = ssub.s32 %s11, 2
      // Predicated region
      $region49: #{conv_block_forward.1} parent=47 // pred_check
        %p8331 = pneg %p150
      $region50: #{conv_block_forward.1} parent=47 // pred_check_branch
        %8333 = sbr.rel (%p8331) target = $region52
      $region51: #{conv_block_forward.1} parent=47 // pred_region
        %p8334 = scmp.lt.s32.totalorder %s17, 1
        %s8335 = scalar_select %p8334, %s17, 1
        %s8336 = smul.addr %s8335, 2
        %s8337 = smul.addr %s8336, 8
        %s8338 = scalar_lea.vmem %s5, %s8337
      $region52: #{conv_block_forward.1} parent=47 // pred_fallthru
        _
    $region48: #{conv_block_forward.1} parent=5 // pred_fallthru
      _
  $region6: #{conv_block_forward.1} parent=0 // loop_footer
    %s15 = sadd.s32 1, %s11
  $region7: #{conv_block_forward.1} parent=0 // loop_footer_branch
    %10 = sbr.rel target = $region3
  $region8: #{conv_block_forward.1} parent=0 // loop_exit
    _

</llo_original>
